<compile_context>
chip_gen: v6e
topology: v6e:2x2x1
jax: 0.10.0
libtpu: 0.0.40
codegen_flags: <defaults>
</compile_context>

<pallas_src>
import functools
import math

import jax
import jax.numpy as jnp
from jax.experimental import pallas as pl
from jax.experimental.pallas import tpu as pltpu


# TODO(synk): PyTorch functional.gelu defaults to the exact erf-GELU; the tanh
# approximation is used here for guaranteed Mosaic lowering (|diff| < ~1e-3).
def _gelu_tanh(x):
    c = math.sqrt(2.0 / math.pi)
    return 0.5 * x * (1.0 + jnp.tanh(c * (x + 0.044715 * x * x * x)))


def _layernorm(x, gamma, beta, eps=1e-5):
    mean = jnp.mean(x, axis=-1, keepdims=True)
    var = jnp.mean(jnp.square(x - mean), axis=-1, keepdims=True)
    return (x - mean) * jax.lax.rsqrt(var + eps) * gamma + beta


def _mha(xq, xkv, wq, wk, wv, wo, bo, n_head, scratch):
    """Multi-head attention. xq:(Sq,C) f32, xkv:(Skv,Dkv) f32, weights bf16."""
    q = jnp.dot(xq.astype(wq.dtype), wq, preferred_element_type=jnp.float32)
    k = jnp.dot(xkv.astype(wk.dtype), wk, preferred_element_type=jnp.float32)
    v = jnp.dot(xkv.astype(wv.dtype), wv, preferred_element_type=jnp.float32)
    c = q.shape[-1]
    dh = c // n_head
    scale = 1.0 / math.sqrt(dh)
    for hd in range(n_head):
        lo, hi = hd * dh, (hd + 1) * dh
        qh = (q[:, lo:hi] * scale).astype(jnp.bfloat16)
        kh = k[:, lo:hi].astype(jnp.bfloat16)
        vh = v[:, lo:hi].astype(jnp.bfloat16)
        # scores = qh @ kh^T  (contract the head dim; no explicit transpose)
        s = jax.lax.dot_general(qh, kh, (((1,), (1,)), ((), ())),
                                preferred_element_type=jnp.float32)
        m = jnp.max(s, axis=-1, keepdims=True)
        p = jnp.exp(s - m)
        p = p / jnp.sum(p, axis=-1, keepdims=True)
        oh = jnp.dot(p.astype(jnp.bfloat16), vh,
                     preferred_element_type=jnp.float32)
        scratch[:, lo:hi] = oh
    attn = scratch[...]
    return jnp.dot(attn.astype(wo.dtype), wo,
                   preferred_element_type=jnp.float32) + bo


def _attention_block_kernel(
    # inputs (per batch element)
    x_ref, ctx_ref, gavg_ref,
    gn_g_ref, gn_b_ref,
    wci_ref, bci_ref,
    ln1_g_ref, ln1_b_ref,
    wq1_ref, wk1_ref, wv1_ref, wo1_ref, bo1_ref,
    ln2_g_ref, ln2_b_ref,
    wq2_ref, wk2_ref, wv2_ref, wo2_ref, bo2_ref,
    ln3_g_ref, ln3_b_ref,
    wg1_ref, bg1_ref,
    wg2_ref, bg2_ref,
    wco_ref, bco_ref,
    # output
    o_ref,
    # scratch
    attn_scratch,
    *, n_head, eps_gn=1e-6, eps_ln=1e-5,
):
    x = x_ref[0]        # (HW, C) f32, original input in sequence layout
    ctx = ctx_ref[0]    # (S_ctx, D_ctx) f32

    # ---- GroupNorm(32, C, eps=1e-6): stats over (channels-in-group x HW) ----
    gavg = gavg_ref[...]                                    # (C, C) averaging matrix
    gp = jnp.dot(x, gavg, preferred_element_type=jnp.float32)       # per-pixel group-avg
    gp2 = jnp.dot(x * x, gavg, preferred_element_type=jnp.float32)
    g_mean = jnp.mean(gp, axis=0, keepdims=True)            # (1, C)
    g_msq = jnp.mean(gp2, axis=0, keepdims=True)
    g_var = g_msq - g_mean * g_mean
    h = (x - g_mean) * jax.lax.rsqrt(g_var + eps_gn)
    h = h * gn_g_ref[...] + gn_b_ref[...]

    # ---- conv_input: 1x1 conv == per-pixel linear over channels ----
    h = jnp.dot(h.astype(wci_ref.dtype), wci_ref[...],
                preferred_element_type=jnp.float32) + bci_ref[...]

    # ---- LayerNorm 1 + self-attention + residual ----
    resid = h
    hn = _layernorm(h, ln1_g_ref[...], ln1_b_ref[...], eps_ln)
    h = resid + _mha(hn, hn, wq1_ref[...], wk1_ref[...], wv1_ref[...],
                     wo1_ref[...], bo1_ref[...], n_head, attn_scratch)

    # ---- LayerNorm 2 + cross-attention (context) + residual ----
    resid = h
    hn = _layernorm(h, ln2_g_ref[...], ln2_b_ref[...], eps_ln)
    h = resid + _mha(hn, ctx, wq2_ref[...], wk2_ref[...], wv2_ref[...],
                     wo2_ref[...], bo2_ref[...], n_head, attn_scratch)

    # ---- LayerNorm 3 + GeGLU feed-forward + residual ----
    resid = h
    hn = _layernorm(h, ln3_g_ref[...], ln3_b_ref[...], eps_ln)
    hg = jnp.dot(hn.astype(wg1_ref.dtype), wg1_ref[...],
                 preferred_element_type=jnp.float32) + bg1_ref[...]
    d_ff = hg.shape[-1] // 2
    a = hg[:, :d_ff]
    gate = hg[:, d_ff:]
    hf = a * _gelu_tanh(gate)
    h = resid + (jnp.dot(hf.astype(wg2_ref.dtype), wg2_ref[...],
                         preferred_element_type=jnp.float32) + bg2_ref[...])

    # ---- conv_output (1x1) + long residual (original x) ----
    out = (jnp.dot(h.astype(wco_ref.dtype), wco_ref[...],
                   preferred_element_type=jnp.float32) + bco_ref[...]) + x
    o_ref[0] = out.astype(o_ref.dtype)


def _batched_spec(shape):
    nd = len(shape)
    return pl.BlockSpec((1,) + tuple(shape[1:]), lambda b: (b,) + (0,) * (nd - 1))


def _replicated_spec(shape):
    nd = len(shape)
    return pl.BlockSpec(tuple(shape), lambda b: (0,) * nd)


def _cost_estimate(B, HW, C, S, Dc):
    mm = lambda m, k, n: 2 * m * k * n
    per_batch = (
        2 * mm(HW, C, C)          # group-norm averaging matmuls (f32)
        + mm(HW, C, C)            # conv_input
        + 3 * mm(HW, C, C)        # self-attn q, k, v
        + 2 * mm(HW, C, HW)       # self-attn scores + p@v (all heads)
        + mm(HW, C, C)            # self-attn out_proj
        + mm(HW, C, C)            # cross-attn q
        + 2 * mm(S, Dc, C)        # cross-attn k, v
        + 2 * mm(HW, C, S)        # cross-attn scores + p@v
        + mm(HW, C, C)            # cross-attn out_proj
        + mm(HW, C, 8 * C)        # geglu linear 1
        + mm(HW, 4 * C, C)        # geglu linear 2
        + mm(HW, C, C)            # conv_output
    )
    transcendentals = B * (HW * (HW + S) + 4 * C * HW)   # softmax exps + gelu tanh
    return B * per_batch, transcendentals


def attention_block(x, context, params, n_head, *, param_dtype=jnp.bfloat16):
    """x: (B, C, H, W), context: (B, S_ctx, D_ctx) -> (B, C, H, W)."""
    B, C, H, W = x.shape
    HW = H * W
    S_ctx, D_ctx = context.shape[1], context.shape[2]
    G = 32
    assert C % G == 0, "GroupNorm(32, C) requires C % 32 == 0"
    assert C % n_head == 0

    # sequence ("features last", lane-dense) layout; layout plumbing stays in XLA
    x_seq = jnp.transpose(x.reshape(B, C, HW), (0, 2, 1)).astype(jnp.float32)
    ctx = context.astype(jnp.float32)

    # (C, C) group-averaging matrix for GroupNorm statistics
    cg = C // G
    ch = jnp.arange(C)
    gavg = jnp.where((ch[:, None] // cg) == (ch[None, :] // cg),
                     1.0 / cg, 0.0).astype(jnp.float32)

    wcast = lambda name: params[name].astype(param_dtype)   # matmul weights -> bf16
    fcast = lambda name: params[name].astype(jnp.float32)   # biases / affine stay f32

    inputs = [
        x_seq, ctx, gavg,
        fcast("gn_gamma"), fcast("gn_beta"),
        wcast("w_ci"), fcast("b_ci"),
        fcast("ln1_g"), fcast("ln1_b"),
        wcast("wq1"), wcast("wk1"), wcast("wv1"), wcast("wo1"), fcast("bo1"),
        fcast("ln2_g"), fcast("ln2_b"),
        wcast("wq2"), wcast("wk2"), wcast("wv2"), wcast("wo2"), fcast("bo2"),
        fcast("ln3_g"), fcast("ln3_b"),
        wcast("wg1"), fcast("bg1"),
        wcast("wg2"), fcast("bg2"),
        wcast("w_co"), fcast("b_co"),
    ]

    in_specs = [_batched_spec(x_seq.shape), _batched_spec(ctx.shape)]
    in_specs += [_replicated_spec(a.shape) for a in inputs[2:]]
    out_specs = _batched_spec((B, HW, C))

    # VMEM limit: ~3x the resident working set, clamped well under v7x's 64 MiB.
    out_bytes = B * HW * C * 4
    total_bytes = sum(int(a.size) * a.dtype.itemsize for a in inputs) + out_bytes
    vmem_limit = int(min(max(3 * total_bytes, 16 << 20), 32 << 20))

    flops, transcendentals = _cost_estimate(B, HW, C, S_ctx, D_ctx)
    cost = pl.CostEstimate(flops=int(flops),
                           transcendentals=int(transcendentals),
                           bytes_accessed=int(total_bytes))

    out_seq = pl.pallas_call(
        functools.partial(_attention_block_kernel, n_head=n_head),
        out_shape=jax.ShapeDtypeStruct((B, HW, C), jnp.float32),
        grid=(B,),
        in_specs=in_specs,
        out_specs=out_specs,
        scratch_shapes=[pltpu.VMEM((HW, C), jnp.float32)],
        compiler_params=pltpu.CompilerParams(
            dimension_semantics=("parallel",),
            vmem_limit_bytes=vmem_limit,
        ),
        cost_estimate=cost,
    )(*inputs)

    out = jnp.transpose(out_seq, (0, 2, 1)).reshape(B, C, H, W)
    return out.astype(x.dtype)


def init_params(key, n_head, n_embd, d_context):
    """Random params (f32). Linear/conv weights are stored pre-transposed (in, out)."""
    C = n_head * n_embd
    ks = iter(jax.random.split(key, 32))

    def linear_w(fan_in, fan_out):
        bound = 1.0 / math.sqrt(fan_in)
        return jax.random.uniform(next(ks), (fan_in, fan_out), jnp.float32, -bound, bound)

    def linear_b(fan_in, fan_out):
        bound = 1.0 / math.sqrt(fan_in)
        return jax.random.uniform(next(ks), (1, fan_out), jnp.float32, -bound, bound)

    def affine():
        g = 1.0 + 0.05 * jax.random.normal(next(ks), (1, C), jnp.float32)
        b = 0.05 * jax.random.normal(next(ks), (1, C), jnp.float32)
        return g, b

    p = {}
    p["gn_gamma"], p["gn_beta"] = affine()
    p["w_ci"], p["b_ci"] = linear_w(C, C), linear_b(C, C)
    p["ln1_g"], p["ln1_b"] = affine()
    p["wq1"], p["wk1"], p["wv1"] = linear_w(C, C), linear_w(C, C), linear_w(C, C)
    p["wo1"], p["bo1"] = linear_w(C, C), linear_b(C, C)
    p["ln2_g"], p["ln2_b"] = affine()
    p["wq2"] = linear_w(C, C)
    p["wk2"], p["wv2"] = linear_w(d_context, C), linear_w(d_context, C)
    p["wo2"], p["bo2"] = linear_w(C, C), linear_b(C, C)
    p["ln3_g"], p["ln3_b"] = affine()
    p["wg1"], p["bg1"] = linear_w(C, 8 * C), linear_b(C, 8 * C)
    p["wg2"], p["bg2"] = linear_w(4 * C, C), linear_b(4 * C, C)
    p["w_co"], p["b_co"] = linear_w(C, C), linear_b(C, C)
    return p


def reference(x, context, params, n_head):
    """Pure-JAX f32 reference of the PyTorch AttentionBlock forward."""
    B, C, H, W = x.shape
    HW = H * W
    G, cg = 32, C // 32
    xf = x.astype(jnp.float32)
    ctx = context.astype(jnp.float32)

    xr = xf.reshape(B, G, cg, HW)
    mean = xr.mean(axis=(2, 3), keepdims=True)
    var = xr.var(axis=(2, 3), keepdims=True)
    xn = (xr - mean) / jnp.sqrt(var + 1e-6)
    xn = xn.reshape(B, C, HW)
    xn = xn * params["gn_gamma"].reshape(1, C, 1) + params["gn_beta"].reshape(1, C, 1)

    h = jnp.transpose(xn, (0, 2, 1))                      # (B, HW, C)
    h = h @ params["w_ci"] + params["b_ci"]

    def ln(t, g, b, eps=1e-5):
        m = t.mean(-1, keepdims=True)
        v = ((t - m) ** 2).mean(-1, keepdims=True)
        return (t - m) / jnp.sqrt(v + eps) * g + b

    def mha(xq, xkv, wq, wk, wv, wo, bo):
        Bq, Sq, Cq = xq.shape
        Skv = xkv.shape[1]
        dh = Cq // n_head
        q = (xq @ wq).reshape(Bq, Sq, n_head, dh).transpose(0, 2, 1, 3)
        k = (xkv @ wk).reshape(Bq, Skv, n_head, dh).transpose(0, 2, 1, 3)
        v = (xkv @ wv).reshape(Bq, Skv, n_head, dh).transpose(0, 2, 1, 3)
        s = jnp.einsum("bhqd,bhkd->bhqk", q, k) / math.sqrt(dh)
        p = jax.nn.softmax(s, axis=-1)
        o = jnp.einsum("bhqk,bhkd->bhqd", p, v).transpose(0, 2, 1, 3).reshape(Bq, Sq, Cq)
        return o @ wo + bo

    hn = ln(h, params["ln1_g"], params["ln1_b"])
    h = h + mha(hn, hn, params["wq1"], params["wk1"], params["wv1"],
                params["wo1"], params["bo1"])
    hn = ln(h, params["ln2_g"], params["ln2_b"])
    h = h + mha(hn, ctx, params["wq2"], params["wk2"], params["wv2"],
                params["wo2"], params["bo2"])
    hn = ln(h, params["ln3_g"], params["ln3_b"])
    hg = hn @ params["wg1"] + params["bg1"]
    a, gate = jnp.split(hg, 2, axis=-1)
    h = h + (a * _gelu_tanh(gate)) @ params["wg2"] + params["bg2"]
    out = h @ params["w_co"] + params["b_co"]
    out = jnp.transpose(out, (0, 2, 1)).reshape(B, C, H, W) + xf
    return out


if __name__ == "__main__":
    n_head, n_embd = 4, 16          # channels = 64 (divisible by 32 for GroupNorm)
    d_context = 32
    B, H, W = 2, 8, 8
    S_ctx = 8

    key = jax.random.PRNGKey(0)
    kx, kc, kp = jax.random.split(key, 3)
    x = jax.random.normal(kx, (B, n_head * n_embd, H, W), jnp.float32)
    context = jax.random.normal(kc, (B, S_ctx, d_context), jnp.float32)
    params = init_params(kp, n_head, n_embd, d_context)

    out = attention_block(x, context, params, n_head)
    out = jax.block_until_ready(out)

    ref = reference(x, context, params, n_head)
    assert out.shape == x.shape
    rel = float(jnp.linalg.norm(out - ref) / (jnp.linalg.norm(ref) + 1e-8))
    assert rel < 3e-2, f"relative error vs f32 reference too large: {rel}"

    print("KERNEL_OK")
</pallas_src>

<mosaic_0001>
module attributes {stable_mosaic.version = 11 : i64} {
  func.func @_attention_block_kernel(%arg0: i32, %arg1: memref<1x64x64xf32, #tpu.memory_space<vmem>>, %arg2: memref<1x8x32xf32, #tpu.memory_space<vmem>>, %arg3: memref<64x64xf32, #tpu.memory_space<vmem>>, %arg4: memref<1x64xf32, #tpu.memory_space<vmem>>, %arg5: memref<1x64xf32, #tpu.memory_space<vmem>>, %arg6: memref<64x64xbf16, #tpu.memory_space<vmem>>, %arg7: memref<1x64xf32, #tpu.memory_space<vmem>>, %arg8: memref<1x64xf32, #tpu.memory_space<vmem>>, %arg9: memref<1x64xf32, #tpu.memory_space<vmem>>, %arg10: memref<64x64xbf16, #tpu.memory_space<vmem>>, %arg11: memref<64x64xbf16, #tpu.memory_space<vmem>>, %arg12: memref<64x64xbf16, #tpu.memory_space<vmem>>, %arg13: memref<64x64xbf16, #tpu.memory_space<vmem>>, %arg14: memref<1x64xf32, #tpu.memory_space<vmem>>, %arg15: memref<1x64xf32, #tpu.memory_space<vmem>>, %arg16: memref<1x64xf32, #tpu.memory_space<vmem>>, %arg17: memref<64x64xbf16, #tpu.memory_space<vmem>>, %arg18: memref<32x64xbf16, #tpu.memory_space<vmem>>, %arg19: memref<32x64xbf16, #tpu.memory_space<vmem>>, %arg20: memref<64x64xbf16, #tpu.memory_space<vmem>>, %arg21: memref<1x64xf32, #tpu.memory_space<vmem>>, %arg22: memref<1x64xf32, #tpu.memory_space<vmem>>, %arg23: memref<1x64xf32, #tpu.memory_space<vmem>>, %arg24: memref<64x512xbf16, #tpu.memory_space<vmem>>, %arg25: memref<1x512xf32, #tpu.memory_space<vmem>>, %arg26: memref<256x64xbf16, #tpu.memory_space<vmem>>, %arg27: memref<1x64xf32, #tpu.memory_space<vmem>>, %arg28: memref<64x64xbf16, #tpu.memory_space<vmem>>, %arg29: memref<1x64xf32, #tpu.memory_space<vmem>>, %arg30: memref<1x64x64xf32, #tpu.memory_space<vmem>>, %arg31: memref<64x64xf32, #tpu.memory_space<vmem>>) attributes {dimension_semantics = [#tpu.dimension_semantics<parallel>], iteration_bounds = array<i64: 2>, scalar_prefetch = 0 : i64, scratch_operands = 1 : i64, tpu.core_type = #tpu.core_type<tc>, window_params = [{transform_indices = @transform_0, window_bounds = array<i64: 1, 64, 64>}, {transform_indices = @transform_1, window_bounds = array<i64: 1, 8, 32>}, {pipeline_mode = #tpu.pipeline_mode<synchronous>, transform_indices = @transform_2, window_bounds = array<i64: 64, 64>}, {pipeline_mode = #tpu.pipeline_mode<synchronous>, transform_indices = @transform_3, window_bounds = array<i64: 1, 64>}, {pipeline_mode = #tpu.pipeline_mode<synchronous>, transform_indices = @transform_4, window_bounds = array<i64: 1, 64>}, {pipeline_mode = #tpu.pipeline_mode<synchronous>, transform_indices = @transform_5, window_bounds = array<i64: 64, 64>}, {pipeline_mode = #tpu.pipeline_mode<synchronous>, transform_indices = @transform_6, window_bounds = array<i64: 1, 64>}, {pipeline_mode = #tpu.pipeline_mode<synchronous>, transform_indices = @transform_7, window_bounds = array<i64: 1, 64>}, {pipeline_mode = #tpu.pipeline_mode<synchronous>, transform_indices = @transform_8, window_bounds = array<i64: 1, 64>}, {pipeline_mode = #tpu.pipeline_mode<synchronous>, transform_indices = @transform_9, window_bounds = array<i64: 64, 64>}, {pipeline_mode = #tpu.pipeline_mode<synchronous>, transform_indices = @transform_10, window_bounds = array<i64: 64, 64>}, {pipeline_mode = #tpu.pipeline_mode<synchronous>, transform_indices = @transform_11, window_bounds = array<i64: 64, 64>}, {pipeline_mode = #tpu.pipeline_mode<synchronous>, transform_indices = @transform_12, window_bounds = array<i64: 64, 64>}, {pipeline_mode = #tpu.pipeline_mode<synchronous>, transform_indices = @transform_13, window_bounds = array<i64: 1, 64>}, {pipeline_mode = #tpu.pipeline_mode<synchronous>, transform_indices = @transform_14, window_bounds = array<i64: 1, 64>}, {pipeline_mode = #tpu.pipeline_mode<synchronous>, transform_indices = @transform_15, window_bounds = array<i64: 1, 64>}, {pipeline_mode = #tpu.pipeline_mode<synchronous>, transform_indices = @transform_16, window_bounds = array<i64: 64, 64>}, {pipeline_mode = #tpu.pipeline_mode<synchronous>, transform_indices = @transform_17, window_bounds = array<i64: 32, 64>}, {pipeline_mode = #tpu.pipeline_mode<synchronous>, transform_indices = @transform_18, window_bounds = array<i64: 32, 64>}, {pipeline_mode = #tpu.pipeline_mode<synchronous>, transform_indices = @transform_19, window_bounds = array<i64: 64, 64>}, {pipeline_mode = #tpu.pipeline_mode<synchronous>, transform_indices = @transform_20, window_bounds = array<i64: 1, 64>}, {pipeline_mode = #tpu.pipeline_mode<synchronous>, transform_indices = @transform_21, window_bounds = array<i64: 1, 64>}, {pipeline_mode = #tpu.pipeline_mode<synchronous>, transform_indices = @transform_22, window_bounds = array<i64: 1, 64>}, {pipeline_mode = #tpu.pipeline_mode<synchronous>, transform_indices = @transform_23, window_bounds = array<i64: 64, 512>}, {pipeline_mode = #tpu.pipeline_mode<synchronous>, transform_indices = @transform_24, window_bounds = array<i64: 1, 512>}, {pipeline_mode = #tpu.pipeline_mode<synchronous>, transform_indices = @transform_25, window_bounds = array<i64: 256, 64>}, {pipeline_mode = #tpu.pipeline_mode<synchronous>, transform_indices = @transform_26, window_bounds = array<i64: 1, 64>}, {pipeline_mode = #tpu.pipeline_mode<synchronous>, transform_indices = @transform_27, window_bounds = array<i64: 64, 64>}, {pipeline_mode = #tpu.pipeline_mode<synchronous>, transform_indices = @transform_28, window_bounds = array<i64: 1, 64>}, {transform_indices = @transform_29, window_bounds = array<i64: 1, 64, 64>}]} {
    %c0 = arith.constant 0 : index
    %c0_0 = arith.constant 0 : index
    %c0_1 = arith.constant 0 : index
    %0 = vector.load %arg1[%c0, %c0_0, %c0_1] : memref<1x64x64xf32, #tpu.memory_space<vmem>>, vector<1x64x64xf32>
    %1 = vector.shape_cast %0 : vector<1x64x64xf32> to vector<64x64xf32>
    %c0_2 = arith.constant 0 : index
    %c0_3 = arith.constant 0 : index
    %c0_4 = arith.constant 0 : index
    %2 = vector.load %arg2[%c0_2, %c0_3, %c0_4] : memref<1x8x32xf32, #tpu.memory_space<vmem>>, vector<1x8x32xf32>
    %3 = vector.shape_cast %2 : vector<1x8x32xf32> to vector<8x32xf32>
    %c0_5 = arith.constant 0 : index
    %c0_6 = arith.constant 0 : index
    %4 = vector.load %arg3[%c0_5, %c0_6] : memref<64x64xf32, #tpu.memory_space<vmem>>, vector<64x64xf32>
    %cst = arith.constant dense<0.000000e+00> : vector<64x64xf32>
    %5 = tpu.matmul %1, %4, %cst {dimension_numbers = #tpu.dot_dimension_numbers<[1], [0], [0], [1], [0, 0, 1, 1], [], []>} : vector<64x64xf32>, vector<64x64xf32>, vector<64x64xf32> -> vector<64x64xf32>
    %6 = arith.mulf %1, %1 : vector<64x64xf32>
    %cst_7 = arith.constant dense<0.000000e+00> : vector<64x64xf32>
    %7 = tpu.matmul %6, %4, %cst_7 {dimension_numbers = #tpu.dot_dimension_numbers<[1], [0], [0], [1], [0, 0, 1, 1], [], []>} : vector<64x64xf32>, vector<64x64xf32>, vector<64x64xf32> -> vector<64x64xf32>
    %cst_8 = arith.constant dense<0.000000e+00> : vector<64xf32>
    %8 = vector.multi_reduction <add>, %5, %cst_8 [0] : vector<64x64xf32> to vector<64xf32>
    %9 = vector.shape_cast %8 : vector<64xf32> to vector<1x64xf32>
    %cst_9 = arith.constant 6.400000e+01 : f32
    %10 = vector.broadcast %cst_9 : f32 to vector<1x64xf32>
    %11 = arith.divf %9, %10 : vector<1x64xf32>
    %cst_10 = arith.constant dense<0.000000e+00> : vector<64xf32>
    %12 = vector.multi_reduction <add>, %7, %cst_10 [0] : vector<64x64xf32> to vector<64xf32>
    %13 = vector.shape_cast %12 : vector<64xf32> to vector<1x64xf32>
    %cst_11 = arith.constant 6.400000e+01 : f32
    %14 = vector.broadcast %cst_11 : f32 to vector<1x64xf32>
    %15 = arith.divf %13, %14 : vector<1x64xf32>
    %16 = arith.mulf %11, %11 : vector<1x64xf32>
    %17 = arith.subf %15, %16 : vector<1x64xf32>
    %18 = vector.broadcast %11 : vector<1x64xf32> to vector<64x64xf32>
    %19 = arith.subf %1, %18 : vector<64x64xf32>
    %cst_12 = arith.constant 9.99999997E-7 : f32
    %20 = vector.broadcast %cst_12 : f32 to vector<1x64xf32>
    %21 = arith.addf %17, %20 : vector<1x64xf32>
    %22 = math.rsqrt %21 : vector<1x64xf32>
    %23 = vector.broadcast %22 : vector<1x64xf32> to vector<64x64xf32>
    %24 = arith.mulf %19, %23 : vector<64x64xf32>
    %c0_13 = arith.constant 0 : index
    %c0_14 = arith.constant 0 : index
    %25 = vector.load %arg4[%c0_13, %c0_14] : memref<1x64xf32, #tpu.memory_space<vmem>>, vector<1x64xf32>
    %26 = vector.broadcast %25 : vector<1x64xf32> to vector<64x64xf32>
    %27 = arith.mulf %24, %26 : vector<64x64xf32>
    %c0_15 = arith.constant 0 : index
    %c0_16 = arith.constant 0 : index
    %28 = vector.load %arg5[%c0_15, %c0_16] : memref<1x64xf32, #tpu.memory_space<vmem>>, vector<1x64xf32>
    %29 = vector.broadcast %28 : vector<1x64xf32> to vector<64x64xf32>
    %30 = arith.addf %27, %29 : vector<64x64xf32>
    %31 = arith.truncf %30 : vector<64x64xf32> to vector<64x64xbf16>
    %c0_17 = arith.constant 0 : index
    %c0_18 = arith.constant 0 : index
    %32 = vector.load %arg6[%c0_17, %c0_18] : memref<64x64xbf16, #tpu.memory_space<vmem>>, vector<64x64xbf16>
    %cst_19 = arith.constant dense<0.000000e+00> : vector<64x64xf32>
    %33 = tpu.matmul %31, %32, %cst_19 {dimension_numbers = #tpu.dot_dimension_numbers<[1], [0], [0], [1], [0, 0, 1, 1], [], []>} : vector<64x64xbf16>, vector<64x64xbf16>, vector<64x64xf32> -> vector<64x64xf32>
    %c0_20 = arith.constant 0 : index
    %c0_21 = arith.constant 0 : index
    %34 = vector.load %arg7[%c0_20, %c0_21] : memref<1x64xf32, #tpu.memory_space<vmem>>, vector<1x64xf32>
    %35 = vector.broadcast %34 : vector<1x64xf32> to vector<64x64xf32>
    %36 = arith.addf %33, %35 : vector<64x64xf32>
    %c0_22 = arith.constant 0 : index
    %c0_23 = arith.constant 0 : index
    %37 = vector.load %arg8[%c0_22, %c0_23] : memref<1x64xf32, #tpu.memory_space<vmem>>, vector<1x64xf32>
    %c0_24 = arith.constant 0 : index
    %c0_25 = arith.constant 0 : index
    %38 = vector.load %arg9[%c0_24, %c0_25] : memref<1x64xf32, #tpu.memory_space<vmem>>, vector<1x64xf32>
    %cst_26 = arith.constant dense<0.000000e+00> : vector<64xf32>
    %39 = vector.multi_reduction <add>, %36, %cst_26 [1] : vector<64x64xf32> to vector<64xf32>
    %40 = vector.shape_cast %39 : vector<64xf32> to vector<64x1xf32>
    %cst_27 = arith.constant 6.400000e+01 : f32
    %41 = vector.broadcast %cst_27 : f32 to vector<64x1xf32>
    %42 = arith.divf %40, %41 : vector<64x1xf32>
    %43 = vector.broadcast %42 : vector<64x1xf32> to vector<64x64xf32>
    %44 = arith.subf %36, %43 : vector<64x64xf32>
    %45 = arith.mulf %44, %44 : vector<64x64xf32>
    %cst_28 = arith.constant dense<0.000000e+00> : vector<64xf32>
    %46 = vector.multi_reduction <add>, %45, %cst_28 [1] : vector<64x64xf32> to vector<64xf32>
    %47 = vector.shape_cast %46 : vector<64xf32> to vector<64x1xf32>
    %cst_29 = arith.constant 6.400000e+01 : f32
    %48 = vector.broadcast %cst_29 : f32 to vector<64x1xf32>
    %49 = arith.divf %47, %48 : vector<64x1xf32>
    %50 = vector.broadcast %42 : vector<64x1xf32> to vector<64x64xf32>
    %51 = arith.subf %36, %50 : vector<64x64xf32>
    %cst_30 = arith.constant 9.99999974E-6 : f32
    %52 = vector.broadcast %cst_30 : f32 to vector<64x1xf32>
    %53 = arith.addf %49, %52 : vector<64x1xf32>
    %54 = math.rsqrt %53 : vector<64x1xf32>
    %55 = vector.broadcast %54 : vector<64x1xf32> to vector<64x64xf32>
    %56 = arith.mulf %51, %55 : vector<64x64xf32>
    %57 = vector.broadcast %37 : vector<1x64xf32> to vector<64x64xf32>
    %58 = arith.mulf %56, %57 : vector<64x64xf32>
    %59 = vector.broadcast %38 : vector<1x64xf32> to vector<64x64xf32>
    %60 = arith.addf %58, %59 : vector<64x64xf32>
    %c0_31 = arith.constant 0 : index
    %c0_32 = arith.constant 0 : index
    %61 = vector.load %arg10[%c0_31, %c0_32] : memref<64x64xbf16, #tpu.memory_space<vmem>>, vector<64x64xbf16>
    %c0_33 = arith.constant 0 : index
    %c0_34 = arith.constant 0 : index
    %62 = vector.load %arg11[%c0_33, %c0_34] : memref<64x64xbf16, #tpu.memory_space<vmem>>, vector<64x64xbf16>
    %c0_35 = arith.constant 0 : index
    %c0_36 = arith.constant 0 : index
    %63 = vector.load %arg12[%c0_35, %c0_36] : memref<64x64xbf16, #tpu.memory_space<vmem>>, vector<64x64xbf16>
    %c0_37 = arith.constant 0 : index
    %c0_38 = arith.constant 0 : index
    %64 = vector.load %arg13[%c0_37, %c0_38] : memref<64x64xbf16, #tpu.memory_space<vmem>>, vector<64x64xbf16>
    %c0_39 = arith.constant 0 : index
    %c0_40 = arith.constant 0 : index
    %65 = vector.load %arg14[%c0_39, %c0_40] : memref<1x64xf32, #tpu.memory_space<vmem>>, vector<1x64xf32>
    %66 = arith.truncf %60 : vector<64x64xf32> to vector<64x64xbf16>
    %cst_41 = arith.constant dense<0.000000e+00> : vector<64x64xf32>
    %67 = tpu.matmul %66, %61, %cst_41 {dimension_numbers = #tpu.dot_dimension_numbers<[1], [0], [0], [1], [0, 0, 1, 1], [], []>} : vector<64x64xbf16>, vector<64x64xbf16>, vector<64x64xf32> -> vector<64x64xf32>
    %68 = arith.truncf %60 : vector<64x64xf32> to vector<64x64xbf16>
    %cst_42 = arith.constant dense<0.000000e+00> : vector<64x64xf32>
    %69 = tpu.matmul %68, %62, %cst_42 {dimension_numbers = #tpu.dot_dimension_numbers<[1], [0], [0], [1], [0, 0, 1, 1], [], []>} : vector<64x64xbf16>, vector<64x64xbf16>, vector<64x64xf32> -> vector<64x64xf32>
    %70 = arith.truncf %60 : vector<64x64xf32> to vector<64x64xbf16>
    %cst_43 = arith.constant dense<0.000000e+00> : vector<64x64xf32>
    %71 = tpu.matmul %70, %63, %cst_43 {dimension_numbers = #tpu.dot_dimension_numbers<[1], [0], [0], [1], [0, 0, 1, 1], [], []>} : vector<64x64xbf16>, vector<64x64xbf16>, vector<64x64xf32> -> vector<64x64xf32>
    %72 = vector.extract_strided_slice %67 {offsets = [0, 0], sizes = [64, 16], strides = [1, 1]} : vector<64x64xf32> to vector<64x16xf32>
    %cst_44 = arith.constant 2.500000e-01 : f32
    %73 = vector.broadcast %cst_44 : f32 to vector<64x16xf32>
    %74 = arith.mulf %72, %73 : vector<64x16xf32>
    %75 = arith.truncf %74 : vector<64x16xf32> to vector<64x16xbf16>
    %76 = vector.extract_strided_slice %69 {offsets = [0, 0], sizes = [64, 16], strides = [1, 1]} : vector<64x64xf32> to vector<64x16xf32>
    %77 = arith.truncf %76 : vector<64x16xf32> to vector<64x16xbf16>
    %78 = vector.extract_strided_slice %71 {offsets = [0, 0], sizes = [64, 16], strides = [1, 1]} : vector<64x64xf32> to vector<64x16xf32>
    %79 = arith.truncf %78 : vector<64x16xf32> to vector<64x16xbf16>
    %cst_45 = arith.constant dense<0.000000e+00> : vector<64x64xf32>
    %80 = tpu.matmul %75, %77, %cst_45 {dimension_numbers = #tpu.dot_dimension_numbers<[1], [1], [0], [0], [0, 0, 1, 0], [], []>} : vector<64x16xbf16>, vector<64x16xbf16>, vector<64x64xf32> -> vector<64x64xf32>
    %cst_46 = arith.constant dense<0xFF800000> : vector<64xf32>
    %81 = vector.multi_reduction <maximumf>, %80, %cst_46 [1] : vector<64x64xf32> to vector<64xf32>
    %82 = vector.shape_cast %81 : vector<64xf32> to vector<64x1xf32>
    %83 = vector.broadcast %82 : vector<64x1xf32> to vector<64x64xf32>
    %84 = arith.subf %80, %83 : vector<64x64xf32>
    %85 = math.exp %84 : vector<64x64xf32>
    %cst_47 = arith.constant dense<0.000000e+00> : vector<64xf32>
    %86 = vector.multi_reduction <add>, %85, %cst_47 [1] : vector<64x64xf32> to vector<64xf32>
    %87 = vector.shape_cast %86 : vector<64xf32> to vector<64x1xf32>
    %88 = vector.broadcast %87 : vector<64x1xf32> to vector<64x64xf32>
    %89 = arith.divf %85, %88 : vector<64x64xf32>
    %90 = arith.truncf %89 : vector<64x64xf32> to vector<64x64xbf16>
    %cst_48 = arith.constant dense<0.000000e+00> : vector<64x16xf32>
    %91 = tpu.matmul %90, %79, %cst_48 {dimension_numbers = #tpu.dot_dimension_numbers<[1], [0], [0], [1], [0, 0, 1, 1], [], []>} : vector<64x64xbf16>, vector<64x16xbf16>, vector<64x16xf32> -> vector<64x16xf32>
    %c0_49 = arith.constant 0 : index
    %c0_50 = arith.constant 0 : index
    %92 = vector.load %arg31[%c0_49, %c0_50] : memref<64x64xf32, #tpu.memory_space<vmem>>, vector<64x16xf32>
    tpu.vector_store %arg31[%c0_49, %c0_50], %91 {strides = array<i32>} : memref<64x64xf32, #tpu.memory_space<vmem>>, vector<64x16xf32>,
    %93 = vector.extract_strided_slice %67 {offsets = [0, 16], sizes = [64, 16], strides = [1, 1]} : vector<64x64xf32> to vector<64x16xf32>
    %cst_51 = arith.constant 2.500000e-01 : f32
    %94 = vector.broadcast %cst_51 : f32 to vector<64x16xf32>
    %95 = arith.mulf %93, %94 : vector<64x16xf32>
    %96 = arith.truncf %95 : vector<64x16xf32> to vector<64x16xbf16>
    %97 = vector.extract_strided_slice %69 {offsets = [0, 16], sizes = [64, 16], strides = [1, 1]} : vector<64x64xf32> to vector<64x16xf32>
    %98 = arith.truncf %97 : vector<64x16xf32> to vector<64x16xbf16>
    %99 = vector.extract_strided_slice %71 {offsets = [0, 16], sizes = [64, 16], strides = [1, 1]} : vector<64x64xf32> to vector<64x16xf32>
    %100 = arith.truncf %99 : vector<64x16xf32> to vector<64x16xbf16>
    %cst_52 = arith.constant dense<0.000000e+00> : vector<64x64xf32>
    %101 = tpu.matmul %96, %98, %cst_52 {dimension_numbers = #tpu.dot_dimension_numbers<[1], [1], [0], [0], [0, 0, 1, 0], [], []>} : vector<64x16xbf16>, vector<64x16xbf16>, vector<64x64xf32> -> vector<64x64xf32>
    %cst_53 = arith.constant dense<0xFF800000> : vector<64xf32>
    %102 = vector.multi_reduction <maximumf>, %101, %cst_53 [1] : vector<64x64xf32> to vector<64xf32>
    %103 = vector.shape_cast %102 : vector<64xf32> to vector<64x1xf32>
    %104 = vector.broadcast %103 : vector<64x1xf32> to vector<64x64xf32>
    %105 = arith.subf %101, %104 : vector<64x64xf32>
    %106 = math.exp %105 : vector<64x64xf32>
    %cst_54 = arith.constant dense<0.000000e+00> : vector<64xf32>
    %107 = vector.multi_reduction <add>, %106, %cst_54 [1] : vector<64x64xf32> to vector<64xf32>
    %108 = vector.shape_cast %107 : vector<64xf32> to vector<64x1xf32>
    %109 = vector.broadcast %108 : vector<64x1xf32> to vector<64x64xf32>
    %110 = arith.divf %106, %109 : vector<64x64xf32>
    %111 = arith.truncf %110 : vector<64x64xf32> to vector<64x64xbf16>
    %cst_55 = arith.constant dense<0.000000e+00> : vector<64x16xf32>
    %112 = tpu.matmul %111, %100, %cst_55 {dimension_numbers = #tpu.dot_dimension_numbers<[1], [0], [0], [1], [0, 0, 1, 1], [], []>} : vector<64x64xbf16>, vector<64x16xbf16>, vector<64x16xf32> -> vector<64x16xf32>
    %c0_56 = arith.constant 0 : index
    %c16 = arith.constant 16 : index
    %113 = vector.load %arg31[%c0_56, %c16] : memref<64x64xf32, #tpu.memory_space<vmem>>, vector<64x16xf32>
    tpu.vector_store %arg31[%c0_56, %c16], %112 {strides = array<i32>} : memref<64x64xf32, #tpu.memory_space<vmem>>, vector<64x16xf32>,
    %114 = vector.extract_strided_slice %67 {offsets = [0, 32], sizes = [64, 16], strides = [1, 1]} : vector<64x64xf32> to vector<64x16xf32>
    %cst_57 = arith.constant 2.500000e-01 : f32
    %115 = vector.broadcast %cst_57 : f32 to vector<64x16xf32>
    %116 = arith.mulf %114, %115 : vector<64x16xf32>
    %117 = arith.truncf %116 : vector<64x16xf32> to vector<64x16xbf16>
    %118 = vector.extract_strided_slice %69 {offsets = [0, 32], sizes = [64, 16], strides = [1, 1]} : vector<64x64xf32> to vector<64x16xf32>
    %119 = arith.truncf %118 : vector<64x16xf32> to vector<64x16xbf16>
    %120 = vector.extract_strided_slice %71 {offsets = [0, 32], sizes = [64, 16], strides = [1, 1]} : vector<64x64xf32> to vector<64x16xf32>
    %121 = arith.truncf %120 : vector<64x16xf32> to vector<64x16xbf16>
    %cst_58 = arith.constant dense<0.000000e+00> : vector<64x64xf32>
    %122 = tpu.matmul %117, %119, %cst_58 {dimension_numbers = #tpu.dot_dimension_numbers<[1], [1], [0], [0], [0, 0, 1, 0], [], []>} : vector<64x16xbf16>, vector<64x16xbf16>, vector<64x64xf32> -> vector<64x64xf32>
    %cst_59 = arith.constant dense<0xFF800000> : vector<64xf32>
    %123 = vector.multi_reduction <maximumf>, %122, %cst_59 [1] : vector<64x64xf32> to vector<64xf32>
    %124 = vector.shape_cast %123 : vector<64xf32> to vector<64x1xf32>
    %125 = vector.broadcast %124 : vector<64x1xf32> to vector<64x64xf32>
    %126 = arith.subf %122, %125 : vector<64x64xf32>
    %127 = math.exp %126 : vector<64x64xf32>
    %cst_60 = arith.constant dense<0.000000e+00> : vector<64xf32>
    %128 = vector.multi_reduction <add>, %127, %cst_60 [1] : vector<64x64xf32> to vector<64xf32>
    %129 = vector.shape_cast %128 : vector<64xf32> to vector<64x1xf32>
    %130 = vector.broadcast %129 : vector<64x1xf32> to vector<64x64xf32>
    %131 = arith.divf %127, %130 : vector<64x64xf32>
    %132 = arith.truncf %131 : vector<64x64xf32> to vector<64x64xbf16>
    %cst_61 = arith.constant dense<0.000000e+00> : vector<64x16xf32>
    %133 = tpu.matmul %132, %121, %cst_61 {dimension_numbers = #tpu.dot_dimension_numbers<[1], [0], [0], [1], [0, 0, 1, 1], [], []>} : vector<64x64xbf16>, vector<64x16xbf16>, vector<64x16xf32> -> vector<64x16xf32>
    %c0_62 = arith.constant 0 : index
    %c32 = arith.constant 32 : index
    %134 = vector.load %arg31[%c0_62, %c32] : memref<64x64xf32, #tpu.memory_space<vmem>>, vector<64x16xf32>
    tpu.vector_store %arg31[%c0_62, %c32], %133 {strides = array<i32>} : memref<64x64xf32, #tpu.memory_space<vmem>>, vector<64x16xf32>,
    %135 = vector.extract_strided_slice %67 {offsets = [0, 48], sizes = [64, 16], strides = [1, 1]} : vector<64x64xf32> to vector<64x16xf32>
    %cst_63 = arith.constant 2.500000e-01 : f32
    %136 = vector.broadcast %cst_63 : f32 to vector<64x16xf32>
    %137 = arith.mulf %135, %136 : vector<64x16xf32>
    %138 = arith.truncf %137 : vector<64x16xf32> to vector<64x16xbf16>
    %139 = vector.extract_strided_slice %69 {offsets = [0, 48], sizes = [64, 16], strides = [1, 1]} : vector<64x64xf32> to vector<64x16xf32>
    %140 = arith.truncf %139 : vector<64x16xf32> to vector<64x16xbf16>
    %141 = vector.extract_strided_slice %71 {offsets = [0, 48], sizes = [64, 16], strides = [1, 1]} : vector<64x64xf32> to vector<64x16xf32>
    %142 = arith.truncf %141 : vector<64x16xf32> to vector<64x16xbf16>
    %cst_64 = arith.constant dense<0.000000e+00> : vector<64x64xf32>
    %143 = tpu.matmul %138, %140, %cst_64 {dimension_numbers = #tpu.dot_dimension_numbers<[1], [1], [0], [0], [0, 0, 1, 0], [], []>} : vector<64x16xbf16>, vector<64x16xbf16>, vector<64x64xf32> -> vector<64x64xf32>
    %cst_65 = arith.constant dense<0xFF800000> : vector<64xf32>
    %144 = vector.multi_reduction <maximumf>, %143, %cst_65 [1] : vector<64x64xf32> to vector<64xf32>
    %145 = vector.shape_cast %144 : vector<64xf32> to vector<64x1xf32>
    %146 = vector.broadcast %145 : vector<64x1xf32> to vector<64x64xf32>
    %147 = arith.subf %143, %146 : vector<64x64xf32>
    %148 = math.exp %147 : vector<64x64xf32>
    %cst_66 = arith.constant dense<0.000000e+00> : vector<64xf32>
    %149 = vector.multi_reduction <add>, %148, %cst_66 [1] : vector<64x64xf32> to vector<64xf32>
    %150 = vector.shape_cast %149 : vector<64xf32> to vector<64x1xf32>
    %151 = vector.broadcast %150 : vector<64x1xf32> to vector<64x64xf32>
    %152 = arith.divf %148, %151 : vector<64x64xf32>
    %153 = arith.truncf %152 : vector<64x64xf32> to vector<64x64xbf16>
    %cst_67 = arith.constant dense<0.000000e+00> : vector<64x16xf32>
    %154 = tpu.matmul %153, %142, %cst_67 {dimension_numbers = #tpu.dot_dimension_numbers<[1], [0], [0], [1], [0, 0, 1, 1], [], []>} : vector<64x64xbf16>, vector<64x16xbf16>, vector<64x16xf32> -> vector<64x16xf32>
    %c0_68 = arith.constant 0 : index
    %c48 = arith.constant 48 : index
    %155 = vector.load %arg31[%c0_68, %c48] : memref<64x64xf32, #tpu.memory_space<vmem>>, vector<64x16xf32>
    tpu.vector_store %arg31[%c0_68, %c48], %154 {strides = array<i32>} : memref<64x64xf32, #tpu.memory_space<vmem>>, vector<64x16xf32>,
    %c0_69 = arith.constant 0 : index
    %c0_70 = arith.constant 0 : index
    %156 = vector.load %arg31[%c0_69, %c0_70] : memref<64x64xf32, #tpu.memory_space<vmem>>, vector<64x64xf32>
    %157 = arith.truncf %156 : vector<64x64xf32> to vector<64x64xbf16>
    %cst_71 = arith.constant dense<0.000000e+00> : vector<64x64xf32>
    %158 = tpu.matmul %157, %64, %cst_71 {dimension_numbers = #tpu.dot_dimension_numbers<[1], [0], [0], [1], [0, 0, 1, 1], [], []>} : vector<64x64xbf16>, vector<64x64xbf16>, vector<64x64xf32> -> vector<64x64xf32>
    %159 = vector.broadcast %65 : vector<1x64xf32> to vector<64x64xf32>
    %160 = arith.addf %158, %159 : vector<64x64xf32>
    %161 = arith.addf %36, %160 : vector<64x64xf32>
    %c0_72 = arith.constant 0 : index
    %c0_73 = arith.constant 0 : index
    %162 = vector.load %arg15[%c0_72, %c0_73] : memref<1x64xf32, #tpu.memory_space<vmem>>, vector<1x64xf32>
    %c0_74 = arith.constant 0 : index
    %c0_75 = arith.constant 0 : index
    %163 = vector.load %arg16[%c0_74, %c0_75] : memref<1x64xf32, #tpu.memory_space<vmem>>, vector<1x64xf32>
    %cst_76 = arith.constant dense<0.000000e+00> : vector<64xf32>
    %164 = vector.multi_reduction <add>, %161, %cst_76 [1] : vector<64x64xf32> to vector<64xf32>
    %165 = vector.shape_cast %164 : vector<64xf32> to vector<64x1xf32>
    %cst_77 = arith.constant 6.400000e+01 : f32
    %166 = vector.broadcast %cst_77 : f32 to vector<64x1xf32>
    %167 = arith.divf %165, %166 : vector<64x1xf32>
    %168 = vector.broadcast %167 : vector<64x1xf32> to vector<64x64xf32>
    %169 = arith.subf %161, %168 : vector<64x64xf32>
    %170 = arith.mulf %169, %169 : vector<64x64xf32>
    %cst_78 = arith.constant dense<0.000000e+00> : vector<64xf32>
    %171 = vector.multi_reduction <add>, %170, %cst_78 [1] : vector<64x64xf32> to vector<64xf32>
    %172 = vector.shape_cast %171 : vector<64xf32> to vector<64x1xf32>
    %cst_79 = arith.constant 6.400000e+01 : f32
    %173 = vector.broadcast %cst_79 : f32 to vector<64x1xf32>
    %174 = arith.divf %172, %173 : vector<64x1xf32>
    %175 = vector.broadcast %167 : vector<64x1xf32> to vector<64x64xf32>
    %176 = arith.subf %161, %175 : vector<64x64xf32>
    %cst_80 = arith.constant 9.99999974E-6 : f32
    %177 = vector.broadcast %cst_80 : f32 to vector<64x1xf32>
    %178 = arith.addf %174, %177 : vector<64x1xf32>
    %179 = math.rsqrt %178 : vector<64x1xf32>
    %180 = vector.broadcast %179 : vector<64x1xf32> to vector<64x64xf32>
    %181 = arith.mulf %176, %180 : vector<64x64xf32>
    %182 = vector.broadcast %162 : vector<1x64xf32> to vector<64x64xf32>
    %183 = arith.mulf %181, %182 : vector<64x64xf32>
    %184 = vector.broadcast %163 : vector<1x64xf32> to vector<64x64xf32>
    %185 = arith.addf %183, %184 : vector<64x64xf32>
    %c0_81 = arith.constant 0 : index
    %c0_82 = arith.constant 0 : index
    %186 = vector.load %arg17[%c0_81, %c0_82] : memref<64x64xbf16, #tpu.memory_space<vmem>>, vector<64x64xbf16>
    %c0_83 = arith.constant 0 : index
    %c0_84 = arith.constant 0 : index
    %187 = vector.load %arg18[%c0_83, %c0_84] : memref<32x64xbf16, #tpu.memory_space<vmem>>, vector<32x64xbf16>
    %c0_85 = arith.constant 0 : index
    %c0_86 = arith.constant 0 : index
    %188 = vector.load %arg19[%c0_85, %c0_86] : memref<32x64xbf16, #tpu.memory_space<vmem>>, vector<32x64xbf16>
    %c0_87 = arith.constant 0 : index
    %c0_88 = arith.constant 0 : index
    %189 = vector.load %arg20[%c0_87, %c0_88] : memref<64x64xbf16, #tpu.memory_space<vmem>>, vector<64x64xbf16>
    %c0_89 = arith.constant 0 : index
    %c0_90 = arith.constant 0 : index
    %190 = vector.load %arg21[%c0_89, %c0_90] : memref<1x64xf32, #tpu.memory_space<vmem>>, vector<1x64xf32>
    %191 = arith.truncf %185 : vector<64x64xf32> to vector<64x64xbf16>
    %cst_91 = arith.constant dense<0.000000e+00> : vector<64x64xf32>
    %192 = tpu.matmul %191, %186, %cst_91 {dimension_numbers = #tpu.dot_dimension_numbers<[1], [0], [0], [1], [0, 0, 1, 1], [], []>} : vector<64x64xbf16>, vector<64x64xbf16>, vector<64x64xf32> -> vector<64x64xf32>
    %193 = arith.truncf %3 : vector<8x32xf32> to vector<8x32xbf16>
    %cst_92 = arith.constant dense<0.000000e+00> : vector<8x64xf32>
    %194 = tpu.matmul %193, %187, %cst_92 {dimension_numbers = #tpu.dot_dimension_numbers<[1], [0], [0], [1], [0, 0, 1, 1], [], []>} : vector<8x32xbf16>, vector<32x64xbf16>, vector<8x64xf32> -> vector<8x64xf32>
    %195 = arith.truncf %3 : vector<8x32xf32> to vector<8x32xbf16>
    %cst_93 = arith.constant dense<0.000000e+00> : vector<8x64xf32>
    %196 = tpu.matmul %195, %188, %cst_93 {dimension_numbers = #tpu.dot_dimension_numbers<[1], [0], [0], [1], [0, 0, 1, 1], [], []>} : vector<8x32xbf16>, vector<32x64xbf16>, vector<8x64xf32> -> vector<8x64xf32>
    %197 = vector.extract_strided_slice %192 {offsets = [0, 0], sizes = [64, 16], strides = [1, 1]} : vector<64x64xf32> to vector<64x16xf32>
    %cst_94 = arith.constant 2.500000e-01 : f32
    %198 = vector.broadcast %cst_94 : f32 to vector<64x16xf32>
    %199 = arith.mulf %197, %198 : vector<64x16xf32>
    %200 = arith.truncf %199 : vector<64x16xf32> to vector<64x16xbf16>
    %201 = vector.extract_strided_slice %194 {offsets = [0, 0], sizes = [8, 16], strides = [1, 1]} : vector<8x64xf32> to vector<8x16xf32>
    %202 = arith.truncf %201 : vector<8x16xf32> to vector<8x16xbf16>
    %203 = vector.extract_strided_slice %196 {offsets = [0, 0], sizes = [8, 16], strides = [1, 1]} : vector<8x64xf32> to vector<8x16xf32>
    %204 = arith.truncf %203 : vector<8x16xf32> to vector<8x16xbf16>
    %cst_95 = arith.constant dense<0.000000e+00> : vector<64x8xf32>
    %205 = tpu.matmul %200, %202, %cst_95 {dimension_numbers = #tpu.dot_dimension_numbers<[1], [1], [0], [0], [0, 0, 1, 0], [], []>} : vector<64x16xbf16>, vector<8x16xbf16>, vector<64x8xf32> -> vector<64x8xf32>
    %cst_96 = arith.constant dense<0xFF800000> : vector<64xf32>
    %206 = vector.multi_reduction <maximumf>, %205, %cst_96 [1] : vector<64x8xf32> to vector<64xf32>
    %207 = vector.shape_cast %206 : vector<64xf32> to vector<64x1xf32>
    %208 = vector.broadcast %207 : vector<64x1xf32> to vector<64x8xf32>
    %209 = arith.subf %205, %208 : vector<64x8xf32>
    %210 = math.exp %209 : vector<64x8xf32>
    %cst_97 = arith.constant dense<0.000000e+00> : vector<64xf32>
    %211 = vector.multi_reduction <add>, %210, %cst_97 [1] : vector<64x8xf32> to vector<64xf32>
    %212 = vector.shape_cast %211 : vector<64xf32> to vector<64x1xf32>
    %213 = vector.broadcast %212 : vector<64x1xf32> to vector<64x8xf32>
    %214 = arith.divf %210, %213 : vector<64x8xf32>
    %215 = arith.truncf %214 : vector<64x8xf32> to vector<64x8xbf16>
    %cst_98 = arith.constant dense<0.000000e+00> : vector<64x16xf32>
    %216 = tpu.matmul %215, %204, %cst_98 {dimension_numbers = #tpu.dot_dimension_numbers<[1], [0], [0], [1], [0, 0, 1, 1], [], []>} : vector<64x8xbf16>, vector<8x16xbf16>, vector<64x16xf32> -> vector<64x16xf32>
    %c0_99 = arith.constant 0 : index
    %c0_100 = arith.constant 0 : index
    %217 = vector.load %arg31[%c0_99, %c0_100] : memref<64x64xf32, #tpu.memory_space<vmem>>, vector<64x16xf32>
    tpu.vector_store %arg31[%c0_99, %c0_100], %216 {strides = array<i32>} : memref<64x64xf32, #tpu.memory_space<vmem>>, vector<64x16xf32>,
    %218 = vector.extract_strided_slice %192 {offsets = [0, 16], sizes = [64, 16], strides = [1, 1]} : vector<64x64xf32> to vector<64x16xf32>
    %cst_101 = arith.constant 2.500000e-01 : f32
    %219 = vector.broadcast %cst_101 : f32 to vector<64x16xf32>
    %220 = arith.mulf %218, %219 : vector<64x16xf32>
    %221 = arith.truncf %220 : vector<64x16xf32> to vector<64x16xbf16>
    %222 = vector.extract_strided_slice %194 {offsets = [0, 16], sizes = [8, 16], strides = [1, 1]} : vector<8x64xf32> to vector<8x16xf32>
    %223 = arith.truncf %222 : vector<8x16xf32> to vector<8x16xbf16>
    %224 = vector.extract_strided_slice %196 {offsets = [0, 16], sizes = [8, 16], strides = [1, 1]} : vector<8x64xf32> to vector<8x16xf32>
    %225 = arith.truncf %224 : vector<8x16xf32> to vector<8x16xbf16>
    %cst_102 = arith.constant dense<0.000000e+00> : vector<64x8xf32>
    %226 = tpu.matmul %221, %223, %cst_102 {dimension_numbers = #tpu.dot_dimension_numbers<[1], [1], [0], [0], [0, 0, 1, 0], [], []>} : vector<64x16xbf16>, vector<8x16xbf16>, vector<64x8xf32> -> vector<64x8xf32>
    %cst_103 = arith.constant dense<0xFF800000> : vector<64xf32>
    %227 = vector.multi_reduction <maximumf>, %226, %cst_103 [1] : vector<64x8xf32> to vector<64xf32>
    %228 = vector.shape_cast %227 : vector<64xf32> to vector<64x1xf32>
    %229 = vector.broadcast %228 : vector<64x1xf32> to vector<64x8xf32>
    %230 = arith.subf %226, %229 : vector<64x8xf32>
    %231 = math.exp %230 : vector<64x8xf32>
    %cst_104 = arith.constant dense<0.000000e+00> : vector<64xf32>
    %232 = vector.multi_reduction <add>, %231, %cst_104 [1] : vector<64x8xf32> to vector<64xf32>
    %233 = vector.shape_cast %232 : vector<64xf32> to vector<64x1xf32>
    %234 = vector.broadcast %233 : vector<64x1xf32> to vector<64x8xf32>
    %235 = arith.divf %231, %234 : vector<64x8xf32>
    %236 = arith.truncf %235 : vector<64x8xf32> to vector<64x8xbf16>
    %cst_105 = arith.constant dense<0.000000e+00> : vector<64x16xf32>
    %237 = tpu.matmul %236, %225, %cst_105 {dimension_numbers = #tpu.dot_dimension_numbers<[1], [0], [0], [1], [0, 0, 1, 1], [], []>} : vector<64x8xbf16>, vector<8x16xbf16>, vector<64x16xf32> -> vector<64x16xf32>
    %c0_106 = arith.constant 0 : index
    %c16_107 = arith.constant 16 : index
    %238 = vector.load %arg31[%c0_106, %c16_107] : memref<64x64xf32, #tpu.memory_space<vmem>>, vector<64x16xf32>
    tpu.vector_store %arg31[%c0_106, %c16_107], %237 {strides = array<i32>} : memref<64x64xf32, #tpu.memory_space<vmem>>, vector<64x16xf32>,
    %239 = vector.extract_strided_slice %192 {offsets = [0, 32], sizes = [64, 16], strides = [1, 1]} : vector<64x64xf32> to vector<64x16xf32>
    %cst_108 = arith.constant 2.500000e-01 : f32
    %240 = vector.broadcast %cst_108 : f32 to vector<64x16xf32>
    %241 = arith.mulf %239, %240 : vector<64x16xf32>
    %242 = arith.truncf %241 : vector<64x16xf32> to vector<64x16xbf16>
    %243 = vector.extract_strided_slice %194 {offsets = [0, 32], sizes = [8, 16], strides = [1, 1]} : vector<8x64xf32> to vector<8x16xf32>
    %244 = arith.truncf %243 : vector<8x16xf32> to vector<8x16xbf16>
    %245 = vector.extract_strided_slice %196 {offsets = [0, 32], sizes = [8, 16], strides = [1, 1]} : vector<8x64xf32> to vector<8x16xf32>
    %246 = arith.truncf %245 : vector<8x16xf32> to vector<8x16xbf16>
    %cst_109 = arith.constant dense<0.000000e+00> : vector<64x8xf32>
    %247 = tpu.matmul %242, %244, %cst_109 {dimension_numbers = #tpu.dot_dimension_numbers<[1], [1], [0], [0], [0, 0, 1, 0], [], []>} : vector<64x16xbf16>, vector<8x16xbf16>, vector<64x8xf32> -> vector<64x8xf32>
    %cst_110 = arith.constant dense<0xFF800000> : vector<64xf32>
    %248 = vector.multi_reduction <maximumf>, %247, %cst_110 [1] : vector<64x8xf32> to vector<64xf32>
    %249 = vector.shape_cast %248 : vector<64xf32> to vector<64x1xf32>
    %250 = vector.broadcast %249 : vector<64x1xf32> to vector<64x8xf32>
    %251 = arith.subf %247, %250 : vector<64x8xf32>
    %252 = math.exp %251 : vector<64x8xf32>
    %cst_111 = arith.constant dense<0.000000e+00> : vector<64xf32>
    %253 = vector.multi_reduction <add>, %252, %cst_111 [1] : vector<64x8xf32> to vector<64xf32>
    %254 = vector.shape_cast %253 : vector<64xf32> to vector<64x1xf32>
    %255 = vector.broadcast %254 : vector<64x1xf32> to vector<64x8xf32>
    %256 = arith.divf %252, %255 : vector<64x8xf32>
    %257 = arith.truncf %256 : vector<64x8xf32> to vector<64x8xbf16>
    %cst_112 = arith.constant dense<0.000000e+00> : vector<64x16xf32>
    %258 = tpu.matmul %257, %246, %cst_112 {dimension_numbers = #tpu.dot_dimension_numbers<[1], [0], [0], [1], [0, 0, 1, 1], [], []>} : vector<64x8xbf16>, vector<8x16xbf16>, vector<64x16xf32> -> vector<64x16xf32>
    %c0_113 = arith.constant 0 : index
    %c32_114 = arith.constant 32 : index
    %259 = vector.load %arg31[%c0_113, %c32_114] : memref<64x64xf32, #tpu.memory_space<vmem>>, vector<64x16xf32>
    tpu.vector_store %arg31[%c0_113, %c32_114], %258 {strides = array<i32>} : memref<64x64xf32, #tpu.memory_space<vmem>>, vector<64x16xf32>,
    %260 = vector.extract_strided_slice %192 {offsets = [0, 48], sizes = [64, 16], strides = [1, 1]} : vector<64x64xf32> to vector<64x16xf32>
    %cst_115 = arith.constant 2.500000e-01 : f32
    %261 = vector.broadcast %cst_115 : f32 to vector<64x16xf32>
    %262 = arith.mulf %260, %261 : vector<64x16xf32>
    %263 = arith.truncf %262 : vector<64x16xf32> to vector<64x16xbf16>
    %264 = vector.extract_strided_slice %194 {offsets = [0, 48], sizes = [8, 16], strides = [1, 1]} : vector<8x64xf32> to vector<8x16xf32>
    %265 = arith.truncf %264 : vector<8x16xf32> to vector<8x16xbf16>
    %266 = vector.extract_strided_slice %196 {offsets = [0, 48], sizes = [8, 16], strides = [1, 1]} : vector<8x64xf32> to vector<8x16xf32>
    %267 = arith.truncf %266 : vector<8x16xf32> to vector<8x16xbf16>
    %cst_116 = arith.constant dense<0.000000e+00> : vector<64x8xf32>
    %268 = tpu.matmul %263, %265, %cst_116 {dimension_numbers = #tpu.dot_dimension_numbers<[1], [1], [0], [0], [0, 0, 1, 0], [], []>} : vector<64x16xbf16>, vector<8x16xbf16>, vector<64x8xf32> -> vector<64x8xf32>
    %cst_117 = arith.constant dense<0xFF800000> : vector<64xf32>
    %269 = vector.multi_reduction <maximumf>, %268, %cst_117 [1] : vector<64x8xf32> to vector<64xf32>
    %270 = vector.shape_cast %269 : vector<64xf32> to vector<64x1xf32>
    %271 = vector.broadcast %270 : vector<64x1xf32> to vector<64x8xf32>
    %272 = arith.subf %268, %271 : vector<64x8xf32>
    %273 = math.exp %272 : vector<64x8xf32>
    %cst_118 = arith.constant dense<0.000000e+00> : vector<64xf32>
    %274 = vector.multi_reduction <add>, %273, %cst_118 [1] : vector<64x8xf32> to vector<64xf32>
    %275 = vector.shape_cast %274 : vector<64xf32> to vector<64x1xf32>
    %276 = vector.broadcast %275 : vector<64x1xf32> to vector<64x8xf32>
    %277 = arith.divf %273, %276 : vector<64x8xf32>
    %278 = arith.truncf %277 : vector<64x8xf32> to vector<64x8xbf16>
    %cst_119 = arith.constant dense<0.000000e+00> : vector<64x16xf32>
    %279 = tpu.matmul %278, %267, %cst_119 {dimension_numbers = #tpu.dot_dimension_numbers<[1], [0], [0], [1], [0, 0, 1, 1], [], []>} : vector<64x8xbf16>, vector<8x16xbf16>, vector<64x16xf32> -> vector<64x16xf32>
    %c0_120 = arith.constant 0 : index
    %c48_121 = arith.constant 48 : index
    %280 = vector.load %arg31[%c0_120, %c48_121] : memref<64x64xf32, #tpu.memory_space<vmem>>, vector<64x16xf32>
    tpu.vector_store %arg31[%c0_120, %c48_121], %279 {strides = array<i32>} : memref<64x64xf32, #tpu.memory_space<vmem>>, vector<64x16xf32>,
    %c0_122 = arith.constant 0 : index
    %c0_123 = arith.constant 0 : index
    %281 = vector.load %arg31[%c0_122, %c0_123] : memref<64x64xf32, #tpu.memory_space<vmem>>, vector<64x64xf32>
    %282 = arith.truncf %281 : vector<64x64xf32> to vector<64x64xbf16>
    %cst_124 = arith.constant dense<0.000000e+00> : vector<64x64xf32>
    %283 = tpu.matmul %282, %189, %cst_124 {dimension_numbers = #tpu.dot_dimension_numbers<[1], [0], [0], [1], [0, 0, 1, 1], [], []>} : vector<64x64xbf16>, vector<64x64xbf16>, vector<64x64xf32> -> vector<64x64xf32>
    %284 = vector.broadcast %190 : vector<1x64xf32> to vector<64x64xf32>
    %285 = arith.addf %283, %284 : vector<64x64xf32>
    %286 = arith.addf %161, %285 : vector<64x64xf32>
    %c0_125 = arith.constant 0 : index
    %c0_126 = arith.constant 0 : index
    %287 = vector.load %arg22[%c0_125, %c0_126] : memref<1x64xf32, #tpu.memory_space<vmem>>, vector<1x64xf32>
    %c0_127 = arith.constant 0 : index
    %c0_128 = arith.constant 0 : index
    %288 = vector.load %arg23[%c0_127, %c0_128] : memref<1x64xf32, #tpu.memory_space<vmem>>, vector<1x64xf32>
    %cst_129 = arith.constant dense<0.000000e+00> : vector<64xf32>
    %289 = vector.multi_reduction <add>, %286, %cst_129 [1] : vector<64x64xf32> to vector<64xf32>
    %290 = vector.shape_cast %289 : vector<64xf32> to vector<64x1xf32>
    %cst_130 = arith.constant 6.400000e+01 : f32
    %291 = vector.broadcast %cst_130 : f32 to vector<64x1xf32>
    %292 = arith.divf %290, %291 : vector<64x1xf32>
    %293 = vector.broadcast %292 : vector<64x1xf32> to vector<64x64xf32>
    %294 = arith.subf %286, %293 : vector<64x64xf32>
    %295 = arith.mulf %294, %294 : vector<64x64xf32>
    %cst_131 = arith.constant dense<0.000000e+00> : vector<64xf32>
    %296 = vector.multi_reduction <add>, %295, %cst_131 [1] : vector<64x64xf32> to vector<64xf32>
    %297 = vector.shape_cast %296 : vector<64xf32> to vector<64x1xf32>
    %cst_132 = arith.constant 6.400000e+01 : f32
    %298 = vector.broadcast %cst_132 : f32 to vector<64x1xf32>
    %299 = arith.divf %297, %298 : vector<64x1xf32>
    %300 = vector.broadcast %292 : vector<64x1xf32> to vector<64x64xf32>
    %301 = arith.subf %286, %300 : vector<64x64xf32>
    %cst_133 = arith.constant 9.99999974E-6 : f32
    %302 = vector.broadcast %cst_133 : f32 to vector<64x1xf32>
    %303 = arith.addf %299, %302 : vector<64x1xf32>
    %304 = math.rsqrt %303 : vector<64x1xf32>
    %305 = vector.broadcast %304 : vector<64x1xf32> to vector<64x64xf32>
    %306 = arith.mulf %301, %305 : vector<64x64xf32>
    %307 = vector.broadcast %287 : vector<1x64xf32> to vector<64x64xf32>
    %308 = arith.mulf %306, %307 : vector<64x64xf32>
    %309 = vector.broadcast %288 : vector<1x64xf32> to vector<64x64xf32>
    %310 = arith.addf %308, %309 : vector<64x64xf32>
    %311 = arith.truncf %310 : vector<64x64xf32> to vector<64x64xbf16>
    %c0_134 = arith.constant 0 : index
    %c0_135 = arith.constant 0 : index
    %312 = vector.load %arg24[%c0_134, %c0_135] : memref<64x512xbf16, #tpu.memory_space<vmem>>, vector<64x512xbf16>
    %cst_136 = arith.constant dense<0.000000e+00> : vector<64x512xf32>
    %313 = tpu.matmul %311, %312, %cst_136 {dimension_numbers = #tpu.dot_dimension_numbers<[1], [0], [0], [1], [0, 0, 1, 1], [], []>} : vector<64x64xbf16>, vector<64x512xbf16>, vector<64x512xf32> -> vector<64x512xf32>
    %c0_137 = arith.constant 0 : index
    %c0_138 = arith.constant 0 : index
    %314 = vector.load %arg25[%c0_137, %c0_138] : memref<1x512xf32, #tpu.memory_space<vmem>>, vector<1x512xf32>
    %315 = vector.broadcast %314 : vector<1x512xf32> to vector<64x512xf32>
    %316 = arith.addf %313, %315 : vector<64x512xf32>
    %317 = vector.extract_strided_slice %316 {offsets = [0, 0], sizes = [64, 256], strides = [1, 1]} : vector<64x512xf32> to vector<64x256xf32>
    %318 = vector.extract_strided_slice %316 {offsets = [0, 256], sizes = [64, 256], strides = [1, 1]} : vector<64x512xf32> to vector<64x256xf32>
    %cst_139 = arith.constant 5.000000e-01 : f32
    %319 = vector.broadcast %cst_139 : f32 to vector<64x256xf32>
    %320 = arith.mulf %319, %318 : vector<64x256xf32>
    %cst_140 = arith.constant 4.471500e-02 : f32
    %321 = vector.broadcast %cst_140 : f32 to vector<64x256xf32>
    %322 = arith.mulf %321, %318 : vector<64x256xf32>
    %323 = arith.mulf %322, %318 : vector<64x256xf32>
    %324 = arith.mulf %323, %318 : vector<64x256xf32>
    %325 = arith.addf %318, %324 : vector<64x256xf32>
    %cst_141 = arith.constant 0.797884583 : f32
    %326 = vector.broadcast %cst_141 : f32 to vector<64x256xf32>
    %327 = arith.mulf %326, %325 : vector<64x256xf32>
    %328 = math.tanh %327 : vector<64x256xf32>
    %cst_142 = arith.constant 1.000000e+00 : f32
    %329 = vector.broadcast %cst_142 : f32 to vector<64x256xf32>
    %330 = arith.addf %329, %328 : vector<64x256xf32>
    %331 = arith.mulf %320, %330 : vector<64x256xf32>
    %332 = arith.mulf %317, %331 : vector<64x256xf32>
    %333 = arith.truncf %332 : vector<64x256xf32> to vector<64x256xbf16>
    %c0_143 = arith.constant 0 : index
    %c0_144 = arith.constant 0 : index
    %334 = vector.load %arg26[%c0_143, %c0_144] : memref<256x64xbf16, #tpu.memory_space<vmem>>, vector<256x64xbf16>
    %cst_145 = arith.constant dense<0.000000e+00> : vector<64x64xf32>
    %335 = tpu.matmul %333, %334, %cst_145 {dimension_numbers = #tpu.dot_dimension_numbers<[1], [0], [0], [1], [0, 0, 1, 1], [], []>} : vector<64x256xbf16>, vector<256x64xbf16>, vector<64x64xf32> -> vector<64x64xf32>
    %c0_146 = arith.constant 0 : index
    %c0_147 = arith.constant 0 : index
    %336 = vector.load %arg27[%c0_146, %c0_147] : memref<1x64xf32, #tpu.memory_space<vmem>>, vector<1x64xf32>
    %337 = vector.broadcast %336 : vector<1x64xf32> to vector<64x64xf32>
    %338 = arith.addf %335, %337 : vector<64x64xf32>
    %339 = arith.addf %286, %338 : vector<64x64xf32>
    %340 = arith.truncf %339 : vector<64x64xf32> to vector<64x64xbf16>
    %c0_148 = arith.constant 0 : index
    %c0_149 = arith.constant 0 : index
    %341 = vector.load %arg28[%c0_148, %c0_149] : memref<64x64xbf16, #tpu.memory_space<vmem>>, vector<64x64xbf16>
    %cst_150 = arith.constant dense<0.000000e+00> : vector<64x64xf32>
    %342 = tpu.matmul %340, %341, %cst_150 {dimension_numbers = #tpu.dot_dimension_numbers<[1], [0], [0], [1], [0, 0, 1, 1], [], []>} : vector<64x64xbf16>, vector<64x64xbf16>, vector<64x64xf32> -> vector<64x64xf32>
    %c0_151 = arith.constant 0 : index
    %c0_152 = arith.constant 0 : index
    %343 = vector.load %arg29[%c0_151, %c0_152] : memref<1x64xf32, #tpu.memory_space<vmem>>, vector<1x64xf32>
    %344 = vector.broadcast %343 : vector<1x64xf32> to vector<64x64xf32>
    %345 = arith.addf %342, %344 : vector<64x64xf32>
    %346 = arith.addf %345, %1 : vector<64x64xf32>
    %c0_153 = arith.constant 0 : index
    %c0_154 = arith.constant 0 : index
    %c0_155 = arith.constant 0 : index
    %347 = vector.load %arg30[%c0_153, %c0_154, %c0_155] : memref<1x64x64xf32, #tpu.memory_space<vmem>>, vector<1x64x64xf32>
    %348 = vector.shape_cast %347 : vector<1x64x64xf32> to vector<64x64xf32>
    %349 = vector.shape_cast %346 : vector<64x64xf32> to vector<1x64x64xf32>
    tpu.vector_store %arg30[%c0_153, %c0_154, %c0_155], %349 {strides = array<i32>} : memref<1x64x64xf32, #tpu.memory_space<vmem>>, vector<1x64x64xf32>,
    return
  }
  func.func @transform_0(%arg0: i32) -> (i32, i32, i32) {
    %c0_i32 = arith.constant 0 : i32
    %c0_i32_0 = arith.constant 0 : i32
    %c0_i32_1 = arith.constant 0 : i32
    return %arg0, %c0_i32, %c0_i32_0 : i32, i32, i32
  }
  func.func @transform_1(%arg0: i32) -> (i32, i32, i32) {
    %c0_i32 = arith.constant 0 : i32
    %c0_i32_0 = arith.constant 0 : i32
    %c0_i32_1 = arith.constant 0 : i32
    return %arg0, %c0_i32, %c0_i32_0 : i32, i32, i32
  }
  func.func @transform_2(%arg0: i32) -> (i32, i32) {
    %c0_i32 = arith.constant 0 : i32
    %c0_i32_0 = arith.constant 0 : i32
    %c0_i32_1 = arith.constant 0 : i32
    return %c0_i32, %c0_i32_0 : i32, i32
  }
  func.func @transform_3(%arg0: i32) -> (i32, i32) {
    %c0_i32 = arith.constant 0 : i32
    %c0_i32_0 = arith.constant 0 : i32
    %c0_i32_1 = arith.constant 0 : i32
    return %c0_i32, %c0_i32_0 : i32, i32
  }
  func.func @transform_4(%arg0: i32) -> (i32, i32) {
    %c0_i32 = arith.constant 0 : i32
    %c0_i32_0 = arith.constant 0 : i32
    %c0_i32_1 = arith.constant 0 : i32
    return %c0_i32, %c0_i32_0 : i32, i32
  }
  func.func @transform_5(%arg0: i32) -> (i32, i32) {
    %c0_i32 = arith.constant 0 : i32
    %c0_i32_0 = arith.constant 0 : i32
    %c0_i32_1 = arith.constant 0 : i32
    return %c0_i32, %c0_i32_0 : i32, i32
  }
  func.func @transform_6(%arg0: i32) -> (i32, i32) {
    %c0_i32 = arith.constant 0 : i32
    %c0_i32_0 = arith.constant 0 : i32
    %c0_i32_1 = arith.constant 0 : i32
    return %c0_i32, %c0_i32_0 : i32, i32
  }
  func.func @transform_7(%arg0: i32) -> (i32, i32) {
    %c0_i32 = arith.constant 0 : i32
    %c0_i32_0 = arith.constant 0 : i32
    %c0_i32_1 = arith.constant 0 : i32
    return %c0_i32, %c0_i32_0 : i32, i32
  }
  func.func @transform_8(%arg0: i32) -> (i32, i32) {
    %c0_i32 = arith.constant 0 : i32
    %c0_i32_0 = arith.constant 0 : i32
    %c0_i32_1 = arith.constant 0 : i32
    return %c0_i32, %c0_i32_0 : i32, i32
  }
  func.func @transform_9(%arg0: i32) -> (i32, i32) {
    %c0_i32 = arith.constant 0 : i32
    %c0_i32_0 = arith.constant 0 : i32
    %c0_i32_1 = arith.constant 0 : i32
    return %c0_i32, %c0_i32_0 : i32, i32
  }
  func.func @transform_10(%arg0: i32) -> (i32, i32) {
    %c0_i32 = arith.constant 0 : i32
    %c0_i32_0 = arith.constant 0 : i32
    %c0_i32_1 = arith.constant 0 : i32
    return %c0_i32, %c0_i32_0 : i32, i32
  }
  func.func @transform_11(%arg0: i32) -> (i32, i32) {
    %c0_i32 = arith.constant 0 : i32
    %c0_i32_0 = arith.constant 0 : i32
    %c0_i32_1 = arith.constant 0 : i32
    return %c0_i32, %c0_i32_0 : i32, i32
  }
  func.func @transform_12(%arg0: i32) -> (i32, i32) {
    %c0_i32 = arith.constant 0 : i32
    %c0_i32_0 = arith.constant 0 : i32
    %c0_i32_1 = arith.constant 0 : i32
    return %c0_i32, %c0_i32_0 : i32, i32
  }
  func.func @transform_13(%arg0: i32) -> (i32, i32) {
    %c0_i32 = arith.constant 0 : i32
    %c0_i32_0 = arith.constant 0 : i32
    %c0_i32_1 = arith.constant 0 : i32
    return %c0_i32, %c0_i32_0 : i32, i32
  }
  func.func @transform_14(%arg0: i32) -> (i32, i32) {
    %c0_i32 = arith.constant 0 : i32
    %c0_i32_0 = arith.constant 0 : i32
    %c0_i32_1 = arith.constant 0 : i32
    return %c0_i32, %c0_i32_0 : i32, i32
  }
  func.func @transform_15(%arg0: i32) -> (i32, i32) {
    %c0_i32 = arith.constant 0 : i32
    %c0_i32_0 = arith.constant 0 : i32
    %c0_i32_1 = arith.constant 0 : i32
    return %c0_i32, %c0_i32_0 : i32, i32
  }
  func.func @transform_16(%arg0: i32) -> (i32, i32) {
    %c0_i32 = arith.constant 0 : i32
    %c0_i32_0 = arith.constant 0 : i32
    %c0_i32_1 = arith.constant 0 : i32
    return %c0_i32, %c0_i32_0 : i32, i32
  }
  func.func @transform_17(%arg0: i32) -> (i32, i32) {
    %c0_i32 = arith.constant 0 : i32
    %c0_i32_0 = arith.constant 0 : i32
    %c0_i32_1 = arith.constant 0 : i32
    return %c0_i32, %c0_i32_0 : i32, i32
  }
  func.func @transform_18(%arg0: i32) -> (i32, i32) {
    %c0_i32 = arith.constant 0 : i32
    %c0_i32_0 = arith.constant 0 : i32
    %c0_i32_1 = arith.constant 0 : i32
    return %c0_i32, %c0_i32_0 : i32, i32
  }
  func.func @transform_19(%arg0: i32) -> (i32, i32) {
    %c0_i32 = arith.constant 0 : i32
    %c0_i32_0 = arith.constant 0 : i32
    %c0_i32_1 = arith.constant 0 : i32
    return %c0_i32, %c0_i32_0 : i32, i32
  }
  func.func @transform_20(%arg0: i32) -> (i32, i32) {
    %c0_i32 = arith.constant 0 : i32
    %c0_i32_0 = arith.constant 0 : i32
    %c0_i32_1 = arith.constant 0 : i32
    return %c0_i32, %c0_i32_0 : i32, i32
  }
  func.func @transform_21(%arg0: i32) -> (i32, i32) {
    %c0_i32 = arith.constant 0 : i32
    %c0_i32_0 = arith.constant 0 : i32
    %c0_i32_1 = arith.constant 0 : i32
    return %c0_i32, %c0_i32_0 : i32, i32
  }
  func.func @transform_22(%arg0: i32) -> (i32, i32) {
    %c0_i32 = arith.constant 0 : i32
    %c0_i32_0 = arith.constant 0 : i32
    %c0_i32_1 = arith.constant 0 : i32
    return %c0_i32, %c0_i32_0 : i32, i32
  }
  func.func @transform_23(%arg0: i32) -> (i32, i32) {
    %c0_i32 = arith.constant 0 : i32
    %c0_i32_0 = arith.constant 0 : i32
    %c0_i32_1 = arith.constant 0 : i32
    return %c0_i32, %c0_i32_0 : i32, i32
  }
  func.func @transform_24(%arg0: i32) -> (i32, i32) {
    %c0_i32 = arith.constant 0 : i32
    %c0_i32_0 = arith.constant 0 : i32
    %c0_i32_1 = arith.constant 0 : i32
    return %c0_i32, %c0_i32_0 : i32, i32
  }
  func.func @transform_25(%arg0: i32) -> (i32, i32) {
    %c0_i32 = arith.constant 0 : i32
    %c0_i32_0 = arith.constant 0 : i32
    %c0_i32_1 = arith.constant 0 : i32
    return %c0_i32, %c0_i32_0 : i32, i32
  }
  func.func @transform_26(%arg0: i32) -> (i32, i32) {
    %c0_i32 = arith.constant 0 : i32
    %c0_i32_0 = arith.constant 0 : i32
    %c0_i32_1 = arith.constant 0 : i32
    return %c0_i32, %c0_i32_0 : i32, i32
  }
  func.func @transform_27(%arg0: i32) -> (i32, i32) {
    %c0_i32 = arith.constant 0 : i32
    %c0_i32_0 = arith.constant 0 : i32
    %c0_i32_1 = arith.constant 0 : i32
    return %c0_i32, %c0_i32_0 : i32, i32
  }
  func.func @transform_28(%arg0: i32) -> (i32, i32) {
    %c0_i32 = arith.constant 0 : i32
    %c0_i32_0 = arith.constant 0 : i32
    %c0_i32_1 = arith.constant 0 : i32
    return %c0_i32, %c0_i32_0 : i32, i32
  }
  func.func @transform_29(%arg0: i32) -> (i32, i32, i32) {
    %c0_i32 = arith.constant 0 : i32
    %c0_i32_0 = arith.constant 0 : i32
    %c0_i32_1 = arith.constant 0 : i32
    return %arg0, %c0_i32, %c0_i32_0 : i32, i32, i32
  }
}

</mosaic_0001>

<llo_original>
// kernel: tpu_custom_call.1
$region0: #{tpu_custom_call.1}
  #allocation0 [shape = 'u32[]', space=smem, size = 0x4, offset = 0x4, fixed_abs, tag = 'smem constant byte address 0x4 - core index']
  #allocation1 [shape = 'u32[144,128]{1,0:T(1,128)}', space=vmem, size = 0x12000, scoped, tag = 'internal scratch']
  #allocation2 [shape = 'f32[64,64]{1,0:T(8,128)}', space=vmem, size = 0x8000, scoped, tag = 'scratch operand']
  %s0 = inlined_call_operand.smem [shape: u32[30], index: -1, kind: input, shape index: {}]
  %s1 = sld [smem:[%s0]]
  %s2 = scalar_lea.smem %s0, 1
  %s3 = sld [smem:[%s2]]
  %s4 = scalar_lea.smem %s0, 2
  %s5 = sld [smem:[%s4]]
  %s6 = scalar_lea.smem %s0, 3
  %s7 = sld [smem:[%s6]]
  %s8 = scalar_lea.smem %s0, 4
  %s9 = sld [smem:[%s8]]
  %s10 = scalar_lea.smem %s0, 5
  %s11 = sld [smem:[%s10]]
  %s12 = scalar_lea.smem %s0, 6
  %s13 = sld [smem:[%s12]]
  %s14 = scalar_lea.smem %s0, 7
  %s15 = sld [smem:[%s14]]
  %s16 = scalar_lea.smem %s0, 8
  %s17 = sld [smem:[%s16]]
  %s18 = scalar_lea.smem %s0, 9
  %s19 = sld [smem:[%s18]]
  %s20 = scalar_lea.smem %s0, 10
  %s21 = sld [smem:[%s20]]
  %s22 = scalar_lea.smem %s0, 11
  %s23 = sld [smem:[%s22]]
  %s24 = scalar_lea.smem %s0, 12
  %s25 = sld [smem:[%s24]]
  %s26 = scalar_lea.smem %s0, 13
  %s27 = sld [smem:[%s26]]
  %s28 = scalar_lea.smem %s0, 14
  %s29 = sld [smem:[%s28]]
  %s30 = scalar_lea.smem %s0, 15
  %s31 = sld [smem:[%s30]]
  %s32 = scalar_lea.smem %s0, 16
  %s33 = sld [smem:[%s32]]
  %s34 = scalar_lea.smem %s0, 17
  %s35 = sld [smem:[%s34]]
  %s36 = scalar_lea.smem %s0, 18
  %s37 = sld [smem:[%s36]]
  %s38 = scalar_lea.smem %s0, 19
  %s39 = sld [smem:[%s38]]
  %s40 = scalar_lea.smem %s0, 20
  %s41 = sld [smem:[%s40]]
  %s42 = scalar_lea.smem %s0, 21
  %s43 = sld [smem:[%s42]]
  %s44 = scalar_lea.smem %s0, 22
  %s45 = sld [smem:[%s44]]
  %s46 = scalar_lea.smem %s0, 23
  %s47 = sld [smem:[%s46]]
  %s48 = scalar_lea.smem %s0, 24
  %s49 = sld [smem:[%s48]]
  %s50 = scalar_lea.smem %s0, 25
  %s51 = sld [smem:[%s50]]
  %s52 = scalar_lea.smem %s0, 26
  %s53 = sld [smem:[%s52]]
  %s54 = scalar_lea.smem %s0, 27
  %s55 = sld [smem:[%s54]]
  %s56 = scalar_lea.smem %s0, 28
  %s57 = sld [smem:[%s56]]
  %s58 = scalar_lea.smem %s0, 29
  %s59 = sld [smem:[%s58]]
  %s60 = sld [smem:[#allocation0]]
  $region233: #{tpu_custom_call.1} parent=0
    _
  %s62 = ssub.s32 1, %s60
  %s63 = scalar_select 0, %s62, %s60
  $region1: #{tpu_custom_call.1} parent=0
    #allocation3 [shape = 'u8[8192]{0}', space=vmem, size = 0x2000, scoped, tag = 'input window, operand 1']
    #allocation4 [shape = 's32[2]{0}', space=sflag, size = 0x8, scoped, tag = 'scoped memory for tpu_custom_call.1']
    #allocation5 [shape = 's32[2]{0}', space=sflag, size = 0x8, scoped, tag = 'scoped memory for tpu_custom_call.1']
    #allocation6 [shape = 'u8[512]{0}', space=vmem, size = 0x400, scoped, tag = 'input window, operand 3, single buffered']
    #allocation7 [shape = 's32[1]{0}', space=sflag, size = 0x4, scoped, tag = 'scoped memory for tpu_custom_call.1']
    #allocation8 [shape = 'u8[512]{0}', space=vmem, size = 0x400, scoped, tag = 'input window, operand 4, single buffered']
    #allocation9 [shape = 'u8[16384]{0}', space=vmem, size = 0x4000, scoped, tag = 'input window, operand 5, single buffered']
    #allocation10 [shape = 's32[1]{0}', space=sflag, size = 0x4, scoped, tag = 'scoped memory for tpu_custom_call.1']
    #allocation11 [shape = 'u8[512]{0}', space=vmem, size = 0x400, scoped, tag = 'input window, operand 6, single buffered']
    #allocation12 [shape = 'u8[512]{0}', space=vmem, size = 0x400, scoped, tag = 'input window, operand 7, single buffered']
    #allocation13 [shape = 's32[1]{0}', space=sflag, size = 0x4, scoped, tag = 'scoped memory for tpu_custom_call.1']
    #allocation14 [shape = 'u8[512]{0}', space=vmem, size = 0x400, scoped, tag = 'input window, operand 8, single buffered']
    #allocation15 [shape = 'u8[16384]{0}', space=vmem, size = 0x4000, scoped, tag = 'input window, operand 9, single buffered']
    #allocation16 [shape = 's32[1]{0}', space=sflag, size = 0x4, scoped, tag = 'scoped memory for tpu_custom_call.1']
    #allocation17 [shape = 'u8[16384]{0}', space=vmem, size = 0x4000, scoped, tag = 'input window, operand 10, single buffered']
    #allocation18 [shape = 'u8[16384]{0}', space=vmem, size = 0x4000, scoped, tag = 'input window, operand 11, single buffered']
    #allocation19 [shape = 's32[1]{0}', space=sflag, size = 0x4, scoped, tag = 'scoped memory for tpu_custom_call.1']
    #allocation20 [shape = 'u8[16384]{0}', space=vmem, size = 0x4000, scoped, tag = 'input window, operand 12, single buffered']
    #allocation21 [shape = 'u8[512]{0}', space=vmem, size = 0x400, scoped, tag = 'input window, operand 13, single buffered']
    #allocation22 [shape = 's32[1]{0}', space=sflag, size = 0x4, scoped, tag = 'scoped memory for tpu_custom_call.1']
    #allocation23 [shape = 'u8[512]{0}', space=vmem, size = 0x400, scoped, tag = 'input window, operand 14, single buffered']
    #allocation24 [shape = 'u8[512]{0}', space=vmem, size = 0x400, scoped, tag = 'input window, operand 15, single buffered']
    #allocation25 [shape = 's32[1]{0}', space=sflag, size = 0x4, scoped, tag = 'scoped memory for tpu_custom_call.1']
    #allocation26 [shape = 'u8[16384]{0}', space=vmem, size = 0x4000, scoped, tag = 'input window, operand 16, single buffered']
    #allocation27 [shape = 'u8[8192]{0}', space=vmem, size = 0x2000, scoped, tag = 'input window, operand 17, single buffered']
    #allocation28 [shape = 's32[1]{0}', space=sflag, size = 0x4, scoped, tag = 'scoped memory for tpu_custom_call.1']
    #allocation29 [shape = 'u8[8192]{0}', space=vmem, size = 0x2000, scoped, tag = 'input window, operand 18, single buffered']
    #allocation30 [shape = 'u8[512]{0}', space=vmem, size = 0x400, scoped, tag = 'input window, operand 20, single buffered']
    #allocation31 [shape = 's32[1]{0}', space=sflag, size = 0x4, scoped, tag = 'scoped memory for tpu_custom_call.1']
    #allocation32 [shape = 'u8[512]{0}', space=vmem, size = 0x400, scoped, tag = 'input window, operand 21, single buffered']
    #allocation33 [shape = 'u8[65536]{0}', space=vmem, size = 0x10000, scoped, tag = 'input window, operand 23, single buffered']
    #allocation34 [shape = 's32[1]{0}', space=sflag, size = 0x4, scoped, tag = 'scoped memory for tpu_custom_call.1']
    #allocation35 [shape = 'u8[16384]{0}', space=vmem, size = 0x4000, scoped, tag = 'input window, operand 27, single buffered']
    #allocation36 [shape = 'u8[65536]{0}', space=vmem, size = 0x10000, scoped, tag = 'output window, operand 0']
    %64 = vsyncpa [#allocation4], 0
    %s65 = scalar_lea.sflag [#allocation4], 1
    %66 = vsyncpa %s65, 0
    %67 = vsyncpa [#allocation7], 0
    %68 = vsyncpa [#allocation10], 0
    %69 = vsyncpa [#allocation13], 0
    %70 = vsyncpa [#allocation16], 0
    %71 = vsyncpa [#allocation19], 0
    %72 = vsyncpa [#allocation22], 0
    %73 = vsyncpa [#allocation25], 0
    %74 = vsyncpa [#allocation28], 0
    %75 = vsyncpa [#allocation31], 0
    %76 = vsyncpa [#allocation34], 0
    %77 = vsyncpa [#allocation5], 0
    %s78 = scalar_lea.sflag [#allocation5], 1
    %79 = vsyncpa %s78, 0
    loop: start=0, step=1, limit=4
    $region2: #{tpu_custom_call.1} parent=1 // loop_pre_header
      _
    $region3: #{tpu_custom_call.1} parent=1 // loop_header
      %s81 = sphi 0, %s85
      %p82 = scmp.ge.s32.totalorder %s81, 4
      %s91 = sphi 0, %s93
      %s94 = sphi 0, %s91
      %s95 = sphi 0, %s94
      %s111 = sphi 0, %s95
      %s117 = sphi 0, %s119
      %s120 = sphi 0, %s117
      %s121 = sphi 0, %s120
      %s137 = sphi 0, %s121
      %s141 = sphi 0, %s141
      %s143 = sphi 0, %s141
      %s144 = sphi 0, %s143
      %s158 = sphi 0, %s144
      %s162 = sphi 0, %s162
      %s164 = sphi 0, %s162
      %s165 = sphi 0, %s164
      %s179 = sphi 0, %s165
      %s183 = sphi 0, %s183
      %s185 = sphi 0, %s183
      %s186 = sphi 0, %s185
      %s200 = sphi 0, %s186
      %s204 = sphi 0, %s204
      %s206 = sphi 0, %s204
      %s207 = sphi 0, %s206
      %s221 = sphi 0, %s207
      %s225 = sphi 0, %s225
      %s227 = sphi 0, %s225
      %s228 = sphi 0, %s227
      %s242 = sphi 0, %s228
      %s246 = sphi 0, %s246
      %s248 = sphi 0, %s246
      %s249 = sphi 0, %s248
      %s263 = sphi 0, %s249
      %s267 = sphi 0, %s267
      %s269 = sphi 0, %s267
      %s270 = sphi 0, %s269
      %s284 = sphi 0, %s270
      %s288 = sphi 0, %s288
      %s290 = sphi 0, %s288
      %s291 = sphi 0, %s290
      %s305 = sphi 0, %s291
      %s309 = sphi 0, %s309
      %s311 = sphi 0, %s309
      %s312 = sphi 0, %s311
      %s326 = sphi 0, %s312
      %s330 = sphi 0, %s330
      %s332 = sphi 0, %s330
      %s333 = sphi 0, %s332
      %s347 = sphi 0, %s333
      %s351 = sphi 0, %s351
      %s353 = sphi 0, %s351
      %s354 = sphi 0, %s353
      %s368 = sphi 0, %s354
      %s372 = sphi 0, %s372
      %s374 = sphi 0, %s372
      %s375 = sphi 0, %s374
      %s389 = sphi 0, %s375
      %s393 = sphi 0, %s393
      %s395 = sphi 0, %s393
      %s396 = sphi 0, %s395
      %s410 = sphi 0, %s396
      %s414 = sphi 0, %s414
      %s416 = sphi 0, %s414
      %s417 = sphi 0, %s416
      %s431 = sphi 0, %s417
      %s435 = sphi 0, %s435
      %s437 = sphi 0, %s435
      %s438 = sphi 0, %s437
      %s452 = sphi 0, %s438
      %s456 = sphi 0, %s456
      %s458 = sphi 0, %s456
      %s459 = sphi 0, %s458
      %s473 = sphi 0, %s459
      %s477 = sphi 0, %s477
      %s479 = sphi 0, %s477
      %s480 = sphi 0, %s479
      %s494 = sphi 0, %s480
      %s498 = sphi 0, %s498
      %s500 = sphi 0, %s498
      %s501 = sphi 0, %s500
      %s515 = sphi 0, %s501
      %s519 = sphi 0, %s519
      %s521 = sphi 0, %s519
      %s522 = sphi 0, %s521
      %s536 = sphi 0, %s522
      %s540 = sphi 0, %s540
      %s542 = sphi 0, %s540
      %s543 = sphi 0, %s542
      %s557 = sphi 0, %s543
      %s561 = sphi 0, %s561
      %s563 = sphi 0, %s561
      %s564 = sphi 0, %s563
      %s578 = sphi 0, %s564
      %s582 = sphi 0, %s582
      %s584 = sphi 0, %s582
      %s585 = sphi 0, %s584
      %s599 = sphi 0, %s585
      %s603 = sphi 0, %s603
      %s605 = sphi 0, %s603
      %s606 = sphi 0, %s605
      %s620 = sphi 0, %s606
      %s624 = sphi 0, %s624
      %s626 = sphi 0, %s624
      %s627 = sphi 0, %s626
      %s641 = sphi 0, %s627
      %s645 = sphi 0, %s645
      %s647 = sphi 0, %s645
      %s648 = sphi 0, %s647
      %s662 = sphi 0, %s648
      %s666 = sphi 0, %s666
      %s668 = sphi 0, %s666
      %s669 = sphi 0, %s668
      %s683 = sphi 0, %s669
      %s687 = sphi 0, %s687
      %s689 = sphi 0, %s687
      %s690 = sphi 0, %s689
      %s704 = sphi 0, %s690
      %s710 = sphi 0, %s712
      %s713 = sphi 0, %s710
      %s714 = sphi 0, %s713
      %s730 = sphi 0, %s714
    $region4: #{tpu_custom_call.1} parent=1 // loop_header_branch
      %84 = sbr.rel (%p82) target = $region8
    $region5: #{tpu_custom_call.1} parent=1 // loop_body
      %s86 = ssub.s32 %s81, 1
      %s87 = ssub.s32 %s81, 2
      %s88 = sadd.s32 %s81, 1
      %s89 = ssub.s32 %s81, %s88
      %p90 = scmp.eq.s32.totalorder %s89, 0
      %s92 = sadd.s32 %s91, 1
      %s93 = scalar_select %p90, %s91, %s92
      %p96 = pneg %p90
      %p97 = scmp.eq.s32.totalorder %s81, 1
      %p98 = por %p96, %p97
      %p99 = scmp.ne.s32.totalorder %s91, %s94
      %p100 = scmp.eq.s32.totalorder %s81, 0
      %p101 = por %p99, %p100
      %p102 = scmp.ne.s32.totalorder %s91, %s94
      %p103 = scmp.eq.s32.totalorder %s86, 1
      %p104 = por %p102, %p103
      %p105 = scmp.ne.s32.totalorder %s94, %s95
      %p106 = scmp.eq.s32.totalorder %s86, 0
      %p107 = por %p105, %p106
      %p108 = scmp.ne.s32.totalorder %s94, %s95
      %p109 = scmp.eq.s32.totalorder %s87, 1
      %p110 = por %p108, %p109
      %p112 = scmp.ne.s32.totalorder %s95, %s111
      %p113 = scmp.eq.s32.totalorder %s87, 0
      %p114 = por %p112, %p113
      %s115 = ssub.s32 %s81, %s88
      %p116 = scmp.eq.s32.totalorder %s115, 0
      %s118 = sadd.s32 %s117, 1
      %s119 = scalar_select %p116, %s117, %s118
      %p122 = pneg %p116
      %p123 = scmp.eq.s32.totalorder %s81, 1
      %p124 = por %p122, %p123
      %p125 = scmp.ne.s32.totalorder %s117, %s120
      %p126 = scmp.eq.s32.totalorder %s81, 0
      %p127 = por %p125, %p126
      %p128 = scmp.ne.s32.totalorder %s117, %s120
      %p129 = scmp.eq.s32.totalorder %s86, 1
      %p130 = por %p128, %p129
      %p131 = scmp.ne.s32.totalorder %s120, %s121
      %p132 = scmp.eq.s32.totalorder %s86, 0
      %p133 = por %p131, %p132
      %p134 = scmp.ne.s32.totalorder %s120, %s121
      %p135 = scmp.eq.s32.totalorder %s87, 1
      %p136 = por %p134, %p135
      %p138 = scmp.ne.s32.totalorder %s121, %s137
      %p139 = scmp.eq.s32.totalorder %s87, 0
      %p140 = por %p138, %p139
      %s142 = sadd.s32 %s141, 1
      %p145 = scmp.eq.s32.totalorder %s81, 1
      %p146 = scmp.ne.s32.totalorder %s141, %s143
      %p147 = scmp.eq.s32.totalorder %s81, 0
      %p148 = por %p146, %p147
      %p149 = scmp.ne.s32.totalorder %s141, %s143
      %p150 = scmp.eq.s32.totalorder %s86, 1
      %p151 = por %p149, %p150
      %p152 = scmp.ne.s32.totalorder %s143, %s144
      %p153 = scmp.eq.s32.totalorder %s86, 0
      %p154 = por %p152, %p153
      %p155 = scmp.ne.s32.totalorder %s143, %s144
      %p156 = scmp.eq.s32.totalorder %s87, 1
      %p157 = por %p155, %p156
      %p159 = scmp.ne.s32.totalorder %s144, %s158
      %p160 = scmp.eq.s32.totalorder %s87, 0
      %p161 = por %p159, %p160
      %s163 = sadd.s32 %s162, 1
      %p166 = scmp.eq.s32.totalorder %s81, 1
      %p167 = scmp.ne.s32.totalorder %s162, %s164
      %p168 = scmp.eq.s32.totalorder %s81, 0
      %p169 = por %p167, %p168
      %p170 = scmp.ne.s32.totalorder %s162, %s164
      %p171 = scmp.eq.s32.totalorder %s86, 1
      %p172 = por %p170, %p171
      %p173 = scmp.ne.s32.totalorder %s164, %s165
      %p174 = scmp.eq.s32.totalorder %s86, 0
      %p175 = por %p173, %p174
      %p176 = scmp.ne.s32.totalorder %s164, %s165
      %p177 = scmp.eq.s32.totalorder %s87, 1
      %p178 = por %p176, %p177
      %p180 = scmp.ne.s32.totalorder %s165, %s179
      %p181 = scmp.eq.s32.totalorder %s87, 0
      %p182 = por %p180, %p181
      %s184 = sadd.s32 %s183, 1
      %p187 = scmp.eq.s32.totalorder %s81, 1
      %p188 = scmp.ne.s32.totalorder %s183, %s185
      %p189 = scmp.eq.s32.totalorder %s81, 0
      %p190 = por %p188, %p189
      %p191 = scmp.ne.s32.totalorder %s183, %s185
      %p192 = scmp.eq.s32.totalorder %s86, 1
      %p193 = por %p191, %p192
      %p194 = scmp.ne.s32.totalorder %s185, %s186
      %p195 = scmp.eq.s32.totalorder %s86, 0
      %p196 = por %p194, %p195
      %p197 = scmp.ne.s32.totalorder %s185, %s186
      %p198 = scmp.eq.s32.totalorder %s87, 1
      %p199 = por %p197, %p198
      %p201 = scmp.ne.s32.totalorder %s186, %s200
      %p202 = scmp.eq.s32.totalorder %s87, 0
      %p203 = por %p201, %p202
      %s205 = sadd.s32 %s204, 1
      %p208 = scmp.eq.s32.totalorder %s81, 1
      %p209 = scmp.ne.s32.totalorder %s204, %s206
      %p210 = scmp.eq.s32.totalorder %s81, 0
      %p211 = por %p209, %p210
      %p212 = scmp.ne.s32.totalorder %s204, %s206
      %p213 = scmp.eq.s32.totalorder %s86, 1
      %p214 = por %p212, %p213
      %p215 = scmp.ne.s32.totalorder %s206, %s207
      %p216 = scmp.eq.s32.totalorder %s86, 0
      %p217 = por %p215, %p216
      %p218 = scmp.ne.s32.totalorder %s206, %s207
      %p219 = scmp.eq.s32.totalorder %s87, 1
      %p220 = por %p218, %p219
      %p222 = scmp.ne.s32.totalorder %s207, %s221
      %p223 = scmp.eq.s32.totalorder %s87, 0
      %p224 = por %p222, %p223
      %s226 = sadd.s32 %s225, 1
      %p229 = scmp.eq.s32.totalorder %s81, 1
      %p230 = scmp.ne.s32.totalorder %s225, %s227
      %p231 = scmp.eq.s32.totalorder %s81, 0
      %p232 = por %p230, %p231
      %p233 = scmp.ne.s32.totalorder %s225, %s227
      %p234 = scmp.eq.s32.totalorder %s86, 1
      %p235 = por %p233, %p234
      %p236 = scmp.ne.s32.totalorder %s227, %s228
      %p237 = scmp.eq.s32.totalorder %s86, 0
      %p238 = por %p236, %p237
      %p239 = scmp.ne.s32.totalorder %s227, %s228
      %p240 = scmp.eq.s32.totalorder %s87, 1
      %p241 = por %p239, %p240
      %p243 = scmp.ne.s32.totalorder %s228, %s242
      %p244 = scmp.eq.s32.totalorder %s87, 0
      %p245 = por %p243, %p244
      %s247 = sadd.s32 %s246, 1
      %p250 = scmp.eq.s32.totalorder %s81, 1
      %p251 = scmp.ne.s32.totalorder %s246, %s248
      %p252 = scmp.eq.s32.totalorder %s81, 0
      %p253 = por %p251, %p252
      %p254 = scmp.ne.s32.totalorder %s246, %s248
      %p255 = scmp.eq.s32.totalorder %s86, 1
      %p256 = por %p254, %p255
      %p257 = scmp.ne.s32.totalorder %s248, %s249
      %p258 = scmp.eq.s32.totalorder %s86, 0
      %p259 = por %p257, %p258
      %p260 = scmp.ne.s32.totalorder %s248, %s249
      %p261 = scmp.eq.s32.totalorder %s87, 1
      %p262 = por %p260, %p261
      %p264 = scmp.ne.s32.totalorder %s249, %s263
      %p265 = scmp.eq.s32.totalorder %s87, 0
      %p266 = por %p264, %p265
      %s268 = sadd.s32 %s267, 1
      %p271 = scmp.eq.s32.totalorder %s81, 1
      %p272 = scmp.ne.s32.totalorder %s267, %s269
      %p273 = scmp.eq.s32.totalorder %s81, 0
      %p274 = por %p272, %p273
      %p275 = scmp.ne.s32.totalorder %s267, %s269
      %p276 = scmp.eq.s32.totalorder %s86, 1
      %p277 = por %p275, %p276
      %p278 = scmp.ne.s32.totalorder %s269, %s270
      %p279 = scmp.eq.s32.totalorder %s86, 0
      %p280 = por %p278, %p279
      %p281 = scmp.ne.s32.totalorder %s269, %s270
      %p282 = scmp.eq.s32.totalorder %s87, 1
      %p283 = por %p281, %p282
      %p285 = scmp.ne.s32.totalorder %s270, %s284
      %p286 = scmp.eq.s32.totalorder %s87, 0
      %p287 = por %p285, %p286
      %s289 = sadd.s32 %s288, 1
      %p292 = scmp.eq.s32.totalorder %s81, 1
      %p293 = scmp.ne.s32.totalorder %s288, %s290
      %p294 = scmp.eq.s32.totalorder %s81, 0
      %p295 = por %p293, %p294
      %p296 = scmp.ne.s32.totalorder %s288, %s290
      %p297 = scmp.eq.s32.totalorder %s86, 1
      %p298 = por %p296, %p297
      %p299 = scmp.ne.s32.totalorder %s290, %s291
      %p300 = scmp.eq.s32.totalorder %s86, 0
      %p301 = por %p299, %p300
      %p302 = scmp.ne.s32.totalorder %s290, %s291
      %p303 = scmp.eq.s32.totalorder %s87, 1
      %p304 = por %p302, %p303
      %p306 = scmp.ne.s32.totalorder %s291, %s305
      %p307 = scmp.eq.s32.totalorder %s87, 0
      %p308 = por %p306, %p307
      %s310 = sadd.s32 %s309, 1
      %p313 = scmp.eq.s32.totalorder %s81, 1
      %p314 = scmp.ne.s32.totalorder %s309, %s311
      %p315 = scmp.eq.s32.totalorder %s81, 0
      %p316 = por %p314, %p315
      %p317 = scmp.ne.s32.totalorder %s309, %s311
      %p318 = scmp.eq.s32.totalorder %s86, 1
      %p319 = por %p317, %p318
      %p320 = scmp.ne.s32.totalorder %s311, %s312
      %p321 = scmp.eq.s32.totalorder %s86, 0
      %p322 = por %p320, %p321
      %p323 = scmp.ne.s32.totalorder %s311, %s312
      %p324 = scmp.eq.s32.totalorder %s87, 1
      %p325 = por %p323, %p324
      %p327 = scmp.ne.s32.totalorder %s312, %s326
      %p328 = scmp.eq.s32.totalorder %s87, 0
      %p329 = por %p327, %p328
      %s331 = sadd.s32 %s330, 1
      %p334 = scmp.eq.s32.totalorder %s81, 1
      %p335 = scmp.ne.s32.totalorder %s330, %s332
      %p336 = scmp.eq.s32.totalorder %s81, 0
      %p337 = por %p335, %p336
      %p338 = scmp.ne.s32.totalorder %s330, %s332
      %p339 = scmp.eq.s32.totalorder %s86, 1
      %p340 = por %p338, %p339
      %p341 = scmp.ne.s32.totalorder %s332, %s333
      %p342 = scmp.eq.s32.totalorder %s86, 0
      %p343 = por %p341, %p342
      %p344 = scmp.ne.s32.totalorder %s332, %s333
      %p345 = scmp.eq.s32.totalorder %s87, 1
      %p346 = por %p344, %p345
      %p348 = scmp.ne.s32.totalorder %s333, %s347
      %p349 = scmp.eq.s32.totalorder %s87, 0
      %p350 = por %p348, %p349
      %s352 = sadd.s32 %s351, 1
      %p355 = scmp.eq.s32.totalorder %s81, 1
      %p356 = scmp.ne.s32.totalorder %s351, %s353
      %p357 = scmp.eq.s32.totalorder %s81, 0
      %p358 = por %p356, %p357
      %p359 = scmp.ne.s32.totalorder %s351, %s353
      %p360 = scmp.eq.s32.totalorder %s86, 1
      %p361 = por %p359, %p360
      %p362 = scmp.ne.s32.totalorder %s353, %s354
      %p363 = scmp.eq.s32.totalorder %s86, 0
      %p364 = por %p362, %p363
      %p365 = scmp.ne.s32.totalorder %s353, %s354
      %p366 = scmp.eq.s32.totalorder %s87, 1
      %p367 = por %p365, %p366
      %p369 = scmp.ne.s32.totalorder %s354, %s368
      %p370 = scmp.eq.s32.totalorder %s87, 0
      %p371 = por %p369, %p370
      %s373 = sadd.s32 %s372, 1
      %p376 = scmp.eq.s32.totalorder %s81, 1
      %p377 = scmp.ne.s32.totalorder %s372, %s374
      %p378 = scmp.eq.s32.totalorder %s81, 0
      %p379 = por %p377, %p378
      %p380 = scmp.ne.s32.totalorder %s372, %s374
      %p381 = scmp.eq.s32.totalorder %s86, 1
      %p382 = por %p380, %p381
      %p383 = scmp.ne.s32.totalorder %s374, %s375
      %p384 = scmp.eq.s32.totalorder %s86, 0
      %p385 = por %p383, %p384
      %p386 = scmp.ne.s32.totalorder %s374, %s375
      %p387 = scmp.eq.s32.totalorder %s87, 1
      %p388 = por %p386, %p387
      %p390 = scmp.ne.s32.totalorder %s375, %s389
      %p391 = scmp.eq.s32.totalorder %s87, 0
      %p392 = por %p390, %p391
      %s394 = sadd.s32 %s393, 1
      %p397 = scmp.eq.s32.totalorder %s81, 1
      %p398 = scmp.ne.s32.totalorder %s393, %s395
      %p399 = scmp.eq.s32.totalorder %s81, 0
      %p400 = por %p398, %p399
      %p401 = scmp.ne.s32.totalorder %s393, %s395
      %p402 = scmp.eq.s32.totalorder %s86, 1
      %p403 = por %p401, %p402
      %p404 = scmp.ne.s32.totalorder %s395, %s396
      %p405 = scmp.eq.s32.totalorder %s86, 0
      %p406 = por %p404, %p405
      %p407 = scmp.ne.s32.totalorder %s395, %s396
      %p408 = scmp.eq.s32.totalorder %s87, 1
      %p409 = por %p407, %p408
      %p411 = scmp.ne.s32.totalorder %s396, %s410
      %p412 = scmp.eq.s32.totalorder %s87, 0
      %p413 = por %p411, %p412
      %s415 = sadd.s32 %s414, 1
      %p418 = scmp.eq.s32.totalorder %s81, 1
      %p419 = scmp.ne.s32.totalorder %s414, %s416
      %p420 = scmp.eq.s32.totalorder %s81, 0
      %p421 = por %p419, %p420
      %p422 = scmp.ne.s32.totalorder %s414, %s416
      %p423 = scmp.eq.s32.totalorder %s86, 1
      %p424 = por %p422, %p423
      %p425 = scmp.ne.s32.totalorder %s416, %s417
      %p426 = scmp.eq.s32.totalorder %s86, 0
      %p427 = por %p425, %p426
      %p428 = scmp.ne.s32.totalorder %s416, %s417
      %p429 = scmp.eq.s32.totalorder %s87, 1
      %p430 = por %p428, %p429
      %p432 = scmp.ne.s32.totalorder %s417, %s431
      %p433 = scmp.eq.s32.totalorder %s87, 0
      %p434 = por %p432, %p433
      %s436 = sadd.s32 %s435, 1
      %p439 = scmp.eq.s32.totalorder %s81, 1
      %p440 = scmp.ne.s32.totalorder %s435, %s437
      %p441 = scmp.eq.s32.totalorder %s81, 0
      %p442 = por %p440, %p441
      %p443 = scmp.ne.s32.totalorder %s435, %s437
      %p444 = scmp.eq.s32.totalorder %s86, 1
      %p445 = por %p443, %p444
      %p446 = scmp.ne.s32.totalorder %s437, %s438
      %p447 = scmp.eq.s32.totalorder %s86, 0
      %p448 = por %p446, %p447
      %p449 = scmp.ne.s32.totalorder %s437, %s438
      %p450 = scmp.eq.s32.totalorder %s87, 1
      %p451 = por %p449, %p450
      %p453 = scmp.ne.s32.totalorder %s438, %s452
      %p454 = scmp.eq.s32.totalorder %s87, 0
      %p455 = por %p453, %p454
      %s457 = sadd.s32 %s456, 1
      %p460 = scmp.eq.s32.totalorder %s81, 1
      %p461 = scmp.ne.s32.totalorder %s456, %s458
      %p462 = scmp.eq.s32.totalorder %s81, 0
      %p463 = por %p461, %p462
      %p464 = scmp.ne.s32.totalorder %s456, %s458
      %p465 = scmp.eq.s32.totalorder %s86, 1
      %p466 = por %p464, %p465
      %p467 = scmp.ne.s32.totalorder %s458, %s459
      %p468 = scmp.eq.s32.totalorder %s86, 0
      %p469 = por %p467, %p468
      %p470 = scmp.ne.s32.totalorder %s458, %s459
      %p471 = scmp.eq.s32.totalorder %s87, 1
      %p472 = por %p470, %p471
      %p474 = scmp.ne.s32.totalorder %s459, %s473
      %p475 = scmp.eq.s32.totalorder %s87, 0
      %p476 = por %p474, %p475
      %s478 = sadd.s32 %s477, 1
      %p481 = scmp.eq.s32.totalorder %s81, 1
      %p482 = scmp.ne.s32.totalorder %s477, %s479
      %p483 = scmp.eq.s32.totalorder %s81, 0
      %p484 = por %p482, %p483
      %p485 = scmp.ne.s32.totalorder %s477, %s479
      %p486 = scmp.eq.s32.totalorder %s86, 1
      %p487 = por %p485, %p486
      %p488 = scmp.ne.s32.totalorder %s479, %s480
      %p489 = scmp.eq.s32.totalorder %s86, 0
      %p490 = por %p488, %p489
      %p491 = scmp.ne.s32.totalorder %s479, %s480
      %p492 = scmp.eq.s32.totalorder %s87, 1
      %p493 = por %p491, %p492
      %p495 = scmp.ne.s32.totalorder %s480, %s494
      %p496 = scmp.eq.s32.totalorder %s87, 0
      %p497 = por %p495, %p496
      %s499 = sadd.s32 %s498, 1
      %p502 = scmp.eq.s32.totalorder %s81, 1
      %p503 = scmp.ne.s32.totalorder %s498, %s500
      %p504 = scmp.eq.s32.totalorder %s81, 0
      %p505 = por %p503, %p504
      %p506 = scmp.ne.s32.totalorder %s498, %s500
      %p507 = scmp.eq.s32.totalorder %s86, 1
      %p508 = por %p506, %p507
      %p509 = scmp.ne.s32.totalorder %s500, %s501
      %p510 = scmp.eq.s32.totalorder %s86, 0
      %p511 = por %p509, %p510
      %p512 = scmp.ne.s32.totalorder %s500, %s501
      %p513 = scmp.eq.s32.totalorder %s87, 1
      %p514 = por %p512, %p513
      %p516 = scmp.ne.s32.totalorder %s501, %s515
      %p517 = scmp.eq.s32.totalorder %s87, 0
      %p518 = por %p516, %p517
      %s520 = sadd.s32 %s519, 1
      %p523 = scmp.eq.s32.totalorder %s81, 1
      %p524 = scmp.ne.s32.totalorder %s519, %s521
      %p525 = scmp.eq.s32.totalorder %s81, 0
      %p526 = por %p524, %p525
      %p527 = scmp.ne.s32.totalorder %s519, %s521
      %p528 = scmp.eq.s32.totalorder %s86, 1
      %p529 = por %p527, %p528
      %p530 = scmp.ne.s32.totalorder %s521, %s522
      %p531 = scmp.eq.s32.totalorder %s86, 0
      %p532 = por %p530, %p531
      %p533 = scmp.ne.s32.totalorder %s521, %s522
      %p534 = scmp.eq.s32.totalorder %s87, 1
      %p535 = por %p533, %p534
      %p537 = scmp.ne.s32.totalorder %s522, %s536
      %p538 = scmp.eq.s32.totalorder %s87, 0
      %p539 = por %p537, %p538
      %s541 = sadd.s32 %s540, 1
      %p544 = scmp.eq.s32.totalorder %s81, 1
      %p545 = scmp.ne.s32.totalorder %s540, %s542
      %p546 = scmp.eq.s32.totalorder %s81, 0
      %p547 = por %p545, %p546
      %p548 = scmp.ne.s32.totalorder %s540, %s542
      %p549 = scmp.eq.s32.totalorder %s86, 1
      %p550 = por %p548, %p549
      %p551 = scmp.ne.s32.totalorder %s542, %s543
      %p552 = scmp.eq.s32.totalorder %s86, 0
      %p553 = por %p551, %p552
      %p554 = scmp.ne.s32.totalorder %s542, %s543
      %p555 = scmp.eq.s32.totalorder %s87, 1
      %p556 = por %p554, %p555
      %p558 = scmp.ne.s32.totalorder %s543, %s557
      %p559 = scmp.eq.s32.totalorder %s87, 0
      %p560 = por %p558, %p559
      %s562 = sadd.s32 %s561, 1
      %p565 = scmp.eq.s32.totalorder %s81, 1
      %p566 = scmp.ne.s32.totalorder %s561, %s563
      %p567 = scmp.eq.s32.totalorder %s81, 0
      %p568 = por %p566, %p567
      %p569 = scmp.ne.s32.totalorder %s561, %s563
      %p570 = scmp.eq.s32.totalorder %s86, 1
      %p571 = por %p569, %p570
      %p572 = scmp.ne.s32.totalorder %s563, %s564
      %p573 = scmp.eq.s32.totalorder %s86, 0
      %p574 = por %p572, %p573
      %p575 = scmp.ne.s32.totalorder %s563, %s564
      %p576 = scmp.eq.s32.totalorder %s87, 1
      %p577 = por %p575, %p576
      %p579 = scmp.ne.s32.totalorder %s564, %s578
      %p580 = scmp.eq.s32.totalorder %s87, 0
      %p581 = por %p579, %p580
      %s583 = sadd.s32 %s582, 1
      %p586 = scmp.eq.s32.totalorder %s81, 1
      %p587 = scmp.ne.s32.totalorder %s582, %s584
      %p588 = scmp.eq.s32.totalorder %s81, 0
      %p589 = por %p587, %p588
      %p590 = scmp.ne.s32.totalorder %s582, %s584
      %p591 = scmp.eq.s32.totalorder %s86, 1
      %p592 = por %p590, %p591
      %p593 = scmp.ne.s32.totalorder %s584, %s585
      %p594 = scmp.eq.s32.totalorder %s86, 0
      %p595 = por %p593, %p594
      %p596 = scmp.ne.s32.totalorder %s584, %s585
      %p597 = scmp.eq.s32.totalorder %s87, 1
      %p598 = por %p596, %p597
      %p600 = scmp.ne.s32.totalorder %s585, %s599
      %p601 = scmp.eq.s32.totalorder %s87, 0
      %p602 = por %p600, %p601
      %s604 = sadd.s32 %s603, 1
      %p607 = scmp.eq.s32.totalorder %s81, 1
      %p608 = scmp.ne.s32.totalorder %s603, %s605
      %p609 = scmp.eq.s32.totalorder %s81, 0
      %p610 = por %p608, %p609
      %p611 = scmp.ne.s32.totalorder %s603, %s605
      %p612 = scmp.eq.s32.totalorder %s86, 1
      %p613 = por %p611, %p612
      %p614 = scmp.ne.s32.totalorder %s605, %s606
      %p615 = scmp.eq.s32.totalorder %s86, 0
      %p616 = por %p614, %p615
      %p617 = scmp.ne.s32.totalorder %s605, %s606
      %p618 = scmp.eq.s32.totalorder %s87, 1
      %p619 = por %p617, %p618
      %p621 = scmp.ne.s32.totalorder %s606, %s620
      %p622 = scmp.eq.s32.totalorder %s87, 0
      %p623 = por %p621, %p622
      %s625 = sadd.s32 %s624, 1
      %p628 = scmp.eq.s32.totalorder %s81, 1
      %p629 = scmp.ne.s32.totalorder %s624, %s626
      %p630 = scmp.eq.s32.totalorder %s81, 0
      %p631 = por %p629, %p630
      %p632 = scmp.ne.s32.totalorder %s624, %s626
      %p633 = scmp.eq.s32.totalorder %s86, 1
      %p634 = por %p632, %p633
      %p635 = scmp.ne.s32.totalorder %s626, %s627
      %p636 = scmp.eq.s32.totalorder %s86, 0
      %p637 = por %p635, %p636
      %p638 = scmp.ne.s32.totalorder %s626, %s627
      %p639 = scmp.eq.s32.totalorder %s87, 1
      %p640 = por %p638, %p639
      %p642 = scmp.ne.s32.totalorder %s627, %s641
      %p643 = scmp.eq.s32.totalorder %s87, 0
      %p644 = por %p642, %p643
      %s646 = sadd.s32 %s645, 1
      %p649 = scmp.eq.s32.totalorder %s81, 1
      %p650 = scmp.ne.s32.totalorder %s645, %s647
      %p651 = scmp.eq.s32.totalorder %s81, 0
      %p652 = por %p650, %p651
      %p653 = scmp.ne.s32.totalorder %s645, %s647
      %p654 = scmp.eq.s32.totalorder %s86, 1
      %p655 = por %p653, %p654
      %p656 = scmp.ne.s32.totalorder %s647, %s648
      %p657 = scmp.eq.s32.totalorder %s86, 0
      %p658 = por %p656, %p657
      %p659 = scmp.ne.s32.totalorder %s647, %s648
      %p660 = scmp.eq.s32.totalorder %s87, 1
      %p661 = por %p659, %p660
      %p663 = scmp.ne.s32.totalorder %s648, %s662
      %p664 = scmp.eq.s32.totalorder %s87, 0
      %p665 = por %p663, %p664
      %s667 = sadd.s32 %s666, 1
      %p670 = scmp.eq.s32.totalorder %s81, 1
      %p671 = scmp.ne.s32.totalorder %s666, %s668
      %p672 = scmp.eq.s32.totalorder %s81, 0
      %p673 = por %p671, %p672
      %p674 = scmp.ne.s32.totalorder %s666, %s668
      %p675 = scmp.eq.s32.totalorder %s86, 1
      %p676 = por %p674, %p675
      %p677 = scmp.ne.s32.totalorder %s668, %s669
      %p678 = scmp.eq.s32.totalorder %s86, 0
      %p679 = por %p677, %p678
      %p680 = scmp.ne.s32.totalorder %s668, %s669
      %p681 = scmp.eq.s32.totalorder %s87, 1
      %p682 = por %p680, %p681
      %p684 = scmp.ne.s32.totalorder %s669, %s683
      %p685 = scmp.eq.s32.totalorder %s87, 0
      %p686 = por %p684, %p685
      %s688 = sadd.s32 %s687, 1
      %p691 = scmp.eq.s32.totalorder %s81, 1
      %p692 = scmp.ne.s32.totalorder %s687, %s689
      %p693 = scmp.eq.s32.totalorder %s81, 0
      %p694 = por %p692, %p693
      %p695 = scmp.ne.s32.totalorder %s687, %s689
      %p696 = scmp.eq.s32.totalorder %s86, 1
      %p697 = por %p695, %p696
      %p698 = scmp.ne.s32.totalorder %s689, %s690
      %p699 = scmp.eq.s32.totalorder %s86, 0
      %p700 = por %p698, %p699
      %p701 = scmp.ne.s32.totalorder %s689, %s690
      %p702 = scmp.eq.s32.totalorder %s87, 1
      %p703 = por %p701, %p702
      %p705 = scmp.ne.s32.totalorder %s690, %s704
      %p706 = scmp.eq.s32.totalorder %s87, 0
      %p707 = por %p705, %p706
      %s708 = ssub.s32 %s81, %s88
      %p709 = scmp.eq.s32.totalorder %s708, 0
      %s711 = sadd.s32 %s710, 1
      %s712 = scalar_select %p709, %s710, %s711
      %p715 = pneg %p709
      %p716 = scmp.eq.s32.totalorder %s81, 1
      %p717 = por %p715, %p716
      %p718 = scmp.ne.s32.totalorder %s710, %s713
      %p719 = scmp.eq.s32.totalorder %s81, 0
      %p720 = por %p718, %p719
      %p721 = scmp.ne.s32.totalorder %s710, %s713
      %p722 = scmp.eq.s32.totalorder %s86, 1
      %p723 = por %p721, %p722
      %p724 = scmp.ne.s32.totalorder %s713, %s714
      %p725 = scmp.eq.s32.totalorder %s86, 0
      %p726 = por %p724, %p725
      %p727 = scmp.ne.s32.totalorder %s713, %s714
      %p728 = scmp.eq.s32.totalorder %s87, 1
      %p729 = por %p727, %p728
      %p731 = scmp.ne.s32.totalorder %s714, %s730
      %p732 = scmp.eq.s32.totalorder %s87, 0
      %p733 = por %p731, %p732
      %p734 = scmp.le.s32.totalorder 1, %s81
      %p735 = scmp.lt.s32.totalorder %s81, 3
      %p736 = pnand %p734, %p735
      %p737 = pneg %p736
      // Predicated region
      $region9: #{tpu_custom_call.1} parent=5 // pred_check
        _
      $region10: #{tpu_custom_call.1} parent=5 // pred_check_branch
        %739 = sbr.rel (%p736) target = $region12
      $region11: #{tpu_custom_call.1} parent=5 // pred_region
        %s740 = ssub.s32 %s81, 1
        // Predicated region
        $region13: #{tpu_custom_call.1} parent=11 // pred_check
          %p741 = pneg %p154
        $region14: #{tpu_custom_call.1} parent=11 // pred_check_branch
          %743 = sbr.rel (%p741) target = $region16
        $region15: #{tpu_custom_call.1} parent=11 // pred_region
          _
        $region16: #{tpu_custom_call.1} parent=11 // pred_fallthru
          _
        // Predicated region
        $region17: #{tpu_custom_call.1} parent=11 // pred_check
          %p744 = pneg %p175
        $region18: #{tpu_custom_call.1} parent=11 // pred_check_branch
          %746 = sbr.rel (%p744) target = $region20
        $region19: #{tpu_custom_call.1} parent=11 // pred_region
          %s748 = ssub.s32 16, 16
          %749 = vsyncadd [#allocation7], %s748
          %s751 = sshll.u32 [#allocation6], 4
          %s752 = int_to_ptr.vmem [resolvable:$true] %s751
          %754 = dma.hbm_to_vmem [thread:$0]  %s7, 16, %s752, [#allocation7]
        $region20: #{tpu_custom_call.1} parent=11 // pred_fallthru
          _
        // Predicated region
        $region21: #{tpu_custom_call.1} parent=11 // pred_check
          %p755 = pneg %p196
        $region22: #{tpu_custom_call.1} parent=11 // pred_check_branch
          %757 = sbr.rel (%p755) target = $region24
        $region23: #{tpu_custom_call.1} parent=11 // pred_region
          %s759 = ssub.s32 16, 16
          %760 = vsyncadd [#allocation7], %s759
          %s762 = sshll.u32 [#allocation8], 4
          %s763 = int_to_ptr.vmem [resolvable:$true] %s762
          %765 = dma.hbm_to_vmem [thread:$0]  %s9, 16, %s763, [#allocation7]
        $region24: #{tpu_custom_call.1} parent=11 // pred_fallthru
          _
        // Predicated region
        $region25: #{tpu_custom_call.1} parent=11 // pred_check
          %p766 = pneg %p217
        $region26: #{tpu_custom_call.1} parent=11 // pred_check_branch
          %768 = sbr.rel (%p766) target = $region28
        $region27: #{tpu_custom_call.1} parent=11 // pred_region
          %s770 = ssub.s32 512, 512
          %771 = vsyncadd [#allocation10], %s770
          %s772 = sshll.u32 [#allocation9], 4
          %s773 = int_to_ptr.vmem [resolvable:$true] %s772
          %778 = dma.hbm_to_vmem [thread:$0]  %s11, 512, %s773, [#allocation10], 64, 64, 4
        $region28: #{tpu_custom_call.1} parent=11 // pred_fallthru
          _
        // Predicated region
        $region29: #{tpu_custom_call.1} parent=11 // pred_check
          %p779 = pneg %p238
        $region30: #{tpu_custom_call.1} parent=11 // pred_check_branch
          %781 = sbr.rel (%p779) target = $region32
        $region31: #{tpu_custom_call.1} parent=11 // pred_region
          %s783 = ssub.s32 16, 16
          %784 = vsyncadd [#allocation10], %s783
          %s786 = sshll.u32 [#allocation11], 4
          %s787 = int_to_ptr.vmem [resolvable:$true] %s786
          %789 = dma.hbm_to_vmem [thread:$0]  %s13, 16, %s787, [#allocation10]
        $region32: #{tpu_custom_call.1} parent=11 // pred_fallthru
          _
        // Predicated region
        $region33: #{tpu_custom_call.1} parent=11 // pred_check
          %p790 = pneg %p259
        $region34: #{tpu_custom_call.1} parent=11 // pred_check_branch
          %792 = sbr.rel (%p790) target = $region36
        $region35: #{tpu_custom_call.1} parent=11 // pred_region
          %s794 = ssub.s32 16, 16
          %795 = vsyncadd [#allocation13], %s794
          %s797 = sshll.u32 [#allocation12], 4
          %s798 = int_to_ptr.vmem [resolvable:$true] %s797
          %800 = dma.hbm_to_vmem [thread:$0]  %s15, 16, %s798, [#allocation13]
        $region36: #{tpu_custom_call.1} parent=11 // pred_fallthru
          _
        // Predicated region
        $region37: #{tpu_custom_call.1} parent=11 // pred_check
          %p801 = pneg %p280
        $region38: #{tpu_custom_call.1} parent=11 // pred_check_branch
          %803 = sbr.rel (%p801) target = $region40
        $region39: #{tpu_custom_call.1} parent=11 // pred_region
          %s805 = ssub.s32 16, 16
          %806 = vsyncadd [#allocation13], %s805
          %s808 = sshll.u32 [#allocation14], 4
          %s809 = int_to_ptr.vmem [resolvable:$true] %s808
          %811 = dma.hbm_to_vmem [thread:$0]  %s17, 16, %s809, [#allocation13]
        $region40: #{tpu_custom_call.1} parent=11 // pred_fallthru
          _
        // Predicated region
        $region41: #{tpu_custom_call.1} parent=11 // pred_check
          %p812 = pneg %p301
        $region42: #{tpu_custom_call.1} parent=11 // pred_check_branch
          %814 = sbr.rel (%p812) target = $region44
        $region43: #{tpu_custom_call.1} parent=11 // pred_region
          %s816 = ssub.s32 512, 512
          %817 = vsyncadd [#allocation16], %s816
          %s818 = sshll.u32 [#allocation15], 4
          %s819 = int_to_ptr.vmem [resolvable:$true] %s818
          %824 = dma.hbm_to_vmem [thread:$0]  %s19, 512, %s819, [#allocation16], 64, 64, 4
        $region44: #{tpu_custom_call.1} parent=11 // pred_fallthru
          _
        // Predicated region
        $region45: #{tpu_custom_call.1} parent=11 // pred_check
          %p825 = pneg %p322
        $region46: #{tpu_custom_call.1} parent=11 // pred_check_branch
          %827 = sbr.rel (%p825) target = $region48
        $region47: #{tpu_custom_call.1} parent=11 // pred_region
          %s829 = ssub.s32 512, 512
          %830 = vsyncadd [#allocation16], %s829
          %s831 = sshll.u32 [#allocation17], 4
          %s832 = int_to_ptr.vmem [resolvable:$true] %s831
          %837 = dma.hbm_to_vmem [thread:$0]  %s21, 512, %s832, [#allocation16], 64, 64, 4
        $region48: #{tpu_custom_call.1} parent=11 // pred_fallthru
          _
        // Predicated region
        $region49: #{tpu_custom_call.1} parent=11 // pred_check
          %p838 = pneg %p343
        $region50: #{tpu_custom_call.1} parent=11 // pred_check_branch
          %840 = sbr.rel (%p838) target = $region52
        $region51: #{tpu_custom_call.1} parent=11 // pred_region
          %s842 = ssub.s32 512, 512
          %843 = vsyncadd [#allocation19], %s842
          %s844 = sshll.u32 [#allocation18], 4
          %s845 = int_to_ptr.vmem [resolvable:$true] %s844
          %850 = dma.hbm_to_vmem [thread:$0]  %s23, 512, %s845, [#allocation19], 64, 64, 4
        $region52: #{tpu_custom_call.1} parent=11 // pred_fallthru
          _
        // Predicated region
        $region53: #{tpu_custom_call.1} parent=11 // pred_check
          %p851 = pneg %p364
        $region54: #{tpu_custom_call.1} parent=11 // pred_check_branch
          %853 = sbr.rel (%p851) target = $region56
        $region55: #{tpu_custom_call.1} parent=11 // pred_region
          %s855 = ssub.s32 512, 512
          %856 = vsyncadd [#allocation19], %s855
          %s857 = sshll.u32 [#allocation20], 4
          %s858 = int_to_ptr.vmem [resolvable:$true] %s857
          %863 = dma.hbm_to_vmem [thread:$0]  %s25, 512, %s858, [#allocation19], 64, 64, 4
        $region56: #{tpu_custom_call.1} parent=11 // pred_fallthru
          _
        // Predicated region
        $region57: #{tpu_custom_call.1} parent=11 // pred_check
          %p864 = pneg %p385
        $region58: #{tpu_custom_call.1} parent=11 // pred_check_branch
          %866 = sbr.rel (%p864) target = $region60
        $region59: #{tpu_custom_call.1} parent=11 // pred_region
          %s868 = ssub.s32 16, 16
          %869 = vsyncadd [#allocation22], %s868
          %s871 = sshll.u32 [#allocation21], 4
          %s872 = int_to_ptr.vmem [resolvable:$true] %s871
          %874 = dma.hbm_to_vmem [thread:$0]  %s27, 16, %s872, [#allocation22]
        $region60: #{tpu_custom_call.1} parent=11 // pred_fallthru
          _
        // Predicated region
        $region61: #{tpu_custom_call.1} parent=11 // pred_check
          %p875 = pneg %p406
        $region62: #{tpu_custom_call.1} parent=11 // pred_check_branch
          %877 = sbr.rel (%p875) target = $region64
        $region63: #{tpu_custom_call.1} parent=11 // pred_region
          %s879 = ssub.s32 16, 16
          %880 = vsyncadd [#allocation22], %s879
          %s882 = sshll.u32 [#allocation23], 4
          %s883 = int_to_ptr.vmem [resolvable:$true] %s882
          %885 = dma.hbm_to_vmem [thread:$0]  %s29, 16, %s883, [#allocation22]
        $region64: #{tpu_custom_call.1} parent=11 // pred_fallthru
          _
        // Predicated region
        $region65: #{tpu_custom_call.1} parent=11 // pred_check
          %p886 = pneg %p427
        $region66: #{tpu_custom_call.1} parent=11 // pred_check_branch
          %888 = sbr.rel (%p886) target = $region68
        $region67: #{tpu_custom_call.1} parent=11 // pred_region
          %s890 = ssub.s32 16, 16
          %891 = vsyncadd [#allocation25], %s890
          %s893 = sshll.u32 [#allocation24], 4
          %s894 = int_to_ptr.vmem [resolvable:$true] %s893
          %896 = dma.hbm_to_vmem [thread:$0]  %s31, 16, %s894, [#allocation25]
        $region68: #{tpu_custom_call.1} parent=11 // pred_fallthru
          _
        // Predicated region
        $region69: #{tpu_custom_call.1} parent=11 // pred_check
          %p897 = pneg %p448
        $region70: #{tpu_custom_call.1} parent=11 // pred_check_branch
          %899 = sbr.rel (%p897) target = $region72
        $region71: #{tpu_custom_call.1} parent=11 // pred_region
          %s901 = ssub.s32 512, 512
          %902 = vsyncadd [#allocation25], %s901
          %s903 = sshll.u32 [#allocation26], 4
          %s904 = int_to_ptr.vmem [resolvable:$true] %s903
          %909 = dma.hbm_to_vmem [thread:$0]  %s33, 512, %s904, [#allocation25], 64, 64, 4
        $region72: #{tpu_custom_call.1} parent=11 // pred_fallthru
          _
        // Predicated region
        $region73: #{tpu_custom_call.1} parent=11 // pred_check
          %p910 = pneg %p469
        $region74: #{tpu_custom_call.1} parent=11 // pred_check_branch
          %912 = sbr.rel (%p910) target = $region76
        $region75: #{tpu_custom_call.1} parent=11 // pred_region
          %s914 = ssub.s32 256, 256
          %915 = vsyncadd [#allocation28], %s914
          %s916 = sshll.u32 [#allocation27], 4
          %s917 = int_to_ptr.vmem [resolvable:$true] %s916
          %922 = dma.hbm_to_vmem [thread:$0]  %s35, 256, %s917, [#allocation28], 64, 64, 4
        $region76: #{tpu_custom_call.1} parent=11 // pred_fallthru
          _
        // Predicated region
        $region77: #{tpu_custom_call.1} parent=11 // pred_check
          %p923 = pneg %p490
        $region78: #{tpu_custom_call.1} parent=11 // pred_check_branch
          %925 = sbr.rel (%p923) target = $region80
        $region79: #{tpu_custom_call.1} parent=11 // pred_region
          %s927 = ssub.s32 256, 256
          %928 = vsyncadd [#allocation28], %s927
          %s929 = sshll.u32 [#allocation29], 4
          %s930 = int_to_ptr.vmem [resolvable:$true] %s929
          %935 = dma.hbm_to_vmem [thread:$0]  %s37, 256, %s930, [#allocation28], 64, 64, 4
        $region80: #{tpu_custom_call.1} parent=11 // pred_fallthru
          _
        // Predicated region
        $region81: #{tpu_custom_call.1} parent=11 // pred_check
          %p936 = pneg %p511
        $region82: #{tpu_custom_call.1} parent=11 // pred_check_branch
          %938 = sbr.rel (%p936) target = $region84
        $region83: #{tpu_custom_call.1} parent=11 // pred_region
          _
        $region84: #{tpu_custom_call.1} parent=11 // pred_fallthru
          _
        // Predicated region
        $region85: #{tpu_custom_call.1} parent=11 // pred_check
          %p939 = pneg %p532
        $region86: #{tpu_custom_call.1} parent=11 // pred_check_branch
          %941 = sbr.rel (%p939) target = $region88
        $region87: #{tpu_custom_call.1} parent=11 // pred_region
          %s943 = ssub.s32 16, 16
          %944 = vsyncadd [#allocation31], %s943
          %s946 = sshll.u32 [#allocation30], 4
          %s947 = int_to_ptr.vmem [resolvable:$true] %s946
          %949 = dma.hbm_to_vmem [thread:$0]  %s41, 16, %s947, [#allocation31]
        $region88: #{tpu_custom_call.1} parent=11 // pred_fallthru
          _
        // Predicated region
        $region89: #{tpu_custom_call.1} parent=11 // pred_check
          %p950 = pneg %p553
        $region90: #{tpu_custom_call.1} parent=11 // pred_check_branch
          %952 = sbr.rel (%p950) target = $region92
        $region91: #{tpu_custom_call.1} parent=11 // pred_region
          %s954 = ssub.s32 16, 16
          %955 = vsyncadd [#allocation31], %s954
          %s957 = sshll.u32 [#allocation32], 4
          %s958 = int_to_ptr.vmem [resolvable:$true] %s957
          %960 = dma.hbm_to_vmem [thread:$0]  %s43, 16, %s958, [#allocation31]
        $region92: #{tpu_custom_call.1} parent=11 // pred_fallthru
          _
        // Predicated region
        $region93: #{tpu_custom_call.1} parent=11 // pred_check
          %p961 = pneg %p574
        $region94: #{tpu_custom_call.1} parent=11 // pred_check_branch
          %963 = sbr.rel (%p961) target = $region96
        $region95: #{tpu_custom_call.1} parent=11 // pred_region
          _
        $region96: #{tpu_custom_call.1} parent=11 // pred_fallthru
          _
        // Predicated region
        $region97: #{tpu_custom_call.1} parent=11 // pred_check
          %p964 = pneg %p595
        $region98: #{tpu_custom_call.1} parent=11 // pred_check_branch
          %966 = sbr.rel (%p964) target = $region100
        $region99: #{tpu_custom_call.1} parent=11 // pred_region
          %s968 = ssub.s32 2048, 2048
          %969 = vsyncadd [#allocation34], %s968
          %s970 = sshll.u32 [#allocation33], 4
          %s971 = int_to_ptr.vmem [resolvable:$true] %s970
          %976 = dma.hbm_to_vmem [thread:$0]  %s47, 2048, %s971, [#allocation34], 256, 256, 16
        $region100: #{tpu_custom_call.1} parent=11 // pred_fallthru
          _
        // Predicated region
        $region101: #{tpu_custom_call.1} parent=11 // pred_check
          %p977 = pneg %p616
        $region102: #{tpu_custom_call.1} parent=11 // pred_check_branch
          %979 = sbr.rel (%p977) target = $region104
        $region103: #{tpu_custom_call.1} parent=11 // pred_region
          _
        $region104: #{tpu_custom_call.1} parent=11 // pred_fallthru
          _
        // Predicated region
        $region105: #{tpu_custom_call.1} parent=11 // pred_check
          %p980 = pneg %p637
        $region106: #{tpu_custom_call.1} parent=11 // pred_check_branch
          %982 = sbr.rel (%p980) target = $region108
        $region107: #{tpu_custom_call.1} parent=11 // pred_region
          _
        $region108: #{tpu_custom_call.1} parent=11 // pred_fallthru
          _
        // Predicated region
        $region109: #{tpu_custom_call.1} parent=11 // pred_check
          %p983 = pneg %p658
        $region110: #{tpu_custom_call.1} parent=11 // pred_check_branch
          %985 = sbr.rel (%p983) target = $region112
        $region111: #{tpu_custom_call.1} parent=11 // pred_region
          _
        $region112: #{tpu_custom_call.1} parent=11 // pred_fallthru
          _
        // Predicated region
        $region113: #{tpu_custom_call.1} parent=11 // pred_check
          %p986 = pneg %p679
        $region114: #{tpu_custom_call.1} parent=11 // pred_check_branch
          %988 = sbr.rel (%p986) target = $region116
        $region115: #{tpu_custom_call.1} parent=11 // pred_region
          %s990 = ssub.s32 512, 512
          %991 = vsyncadd [#allocation34], %s990
          %s992 = sshll.u32 [#allocation35], 4
          %s993 = int_to_ptr.vmem [resolvable:$true] %s992
          %998 = dma.hbm_to_vmem [thread:$0]  %s55, 512, %s993, [#allocation34], 64, 64, 4
        $region116: #{tpu_custom_call.1} parent=11 // pred_fallthru
          _
        // Predicated region
        $region117: #{tpu_custom_call.1} parent=11 // pred_check
          %p999 = pneg %p700
        $region118: #{tpu_custom_call.1} parent=11 // pred_check_branch
          %1001 = sbr.rel (%p999) target = $region120
        $region119: #{tpu_custom_call.1} parent=11 // pred_region
          _
        $region120: #{tpu_custom_call.1} parent=11 // pred_fallthru
          _
      $region12: #{tpu_custom_call.1} parent=5 // pred_fallthru
        _
      %p1002 = scmp.lt.s32.totalorder %s81, 2
      // Predicated region
      $region121: #{tpu_custom_call.1} parent=5 // pred_check
        %p1003 = pneg %p1002
      $region122: #{tpu_custom_call.1} parent=5 // pred_check_branch
        %1005 = sbr.rel (%p1003) target = $region124
      $region123: #{tpu_custom_call.1} parent=5 // pred_region
        // Predicated region
        $region125: #{tpu_custom_call.1} parent=123 // pred_check
          %p1006 = pneg %p101
        $region126: #{tpu_custom_call.1} parent=123 // pred_check_branch
          %1008 = sbr.rel (%p1006) target = $region128
        $region127: #{tpu_custom_call.1} parent=123 // pred_region
          %p1009 = scmp.lt.s32.totalorder %s81, 1
          %s1010 = scalar_select %p1009, %s81, 1
          %s1011 = smul.addr %s1010, 8
          %s1012 = smul.addr %s1011, 8
          %s1013 = scalar_lea.vmem %s1, %s1012
        $region128: #{tpu_custom_call.1} parent=123 // pred_fallthru
          _
        // Predicated region
        $region129: #{tpu_custom_call.1} parent=123 // pred_check
          %p1014 = pneg %p127
        $region130: #{tpu_custom_call.1} parent=123 // pred_check_branch
          %1016 = sbr.rel (%p1014) target = $region132
        $region131: #{tpu_custom_call.1} parent=123 // pred_region
          %s1017 = sand.u32 %s117, 1
          %s1018 = scalar_lea.sflag [#allocation4], %s1017
          %s1019 = sand.u32 %s117, 1
          %s1020 = smul.addr %s1019, 8
          %s1021 = scalar_lea.vmem [#allocation3], %s1020
          %s1023 = ssub.s32 128, 128
          %1024 = vsyncadd %s1018, %s1023
          %s1025 = smul.addr %s81, 128
          %s1026 = scalar_lea.hbm %s3, %s1025
          %s1028 = sshll.u32 %s1021, 4
          %s1029 = int_to_ptr.vmem [resolvable:$true] %s1028
          %1031 = dma.hbm_to_vmem [thread:$0]  %s1026, 128, %s1029, %s1018
        $region132: #{tpu_custom_call.1} parent=123 // pred_fallthru
          _
      $region124: #{tpu_custom_call.1} parent=5 // pred_fallthru
        _
      %p1032 = scmp.le.s32.totalorder 1, %s81
      %p1033 = scmp.lt.s32.totalorder %s81, 3
      %p1034 = pnand %p1032, %p1033
      %p1035 = pneg %p1034
      // Predicated region
      $region133: #{tpu_custom_call.1} parent=5 // pred_check
        _
      $region134: #{tpu_custom_call.1} parent=5 // pred_check_branch
        %1037 = sbr.rel (%p1034) target = $region136
      $region135: #{tpu_custom_call.1} parent=5 // pred_region
        %s1038 = ssub.s32 %s81, 1
        %s1039 = sand.u32 %s120, 1
        %s1040 = scalar_lea.sflag [#allocation4], %s1039
        %s1041 = sand.u32 %s120, 1
        %s1042 = smul.addr %s1041, 8
        %s1043 = scalar_lea.vmem [#allocation3], %s1042
        // Predicated region
        $region137: #{tpu_custom_call.1} parent=135 // pred_check
          %p1044 = pneg %p133
        $region138: #{tpu_custom_call.1} parent=135 // pred_check_branch
          %1046 = sbr.rel (%p1044) target = $region140
        $region139: #{tpu_custom_call.1} parent=135 // pred_region
          %1047 = dma.done %s1040, 128
        $region140: #{tpu_custom_call.1} parent=135 // pred_fallthru
          _
        // Predicated region
        $region141: #{tpu_custom_call.1} parent=135 // pred_check
          %p1048 = pneg %p175
        $region142: #{tpu_custom_call.1} parent=135 // pred_check_branch
          %1050 = sbr.rel (%p1048) target = $region144
        $region143: #{tpu_custom_call.1} parent=135 // pred_region
          %1051 = dma.done [#allocation7], 16
        $region144: #{tpu_custom_call.1} parent=135 // pred_fallthru
          _
        // Predicated region
        $region145: #{tpu_custom_call.1} parent=135 // pred_check
          %p1052 = pneg %p196
        $region146: #{tpu_custom_call.1} parent=135 // pred_check_branch
          %1054 = sbr.rel (%p1052) target = $region148
        $region147: #{tpu_custom_call.1} parent=135 // pred_region
          %1055 = dma.done [#allocation7], 16
        $region148: #{tpu_custom_call.1} parent=135 // pred_fallthru
          _
        // Predicated region
        $region149: #{tpu_custom_call.1} parent=135 // pred_check
          %p1056 = pneg %p217
        $region150: #{tpu_custom_call.1} parent=135 // pred_check_branch
          %1058 = sbr.rel (%p1056) target = $region152
        $region151: #{tpu_custom_call.1} parent=135 // pred_region
          %1059 = dma.done [#allocation10], 512
        $region152: #{tpu_custom_call.1} parent=135 // pred_fallthru
          _
        // Predicated region
        $region153: #{tpu_custom_call.1} parent=135 // pred_check
          %p1060 = pneg %p238
        $region154: #{tpu_custom_call.1} parent=135 // pred_check_branch
          %1062 = sbr.rel (%p1060) target = $region156
        $region155: #{tpu_custom_call.1} parent=135 // pred_region
          %1063 = dma.done [#allocation10], 16
        $region156: #{tpu_custom_call.1} parent=135 // pred_fallthru
          _
        // Predicated region
        $region157: #{tpu_custom_call.1} parent=135 // pred_check
          %p1064 = pneg %p259
        $region158: #{tpu_custom_call.1} parent=135 // pred_check_branch
          %1066 = sbr.rel (%p1064) target = $region160
        $region159: #{tpu_custom_call.1} parent=135 // pred_region
          %1067 = dma.done [#allocation13], 16
        $region160: #{tpu_custom_call.1} parent=135 // pred_fallthru
          _
        // Predicated region
        $region161: #{tpu_custom_call.1} parent=135 // pred_check
          %p1068 = pneg %p280
        $region162: #{tpu_custom_call.1} parent=135 // pred_check_branch
          %1070 = sbr.rel (%p1068) target = $region164
        $region163: #{tpu_custom_call.1} parent=135 // pred_region
          %1071 = dma.done [#allocation13], 16
        $region164: #{tpu_custom_call.1} parent=135 // pred_fallthru
          _
        // Predicated region
        $region165: #{tpu_custom_call.1} parent=135 // pred_check
          %p1072 = pneg %p301
        $region166: #{tpu_custom_call.1} parent=135 // pred_check_branch
          %1074 = sbr.rel (%p1072) target = $region168
        $region167: #{tpu_custom_call.1} parent=135 // pred_region
          %1075 = dma.done [#allocation16], 512
        $region168: #{tpu_custom_call.1} parent=135 // pred_fallthru
          _
        // Predicated region
        $region169: #{tpu_custom_call.1} parent=135 // pred_check
          %p1076 = pneg %p322
        $region170: #{tpu_custom_call.1} parent=135 // pred_check_branch
          %1078 = sbr.rel (%p1076) target = $region172
        $region171: #{tpu_custom_call.1} parent=135 // pred_region
          %1079 = dma.done [#allocation16], 512
        $region172: #{tpu_custom_call.1} parent=135 // pred_fallthru
          _
        // Predicated region
        $region173: #{tpu_custom_call.1} parent=135 // pred_check
          %p1080 = pneg %p343
        $region174: #{tpu_custom_call.1} parent=135 // pred_check_branch
          %1082 = sbr.rel (%p1080) target = $region176
        $region175: #{tpu_custom_call.1} parent=135 // pred_region
          %1083 = dma.done [#allocation19], 512
        $region176: #{tpu_custom_call.1} parent=135 // pred_fallthru
          _
        // Predicated region
        $region177: #{tpu_custom_call.1} parent=135 // pred_check
          %p1084 = pneg %p364
        $region178: #{tpu_custom_call.1} parent=135 // pred_check_branch
          %1086 = sbr.rel (%p1084) target = $region180
        $region179: #{tpu_custom_call.1} parent=135 // pred_region
          %1087 = dma.done [#allocation19], 512
        $region180: #{tpu_custom_call.1} parent=135 // pred_fallthru
          _
        // Predicated region
        $region181: #{tpu_custom_call.1} parent=135 // pred_check
          %p1088 = pneg %p385
        $region182: #{tpu_custom_call.1} parent=135 // pred_check_branch
          %1090 = sbr.rel (%p1088) target = $region184
        $region183: #{tpu_custom_call.1} parent=135 // pred_region
          %1091 = dma.done [#allocation22], 16
        $region184: #{tpu_custom_call.1} parent=135 // pred_fallthru
          _
        // Predicated region
        $region185: #{tpu_custom_call.1} parent=135 // pred_check
          %p1092 = pneg %p406
        $region186: #{tpu_custom_call.1} parent=135 // pred_check_branch
          %1094 = sbr.rel (%p1092) target = $region188
        $region187: #{tpu_custom_call.1} parent=135 // pred_region
          %1095 = dma.done [#allocation22], 16
        $region188: #{tpu_custom_call.1} parent=135 // pred_fallthru
          _
        // Predicated region
        $region189: #{tpu_custom_call.1} parent=135 // pred_check
          %p1096 = pneg %p427
        $region190: #{tpu_custom_call.1} parent=135 // pred_check_branch
          %1098 = sbr.rel (%p1096) target = $region192
        $region191: #{tpu_custom_call.1} parent=135 // pred_region
          %1099 = dma.done [#allocation25], 16
        $region192: #{tpu_custom_call.1} parent=135 // pred_fallthru
          _
        // Predicated region
        $region193: #{tpu_custom_call.1} parent=135 // pred_check
          %p1100 = pneg %p448
        $region194: #{tpu_custom_call.1} parent=135 // pred_check_branch
          %1102 = sbr.rel (%p1100) target = $region196
        $region195: #{tpu_custom_call.1} parent=135 // pred_region
          %1103 = dma.done [#allocation25], 512
        $region196: #{tpu_custom_call.1} parent=135 // pred_fallthru
          _
        // Predicated region
        $region197: #{tpu_custom_call.1} parent=135 // pred_check
          %p1104 = pneg %p469
        $region198: #{tpu_custom_call.1} parent=135 // pred_check_branch
          %1106 = sbr.rel (%p1104) target = $region200
        $region199: #{tpu_custom_call.1} parent=135 // pred_region
          %1107 = dma.done [#allocation28], 256
        $region200: #{tpu_custom_call.1} parent=135 // pred_fallthru
          _
        // Predicated region
        $region201: #{tpu_custom_call.1} parent=135 // pred_check
          %p1108 = pneg %p490
        $region202: #{tpu_custom_call.1} parent=135 // pred_check_branch
          %1110 = sbr.rel (%p1108) target = $region204
        $region203: #{tpu_custom_call.1} parent=135 // pred_region
          %1111 = dma.done [#allocation28], 256
        $region204: #{tpu_custom_call.1} parent=135 // pred_fallthru
          _
        // Predicated region
        $region205: #{tpu_custom_call.1} parent=135 // pred_check
          %p1112 = pneg %p532
        $region206: #{tpu_custom_call.1} parent=135 // pred_check_branch
          %1114 = sbr.rel (%p1112) target = $region208
        $region207: #{tpu_custom_call.1} parent=135 // pred_region
          %1115 = dma.done [#allocation31], 16
        $region208: #{tpu_custom_call.1} parent=135 // pred_fallthru
          _
        // Predicated region
        $region209: #{tpu_custom_call.1} parent=135 // pred_check
          %p1116 = pneg %p553
        $region210: #{tpu_custom_call.1} parent=135 // pred_check_branch
          %1118 = sbr.rel (%p1116) target = $region212
        $region211: #{tpu_custom_call.1} parent=135 // pred_region
          %1119 = dma.done [#allocation31], 16
        $region212: #{tpu_custom_call.1} parent=135 // pred_fallthru
          _
        // Predicated region
        $region213: #{tpu_custom_call.1} parent=135 // pred_check
          %p1120 = pneg %p595
        $region214: #{tpu_custom_call.1} parent=135 // pred_check_branch
          %1122 = sbr.rel (%p1120) target = $region216
        $region215: #{tpu_custom_call.1} parent=135 // pred_region
          %1123 = dma.done [#allocation34], 2048
        $region216: #{tpu_custom_call.1} parent=135 // pred_fallthru
          _
        // Predicated region
        $region217: #{tpu_custom_call.1} parent=135 // pred_check
          %p1124 = pneg %p679
        $region218: #{tpu_custom_call.1} parent=135 // pred_check_branch
          %1126 = sbr.rel (%p1124) target = $region220
        $region219: #{tpu_custom_call.1} parent=135 // pred_region
          %1127 = dma.done [#allocation34], 512
        $region220: #{tpu_custom_call.1} parent=135 // pred_fallthru
          _
        %p1128 = scmp.lt.s32.totalorder %s86, 1
        %s1129 = scalar_select %p1128, %s86, 1
        %s1130 = smul.addr %s1129, 8
        %s1131 = smul.addr %s1130, 8
        %s1132 = scalar_lea.vmem %s1, %s1131
        %p1133 = pneg %p107
        %p1134 = pneg %p104
        %s1135 = sand.u32 %s120, 1
        %s1136 = scalar_lea.sflag [#allocation4], %s1135
        %s1137 = sand.u32 %s120, 1
        %s1138 = smul.addr %s1137, 8
        %s1139 = scalar_lea.vmem [#allocation3], %s1138
        %p1140 = pneg %p133
        %p1141 = pneg %p130
        %p1142 = pneg %p154
        %p1143 = pneg %p151
        %p1144 = pneg %p175
        %p1145 = pneg %p172
        %p1146 = pneg %p196
        %p1147 = pneg %p193
        %p1148 = pneg %p217
        %p1149 = pneg %p214
        %p1150 = pneg %p238
        %p1151 = pneg %p235
        %p1152 = pneg %p259
        %p1153 = pneg %p256
        %p1154 = pneg %p280
        %p1155 = pneg %p277
        %p1156 = pneg %p301
        %p1157 = pneg %p298
        %p1158 = pneg %p322
        %p1159 = pneg %p319
        %p1160 = pneg %p343
        %p1161 = pneg %p340
        %p1162 = pneg %p364
        %p1163 = pneg %p361
        %p1164 = pneg %p385
        %p1165 = pneg %p382
        %p1166 = pneg %p406
        %p1167 = pneg %p403
        %p1168 = pneg %p427
        %p1169 = pneg %p424
        %p1170 = pneg %p448
        %p1171 = pneg %p445
        %p1172 = pneg %p469
        %p1173 = pneg %p466
        %p1174 = pneg %p490
        %p1175 = pneg %p487
        %p1176 = pneg %p511
        %p1177 = pneg %p508
        %p1178 = pneg %p532
        %p1179 = pneg %p529
        %p1180 = pneg %p553
        %p1181 = pneg %p550
        %p1182 = pneg %p574
        %p1183 = pneg %p571
        %p1184 = pneg %p595
        %p1185 = pneg %p592
        %p1186 = pneg %p616
        %p1187 = pneg %p613
        %p1188 = pneg %p637
        %p1189 = pneg %p634
        %p1190 = pneg %p658
        %p1191 = pneg %p655
        %p1192 = pneg %p679
        %p1193 = pneg %p676
        %p1194 = pneg %p700
        %p1195 = pneg %p697
        %p1196 = pneg %p726
        %p1197 = pneg %p723
        %s1198 = sand.u32 %s713, 1
        %s1199 = scalar_lea.sflag [#allocation5], %s1198
        %s1200 = sand.u32 %s713, 1
        %s1201 = smul.addr %s1200, 64
        %s1202 = scalar_lea.vmem [#allocation36], %s1201
        %p1203 = scmp.lt.s32.totalorder %s86, 1
        %s1204 = scalar_select %p1203, %s86, 1
        %s1205 = smul.addr %s1204, 8
        %s1206 = smul.addr %s1205, 8
        %s1207 = scalar_lea.vmem %s1, %s1206
        %v1209 = vld [vmem:[%s1207] sm:$0xff]
        %v1210 = vld [vmem:[%s1207 + $0x8] sm:$0xff]
        %v1211 = vld [vmem:[%s1207 + $0x10] sm:$0xff]
        %v1212 = vld [vmem:[%s1207 + $0x18] sm:$0xff]
        %v1213 = vld [vmem:[%s1207 + $0x20] sm:$0xff]
        %v1214 = vld [vmem:[%s1207 + $0x28] sm:$0xff]
        %v1215 = vld [vmem:[%s1207 + $0x30] sm:$0xff]
        %v1216 = vld [vmem:[%s1207 + $0x38] sm:$0xff]
        %v1217 = vld [vmem:[%s1043] sm:$0xff]
        %v1218 = vld [vmem:[%s5] sm:$0xff]
        %v1219 = vld [vmem:[%s5 + $0x8] sm:$0xff]
        %v1220 = vld [vmem:[%s5 + $0x10] sm:$0xff]
        %v1221 = vld [vmem:[%s5 + $0x18] sm:$0xff]
        %v1222 = vld [vmem:[%s5 + $0x20] sm:$0xff]
        %v1223 = vld [vmem:[%s5 + $0x28] sm:$0xff]
        %v1224 = vld [vmem:[%s5 + $0x30] sm:$0xff]
        %v1225 = vld [vmem:[%s5 + $0x38] sm:$0xff]
        %vm1226 = vcmask 523264
        %v1228 = vsel %vm1226, %v1209, 0
        %v1231 = vsel %vm1226, %v1210, 0
        %v1234 = vsel %vm1226, %v1211, 0
        %v1237 = vsel %vm1226, %v1212, 0
        %v1240 = vsel %vm1226, %v1213, 0
        %v1243 = vsel %vm1226, %v1214, 0
        %v1246 = vsel %vm1226, %v1215, 0
        %v1249 = vsel %vm1226, %v1216, 0
        %1251 = vmatprep.subr.mxu0 0.0
        %1252 = vmatpush1.msra.mxu0 0.0
        %1253 = vmatprep.subr.mxu0 0.0
        %1254 = vmatpush1.msra.mxu0 0.0
        %1255 = vmatprep.subr.mxu0 0.0
        %1256 = vmatpush1.msra.mxu0 0.0
        %1257 = vmatprep.subr.mxu0 0.0
        %1258 = vmatpush1.msra.mxu0 0.0
        %1259 = vmatprep.subr.mxu0 0.0
        %1260 = vmatpush1.msra.mxu0 0.0
        %1261 = vmatprep.subr.mxu0 0.0
        %1262 = vmatpush1.msra.mxu0 0.0
        %1263 = vmatprep.subr.mxu0 0.0
        %1264 = vmatpush1.msra.mxu0 0.0
        %1265 = vmatprep.subr.mxu0 0.0
        %1266 = vmatpush1.msra.mxu0 0.0
        %1267 = vmatprep.subr.mxu0 0.0
        %1268 = vmatpush1.msra.mxu0 %v1225
        %1269 = vmatprep.subr.mxu0 0.0
        %1270 = vmatpush1.msra.mxu0 %v1224
        %1271 = vmatprep.subr.mxu0 0.0
        %1272 = vmatpush1.msra.mxu0 %v1223
        %1273 = vmatprep.subr.mxu0 0.0
        %1274 = vmatpush1.msra.mxu0 %v1222
        %1275 = vmatprep.subr.mxu0 0.0
        %1276 = vmatpush1.msra.mxu0 %v1221
        %1277 = vmatprep.subr.mxu0 0.0
        %1278 = vmatpush1.msra.mxu0 %v1220
        %1279 = vmatprep.subr.mxu0 0.0
        %1280 = vmatpush1.msra.mxu0 %v1219
        %1281 = vmatprep.subr.mxu0 0.0
        %1282 = vmatpush1.msra.mxu0 %v1218
        %1283 = vmatprep.subr.mxu0 0.0
        %1284 = vmatpush2.msra.mxu0 0.0
        %1285 = vmatprep.subr.mxu0 0.0
        %1286 = vmatpush2.msra.mxu0 0.0
        %1287 = vmatprep.subr.mxu0 0.0
        %1288 = vmatpush2.msra.mxu0 0.0
        %1289 = vmatprep.subr.mxu0 0.0
        %1290 = vmatpush2.msra.mxu0 0.0
        %1291 = vmatprep.subr.mxu0 0.0
        %1292 = vmatpush2.msra.mxu0 0.0
        %1293 = vmatprep.subr.mxu0 0.0
        %1294 = vmatpush2.msra.mxu0 0.0
        %1295 = vmatprep.subr.mxu0 0.0
        %1296 = vmatpush2.msra.mxu0 0.0
        %1297 = vmatprep.subr.mxu0 0.0
        %1298 = vmatpush2.msra.mxu0 0.0
        %1299 = vmatprep.subr.mxu0 0.0
        %1300 = vmatpush2.msra.mxu0 0.0
        %1301 = vmatprep.subr.mxu0 0.0
        %1302 = vmatpush2.msra.mxu0 0.0
        %1303 = vmatprep.subr.mxu0 0.0
        %1304 = vmatpush2.msra.mxu0 0.0
        %1305 = vmatprep.subr.mxu0 0.0
        %1306 = vmatpush2.msra.mxu0 0.0
        %1307 = vmatprep.subr.mxu0 0.0
        %1308 = vmatpush2.msra.mxu0 0.0
        %1309 = vmatprep.subr.mxu0 0.0
        %1310 = vmatpush2.msra.mxu0 0.0
        %1311 = vmatprep.subr.mxu0 0.0
        %1312 = vmatpush2.msra.mxu0 0.0
        %1313 = vmatprep.subr.mxu0 0.0
        %1314 = vmatpush2.msra.mxu0 0.0
        %1315 = vmatprep.mubr.f32.mxu0 0.0
        %1316 = vmatmul.mubr.f32.gmra.mxu0 %v1228
        %v1317 = vpop.f32.mrf.mxu0
        %v1318 = vadd.f32 0.0, %v1317
        %v1319 = vpop.f32.mrf.mxu0
        %1320 = vmatprep.mubr.f32.mxu0 0.0
        %1321 = vmatmul.mubr.f32.gmra.mxu0 %v1231
        %v1322 = vpop.f32.mrf.mxu0
        %v1323 = vadd.f32 0.0, %v1322
        %v1324 = vpop.f32.mrf.mxu0
        %1325 = vmatprep.mubr.f32.mxu0 0.0
        %1326 = vmatmul.mubr.f32.gmra.mxu0 %v1234
        %v1327 = vpop.f32.mrf.mxu0
        %v1328 = vadd.f32 0.0, %v1327
        %v1329 = vpop.f32.mrf.mxu0
        %1330 = vmatprep.mubr.f32.mxu0 0.0
        %1331 = vmatmul.mubr.f32.gmra.mxu0 %v1237
        %v1332 = vpop.f32.mrf.mxu0
        %v1333 = vadd.f32 0.0, %v1332
        %v1334 = vpop.f32.mrf.mxu0
        %1335 = vmatprep.mubr.f32.mxu0 0.0
        %1336 = vmatmul.mubr.f32.gmra.mxu0 %v1240
        %v1337 = vpop.f32.mrf.mxu0
        %v1338 = vadd.f32 0.0, %v1337
        %v1339 = vpop.f32.mrf.mxu0
        %1340 = vmatprep.mubr.f32.mxu0 0.0
        %1341 = vmatmul.mubr.f32.gmra.mxu0 %v1243
        %v1342 = vpop.f32.mrf.mxu0
        %v1343 = vadd.f32 0.0, %v1342
        %v1344 = vpop.f32.mrf.mxu0
        %1345 = vmatprep.mubr.f32.mxu0 0.0
        %1346 = vmatmul.mubr.f32.gmra.mxu0 %v1246
        %v1347 = vpop.f32.mrf.mxu0
        %v1348 = vadd.f32 0.0, %v1347
        %v1349 = vpop.f32.mrf.mxu0
        %1350 = vmatprep.mubr.f32.mxu0 0.0
        %1351 = vmatmul.mubr.f32.gmra.mxu0 %v1249
        %v1352 = vpop.f32.mrf.mxu0
        %v1353 = vadd.f32 0.0, %v1352
        %v1354 = vpop.f32.mrf.mxu0
        %1355 = vdwg.mxu0
        %v1356 = vmul.f32 %v1209, %v1209
        %v1357 = vmul.f32 %v1210, %v1210
        %v1358 = vmul.f32 %v1211, %v1211
        %v1359 = vmul.f32 %v1212, %v1212
        %v1360 = vmul.f32 %v1213, %v1213
        %v1361 = vmul.f32 %v1214, %v1214
        %v1362 = vmul.f32 %v1215, %v1215
        %v1363 = vmul.f32 %v1216, %v1216
        %v1365 = vsel %vm1226, %v1356, 0
        %v1368 = vsel %vm1226, %v1357, 0
        %v1371 = vsel %vm1226, %v1358, 0
        %v1374 = vsel %vm1226, %v1359, 0
        %v1377 = vsel %vm1226, %v1360, 0
        %v1380 = vsel %vm1226, %v1361, 0
        %v1383 = vsel %vm1226, %v1362, 0
        %v1386 = vsel %vm1226, %v1363, 0
        %1388 = vmatprep.subr.mxu0 0.0
        %1389 = vmatpush1.msra.mxu0 0.0
        %1390 = vmatprep.subr.mxu0 0.0
        %1391 = vmatpush1.msra.mxu0 0.0
        %1392 = vmatprep.subr.mxu0 0.0
        %1393 = vmatpush1.msra.mxu0 0.0
        %1394 = vmatprep.subr.mxu0 0.0
        %1395 = vmatpush1.msra.mxu0 0.0
        %1396 = vmatprep.subr.mxu0 0.0
        %1397 = vmatpush1.msra.mxu0 0.0
        %1398 = vmatprep.subr.mxu0 0.0
        %1399 = vmatpush1.msra.mxu0 0.0
        %1400 = vmatprep.subr.mxu0 0.0
        %1401 = vmatpush1.msra.mxu0 0.0
        %1402 = vmatprep.subr.mxu0 0.0
        %1403 = vmatpush1.msra.mxu0 0.0
        %1404 = vmatprep.subr.mxu0 0.0
        %1405 = vmatpush1.msra.mxu0 %v1225
        %1406 = vmatprep.subr.mxu0 0.0
        %1407 = vmatpush1.msra.mxu0 %v1224
        %1408 = vmatprep.subr.mxu0 0.0
        %1409 = vmatpush1.msra.mxu0 %v1223
        %1410 = vmatprep.subr.mxu0 0.0
        %1411 = vmatpush1.msra.mxu0 %v1222
        %1412 = vmatprep.subr.mxu0 0.0
        %1413 = vmatpush1.msra.mxu0 %v1221
        %1414 = vmatprep.subr.mxu0 0.0
        %1415 = vmatpush1.msra.mxu0 %v1220
        %1416 = vmatprep.subr.mxu0 0.0
        %1417 = vmatpush1.msra.mxu0 %v1219
        %1418 = vmatprep.subr.mxu0 0.0
        %1419 = vmatpush1.msra.mxu0 %v1218
        %1420 = vmatprep.subr.mxu0 0.0
        %1421 = vmatpush2.msra.mxu0 0.0
        %1422 = vmatprep.subr.mxu0 0.0
        %1423 = vmatpush2.msra.mxu0 0.0
        %1424 = vmatprep.subr.mxu0 0.0
        %1425 = vmatpush2.msra.mxu0 0.0
        %1426 = vmatprep.subr.mxu0 0.0
        %1427 = vmatpush2.msra.mxu0 0.0
        %1428 = vmatprep.subr.mxu0 0.0
        %1429 = vmatpush2.msra.mxu0 0.0
        %1430 = vmatprep.subr.mxu0 0.0
        %1431 = vmatpush2.msra.mxu0 0.0
        %1432 = vmatprep.subr.mxu0 0.0
        %1433 = vmatpush2.msra.mxu0 0.0
        %1434 = vmatprep.subr.mxu0 0.0
        %1435 = vmatpush2.msra.mxu0 0.0
        %1436 = vmatprep.subr.mxu0 0.0
        %1437 = vmatpush2.msra.mxu0 0.0
        %1438 = vmatprep.subr.mxu0 0.0
        %1439 = vmatpush2.msra.mxu0 0.0
        %1440 = vmatprep.subr.mxu0 0.0
        %1441 = vmatpush2.msra.mxu0 0.0
        %1442 = vmatprep.subr.mxu0 0.0
        %1443 = vmatpush2.msra.mxu0 0.0
        %1444 = vmatprep.subr.mxu0 0.0
        %1445 = vmatpush2.msra.mxu0 0.0
        %1446 = vmatprep.subr.mxu0 0.0
        %1447 = vmatpush2.msra.mxu0 0.0
        %1448 = vmatprep.subr.mxu0 0.0
        %1449 = vmatpush2.msra.mxu0 0.0
        %1450 = vmatprep.subr.mxu0 0.0
        %1451 = vmatpush2.msra.mxu0 0.0
        %1452 = vmatprep.mubr.f32.mxu0 0.0
        %1453 = vmatmul.mubr.f32.gmra.mxu0 %v1365
        %v1454 = vpop.f32.mrf.mxu0
        %v1455 = vadd.f32 0.0, %v1454
        %v1456 = vpop.f32.mrf.mxu0
        %1457 = vmatprep.mubr.f32.mxu0 0.0
        %1458 = vmatmul.mubr.f32.gmra.mxu0 %v1368
        %v1459 = vpop.f32.mrf.mxu0
        %v1460 = vadd.f32 0.0, %v1459
        %v1461 = vpop.f32.mrf.mxu0
        %1462 = vmatprep.mubr.f32.mxu0 0.0
        %1463 = vmatmul.mubr.f32.gmra.mxu0 %v1371
        %v1464 = vpop.f32.mrf.mxu0
        %v1465 = vadd.f32 0.0, %v1464
        %v1466 = vpop.f32.mrf.mxu0
        %1467 = vmatprep.mubr.f32.mxu0 0.0
        %1468 = vmatmul.mubr.f32.gmra.mxu0 %v1374
        %v1469 = vpop.f32.mrf.mxu0
        %v1470 = vadd.f32 0.0, %v1469
        %v1471 = vpop.f32.mrf.mxu0
        %1472 = vmatprep.mubr.f32.mxu0 0.0
        %1473 = vmatmul.mubr.f32.gmra.mxu0 %v1377
        %v1474 = vpop.f32.mrf.mxu0
        %v1475 = vadd.f32 0.0, %v1474
        %v1476 = vpop.f32.mrf.mxu0
        %1477 = vmatprep.mubr.f32.mxu0 0.0
        %1478 = vmatmul.mubr.f32.gmra.mxu0 %v1380
        %v1479 = vpop.f32.mrf.mxu0
        %v1480 = vadd.f32 0.0, %v1479
        %v1481 = vpop.f32.mrf.mxu0
        %1482 = vmatprep.mubr.f32.mxu0 0.0
        %1483 = vmatmul.mubr.f32.gmra.mxu0 %v1383
        %v1484 = vpop.f32.mrf.mxu0
        %v1485 = vadd.f32 0.0, %v1484
        %v1486 = vpop.f32.mrf.mxu0
        %1487 = vmatprep.mubr.f32.mxu0 0.0
        %1488 = vmatmul.mubr.f32.gmra.mxu0 %v1386
        %v1489 = vpop.f32.mrf.mxu0
        %v1490 = vadd.f32 0.0, %v1489
        %v1491 = vpop.f32.mrf.mxu0
        %1492 = vdwg.mxu0
        %v1493 = vsel %vm1226, %v1318, 0.0
        %v1494 = vsel %vm1226, %v1323, 0.0
        %v1495 = vadd.f32 %v1493, %v1494
        %v1496 = vsel %vm1226, %v1328, 0.0
        %v1497 = vadd.f32 %v1495, %v1496
        %v1498 = vsel %vm1226, %v1333, 0.0
        %v1499 = vadd.f32 %v1497, %v1498
        %v1500 = vsel %vm1226, %v1338, 0.0
        %v1501 = vadd.f32 %v1499, %v1500
        %v1502 = vsel %vm1226, %v1343, 0.0
        %v1503 = vadd.f32 %v1501, %v1502
        %v1504 = vsel %vm1226, %v1348, 0.0
        %v1505 = vadd.f32 %v1503, %v1504
        %v1506 = vsel %vm1226, %v1353, 0.0
        %v1507 = vadd.f32 %v1505, %v1506
        %v1508 = vrot.slane %v1507, 4
        %v1509 = vadd.f32 %v1507, %v1508
        %v1510 = vrot.slane %v1509, 2
        %v1511 = vadd.f32 %v1509, %v1510
        %v1512 = vrot.slane %v1511, 1
        %v1513 = vadd.f32 %v1511, %v1512
        %v1514 = vrcp.pop 64.0
        %v1515 = vmul.f32 %v1513, %v1514
        %v1516 = vsel %vm1226, %v1455, 0.0
        %v1517 = vsel %vm1226, %v1460, 0.0
        %v1518 = vadd.f32 %v1516, %v1517
        %v1519 = vsel %vm1226, %v1465, 0.0
        %v1520 = vadd.f32 %v1518, %v1519
        %v1521 = vsel %vm1226, %v1470, 0.0
        %v1522 = vadd.f32 %v1520, %v1521
        %v1523 = vsel %vm1226, %v1475, 0.0
        %v1524 = vadd.f32 %v1522, %v1523
        %v1525 = vsel %vm1226, %v1480, 0.0
        %v1526 = vadd.f32 %v1524, %v1525
        %v1527 = vsel %vm1226, %v1485, 0.0
        %v1528 = vadd.f32 %v1526, %v1527
        %v1529 = vsel %vm1226, %v1490, 0.0
        %v1530 = vadd.f32 %v1528, %v1529
        %v1531 = vrot.slane %v1530, 4
        %v1532 = vadd.f32 %v1530, %v1531
        %v1533 = vrot.slane %v1532, 2
        %v1534 = vadd.f32 %v1532, %v1533
        %v1535 = vrot.slane %v1534, 1
        %v1536 = vadd.f32 %v1534, %v1535
        %v1537 = vmul.f32 %v1536, %v1514
        %v1538 = vmul.f32 %v1515, %v1515
        %v1539 = vsub.f32 %v1537, %v1538
        %v1540 = vsub.f32 %v1209, %v1515
        %v1541 = vsub.f32 %v1210, %v1515
        %v1542 = vsub.f32 %v1211, %v1515
        %v1543 = vsub.f32 %v1212, %v1515
        %v1544 = vsub.f32 %v1213, %v1515
        %v1545 = vsub.f32 %v1214, %v1515
        %v1546 = vsub.f32 %v1215, %v1515
        %v1547 = vsub.f32 %v1216, %v1515
        %v1548 = vadd.f32 %v1539, 1e-06
        %v1549 = vrsqrt.pop %v1548
        %v1550 = vmul.f32 %v1540, %v1549
        %v1551 = vmul.f32 %v1541, %v1549
        %v1552 = vmul.f32 %v1542, %v1549
        %v1553 = vmul.f32 %v1543, %v1549
        %v1554 = vmul.f32 %v1544, %v1549
        %v1555 = vmul.f32 %v1545, %v1549
        %v1556 = vmul.f32 %v1546, %v1549
        %v1557 = vmul.f32 %v1547, %v1549
        %v1558 = vld [vmem:[#allocation6] sm:$0x1]
        %v1560 = vlaneseq
        %v1561 = vshrl.u32 %v1560, 7
        %v1562 = vsub.s32 0, %v1561
        %v1563 = vrot.slane %v1558, %v1562
        %v1565 = vmul.f32 %v1550, %v1563
        %v1566 = vmul.f32 %v1551, %v1563
        %v1567 = vmul.f32 %v1552, %v1563
        %v1568 = vmul.f32 %v1553, %v1563
        %v1569 = vmul.f32 %v1554, %v1563
        %v1570 = vmul.f32 %v1555, %v1563
        %v1571 = vmul.f32 %v1556, %v1563
        %v1572 = vmul.f32 %v1557, %v1563
        %v1573 = vld [vmem:[#allocation8] sm:$0x1]
        %v1575 = vlaneseq
        %v1576 = vshrl.u32 %v1575, 7
        %v1577 = vsub.s32 0, %v1576
        %v1578 = vrot.slane %v1573, %v1577
        %v1580 = vadd.f32 %v1565, %v1578
        %v1581 = vadd.f32 %v1566, %v1578
        %v1582 = vadd.f32 %v1567, %v1578
        %v1583 = vadd.f32 %v1568, %v1578
        %v1584 = vadd.f32 %v1569, %v1578
        %v1585 = vadd.f32 %v1570, %v1578
        %v1586 = vadd.f32 %v1571, %v1578
        %v1587 = vadd.f32 %v1572, %v1578
        %v1588 = vpack.c.bf16 %v1581, %v1580
        %v1589 = vpack.c.bf16 %v1583, %v1582
        %v1590 = vpack.c.bf16 %v1585, %v1584
        %v1591 = vpack.c.bf16 %v1587, %v1586
        %v1592 = vld [vmem:[#allocation9] sm:$0xf]
        %v1593 = vld [vmem:[#allocation9 + $0x4] sm:$0xf]
        %v1594 = vld [vmem:[#allocation9 + $0x8] sm:$0xf]
        %v1595 = vld [vmem:[#allocation9 + $0xc] sm:$0xf]
        %v1596 = vld [vmem:[#allocation9 + $0x10] sm:$0xf]
        %v1597 = vld [vmem:[#allocation9 + $0x14] sm:$0xf]
        %v1598 = vld [vmem:[#allocation9 + $0x18] sm:$0xf]
        %v1599 = vld [vmem:[#allocation9 + $0x1c] sm:$0xf]
        %v1600 = vld [vmem:[#allocation11] sm:$0x1]
        %v1602 = vlaneseq
        %v1603 = vshrl.u32 %v1602, 7
        %v1604 = vsub.s32 0, %v1603
        %v1605 = vrot.slane %v1600, %v1604
        %v1615 = vunpack.c.l.b16 %v1592
        %v1616 = vunpack.c.l.b16 %v1593
        %v1617 = vunpack.c.l.b16 %v1594
        %v1618 = vunpack.c.l.b16 %v1595
        %v1619 = vunpack.c.l.b16 %v1596
        %v1620 = vunpack.c.l.b16 %v1597
        %v1621 = vunpack.c.l.b16 %v1598
        %v1622 = vunpack.c.l.b16 %v1599
        %v1623 = vpack.c.b16 %v1616, %v1615
        %v1624 = vpack.c.b16 %v1618, %v1617
        %v1625 = vpack.c.b16 %v1620, %v1619
        %v1626 = vpack.c.b16 %v1622, %v1621
        %v1632 = vsel %vm1226, %v1588, 0
        %v1635 = vsel %vm1226, %v1589, 0
        %v1638 = vsel %vm1226, %v1590, 0
        %v1641 = vsel %vm1226, %v1591, 0
        %1643 = vmatprep.subr.bf16.mxu0 0
        %1644 = vmatpush1.bf16.msra.mxu0 0
        %1645 = vmatprep.subr.bf16.mxu0 0
        %1646 = vmatpush1.bf16.msra.mxu0 0
        %1647 = vmatprep.subr.bf16.mxu0 0
        %1648 = vmatpush1.bf16.msra.mxu0 0
        %1649 = vmatprep.subr.bf16.mxu0 0
        %1650 = vmatpush1.bf16.msra.mxu0 0
        %1651 = vmatprep.subr.bf16.mxu0 0
        %1652 = vmatpush1.bf16.msra.mxu0 %v1626
        %1653 = vmatprep.subr.bf16.mxu0 0
        %1654 = vmatpush1.bf16.msra.mxu0 %v1625
        %1655 = vmatprep.subr.bf16.mxu0 0
        %1656 = vmatpush1.bf16.msra.mxu0 %v1624
        %1657 = vmatprep.subr.bf16.mxu0 0
        %1658 = vmatpush1.bf16.msra.mxu0 %v1623
        %1659 = vmatprep.subr.bf16.mxu0 0
        %1660 = vmatpush2.bf16.msra.mxu0 0
        %1661 = vmatprep.subr.bf16.mxu0 0
        %1662 = vmatpush2.bf16.msra.mxu0 0
        %1663 = vmatprep.subr.bf16.mxu0 0
        %1664 = vmatpush2.bf16.msra.mxu0 0
        %1665 = vmatprep.subr.bf16.mxu0 0
        %1666 = vmatpush2.bf16.msra.mxu0 0
        %1667 = vmatprep.subr.bf16.mxu0 0
        %1668 = vmatpush2.bf16.msra.mxu0 0
        %1669 = vmatprep.subr.bf16.mxu0 0
        %1670 = vmatpush2.bf16.msra.mxu0 0
        %1671 = vmatprep.subr.bf16.mxu0 0
        %1672 = vmatpush2.bf16.msra.mxu0 0
        %1673 = vmatprep.subr.bf16.mxu0 0
        %1674 = vmatpush2.bf16.msra.mxu0 0
        %1675 = vmatprep.mubr.bf16.mxu0 0
        %1676 = vmatmul.mubr.bf16.gmra.mxu0 %v1632
        %v1677 = vpop.f32.mrf.mxu0
        %v1678 = vadd.f32 %v1605, %v1677
        %v1679 = vpop.f32.mrf.mxu0
        %v1680 = vpop.f32.mrf.mxu0
        %v1681 = vadd.f32 %v1605, %v1680
        %v1682 = vpop.f32.mrf.mxu0
        %1683 = vmatprep.mubr.bf16.mxu0 0
        %1684 = vmatmul.mubr.bf16.gmra.mxu0 %v1635
        %v1685 = vpop.f32.mrf.mxu0
        %v1686 = vadd.f32 %v1605, %v1685
        %v1687 = vpop.f32.mrf.mxu0
        %v1688 = vpop.f32.mrf.mxu0
        %v1689 = vadd.f32 %v1605, %v1688
        %v1690 = vpop.f32.mrf.mxu0
        %1691 = vmatprep.mubr.bf16.mxu0 0
        %1692 = vmatmul.mubr.bf16.gmra.mxu0 %v1638
        %v1693 = vpop.f32.mrf.mxu0
        %v1694 = vadd.f32 %v1605, %v1693
        %v1695 = vpop.f32.mrf.mxu0
        %v1696 = vpop.f32.mrf.mxu0
        %v1697 = vadd.f32 %v1605, %v1696
        %v1698 = vpop.f32.mrf.mxu0
        %1699 = vmatprep.mubr.bf16.mxu0 0
        %1700 = vmatmul.mubr.bf16.gmra.mxu0 %v1641
        %v1701 = vpop.f32.mrf.mxu0
        %v1702 = vadd.f32 %v1605, %v1701
        %v1703 = vpop.f32.mrf.mxu0
        %v1704 = vpop.f32.mrf.mxu0
        %v1705 = vadd.f32 %v1605, %v1704
        %v1706 = vpop.f32.mrf.mxu0
        %1707 = vdwg.mxu0
        %v1708 = vld [vmem:[#allocation12] sm:$0x1]
        %v1709 = vld [vmem:[#allocation14] sm:$0x1]
        %v1710 = vsel %vm1226, %v1678, 0.0
        %1711 = vadd.xlane.f32.xlu0 %v1710
        %v1712 = vpop.xlane.xlu0 %1711
        %v1713 = vsel %vm1226, %v1681, 0.0
        %1714 = vadd.xlane.f32.xlu0 %v1713
        %v1715 = vpop.xlane.xlu0 %1714
        %v1716 = vsel %vm1226, %v1686, 0.0
        %1717 = vadd.xlane.f32.xlu0 %v1716
        %v1718 = vpop.xlane.xlu0 %1717
        %v1719 = vsel %vm1226, %v1689, 0.0
        %1720 = vadd.xlane.f32.xlu0 %v1719
        %v1721 = vpop.xlane.xlu0 %1720
        %v1722 = vsel %vm1226, %v1694, 0.0
        %1723 = vadd.xlane.f32.xlu0 %v1722
        %v1724 = vpop.xlane.xlu0 %1723
        %v1725 = vsel %vm1226, %v1697, 0.0
        %1726 = vadd.xlane.f32.xlu0 %v1725
        %v1727 = vpop.xlane.xlu0 %1726
        %v1728 = vsel %vm1226, %v1702, 0.0
        %1729 = vadd.xlane.f32.xlu0 %v1728
        %v1730 = vpop.xlane.xlu0 %1729
        %v1731 = vsel %vm1226, %v1705, 0.0
        %1732 = vadd.xlane.f32.xlu0 %v1731
        %v1733 = vpop.xlane.xlu0 %1732
        %v1734 = vmul.f32 %v1712, %v1514
        %v1735 = vmul.f32 %v1715, %v1514
        %v1736 = vmul.f32 %v1718, %v1514
        %v1737 = vmul.f32 %v1721, %v1514
        %v1738 = vmul.f32 %v1724, %v1514
        %v1739 = vmul.f32 %v1727, %v1514
        %v1740 = vmul.f32 %v1730, %v1514
        %v1741 = vmul.f32 %v1733, %v1514
        %v1742 = vsub.f32 %v1678, %v1734
        %v1743 = vsub.f32 %v1681, %v1735
        %v1744 = vsub.f32 %v1686, %v1736
        %v1745 = vsub.f32 %v1689, %v1737
        %v1746 = vsub.f32 %v1694, %v1738
        %v1747 = vsub.f32 %v1697, %v1739
        %v1748 = vsub.f32 %v1702, %v1740
        %v1749 = vsub.f32 %v1705, %v1741
        %v1750 = vmul.f32 %v1742, %v1742
        %v1751 = vmul.f32 %v1743, %v1743
        %v1752 = vmul.f32 %v1744, %v1744
        %v1753 = vmul.f32 %v1745, %v1745
        %v1754 = vmul.f32 %v1746, %v1746
        %v1755 = vmul.f32 %v1747, %v1747
        %v1756 = vmul.f32 %v1748, %v1748
        %v1757 = vmul.f32 %v1749, %v1749
        %v1758 = vsel %vm1226, %v1750, 0.0
        %1759 = vadd.xlane.f32.xlu0 %v1758
        %v1760 = vpop.xlane.xlu0 %1759
        %v1761 = vsel %vm1226, %v1751, 0.0
        %1762 = vadd.xlane.f32.xlu0 %v1761
        %v1763 = vpop.xlane.xlu0 %1762
        %v1764 = vsel %vm1226, %v1752, 0.0
        %1765 = vadd.xlane.f32.xlu0 %v1764
        %v1766 = vpop.xlane.xlu0 %1765
        %v1767 = vsel %vm1226, %v1753, 0.0
        %1768 = vadd.xlane.f32.xlu0 %v1767
        %v1769 = vpop.xlane.xlu0 %1768
        %v1770 = vsel %vm1226, %v1754, 0.0
        %1771 = vadd.xlane.f32.xlu0 %v1770
        %v1772 = vpop.xlane.xlu0 %1771
        %v1773 = vsel %vm1226, %v1755, 0.0
        %1774 = vadd.xlane.f32.xlu0 %v1773
        %v1775 = vpop.xlane.xlu0 %1774
        %v1776 = vsel %vm1226, %v1756, 0.0
        %1777 = vadd.xlane.f32.xlu0 %v1776
        %v1778 = vpop.xlane.xlu0 %1777
        %v1779 = vsel %vm1226, %v1757, 0.0
        %1780 = vadd.xlane.f32.xlu0 %v1779
        %v1781 = vpop.xlane.xlu0 %1780
        %v1782 = vmul.f32 %v1760, %v1514
        %v1783 = vmul.f32 %v1763, %v1514
        %v1784 = vmul.f32 %v1766, %v1514
        %v1785 = vmul.f32 %v1769, %v1514
        %v1786 = vmul.f32 %v1772, %v1514
        %v1787 = vmul.f32 %v1775, %v1514
        %v1788 = vmul.f32 %v1778, %v1514
        %v1789 = vmul.f32 %v1781, %v1514
        %v1790 = vadd.f32 %v1782, 1e-05
        %v1791 = vadd.f32 %v1783, 1e-05
        %v1792 = vadd.f32 %v1784, 1e-05
        %v1793 = vadd.f32 %v1785, 1e-05
        %v1794 = vadd.f32 %v1786, 1e-05
        %v1795 = vadd.f32 %v1787, 1e-05
        %v1796 = vadd.f32 %v1788, 1e-05
        %v1797 = vadd.f32 %v1789, 1e-05
        %v1798 = vrsqrt.pop %v1790
        %v1799 = vrsqrt.pop %v1791
        %v1800 = vrsqrt.pop %v1792
        %v1801 = vrsqrt.pop %v1793
        %v1802 = vrsqrt.pop %v1794
        %v1803 = vrsqrt.pop %v1795
        %v1804 = vrsqrt.pop %v1796
        %v1805 = vrsqrt.pop %v1797
        %v1806 = vmul.f32 %v1742, %v1798
        %v1807 = vmul.f32 %v1743, %v1799
        %v1808 = vmul.f32 %v1744, %v1800
        %v1809 = vmul.f32 %v1745, %v1801
        %v1810 = vmul.f32 %v1746, %v1802
        %v1811 = vmul.f32 %v1747, %v1803
        %v1812 = vmul.f32 %v1748, %v1804
        %v1813 = vmul.f32 %v1749, %v1805
        %v1815 = vlaneseq
        %v1816 = vshrl.u32 %v1815, 7
        %v1817 = vsub.s32 0, %v1816
        %v1818 = vrot.slane %v1708, %v1817
        %v1820 = vmul.f32 %v1806, %v1818
        %v1821 = vmul.f32 %v1807, %v1818
        %v1822 = vmul.f32 %v1808, %v1818
        %v1823 = vmul.f32 %v1809, %v1818
        %v1824 = vmul.f32 %v1810, %v1818
        %v1825 = vmul.f32 %v1811, %v1818
        %v1826 = vmul.f32 %v1812, %v1818
        %v1827 = vmul.f32 %v1813, %v1818
        %v1829 = vlaneseq
        %v1830 = vshrl.u32 %v1829, 7
        %v1831 = vsub.s32 0, %v1830
        %v1832 = vrot.slane %v1709, %v1831
        %v1834 = vadd.f32 %v1820, %v1832
        %v1835 = vadd.f32 %v1821, %v1832
        %v1836 = vadd.f32 %v1822, %v1832
        %v1837 = vadd.f32 %v1823, %v1832
        %v1838 = vadd.f32 %v1824, %v1832
        %v1839 = vadd.f32 %v1825, %v1832
        %v1840 = vadd.f32 %v1826, %v1832
        %v1841 = vadd.f32 %v1827, %v1832
        %v1842 = vld [vmem:[#allocation15] sm:$0xf]
        %v1843 = vld [vmem:[#allocation15 + $0x4] sm:$0xf]
        %v1844 = vld [vmem:[#allocation15 + $0x8] sm:$0xf]
        %v1845 = vld [vmem:[#allocation15 + $0xc] sm:$0xf]
        %v1846 = vld [vmem:[#allocation15 + $0x10] sm:$0xf]
        %v1847 = vld [vmem:[#allocation15 + $0x14] sm:$0xf]
        %v1848 = vld [vmem:[#allocation15 + $0x18] sm:$0xf]
        %v1849 = vld [vmem:[#allocation15 + $0x1c] sm:$0xf]
        %v1850 = vld [vmem:[#allocation17] sm:$0xf]
        %v1851 = vld [vmem:[#allocation17 + $0x4] sm:$0xf]
        %v1852 = vld [vmem:[#allocation17 + $0x8] sm:$0xf]
        %v1853 = vld [vmem:[#allocation17 + $0xc] sm:$0xf]
        %v1854 = vld [vmem:[#allocation17 + $0x10] sm:$0xf]
        %v1855 = vld [vmem:[#allocation17 + $0x14] sm:$0xf]
        %v1856 = vld [vmem:[#allocation17 + $0x18] sm:$0xf]
        %v1857 = vld [vmem:[#allocation17 + $0x1c] sm:$0xf]
        %v1858 = vld [vmem:[#allocation18] sm:$0xf]
        %v1859 = vld [vmem:[#allocation18 + $0x4] sm:$0xf]
        %v1860 = vld [vmem:[#allocation18 + $0x8] sm:$0xf]
        %v1861 = vld [vmem:[#allocation18 + $0xc] sm:$0xf]
        %v1862 = vld [vmem:[#allocation18 + $0x10] sm:$0xf]
        %v1863 = vld [vmem:[#allocation18 + $0x14] sm:$0xf]
        %v1864 = vld [vmem:[#allocation18 + $0x18] sm:$0xf]
        %v1865 = vld [vmem:[#allocation18 + $0x1c] sm:$0xf]
        %v1866 = vld [vmem:[#allocation20] sm:$0xf]
        %v1867 = vld [vmem:[#allocation20 + $0x4] sm:$0xf]
        %v1868 = vld [vmem:[#allocation20 + $0x8] sm:$0xf]
        %v1869 = vld [vmem:[#allocation20 + $0xc] sm:$0xf]
        %v1870 = vld [vmem:[#allocation20 + $0x10] sm:$0xf]
        %v1871 = vld [vmem:[#allocation20 + $0x14] sm:$0xf]
        %v1872 = vld [vmem:[#allocation20 + $0x18] sm:$0xf]
        %v1873 = vld [vmem:[#allocation20 + $0x1c] sm:$0xf]
        %v1874 = vld [vmem:[#allocation21] sm:$0x1]
        %v1875 = vpack.c.bf16 %v1835, %v1834
        %v1876 = vpack.c.bf16 %v1837, %v1836
        %v1877 = vpack.c.bf16 %v1839, %v1838
        %v1878 = vpack.c.bf16 %v1841, %v1840
        %v1887 = vunpack.c.l.b16 %v1842
        %v1888 = vunpack.c.l.b16 %v1843
        %v1889 = vunpack.c.l.b16 %v1844
        %v1890 = vunpack.c.l.b16 %v1845
        %v1891 = vunpack.c.l.b16 %v1846
        %v1892 = vunpack.c.l.b16 %v1847
        %v1893 = vunpack.c.l.b16 %v1848
        %v1894 = vunpack.c.l.b16 %v1849
        %v1895 = vpack.c.b16 %v1888, %v1887
        %v1896 = vpack.c.b16 %v1890, %v1889
        %v1897 = vpack.c.b16 %v1892, %v1891
        %v1898 = vpack.c.b16 %v1894, %v1893
        %v1904 = vsel %vm1226, %v1875, 0
        %v1907 = vsel %vm1226, %v1876, 0
        %v1910 = vsel %vm1226, %v1877, 0
        %v1913 = vsel %vm1226, %v1878, 0
        %1915 = vmatprep.subr.bf16.mxu0 0
        %1916 = vmatpush1.bf16.msra.mxu0 0
        %1917 = vmatprep.subr.bf16.mxu0 0
        %1918 = vmatpush1.bf16.msra.mxu0 0
        %1919 = vmatprep.subr.bf16.mxu0 0
        %1920 = vmatpush1.bf16.msra.mxu0 0
        %1921 = vmatprep.subr.bf16.mxu0 0
        %1922 = vmatpush1.bf16.msra.mxu0 0
        %1923 = vmatprep.subr.bf16.mxu0 0
        %1924 = vmatpush1.bf16.msra.mxu0 %v1898
        %1925 = vmatprep.subr.bf16.mxu0 0
        %1926 = vmatpush1.bf16.msra.mxu0 %v1897
        %1927 = vmatprep.subr.bf16.mxu0 0
        %1928 = vmatpush1.bf16.msra.mxu0 %v1896
        %1929 = vmatprep.subr.bf16.mxu0 0
        %1930 = vmatpush1.bf16.msra.mxu0 %v1895
        %1931 = vmatprep.subr.bf16.mxu0 0
        %1932 = vmatpush2.bf16.msra.mxu0 0
        %1933 = vmatprep.subr.bf16.mxu0 0
        %1934 = vmatpush2.bf16.msra.mxu0 0
        %1935 = vmatprep.subr.bf16.mxu0 0
        %1936 = vmatpush2.bf16.msra.mxu0 0
        %1937 = vmatprep.subr.bf16.mxu0 0
        %1938 = vmatpush2.bf16.msra.mxu0 0
        %1939 = vmatprep.subr.bf16.mxu0 0
        %1940 = vmatpush2.bf16.msra.mxu0 0
        %1941 = vmatprep.subr.bf16.mxu0 0
        %1942 = vmatpush2.bf16.msra.mxu0 0
        %1943 = vmatprep.subr.bf16.mxu0 0
        %1944 = vmatpush2.bf16.msra.mxu0 0
        %1945 = vmatprep.subr.bf16.mxu0 0
        %1946 = vmatpush2.bf16.msra.mxu0 0
        %1947 = vmatprep.mubr.bf16.mxu0 0
        %1948 = vmatmul.mubr.bf16.gmra.mxu0 %v1904
        %v1949 = vpop.f32.mrf.mxu0
        %v1950 = vadd.f32 0.0, %v1949
        %v1951 = vpop.f32.mrf.mxu0
        %v1952 = vpop.f32.mrf.mxu0
        %v1953 = vadd.f32 0.0, %v1952
        %v1954 = vpop.f32.mrf.mxu0
        %1955 = vmatprep.mubr.bf16.mxu0 0
        %1956 = vmatmul.mubr.bf16.gmra.mxu0 %v1907
        %v1957 = vpop.f32.mrf.mxu0
        %v1958 = vadd.f32 0.0, %v1957
        %v1959 = vpop.f32.mrf.mxu0
        %v1960 = vpop.f32.mrf.mxu0
        %v1961 = vadd.f32 0.0, %v1960
        %v1962 = vpop.f32.mrf.mxu0
        %1963 = vmatprep.mubr.bf16.mxu0 0
        %1964 = vmatmul.mubr.bf16.gmra.mxu0 %v1910
        %v1965 = vpop.f32.mrf.mxu0
        %v1966 = vadd.f32 0.0, %v1965
        %v1967 = vpop.f32.mrf.mxu0
        %v1968 = vpop.f32.mrf.mxu0
        %v1969 = vadd.f32 0.0, %v1968
        %v1970 = vpop.f32.mrf.mxu0
        %1971 = vmatprep.mubr.bf16.mxu0 0
        %1972 = vmatmul.mubr.bf16.gmra.mxu0 %v1913
        %v1973 = vpop.f32.mrf.mxu0
        %v1974 = vadd.f32 0.0, %v1973
        %v1975 = vpop.f32.mrf.mxu0
        %v1976 = vpop.f32.mrf.mxu0
        %v1977 = vadd.f32 0.0, %v1976
        %v1978 = vpop.f32.mrf.mxu0
        %1979 = vdwg.mxu0
        %v1988 = vunpack.c.l.b16 %v1850
        %v1989 = vunpack.c.l.b16 %v1851
        %v1990 = vunpack.c.l.b16 %v1852
        %v1991 = vunpack.c.l.b16 %v1853
        %v1992 = vunpack.c.l.b16 %v1854
        %v1993 = vunpack.c.l.b16 %v1855
        %v1994 = vunpack.c.l.b16 %v1856
        %v1995 = vunpack.c.l.b16 %v1857
        %v1996 = vpack.c.b16 %v1989, %v1988
        %v1997 = vpack.c.b16 %v1991, %v1990
        %v1998 = vpack.c.b16 %v1993, %v1992
        %v1999 = vpack.c.b16 %v1995, %v1994
        %2004 = vmatprep.subr.bf16.mxu0 0
        %2005 = vmatpush1.bf16.msra.mxu0 0
        %2006 = vmatprep.subr.bf16.mxu0 0
        %2007 = vmatpush1.bf16.msra.mxu0 0
        %2008 = vmatprep.subr.bf16.mxu0 0
        %2009 = vmatpush1.bf16.msra.mxu0 0
        %2010 = vmatprep.subr.bf16.mxu0 0
        %2011 = vmatpush1.bf16.msra.mxu0 0
        %2012 = vmatprep.subr.bf16.mxu0 0
        %2013 = vmatpush1.bf16.msra.mxu0 %v1999
        %2014 = vmatprep.subr.bf16.mxu0 0
        %2015 = vmatpush1.bf16.msra.mxu0 %v1998
        %2016 = vmatprep.subr.bf16.mxu0 0
        %2017 = vmatpush1.bf16.msra.mxu0 %v1997
        %2018 = vmatprep.subr.bf16.mxu0 0
        %2019 = vmatpush1.bf16.msra.mxu0 %v1996
        %2020 = vmatprep.subr.bf16.mxu0 0
        %2021 = vmatpush2.bf16.msra.mxu0 0
        %2022 = vmatprep.subr.bf16.mxu0 0
        %2023 = vmatpush2.bf16.msra.mxu0 0
        %2024 = vmatprep.subr.bf16.mxu0 0
        %2025 = vmatpush2.bf16.msra.mxu0 0
        %2026 = vmatprep.subr.bf16.mxu0 0
        %2027 = vmatpush2.bf16.msra.mxu0 0
        %2028 = vmatprep.subr.bf16.mxu0 0
        %2029 = vmatpush2.bf16.msra.mxu0 0
        %2030 = vmatprep.subr.bf16.mxu0 0
        %2031 = vmatpush2.bf16.msra.mxu0 0
        %2032 = vmatprep.subr.bf16.mxu0 0
        %2033 = vmatpush2.bf16.msra.mxu0 0
        %2034 = vmatprep.subr.bf16.mxu0 0
        %2035 = vmatpush2.bf16.msra.mxu0 0
        %2036 = vmatprep.mubr.bf16.mxu0 0
        %2037 = vmatmul.mubr.bf16.gmra.mxu0 %v1904
        %v2038 = vpop.f32.mrf.mxu0
        %v2039 = vadd.f32 0.0, %v2038
        %v2040 = vpop.f32.mrf.mxu0
        %v2041 = vpop.f32.mrf.mxu0
        %v2042 = vadd.f32 0.0, %v2041
        %v2043 = vpop.f32.mrf.mxu0
        %2044 = vmatprep.mubr.bf16.mxu0 0
        %2045 = vmatmul.mubr.bf16.gmra.mxu0 %v1907
        %v2046 = vpop.f32.mrf.mxu0
        %v2047 = vadd.f32 0.0, %v2046
        %v2048 = vpop.f32.mrf.mxu0
        %v2049 = vpop.f32.mrf.mxu0
        %v2050 = vadd.f32 0.0, %v2049
        %v2051 = vpop.f32.mrf.mxu0
        %2052 = vmatprep.mubr.bf16.mxu0 0
        %2053 = vmatmul.mubr.bf16.gmra.mxu0 %v1910
        %v2054 = vpop.f32.mrf.mxu0
        %v2055 = vadd.f32 0.0, %v2054
        %v2056 = vpop.f32.mrf.mxu0
        %v2057 = vpop.f32.mrf.mxu0
        %v2058 = vadd.f32 0.0, %v2057
        %v2059 = vpop.f32.mrf.mxu0
        %2060 = vmatprep.mubr.bf16.mxu0 0
        %2061 = vmatmul.mubr.bf16.gmra.mxu0 %v1913
        %v2062 = vpop.f32.mrf.mxu0
        %v2063 = vadd.f32 0.0, %v2062
        %v2064 = vpop.f32.mrf.mxu0
        %v2065 = vpop.f32.mrf.mxu0
        %v2066 = vadd.f32 0.0, %v2065
        %v2067 = vpop.f32.mrf.mxu0
        %2068 = vdwg.mxu0
        %v2077 = vunpack.c.l.b16 %v1858
        %v2078 = vunpack.c.l.b16 %v1859
        %v2079 = vunpack.c.l.b16 %v1860
        %v2080 = vunpack.c.l.b16 %v1861
        %v2081 = vunpack.c.l.b16 %v1862
        %v2082 = vunpack.c.l.b16 %v1863
        %v2083 = vunpack.c.l.b16 %v1864
        %v2084 = vunpack.c.l.b16 %v1865
        %v2085 = vpack.c.b16 %v2078, %v2077
        %v2086 = vpack.c.b16 %v2080, %v2079
        %v2087 = vpack.c.b16 %v2082, %v2081
        %v2088 = vpack.c.b16 %v2084, %v2083
        %2093 = vmatprep.subr.bf16.mxu0 0
        %2094 = vmatpush1.bf16.msra.mxu0 0
        %2095 = vmatprep.subr.bf16.mxu0 0
        %2096 = vmatpush1.bf16.msra.mxu0 0
        %2097 = vmatprep.subr.bf16.mxu0 0
        %2098 = vmatpush1.bf16.msra.mxu0 0
        %2099 = vmatprep.subr.bf16.mxu0 0
        %2100 = vmatpush1.bf16.msra.mxu0 0
        %2101 = vmatprep.subr.bf16.mxu0 0
        %2102 = vmatpush1.bf16.msra.mxu0 %v2088
        %2103 = vmatprep.subr.bf16.mxu0 0
        %2104 = vmatpush1.bf16.msra.mxu0 %v2087
        %2105 = vmatprep.subr.bf16.mxu0 0
        %2106 = vmatpush1.bf16.msra.mxu0 %v2086
        %2107 = vmatprep.subr.bf16.mxu0 0
        %2108 = vmatpush1.bf16.msra.mxu0 %v2085
        %2109 = vmatprep.subr.bf16.mxu0 0
        %2110 = vmatpush2.bf16.msra.mxu0 0
        %2111 = vmatprep.subr.bf16.mxu0 0
        %2112 = vmatpush2.bf16.msra.mxu0 0
        %2113 = vmatprep.subr.bf16.mxu0 0
        %2114 = vmatpush2.bf16.msra.mxu0 0
        %2115 = vmatprep.subr.bf16.mxu0 0
        %2116 = vmatpush2.bf16.msra.mxu0 0
        %2117 = vmatprep.subr.bf16.mxu0 0
        %2118 = vmatpush2.bf16.msra.mxu0 0
        %2119 = vmatprep.subr.bf16.mxu0 0
        %2120 = vmatpush2.bf16.msra.mxu0 0
        %2121 = vmatprep.subr.bf16.mxu0 0
        %2122 = vmatpush2.bf16.msra.mxu0 0
        %2123 = vmatprep.subr.bf16.mxu0 0
        %2124 = vmatpush2.bf16.msra.mxu0 0
        %2125 = vmatprep.mubr.bf16.mxu0 0
        %2126 = vmatmul.mubr.bf16.gmra.mxu0 %v1904
        %v2127 = vpop.f32.mrf.mxu0
        %v2128 = vadd.f32 0.0, %v2127
        %v2129 = vpop.f32.mrf.mxu0
        %v2130 = vpop.f32.mrf.mxu0
        %v2131 = vadd.f32 0.0, %v2130
        %v2132 = vpop.f32.mrf.mxu0
        %2133 = vmatprep.mubr.bf16.mxu0 0
        %2134 = vmatmul.mubr.bf16.gmra.mxu0 %v1907
        %v2135 = vpop.f32.mrf.mxu0
        %v2136 = vadd.f32 0.0, %v2135
        %v2137 = vpop.f32.mrf.mxu0
        %v2138 = vpop.f32.mrf.mxu0
        %v2139 = vadd.f32 0.0, %v2138
        %v2140 = vpop.f32.mrf.mxu0
        %2141 = vmatprep.mubr.bf16.mxu0 0
        %2142 = vmatmul.mubr.bf16.gmra.mxu0 %v1910
        %v2143 = vpop.f32.mrf.mxu0
        %v2144 = vadd.f32 0.0, %v2143
        %v2145 = vpop.f32.mrf.mxu0
        %v2146 = vpop.f32.mrf.mxu0
        %v2147 = vadd.f32 0.0, %v2146
        %v2148 = vpop.f32.mrf.mxu0
        %2149 = vmatprep.mubr.bf16.mxu0 0
        %2150 = vmatmul.mubr.bf16.gmra.mxu0 %v1913
        %v2151 = vpop.f32.mrf.mxu0
        %v2152 = vadd.f32 0.0, %v2151
        %v2153 = vpop.f32.mrf.mxu0
        %v2154 = vpop.f32.mrf.mxu0
        %v2155 = vadd.f32 0.0, %v2154
        %v2156 = vpop.f32.mrf.mxu0
        %2157 = vdwg.mxu0
        %v2158 = vmul.f32 %v1950, 0.25
        %v2159 = vmul.f32 %v1953, 0.25
        %v2160 = vmul.f32 %v1958, 0.25
        %v2161 = vmul.f32 %v1961, 0.25
        %v2162 = vmul.f32 %v1966, 0.25
        %v2163 = vmul.f32 %v1969, 0.25
        %v2164 = vmul.f32 %v1974, 0.25
        %v2165 = vmul.f32 %v1977, 0.25
        %v2166 = vpack.c.bf16 %v2159, %v2158
        %v2167 = vpack.c.bf16 %v2161, %v2160
        %v2168 = vpack.c.bf16 %v2163, %v2162
        %v2169 = vpack.c.bf16 %v2165, %v2164
        %v2170 = vpack.c.bf16 %v2042, %v2039
        %v2171 = vpack.c.bf16 %v2050, %v2047
        %v2172 = vpack.c.bf16 %v2058, %v2055
        %v2173 = vpack.c.bf16 %v2066, %v2063
        %v2174 = vpack.c.bf16 %v2131, %v2128
        %v2175 = vpack.c.bf16 %v2139, %v2136
        %v2176 = vpack.c.bf16 %v2147, %v2144
        %v2177 = vpack.c.bf16 %v2155, %v2152
        %vm2178 = vcmask 130048
        %v2180 = vsel %vm2178, %v2166, 0
        %v2183 = vsel %vm2178, %v2167, 0
        %v2186 = vsel %vm2178, %v2168, 0
        %v2189 = vsel %vm2178, %v2169, 0
        %v2192 = vsel %vm2178, %v2170, 0
        %v2195 = vsel %vm2178, %v2171, 0
        %v2198 = vsel %vm2178, %v2172, 0
        %v2201 = vsel %vm2178, %v2173, 0
        %2203 = vmatprep.subr.bf16.mxu0 0
        %2204 = vmatpush1.bf16.xpose.msra.mxu0 0
        %2205 = vmatprep.subr.bf16.mxu0 0
        %2206 = vmatpush1.bf16.xpose.msra.mxu0 0
        %2207 = vmatprep.subr.bf16.mxu0 0
        %2208 = vmatpush1.bf16.xpose.msra.mxu0 0
        %2209 = vmatprep.subr.bf16.mxu0 0
        %2210 = vmatpush1.bf16.xpose.msra.mxu0 0
        %2211 = vmatprep.subr.bf16.mxu0 0
        %2212 = vmatpush1.bf16.xpose.msra.mxu0 %v2201
        %2213 = vmatprep.subr.bf16.mxu0 0
        %2214 = vmatpush1.bf16.xpose.msra.mxu0 %v2198
        %2215 = vmatprep.subr.bf16.mxu0 0
        %2216 = vmatpush1.bf16.xpose.msra.mxu0 %v2195
        %2217 = vmatprep.subr.bf16.mxu0 0
        %2218 = vmatpush1.bf16.xpose.msra.mxu0 %v2192
        %2219 = vmatprep.subr.bf16.mxu0 0
        %2220 = vmatpush2.bf16.xpose.msra.mxu0 0
        %2221 = vmatprep.subr.bf16.mxu0 0
        %2222 = vmatpush2.bf16.xpose.msra.mxu0 0
        %2223 = vmatprep.subr.bf16.mxu0 0
        %2224 = vmatpush2.bf16.xpose.msra.mxu0 0
        %2225 = vmatprep.subr.bf16.mxu0 0
        %2226 = vmatpush2.bf16.xpose.msra.mxu0 0
        %2227 = vmatprep.subr.bf16.mxu0 0
        %2228 = vmatpush2.bf16.xpose.msra.mxu0 0
        %2229 = vmatprep.subr.bf16.mxu0 0
        %2230 = vmatpush2.bf16.xpose.msra.mxu0 0
        %2231 = vmatprep.subr.bf16.mxu0 0
        %2232 = vmatpush2.bf16.xpose.msra.mxu0 0
        %2233 = vmatprep.subr.bf16.mxu0 0
        %2234 = vmatpush2.bf16.xpose.msra.mxu0 0
        %2235 = vmatprep.mubr.bf16.mxu0 0
        %2236 = vmatmul.mubr.bf16.gmra.mxu0 %v2180
        %v2237 = vpop.f32.mrf.mxu0
        %v2238 = vadd.f32 0.0, %v2237
        %v2239 = vpop.f32.mrf.mxu0
        %v2240 = vpop.f32.mrf.mxu0
        %v2241 = vadd.f32 0.0, %v2240
        %v2242 = vpop.f32.mrf.mxu0
        %2243 = vmatprep.mubr.bf16.mxu0 0
        %2244 = vmatmul.mubr.bf16.gmra.mxu0 %v2183
        %v2245 = vpop.f32.mrf.mxu0
        %v2246 = vadd.f32 0.0, %v2245
        %v2247 = vpop.f32.mrf.mxu0
        %v2248 = vpop.f32.mrf.mxu0
        %v2249 = vadd.f32 0.0, %v2248
        %v2250 = vpop.f32.mrf.mxu0
        %2251 = vmatprep.mubr.bf16.mxu0 0
        %2252 = vmatmul.mubr.bf16.gmra.mxu0 %v2186
        %v2253 = vpop.f32.mrf.mxu0
        %v2254 = vadd.f32 0.0, %v2253
        %v2255 = vpop.f32.mrf.mxu0
        %v2256 = vpop.f32.mrf.mxu0
        %v2257 = vadd.f32 0.0, %v2256
        %v2258 = vpop.f32.mrf.mxu0
        %2259 = vmatprep.mubr.bf16.mxu0 0
        %2260 = vmatmul.mubr.bf16.gmra.mxu0 %v2189
        %v2261 = vpop.f32.mrf.mxu0
        %v2262 = vadd.f32 0.0, %v2261
        %v2263 = vpop.f32.mrf.mxu0
        %v2264 = vpop.f32.mrf.mxu0
        %v2265 = vadd.f32 0.0, %v2264
        %v2266 = vpop.f32.mrf.mxu0
        %2267 = vdwg.mxu0
        %v2268 = vsel %vm1226, %v2238, -inf
        %2269 = vmax.xlane.f32.xlu0 %v2268
        %v2270 = vpop.xlane.xlu0 %2269
        %v2271 = vsel %vm1226, %v2241, -inf
        %2272 = vmax.xlane.f32.xlu0 %v2271
        %v2273 = vpop.xlane.xlu0 %2272
        %v2274 = vsel %vm1226, %v2246, -inf
        %2275 = vmax.xlane.f32.xlu0 %v2274
        %v2276 = vpop.xlane.xlu0 %2275
        %v2277 = vsel %vm1226, %v2249, -inf
        %2278 = vmax.xlane.f32.xlu0 %v2277
        %v2279 = vpop.xlane.xlu0 %2278
        %v2280 = vsel %vm1226, %v2254, -inf
        %2281 = vmax.xlane.f32.xlu0 %v2280
        %v2282 = vpop.xlane.xlu0 %2281
        %v2283 = vsel %vm1226, %v2257, -inf
        %2284 = vmax.xlane.f32.xlu0 %v2283
        %v2285 = vpop.xlane.xlu0 %2284
        %v2286 = vsel %vm1226, %v2262, -inf
        %2287 = vmax.xlane.f32.xlu0 %v2286
        %v2288 = vpop.xlane.xlu0 %2287
        %v2289 = vsel %vm1226, %v2265, -inf
        %2290 = vmax.xlane.f32.xlu0 %v2289
        %v2291 = vpop.xlane.xlu0 %2290
        %v2292 = vsub.f32 %v2238, %v2270
        %v2293 = vsub.f32 %v2241, %v2273
        %v2294 = vsub.f32 %v2246, %v2276
        %v2295 = vsub.f32 %v2249, %v2279
        %v2296 = vsub.f32 %v2254, %v2282
        %v2297 = vsub.f32 %v2257, %v2285
        %v2298 = vsub.f32 %v2262, %v2288
        %v2299 = vsub.f32 %v2265, %v2291
        %v2300 = vmul.f32 %v2292, 1.442695
        %v2301 = vpow.pop %v2300
        %v2302 = vmul.f32 %v2293, 1.442695
        %v2303 = vpow.pop %v2302
        %v2304 = vmul.f32 %v2294, 1.442695
        %v2305 = vpow.pop %v2304
        %v2306 = vmul.f32 %v2295, 1.442695
        %v2307 = vpow.pop %v2306
        %v2308 = vmul.f32 %v2296, 1.442695
        %v2309 = vpow.pop %v2308
        %v2310 = vmul.f32 %v2297, 1.442695
        %v2311 = vpow.pop %v2310
        %v2312 = vmul.f32 %v2298, 1.442695
        %v2313 = vpow.pop %v2312
        %v2314 = vmul.f32 %v2299, 1.442695
        %v2315 = vpow.pop %v2314
        %v2316 = vsel %vm1226, %v2301, 0.0
        %2317 = vadd.xlane.f32.xlu0 %v2316
        %v2318 = vpop.xlane.xlu0 %2317
        %v2319 = vsel %vm1226, %v2303, 0.0
        %2320 = vadd.xlane.f32.xlu0 %v2319
        %v2321 = vpop.xlane.xlu0 %2320
        %v2322 = vsel %vm1226, %v2305, 0.0
        %2323 = vadd.xlane.f32.xlu0 %v2322
        %v2324 = vpop.xlane.xlu0 %2323
        %v2325 = vsel %vm1226, %v2307, 0.0
        %2326 = vadd.xlane.f32.xlu0 %v2325
        %v2327 = vpop.xlane.xlu0 %2326
        %v2328 = vsel %vm1226, %v2309, 0.0
        %2329 = vadd.xlane.f32.xlu0 %v2328
        %v2330 = vpop.xlane.xlu0 %2329
        %v2331 = vsel %vm1226, %v2311, 0.0
        %2332 = vadd.xlane.f32.xlu0 %v2331
        %v2333 = vpop.xlane.xlu0 %2332
        %v2334 = vsel %vm1226, %v2313, 0.0
        %2335 = vadd.xlane.f32.xlu0 %v2334
        %v2336 = vpop.xlane.xlu0 %2335
        %v2337 = vsel %vm1226, %v2315, 0.0
        %2338 = vadd.xlane.f32.xlu0 %v2337
        %v2339 = vpop.xlane.xlu0 %2338
        %v2340 = vrcp.pop %v2318
        %v2341 = vmul.f32 %v2301, %v2340
        %v2342 = vrcp.pop %v2321
        %v2343 = vmul.f32 %v2303, %v2342
        %v2344 = vrcp.pop %v2324
        %v2345 = vmul.f32 %v2305, %v2344
        %v2346 = vrcp.pop %v2327
        %v2347 = vmul.f32 %v2307, %v2346
        %v2348 = vrcp.pop %v2330
        %v2349 = vmul.f32 %v2309, %v2348
        %v2350 = vrcp.pop %v2333
        %v2351 = vmul.f32 %v2311, %v2350
        %v2352 = vrcp.pop %v2336
        %v2353 = vmul.f32 %v2313, %v2352
        %v2354 = vrcp.pop %v2339
        %v2355 = vmul.f32 %v2315, %v2354
        %v2356 = vpack.c.bf16 %v2343, %v2341
        %v2357 = vpack.c.bf16 %v2347, %v2345
        %v2358 = vpack.c.bf16 %v2351, %v2349
        %v2359 = vpack.c.bf16 %v2355, %v2353
        %v2361 = vsel %vm1226, %v2356, 0
        %v2364 = vsel %vm1226, %v2357, 0
        %v2367 = vsel %vm1226, %v2358, 0
        %v2370 = vsel %vm1226, %v2359, 0
        %2372 = vmatprep.subr.bf16.mxu0 0
        %2373 = vmatpush1.bf16.msra.mxu0 0
        %2374 = vmatprep.subr.bf16.mxu0 0
        %2375 = vmatpush1.bf16.msra.mxu0 0
        %2376 = vmatprep.subr.bf16.mxu0 0
        %2377 = vmatpush1.bf16.msra.mxu0 0
        %2378 = vmatprep.subr.bf16.mxu0 0
        %2379 = vmatpush1.bf16.msra.mxu0 0
        %2380 = vmatprep.subr.bf16.mxu0 0
        %2381 = vmatpush1.bf16.msra.mxu0 %v2177
        %2382 = vmatprep.subr.bf16.mxu0 0
        %2383 = vmatpush1.bf16.msra.mxu0 %v2176
        %2384 = vmatprep.subr.bf16.mxu0 0
        %2385 = vmatpush1.bf16.msra.mxu0 %v2175
        %2386 = vmatprep.subr.bf16.mxu0 0
        %2387 = vmatpush1.bf16.msra.mxu0 %v2174
        %2388 = vmatprep.subr.bf16.mxu0 0
        %2389 = vmatpush2.bf16.msra.mxu0 0
        %2390 = vmatprep.subr.bf16.mxu0 0
        %2391 = vmatpush2.bf16.msra.mxu0 0
        %2392 = vmatprep.subr.bf16.mxu0 0
        %2393 = vmatpush2.bf16.msra.mxu0 0
        %2394 = vmatprep.subr.bf16.mxu0 0
        %2395 = vmatpush2.bf16.msra.mxu0 0
        %2396 = vmatprep.subr.bf16.mxu0 0
        %2397 = vmatpush2.bf16.msra.mxu0 0
        %2398 = vmatprep.subr.bf16.mxu0 0
        %2399 = vmatpush2.bf16.msra.mxu0 0
        %2400 = vmatprep.subr.bf16.mxu0 0
        %2401 = vmatpush2.bf16.msra.mxu0 0
        %2402 = vmatprep.subr.bf16.mxu0 0
        %2403 = vmatpush2.bf16.msra.mxu0 0
        %2404 = vmatprep.mubr.bf16.mxu0 0
        %2405 = vmatmul.mubr.bf16.gmra.mxu0 %v2361
        %v2406 = vpop.f32.mrf.mxu0
        %v2407 = vadd.f32 0.0, %v2406
        %v2408 = vpop.f32.mrf.mxu0
        %v2409 = vpop.f32.mrf.mxu0
        %v2410 = vadd.f32 0.0, %v2409
        %v2411 = vpop.f32.mrf.mxu0
        %2412 = vmatprep.mubr.bf16.mxu0 0
        %2413 = vmatmul.mubr.bf16.gmra.mxu0 %v2364
        %v2414 = vpop.f32.mrf.mxu0
        %v2415 = vadd.f32 0.0, %v2414
        %v2416 = vpop.f32.mrf.mxu0
        %v2417 = vpop.f32.mrf.mxu0
        %v2418 = vadd.f32 0.0, %v2417
        %v2419 = vpop.f32.mrf.mxu0
        %2420 = vmatprep.mubr.bf16.mxu0 0
        %2421 = vmatmul.mubr.bf16.gmra.mxu0 %v2367
        %v2422 = vpop.f32.mrf.mxu0
        %v2423 = vadd.f32 0.0, %v2422
        %v2424 = vpop.f32.mrf.mxu0
        %v2425 = vpop.f32.mrf.mxu0
        %v2426 = vadd.f32 0.0, %v2425
        %v2427 = vpop.f32.mrf.mxu0
        %2428 = vmatprep.mubr.bf16.mxu0 0
        %2429 = vmatmul.mubr.bf16.gmra.mxu0 %v2370
        %v2430 = vpop.f32.mrf.mxu0
        %v2431 = vadd.f32 0.0, %v2430
        %v2432 = vpop.f32.mrf.mxu0
        %v2433 = vpop.f32.mrf.mxu0
        %v2434 = vadd.f32 0.0, %v2433
        %v2435 = vpop.f32.mrf.mxu0
        %2436 = vdwg.mxu0
        %2437 = vst.msk [vmem:[#allocation2] sm:$0xff] %vm2178, %v2407
        %2438 = vst.msk [vmem:[#allocation2 + $0x8] sm:$0xff] %vm2178, %v2410
        %2439 = vst.msk [vmem:[#allocation2 + $0x10] sm:$0xff] %vm2178, %v2415
        %2440 = vst.msk [vmem:[#allocation2 + $0x18] sm:$0xff] %vm2178, %v2418
        %2441 = vst.msk [vmem:[#allocation2 + $0x20] sm:$0xff] %vm2178, %v2423
        %2442 = vst.msk [vmem:[#allocation2 + $0x28] sm:$0xff] %vm2178, %v2426
        %2443 = vst.msk [vmem:[#allocation2 + $0x30] sm:$0xff] %vm2178, %v2431
        %2444 = vst.msk [vmem:[#allocation2 + $0x38] sm:$0xff] %vm2178, %v2434
        %2449 = vrot.lane.b32.xlu0 %v2166, 112
        %v2450 = vpop.permute.xlu0 %2449
        %2451 = vrot.lane.b32.xlu0 %v2167, 112
        %v2452 = vpop.permute.xlu0 %2451
        %2453 = vrot.lane.b32.xlu0 %v2168, 112
        %v2454 = vpop.permute.xlu0 %2453
        %2455 = vrot.lane.b32.xlu0 %v2169, 112
        %v2456 = vpop.permute.xlu0 %2455
        %2461 = vrot.lane.b32.xlu0 %v2170, 112
        %v2462 = vpop.permute.xlu0 %2461
        %2463 = vrot.lane.b32.xlu0 %v2171, 112
        %v2464 = vpop.permute.xlu0 %2463
        %2465 = vrot.lane.b32.xlu0 %v2172, 112
        %v2466 = vpop.permute.xlu0 %2465
        %2467 = vrot.lane.b32.xlu0 %v2173, 112
        %v2468 = vpop.permute.xlu0 %2467
        %v2470 = vsel %vm2178, %v2450, 0
        %v2473 = vsel %vm2178, %v2452, 0
        %v2476 = vsel %vm2178, %v2454, 0
        %v2479 = vsel %vm2178, %v2456, 0
        %v2482 = vsel %vm2178, %v2462, 0
        %v2485 = vsel %vm2178, %v2464, 0
        %v2488 = vsel %vm2178, %v2466, 0
        %v2491 = vsel %vm2178, %v2468, 0
        %2493 = vmatprep.subr.bf16.mxu0 0
        %2494 = vmatpush1.bf16.xpose.msra.mxu0 0
        %2495 = vmatprep.subr.bf16.mxu0 0
        %2496 = vmatpush1.bf16.xpose.msra.mxu0 0
        %2497 = vmatprep.subr.bf16.mxu0 0
        %2498 = vmatpush1.bf16.xpose.msra.mxu0 0
        %2499 = vmatprep.subr.bf16.mxu0 0
        %2500 = vmatpush1.bf16.xpose.msra.mxu0 0
        %2501 = vmatprep.subr.bf16.mxu0 0
        %2502 = vmatpush1.bf16.xpose.msra.mxu0 %v2491
        %2503 = vmatprep.subr.bf16.mxu0 0
        %2504 = vmatpush1.bf16.xpose.msra.mxu0 %v2488
        %2505 = vmatprep.subr.bf16.mxu0 0
        %2506 = vmatpush1.bf16.xpose.msra.mxu0 %v2485
        %2507 = vmatprep.subr.bf16.mxu0 0
        %2508 = vmatpush1.bf16.xpose.msra.mxu0 %v2482
        %2509 = vmatprep.subr.bf16.mxu0 0
        %2510 = vmatpush2.bf16.xpose.msra.mxu0 0
        %2511 = vmatprep.subr.bf16.mxu0 0
        %2512 = vmatpush2.bf16.xpose.msra.mxu0 0
        %2513 = vmatprep.subr.bf16.mxu0 0
        %2514 = vmatpush2.bf16.xpose.msra.mxu0 0
        %2515 = vmatprep.subr.bf16.mxu0 0
        %2516 = vmatpush2.bf16.xpose.msra.mxu0 0
        %2517 = vmatprep.subr.bf16.mxu0 0
        %2518 = vmatpush2.bf16.xpose.msra.mxu0 0
        %2519 = vmatprep.subr.bf16.mxu0 0
        %2520 = vmatpush2.bf16.xpose.msra.mxu0 0
        %2521 = vmatprep.subr.bf16.mxu0 0
        %2522 = vmatpush2.bf16.xpose.msra.mxu0 0
        %2523 = vmatprep.subr.bf16.mxu0 0
        %2524 = vmatpush2.bf16.xpose.msra.mxu0 0
        %2525 = vmatprep.mubr.bf16.mxu0 0
        %2526 = vmatmul.mubr.bf16.gmra.mxu0 %v2470
        %v2527 = vpop.f32.mrf.mxu0
        %v2528 = vadd.f32 0.0, %v2527
        %v2529 = vpop.f32.mrf.mxu0
        %v2530 = vpop.f32.mrf.mxu0
        %v2531 = vadd.f32 0.0, %v2530
        %v2532 = vpop.f32.mrf.mxu0
        %2533 = vmatprep.mubr.bf16.mxu0 0
        %2534 = vmatmul.mubr.bf16.gmra.mxu0 %v2473
        %v2535 = vpop.f32.mrf.mxu0
        %v2536 = vadd.f32 0.0, %v2535
        %v2537 = vpop.f32.mrf.mxu0
        %v2538 = vpop.f32.mrf.mxu0
        %v2539 = vadd.f32 0.0, %v2538
        %v2540 = vpop.f32.mrf.mxu0
        %2541 = vmatprep.mubr.bf16.mxu0 0
        %2542 = vmatmul.mubr.bf16.gmra.mxu0 %v2476
        %v2543 = vpop.f32.mrf.mxu0
        %v2544 = vadd.f32 0.0, %v2543
        %v2545 = vpop.f32.mrf.mxu0
        %v2546 = vpop.f32.mrf.mxu0
        %v2547 = vadd.f32 0.0, %v2546
        %v2548 = vpop.f32.mrf.mxu0
        %2549 = vmatprep.mubr.bf16.mxu0 0
        %2550 = vmatmul.mubr.bf16.gmra.mxu0 %v2479
        %v2551 = vpop.f32.mrf.mxu0
        %v2552 = vadd.f32 0.0, %v2551
        %v2553 = vpop.f32.mrf.mxu0
        %v2554 = vpop.f32.mrf.mxu0
        %v2555 = vadd.f32 0.0, %v2554
        %v2556 = vpop.f32.mrf.mxu0
        %2557 = vdwg.mxu0
        %v2558 = vsel %vm1226, %v2528, -inf
        %2559 = vmax.xlane.f32.xlu0 %v2558
        %v2560 = vpop.xlane.xlu0 %2559
        %v2561 = vsel %vm1226, %v2531, -inf
        %2562 = vmax.xlane.f32.xlu0 %v2561
        %v2563 = vpop.xlane.xlu0 %2562
        %v2564 = vsel %vm1226, %v2536, -inf
        %2565 = vmax.xlane.f32.xlu0 %v2564
        %v2566 = vpop.xlane.xlu0 %2565
        %v2567 = vsel %vm1226, %v2539, -inf
        %2568 = vmax.xlane.f32.xlu0 %v2567
        %v2569 = vpop.xlane.xlu0 %2568
        %v2570 = vsel %vm1226, %v2544, -inf
        %2571 = vmax.xlane.f32.xlu0 %v2570
        %v2572 = vpop.xlane.xlu0 %2571
        %v2573 = vsel %vm1226, %v2547, -inf
        %2574 = vmax.xlane.f32.xlu0 %v2573
        %v2575 = vpop.xlane.xlu0 %2574
        %v2576 = vsel %vm1226, %v2552, -inf
        %2577 = vmax.xlane.f32.xlu0 %v2576
        %v2578 = vpop.xlane.xlu0 %2577
        %v2579 = vsel %vm1226, %v2555, -inf
        %2580 = vmax.xlane.f32.xlu0 %v2579
        %v2581 = vpop.xlane.xlu0 %2580
        %v2582 = vsub.f32 %v2528, %v2560
        %v2583 = vsub.f32 %v2531, %v2563
        %v2584 = vsub.f32 %v2536, %v2566
        %v2585 = vsub.f32 %v2539, %v2569
        %v2586 = vsub.f32 %v2544, %v2572
        %v2587 = vsub.f32 %v2547, %v2575
        %v2588 = vsub.f32 %v2552, %v2578
        %v2589 = vsub.f32 %v2555, %v2581
        %v2590 = vmul.f32 %v2582, 1.442695
        %v2591 = vpow.pop %v2590
        %v2592 = vmul.f32 %v2583, 1.442695
        %v2593 = vpow.pop %v2592
        %v2594 = vmul.f32 %v2584, 1.442695
        %v2595 = vpow.pop %v2594
        %v2596 = vmul.f32 %v2585, 1.442695
        %v2597 = vpow.pop %v2596
        %v2598 = vmul.f32 %v2586, 1.442695
        %v2599 = vpow.pop %v2598
        %v2600 = vmul.f32 %v2587, 1.442695
        %v2601 = vpow.pop %v2600
        %v2602 = vmul.f32 %v2588, 1.442695
        %v2603 = vpow.pop %v2602
        %v2604 = vmul.f32 %v2589, 1.442695
        %v2605 = vpow.pop %v2604
        %v2606 = vsel %vm1226, %v2591, 0.0
        %2607 = vadd.xlane.f32.xlu0 %v2606
        %v2608 = vpop.xlane.xlu0 %2607
        %v2609 = vsel %vm1226, %v2593, 0.0
        %2610 = vadd.xlane.f32.xlu0 %v2609
        %v2611 = vpop.xlane.xlu0 %2610
        %v2612 = vsel %vm1226, %v2595, 0.0
        %2613 = vadd.xlane.f32.xlu0 %v2612
        %v2614 = vpop.xlane.xlu0 %2613
        %v2615 = vsel %vm1226, %v2597, 0.0
        %2616 = vadd.xlane.f32.xlu0 %v2615
        %v2617 = vpop.xlane.xlu0 %2616
        %v2618 = vsel %vm1226, %v2599, 0.0
        %2619 = vadd.xlane.f32.xlu0 %v2618
        %v2620 = vpop.xlane.xlu0 %2619
        %v2621 = vsel %vm1226, %v2601, 0.0
        %2622 = vadd.xlane.f32.xlu0 %v2621
        %v2623 = vpop.xlane.xlu0 %2622
        %v2624 = vsel %vm1226, %v2603, 0.0
        %2625 = vadd.xlane.f32.xlu0 %v2624
        %v2626 = vpop.xlane.xlu0 %2625
        %v2627 = vsel %vm1226, %v2605, 0.0
        %2628 = vadd.xlane.f32.xlu0 %v2627
        %v2629 = vpop.xlane.xlu0 %2628
        %v2630 = vrcp.pop %v2608
        %v2631 = vmul.f32 %v2591, %v2630
        %v2632 = vrcp.pop %v2611
        %v2633 = vmul.f32 %v2593, %v2632
        %v2634 = vrcp.pop %v2614
        %v2635 = vmul.f32 %v2595, %v2634
        %v2636 = vrcp.pop %v2617
        %v2637 = vmul.f32 %v2597, %v2636
        %v2638 = vrcp.pop %v2620
        %v2639 = vmul.f32 %v2599, %v2638
        %v2640 = vrcp.pop %v2623
        %v2641 = vmul.f32 %v2601, %v2640
        %v2642 = vrcp.pop %v2626
        %v2643 = vmul.f32 %v2603, %v2642
        %v2644 = vrcp.pop %v2629
        %v2645 = vmul.f32 %v2605, %v2644
        %v2646 = vpack.c.bf16 %v2633, %v2631
        %v2647 = vpack.c.bf16 %v2637, %v2635
        %v2648 = vpack.c.bf16 %v2641, %v2639
        %v2649 = vpack.c.bf16 %v2645, %v2643
        %2654 = vrot.lane.b32.xlu0 %v2174, 112
        %v2655 = vpop.permute.xlu0 %2654
        %2656 = vrot.lane.b32.xlu0 %v2175, 112
        %v2657 = vpop.permute.xlu0 %2656
        %2658 = vrot.lane.b32.xlu0 %v2176, 112
        %v2659 = vpop.permute.xlu0 %2658
        %2660 = vrot.lane.b32.xlu0 %v2177, 112
        %v2661 = vpop.permute.xlu0 %2660
        %v2667 = vsel %vm1226, %v2646, 0
        %v2670 = vsel %vm1226, %v2647, 0
        %v2673 = vsel %vm1226, %v2648, 0
        %v2676 = vsel %vm1226, %v2649, 0
        %2678 = vmatprep.subr.bf16.mxu0 0
        %2679 = vmatpush1.bf16.msra.mxu0 0
        %2680 = vmatprep.subr.bf16.mxu0 0
        %2681 = vmatpush1.bf16.msra.mxu0 0
        %2682 = vmatprep.subr.bf16.mxu0 0
        %2683 = vmatpush1.bf16.msra.mxu0 0
        %2684 = vmatprep.subr.bf16.mxu0 0
        %2685 = vmatpush1.bf16.msra.mxu0 0
        %2686 = vmatprep.subr.bf16.mxu0 0
        %2687 = vmatpush1.bf16.msra.mxu0 %v2661
        %2688 = vmatprep.subr.bf16.mxu0 0
        %2689 = vmatpush1.bf16.msra.mxu0 %v2659
        %2690 = vmatprep.subr.bf16.mxu0 0
        %2691 = vmatpush1.bf16.msra.mxu0 %v2657
        %2692 = vmatprep.subr.bf16.mxu0 0
        %2693 = vmatpush1.bf16.msra.mxu0 %v2655
        %2694 = vmatprep.subr.bf16.mxu0 0
        %2695 = vmatpush2.bf16.msra.mxu0 0
        %2696 = vmatprep.subr.bf16.mxu0 0
        %2697 = vmatpush2.bf16.msra.mxu0 0
        %2698 = vmatprep.subr.bf16.mxu0 0
        %2699 = vmatpush2.bf16.msra.mxu0 0
        %2700 = vmatprep.subr.bf16.mxu0 0
        %2701 = vmatpush2.bf16.msra.mxu0 0
        %2702 = vmatprep.subr.bf16.mxu0 0
        %2703 = vmatpush2.bf16.msra.mxu0 0
        %2704 = vmatprep.subr.bf16.mxu0 0
        %2705 = vmatpush2.bf16.msra.mxu0 0
        %2706 = vmatprep.subr.bf16.mxu0 0
        %2707 = vmatpush2.bf16.msra.mxu0 0
        %2708 = vmatprep.subr.bf16.mxu0 0
        %2709 = vmatpush2.bf16.msra.mxu0 0
        %2710 = vmatprep.mubr.bf16.mxu0 0
        %2711 = vmatmul.mubr.bf16.gmra.mxu0 %v2667
        %v2712 = vpop.f32.mrf.mxu0
        %v2713 = vadd.f32 0.0, %v2712
        %v2714 = vpop.f32.mrf.mxu0
        %v2715 = vpop.f32.mrf.mxu0
        %v2716 = vadd.f32 0.0, %v2715
        %v2717 = vpop.f32.mrf.mxu0
        %2718 = vmatprep.mubr.bf16.mxu0 0
        %2719 = vmatmul.mubr.bf16.gmra.mxu0 %v2670
        %v2720 = vpop.f32.mrf.mxu0
        %v2721 = vadd.f32 0.0, %v2720
        %v2722 = vpop.f32.mrf.mxu0
        %v2723 = vpop.f32.mrf.mxu0
        %v2724 = vadd.f32 0.0, %v2723
        %v2725 = vpop.f32.mrf.mxu0
        %2726 = vmatprep.mubr.bf16.mxu0 0
        %2727 = vmatmul.mubr.bf16.gmra.mxu0 %v2673
        %v2728 = vpop.f32.mrf.mxu0
        %v2729 = vadd.f32 0.0, %v2728
        %v2730 = vpop.f32.mrf.mxu0
        %v2731 = vpop.f32.mrf.mxu0
        %v2732 = vadd.f32 0.0, %v2731
        %v2733 = vpop.f32.mrf.mxu0
        %2734 = vmatprep.mubr.bf16.mxu0 0
        %2735 = vmatmul.mubr.bf16.gmra.mxu0 %v2676
        %v2736 = vpop.f32.mrf.mxu0
        %v2737 = vadd.f32 0.0, %v2736
        %v2738 = vpop.f32.mrf.mxu0
        %v2739 = vpop.f32.mrf.mxu0
        %v2740 = vadd.f32 0.0, %v2739
        %v2741 = vpop.f32.mrf.mxu0
        %2742 = vdwg.mxu0
        %2751 = vrot.lane.b32.xlu0 %v2713, 16
        %v2752 = vpop.permute.xlu0 %2751
        %2753 = vrot.lane.b32.xlu0 %v2716, 16
        %v2754 = vpop.permute.xlu0 %2753
        %2755 = vrot.lane.b32.xlu0 %v2721, 16
        %v2756 = vpop.permute.xlu0 %2755
        %2757 = vrot.lane.b32.xlu0 %v2724, 16
        %v2758 = vpop.permute.xlu0 %2757
        %2759 = vrot.lane.b32.xlu0 %v2729, 16
        %v2760 = vpop.permute.xlu0 %2759
        %2761 = vrot.lane.b32.xlu0 %v2732, 16
        %v2762 = vpop.permute.xlu0 %2761
        %2763 = vrot.lane.b32.xlu0 %v2737, 16
        %v2764 = vpop.permute.xlu0 %2763
        %2765 = vrot.lane.b32.xlu0 %v2740, 16
        %v2766 = vpop.permute.xlu0 %2765
        %vm2775 = vcmask 261248
        %2776 = vst.msk [vmem:[#allocation2] sm:$0xff] %vm2775, %v2752
        %2777 = vst.msk [vmem:[#allocation2 + $0x8] sm:$0xff] %vm2775, %v2754
        %2778 = vst.msk [vmem:[#allocation2 + $0x10] sm:$0xff] %vm2775, %v2756
        %2779 = vst.msk [vmem:[#allocation2 + $0x18] sm:$0xff] %vm2775, %v2758
        %2780 = vst.msk [vmem:[#allocation2 + $0x20] sm:$0xff] %vm2775, %v2760
        %2781 = vst.msk [vmem:[#allocation2 + $0x28] sm:$0xff] %vm2775, %v2762
        %2782 = vst.msk [vmem:[#allocation2 + $0x30] sm:$0xff] %vm2775, %v2764
        %2783 = vst.msk [vmem:[#allocation2 + $0x38] sm:$0xff] %vm2775, %v2766
        %2784 = vrot.lane.b32.xlu0 %v2166, 96
        %v2785 = vpop.permute.xlu0 %2784
        %2786 = vrot.lane.b32.xlu0 %v2167, 96
        %v2787 = vpop.permute.xlu0 %2786
        %2788 = vrot.lane.b32.xlu0 %v2168, 96
        %v2789 = vpop.permute.xlu0 %2788
        %2790 = vrot.lane.b32.xlu0 %v2169, 96
        %v2791 = vpop.permute.xlu0 %2790
        %2792 = vrot.lane.b32.xlu0 %v2170, 96
        %v2793 = vpop.permute.xlu0 %2792
        %2794 = vrot.lane.b32.xlu0 %v2171, 96
        %v2795 = vpop.permute.xlu0 %2794
        %2796 = vrot.lane.b32.xlu0 %v2172, 96
        %v2797 = vpop.permute.xlu0 %2796
        %2798 = vrot.lane.b32.xlu0 %v2173, 96
        %v2799 = vpop.permute.xlu0 %2798
        %v2801 = vsel %vm2178, %v2785, 0
        %v2804 = vsel %vm2178, %v2787, 0
        %v2807 = vsel %vm2178, %v2789, 0
        %v2810 = vsel %vm2178, %v2791, 0
        %v2813 = vsel %vm2178, %v2793, 0
        %v2816 = vsel %vm2178, %v2795, 0
        %v2819 = vsel %vm2178, %v2797, 0
        %v2822 = vsel %vm2178, %v2799, 0
        %2824 = vmatprep.subr.bf16.mxu0 0
        %2825 = vmatpush1.bf16.xpose.msra.mxu0 0
        %2826 = vmatprep.subr.bf16.mxu0 0
        %2827 = vmatpush1.bf16.xpose.msra.mxu0 0
        %2828 = vmatprep.subr.bf16.mxu0 0
        %2829 = vmatpush1.bf16.xpose.msra.mxu0 0
        %2830 = vmatprep.subr.bf16.mxu0 0
        %2831 = vmatpush1.bf16.xpose.msra.mxu0 0
        %2832 = vmatprep.subr.bf16.mxu0 0
        %2833 = vmatpush1.bf16.xpose.msra.mxu0 %v2822
        %2834 = vmatprep.subr.bf16.mxu0 0
        %2835 = vmatpush1.bf16.xpose.msra.mxu0 %v2819
        %2836 = vmatprep.subr.bf16.mxu0 0
        %2837 = vmatpush1.bf16.xpose.msra.mxu0 %v2816
        %2838 = vmatprep.subr.bf16.mxu0 0
        %2839 = vmatpush1.bf16.xpose.msra.mxu0 %v2813
        %2840 = vmatprep.subr.bf16.mxu0 0
        %2841 = vmatpush2.bf16.xpose.msra.mxu0 0
        %2842 = vmatprep.subr.bf16.mxu0 0
        %2843 = vmatpush2.bf16.xpose.msra.mxu0 0
        %2844 = vmatprep.subr.bf16.mxu0 0
        %2845 = vmatpush2.bf16.xpose.msra.mxu0 0
        %2846 = vmatprep.subr.bf16.mxu0 0
        %2847 = vmatpush2.bf16.xpose.msra.mxu0 0
        %2848 = vmatprep.subr.bf16.mxu0 0
        %2849 = vmatpush2.bf16.xpose.msra.mxu0 0
        %2850 = vmatprep.subr.bf16.mxu0 0
        %2851 = vmatpush2.bf16.xpose.msra.mxu0 0
        %2852 = vmatprep.subr.bf16.mxu0 0
        %2853 = vmatpush2.bf16.xpose.msra.mxu0 0
        %2854 = vmatprep.subr.bf16.mxu0 0
        %2855 = vmatpush2.bf16.xpose.msra.mxu0 0
        %2856 = vmatprep.mubr.bf16.mxu0 0
        %2857 = vmatmul.mubr.bf16.gmra.mxu0 %v2801
        %v2858 = vpop.f32.mrf.mxu0
        %v2859 = vadd.f32 0.0, %v2858
        %v2860 = vpop.f32.mrf.mxu0
        %v2861 = vpop.f32.mrf.mxu0
        %v2862 = vadd.f32 0.0, %v2861
        %v2863 = vpop.f32.mrf.mxu0
        %2864 = vmatprep.mubr.bf16.mxu0 0
        %2865 = vmatmul.mubr.bf16.gmra.mxu0 %v2804
        %v2866 = vpop.f32.mrf.mxu0
        %v2867 = vadd.f32 0.0, %v2866
        %v2868 = vpop.f32.mrf.mxu0
        %v2869 = vpop.f32.mrf.mxu0
        %v2870 = vadd.f32 0.0, %v2869
        %v2871 = vpop.f32.mrf.mxu0
        %2872 = vmatprep.mubr.bf16.mxu0 0
        %2873 = vmatmul.mubr.bf16.gmra.mxu0 %v2807
        %v2874 = vpop.f32.mrf.mxu0
        %v2875 = vadd.f32 0.0, %v2874
        %v2876 = vpop.f32.mrf.mxu0
        %v2877 = vpop.f32.mrf.mxu0
        %v2878 = vadd.f32 0.0, %v2877
        %v2879 = vpop.f32.mrf.mxu0
        %2880 = vmatprep.mubr.bf16.mxu0 0
        %2881 = vmatmul.mubr.bf16.gmra.mxu0 %v2810
        %v2882 = vpop.f32.mrf.mxu0
        %v2883 = vadd.f32 0.0, %v2882
        %v2884 = vpop.f32.mrf.mxu0
        %v2885 = vpop.f32.mrf.mxu0
        %v2886 = vadd.f32 0.0, %v2885
        %v2887 = vpop.f32.mrf.mxu0
        %2888 = vdwg.mxu0
        %v2889 = vsel %vm1226, %v2859, -inf
        %2890 = vmax.xlane.f32.xlu0 %v2889
        %v2891 = vpop.xlane.xlu0 %2890
        %v2892 = vsel %vm1226, %v2862, -inf
        %2893 = vmax.xlane.f32.xlu0 %v2892
        %v2894 = vpop.xlane.xlu0 %2893
        %v2895 = vsel %vm1226, %v2867, -inf
        %2896 = vmax.xlane.f32.xlu0 %v2895
        %v2897 = vpop.xlane.xlu0 %2896
        %v2898 = vsel %vm1226, %v2870, -inf
        %2899 = vmax.xlane.f32.xlu0 %v2898
        %v2900 = vpop.xlane.xlu0 %2899
        %v2901 = vsel %vm1226, %v2875, -inf
        %2902 = vmax.xlane.f32.xlu0 %v2901
        %v2903 = vpop.xlane.xlu0 %2902
        %v2904 = vsel %vm1226, %v2878, -inf
        %2905 = vmax.xlane.f32.xlu0 %v2904
        %v2906 = vpop.xlane.xlu0 %2905
        %v2907 = vsel %vm1226, %v2883, -inf
        %2908 = vmax.xlane.f32.xlu0 %v2907
        %v2909 = vpop.xlane.xlu0 %2908
        %v2910 = vsel %vm1226, %v2886, -inf
        %2911 = vmax.xlane.f32.xlu0 %v2910
        %v2912 = vpop.xlane.xlu0 %2911
        %v2913 = vsub.f32 %v2859, %v2891
        %v2914 = vsub.f32 %v2862, %v2894
        %v2915 = vsub.f32 %v2867, %v2897
        %v2916 = vsub.f32 %v2870, %v2900
        %v2917 = vsub.f32 %v2875, %v2903
        %v2918 = vsub.f32 %v2878, %v2906
        %v2919 = vsub.f32 %v2883, %v2909
        %v2920 = vsub.f32 %v2886, %v2912
        %v2921 = vmul.f32 %v2913, 1.442695
        %v2922 = vpow.pop %v2921
        %v2923 = vmul.f32 %v2914, 1.442695
        %v2924 = vpow.pop %v2923
        %v2925 = vmul.f32 %v2915, 1.442695
        %v2926 = vpow.pop %v2925
        %v2927 = vmul.f32 %v2916, 1.442695
        %v2928 = vpow.pop %v2927
        %v2929 = vmul.f32 %v2917, 1.442695
        %v2930 = vpow.pop %v2929
        %v2931 = vmul.f32 %v2918, 1.442695
        %v2932 = vpow.pop %v2931
        %v2933 = vmul.f32 %v2919, 1.442695
        %v2934 = vpow.pop %v2933
        %v2935 = vmul.f32 %v2920, 1.442695
        %v2936 = vpow.pop %v2935
        %v2937 = vsel %vm1226, %v2922, 0.0
        %2938 = vadd.xlane.f32.xlu0 %v2937
        %v2939 = vpop.xlane.xlu0 %2938
        %v2940 = vsel %vm1226, %v2924, 0.0
        %2941 = vadd.xlane.f32.xlu0 %v2940
        %v2942 = vpop.xlane.xlu0 %2941
        %v2943 = vsel %vm1226, %v2926, 0.0
        %2944 = vadd.xlane.f32.xlu0 %v2943
        %v2945 = vpop.xlane.xlu0 %2944
        %v2946 = vsel %vm1226, %v2928, 0.0
        %2947 = vadd.xlane.f32.xlu0 %v2946
        %v2948 = vpop.xlane.xlu0 %2947
        %v2949 = vsel %vm1226, %v2930, 0.0
        %2950 = vadd.xlane.f32.xlu0 %v2949
        %v2951 = vpop.xlane.xlu0 %2950
        %v2952 = vsel %vm1226, %v2932, 0.0
        %2953 = vadd.xlane.f32.xlu0 %v2952
        %v2954 = vpop.xlane.xlu0 %2953
        %v2955 = vsel %vm1226, %v2934, 0.0
        %2956 = vadd.xlane.f32.xlu0 %v2955
        %v2957 = vpop.xlane.xlu0 %2956
        %v2958 = vsel %vm1226, %v2936, 0.0
        %2959 = vadd.xlane.f32.xlu0 %v2958
        %v2960 = vpop.xlane.xlu0 %2959
        %v2961 = vrcp.pop %v2939
        %v2962 = vmul.f32 %v2922, %v2961
        %v2963 = vrcp.pop %v2942
        %v2964 = vmul.f32 %v2924, %v2963
        %v2965 = vrcp.pop %v2945
        %v2966 = vmul.f32 %v2926, %v2965
        %v2967 = vrcp.pop %v2948
        %v2968 = vmul.f32 %v2928, %v2967
        %v2969 = vrcp.pop %v2951
        %v2970 = vmul.f32 %v2930, %v2969
        %v2971 = vrcp.pop %v2954
        %v2972 = vmul.f32 %v2932, %v2971
        %v2973 = vrcp.pop %v2957
        %v2974 = vmul.f32 %v2934, %v2973
        %v2975 = vrcp.pop %v2960
        %v2976 = vmul.f32 %v2936, %v2975
        %v2977 = vpack.c.bf16 %v2964, %v2962
        %v2978 = vpack.c.bf16 %v2968, %v2966
        %v2979 = vpack.c.bf16 %v2972, %v2970
        %v2980 = vpack.c.bf16 %v2976, %v2974
        %2981 = vrot.lane.b32.xlu0 %v2174, 96
        %v2982 = vpop.permute.xlu0 %2981
        %2983 = vrot.lane.b32.xlu0 %v2175, 96
        %v2984 = vpop.permute.xlu0 %2983
        %2985 = vrot.lane.b32.xlu0 %v2176, 96
        %v2986 = vpop.permute.xlu0 %2985
        %2987 = vrot.lane.b32.xlu0 %v2177, 96
        %v2988 = vpop.permute.xlu0 %2987
        %v2994 = vsel %vm1226, %v2977, 0
        %v2997 = vsel %vm1226, %v2978, 0
        %v3000 = vsel %vm1226, %v2979, 0
        %v3003 = vsel %vm1226, %v2980, 0
        %3005 = vmatprep.subr.bf16.mxu0 0
        %3006 = vmatpush1.bf16.msra.mxu0 0
        %3007 = vmatprep.subr.bf16.mxu0 0
        %3008 = vmatpush1.bf16.msra.mxu0 0
        %3009 = vmatprep.subr.bf16.mxu0 0
        %3010 = vmatpush1.bf16.msra.mxu0 0
        %3011 = vmatprep.subr.bf16.mxu0 0
        %3012 = vmatpush1.bf16.msra.mxu0 0
        %3013 = vmatprep.subr.bf16.mxu0 0
        %3014 = vmatpush1.bf16.msra.mxu0 %v2988
        %3015 = vmatprep.subr.bf16.mxu0 0
        %3016 = vmatpush1.bf16.msra.mxu0 %v2986
        %3017 = vmatprep.subr.bf16.mxu0 0
        %3018 = vmatpush1.bf16.msra.mxu0 %v2984
        %3019 = vmatprep.subr.bf16.mxu0 0
        %3020 = vmatpush1.bf16.msra.mxu0 %v2982
        %3021 = vmatprep.subr.bf16.mxu0 0
        %3022 = vmatpush2.bf16.msra.mxu0 0
        %3023 = vmatprep.subr.bf16.mxu0 0
        %3024 = vmatpush2.bf16.msra.mxu0 0
        %3025 = vmatprep.subr.bf16.mxu0 0
        %3026 = vmatpush2.bf16.msra.mxu0 0
        %3027 = vmatprep.subr.bf16.mxu0 0
        %3028 = vmatpush2.bf16.msra.mxu0 0
        %3029 = vmatprep.subr.bf16.mxu0 0
        %3030 = vmatpush2.bf16.msra.mxu0 0
        %3031 = vmatprep.subr.bf16.mxu0 0
        %3032 = vmatpush2.bf16.msra.mxu0 0
        %3033 = vmatprep.subr.bf16.mxu0 0
        %3034 = vmatpush2.bf16.msra.mxu0 0
        %3035 = vmatprep.subr.bf16.mxu0 0
        %3036 = vmatpush2.bf16.msra.mxu0 0
        %3037 = vmatprep.mubr.bf16.mxu0 0
        %3038 = vmatmul.mubr.bf16.gmra.mxu0 %v2994
        %v3039 = vpop.f32.mrf.mxu0
        %v3040 = vadd.f32 0.0, %v3039
        %v3041 = vpop.f32.mrf.mxu0
        %v3042 = vpop.f32.mrf.mxu0
        %v3043 = vadd.f32 0.0, %v3042
        %v3044 = vpop.f32.mrf.mxu0
        %3045 = vmatprep.mubr.bf16.mxu0 0
        %3046 = vmatmul.mubr.bf16.gmra.mxu0 %v2997
        %v3047 = vpop.f32.mrf.mxu0
        %v3048 = vadd.f32 0.0, %v3047
        %v3049 = vpop.f32.mrf.mxu0
        %v3050 = vpop.f32.mrf.mxu0
        %v3051 = vadd.f32 0.0, %v3050
        %v3052 = vpop.f32.mrf.mxu0
        %3053 = vmatprep.mubr.bf16.mxu0 0
        %3054 = vmatmul.mubr.bf16.gmra.mxu0 %v3000
        %v3055 = vpop.f32.mrf.mxu0
        %v3056 = vadd.f32 0.0, %v3055
        %v3057 = vpop.f32.mrf.mxu0
        %v3058 = vpop.f32.mrf.mxu0
        %v3059 = vadd.f32 0.0, %v3058
        %v3060 = vpop.f32.mrf.mxu0
        %3061 = vmatprep.mubr.bf16.mxu0 0
        %3062 = vmatmul.mubr.bf16.gmra.mxu0 %v3003
        %v3063 = vpop.f32.mrf.mxu0
        %v3064 = vadd.f32 0.0, %v3063
        %v3065 = vpop.f32.mrf.mxu0
        %v3066 = vpop.f32.mrf.mxu0
        %v3067 = vadd.f32 0.0, %v3066
        %v3068 = vpop.f32.mrf.mxu0
        %3069 = vdwg.mxu0
        %3078 = vrot.lane.b32.xlu0 %v3040, 32
        %v3079 = vpop.permute.xlu0 %3078
        %3080 = vrot.lane.b32.xlu0 %v3043, 32
        %v3081 = vpop.permute.xlu0 %3080
        %3082 = vrot.lane.b32.xlu0 %v3048, 32
        %v3083 = vpop.permute.xlu0 %3082
        %3084 = vrot.lane.b32.xlu0 %v3051, 32
        %v3085 = vpop.permute.xlu0 %3084
        %3086 = vrot.lane.b32.xlu0 %v3056, 32
        %v3087 = vpop.permute.xlu0 %3086
        %3088 = vrot.lane.b32.xlu0 %v3059, 32
        %v3089 = vpop.permute.xlu0 %3088
        %3090 = vrot.lane.b32.xlu0 %v3064, 32
        %v3091 = vpop.permute.xlu0 %3090
        %3092 = vrot.lane.b32.xlu0 %v3067, 32
        %v3093 = vpop.permute.xlu0 %3092
        %vm3102 = vcmask 392448
        %3103 = vst.msk [vmem:[#allocation2] sm:$0xff] %vm3102, %v3079
        %3104 = vst.msk [vmem:[#allocation2 + $0x8] sm:$0xff] %vm3102, %v3081
        %3105 = vst.msk [vmem:[#allocation2 + $0x10] sm:$0xff] %vm3102, %v3083
        %3106 = vst.msk [vmem:[#allocation2 + $0x18] sm:$0xff] %vm3102, %v3085
        %3107 = vst.msk [vmem:[#allocation2 + $0x20] sm:$0xff] %vm3102, %v3087
        %3108 = vst.msk [vmem:[#allocation2 + $0x28] sm:$0xff] %vm3102, %v3089
        %3109 = vst.msk [vmem:[#allocation2 + $0x30] sm:$0xff] %vm3102, %v3091
        %3110 = vst.msk [vmem:[#allocation2 + $0x38] sm:$0xff] %vm3102, %v3093
        %3111 = vrot.lane.b32.xlu0 %v2166, 80
        %v3112 = vpop.permute.xlu0 %3111
        %3113 = vrot.lane.b32.xlu0 %v2167, 80
        %v3114 = vpop.permute.xlu0 %3113
        %3115 = vrot.lane.b32.xlu0 %v2168, 80
        %v3116 = vpop.permute.xlu0 %3115
        %3117 = vrot.lane.b32.xlu0 %v2169, 80
        %v3118 = vpop.permute.xlu0 %3117
        %3119 = vrot.lane.b32.xlu0 %v2170, 80
        %v3120 = vpop.permute.xlu0 %3119
        %3121 = vrot.lane.b32.xlu0 %v2171, 80
        %v3122 = vpop.permute.xlu0 %3121
        %3123 = vrot.lane.b32.xlu0 %v2172, 80
        %v3124 = vpop.permute.xlu0 %3123
        %3125 = vrot.lane.b32.xlu0 %v2173, 80
        %v3126 = vpop.permute.xlu0 %3125
        %v3128 = vsel %vm2178, %v3112, 0
        %v3131 = vsel %vm2178, %v3114, 0
        %v3134 = vsel %vm2178, %v3116, 0
        %v3137 = vsel %vm2178, %v3118, 0
        %v3140 = vsel %vm2178, %v3120, 0
        %v3143 = vsel %vm2178, %v3122, 0
        %v3146 = vsel %vm2178, %v3124, 0
        %v3149 = vsel %vm2178, %v3126, 0
        %3151 = vmatprep.subr.bf16.mxu0 0
        %3152 = vmatpush1.bf16.xpose.msra.mxu0 0
        %3153 = vmatprep.subr.bf16.mxu0 0
        %3154 = vmatpush1.bf16.xpose.msra.mxu0 0
        %3155 = vmatprep.subr.bf16.mxu0 0
        %3156 = vmatpush1.bf16.xpose.msra.mxu0 0
        %3157 = vmatprep.subr.bf16.mxu0 0
        %3158 = vmatpush1.bf16.xpose.msra.mxu0 0
        %3159 = vmatprep.subr.bf16.mxu0 0
        %3160 = vmatpush1.bf16.xpose.msra.mxu0 %v3149
        %3161 = vmatprep.subr.bf16.mxu0 0
        %3162 = vmatpush1.bf16.xpose.msra.mxu0 %v3146
        %3163 = vmatprep.subr.bf16.mxu0 0
        %3164 = vmatpush1.bf16.xpose.msra.mxu0 %v3143
        %3165 = vmatprep.subr.bf16.mxu0 0
        %3166 = vmatpush1.bf16.xpose.msra.mxu0 %v3140
        %3167 = vmatprep.subr.bf16.mxu0 0
        %3168 = vmatpush2.bf16.xpose.msra.mxu0 0
        %3169 = vmatprep.subr.bf16.mxu0 0
        %3170 = vmatpush2.bf16.xpose.msra.mxu0 0
        %3171 = vmatprep.subr.bf16.mxu0 0
        %3172 = vmatpush2.bf16.xpose.msra.mxu0 0
        %3173 = vmatprep.subr.bf16.mxu0 0
        %3174 = vmatpush2.bf16.xpose.msra.mxu0 0
        %3175 = vmatprep.subr.bf16.mxu0 0
        %3176 = vmatpush2.bf16.xpose.msra.mxu0 0
        %3177 = vmatprep.subr.bf16.mxu0 0
        %3178 = vmatpush2.bf16.xpose.msra.mxu0 0
        %3179 = vmatprep.subr.bf16.mxu0 0
        %3180 = vmatpush2.bf16.xpose.msra.mxu0 0
        %3181 = vmatprep.subr.bf16.mxu0 0
        %3182 = vmatpush2.bf16.xpose.msra.mxu0 0
        %3183 = vmatprep.mubr.bf16.mxu0 0
        %3184 = vmatmul.mubr.bf16.gmra.mxu0 %v3128
        %v3185 = vpop.f32.mrf.mxu0
        %v3186 = vadd.f32 0.0, %v3185
        %v3187 = vpop.f32.mrf.mxu0
        %v3188 = vpop.f32.mrf.mxu0
        %v3189 = vadd.f32 0.0, %v3188
        %v3190 = vpop.f32.mrf.mxu0
        %3191 = vmatprep.mubr.bf16.mxu0 0
        %3192 = vmatmul.mubr.bf16.gmra.mxu0 %v3131
        %v3193 = vpop.f32.mrf.mxu0
        %v3194 = vadd.f32 0.0, %v3193
        %v3195 = vpop.f32.mrf.mxu0
        %v3196 = vpop.f32.mrf.mxu0
        %v3197 = vadd.f32 0.0, %v3196
        %v3198 = vpop.f32.mrf.mxu0
        %3199 = vmatprep.mubr.bf16.mxu0 0
        %3200 = vmatmul.mubr.bf16.gmra.mxu0 %v3134
        %v3201 = vpop.f32.mrf.mxu0
        %v3202 = vadd.f32 0.0, %v3201
        %v3203 = vpop.f32.mrf.mxu0
        %v3204 = vpop.f32.mrf.mxu0
        %v3205 = vadd.f32 0.0, %v3204
        %v3206 = vpop.f32.mrf.mxu0
        %3207 = vmatprep.mubr.bf16.mxu0 0
        %3208 = vmatmul.mubr.bf16.gmra.mxu0 %v3137
        %v3209 = vpop.f32.mrf.mxu0
        %v3210 = vadd.f32 0.0, %v3209
        %v3211 = vpop.f32.mrf.mxu0
        %v3212 = vpop.f32.mrf.mxu0
        %v3213 = vadd.f32 0.0, %v3212
        %v3214 = vpop.f32.mrf.mxu0
        %3215 = vdwg.mxu0
        %v3216 = vsel %vm1226, %v3186, -inf
        %3217 = vmax.xlane.f32.xlu0 %v3216
        %v3218 = vpop.xlane.xlu0 %3217
        %v3219 = vsel %vm1226, %v3189, -inf
        %3220 = vmax.xlane.f32.xlu0 %v3219
        %v3221 = vpop.xlane.xlu0 %3220
        %v3222 = vsel %vm1226, %v3194, -inf
        %3223 = vmax.xlane.f32.xlu0 %v3222
        %v3224 = vpop.xlane.xlu0 %3223
        %v3225 = vsel %vm1226, %v3197, -inf
        %3226 = vmax.xlane.f32.xlu0 %v3225
        %v3227 = vpop.xlane.xlu0 %3226
        %v3228 = vsel %vm1226, %v3202, -inf
        %3229 = vmax.xlane.f32.xlu0 %v3228
        %v3230 = vpop.xlane.xlu0 %3229
        %v3231 = vsel %vm1226, %v3205, -inf
        %3232 = vmax.xlane.f32.xlu0 %v3231
        %v3233 = vpop.xlane.xlu0 %3232
        %v3234 = vsel %vm1226, %v3210, -inf
        %3235 = vmax.xlane.f32.xlu0 %v3234
        %v3236 = vpop.xlane.xlu0 %3235
        %v3237 = vsel %vm1226, %v3213, -inf
        %3238 = vmax.xlane.f32.xlu0 %v3237
        %v3239 = vpop.xlane.xlu0 %3238
        %v3240 = vsub.f32 %v3186, %v3218
        %v3241 = vsub.f32 %v3189, %v3221
        %v3242 = vsub.f32 %v3194, %v3224
        %v3243 = vsub.f32 %v3197, %v3227
        %v3244 = vsub.f32 %v3202, %v3230
        %v3245 = vsub.f32 %v3205, %v3233
        %v3246 = vsub.f32 %v3210, %v3236
        %v3247 = vsub.f32 %v3213, %v3239
        %v3248 = vmul.f32 %v3240, 1.442695
        %v3249 = vpow.pop %v3248
        %v3250 = vmul.f32 %v3241, 1.442695
        %v3251 = vpow.pop %v3250
        %v3252 = vmul.f32 %v3242, 1.442695
        %v3253 = vpow.pop %v3252
        %v3254 = vmul.f32 %v3243, 1.442695
        %v3255 = vpow.pop %v3254
        %v3256 = vmul.f32 %v3244, 1.442695
        %v3257 = vpow.pop %v3256
        %v3258 = vmul.f32 %v3245, 1.442695
        %v3259 = vpow.pop %v3258
        %v3260 = vmul.f32 %v3246, 1.442695
        %v3261 = vpow.pop %v3260
        %v3262 = vmul.f32 %v3247, 1.442695
        %v3263 = vpow.pop %v3262
        %v3264 = vsel %vm1226, %v3249, 0.0
        %3265 = vadd.xlane.f32.xlu0 %v3264
        %v3266 = vpop.xlane.xlu0 %3265
        %v3267 = vsel %vm1226, %v3251, 0.0
        %3268 = vadd.xlane.f32.xlu0 %v3267
        %v3269 = vpop.xlane.xlu0 %3268
        %v3270 = vsel %vm1226, %v3253, 0.0
        %3271 = vadd.xlane.f32.xlu0 %v3270
        %v3272 = vpop.xlane.xlu0 %3271
        %v3273 = vsel %vm1226, %v3255, 0.0
        %3274 = vadd.xlane.f32.xlu0 %v3273
        %v3275 = vpop.xlane.xlu0 %3274
        %v3276 = vsel %vm1226, %v3257, 0.0
        %3277 = vadd.xlane.f32.xlu0 %v3276
        %v3278 = vpop.xlane.xlu0 %3277
        %v3279 = vsel %vm1226, %v3259, 0.0
        %3280 = vadd.xlane.f32.xlu0 %v3279
        %v3281 = vpop.xlane.xlu0 %3280
        %v3282 = vsel %vm1226, %v3261, 0.0
        %3283 = vadd.xlane.f32.xlu0 %v3282
        %v3284 = vpop.xlane.xlu0 %3283
        %v3285 = vsel %vm1226, %v3263, 0.0
        %3286 = vadd.xlane.f32.xlu0 %v3285
        %v3287 = vpop.xlane.xlu0 %3286
        %v3288 = vrcp.pop %v3266
        %v3289 = vmul.f32 %v3249, %v3288
        %v3290 = vrcp.pop %v3269
        %v3291 = vmul.f32 %v3251, %v3290
        %v3292 = vrcp.pop %v3272
        %v3293 = vmul.f32 %v3253, %v3292
        %v3294 = vrcp.pop %v3275
        %v3295 = vmul.f32 %v3255, %v3294
        %v3296 = vrcp.pop %v3278
        %v3297 = vmul.f32 %v3257, %v3296
        %v3298 = vrcp.pop %v3281
        %v3299 = vmul.f32 %v3259, %v3298
        %v3300 = vrcp.pop %v3284
        %v3301 = vmul.f32 %v3261, %v3300
        %v3302 = vrcp.pop %v3287
        %v3303 = vmul.f32 %v3263, %v3302
        %v3304 = vpack.c.bf16 %v3291, %v3289
        %v3305 = vpack.c.bf16 %v3295, %v3293
        %v3306 = vpack.c.bf16 %v3299, %v3297
        %v3307 = vpack.c.bf16 %v3303, %v3301
        %3308 = vrot.lane.b32.xlu0 %v2174, 80
        %v3309 = vpop.permute.xlu0 %3308
        %3310 = vrot.lane.b32.xlu0 %v2175, 80
        %v3311 = vpop.permute.xlu0 %3310
        %3312 = vrot.lane.b32.xlu0 %v2176, 80
        %v3313 = vpop.permute.xlu0 %3312
        %3314 = vrot.lane.b32.xlu0 %v2177, 80
        %v3315 = vpop.permute.xlu0 %3314
        %v3321 = vsel %vm1226, %v3304, 0
        %v3324 = vsel %vm1226, %v3305, 0
        %v3327 = vsel %vm1226, %v3306, 0
        %v3330 = vsel %vm1226, %v3307, 0
        %3332 = vmatprep.subr.bf16.mxu0 0
        %3333 = vmatpush1.bf16.msra.mxu0 0
        %3334 = vmatprep.subr.bf16.mxu0 0
        %3335 = vmatpush1.bf16.msra.mxu0 0
        %3336 = vmatprep.subr.bf16.mxu0 0
        %3337 = vmatpush1.bf16.msra.mxu0 0
        %3338 = vmatprep.subr.bf16.mxu0 0
        %3339 = vmatpush1.bf16.msra.mxu0 0
        %3340 = vmatprep.subr.bf16.mxu0 0
        %3341 = vmatpush1.bf16.msra.mxu0 %v3315
        %3342 = vmatprep.subr.bf16.mxu0 0
        %3343 = vmatpush1.bf16.msra.mxu0 %v3313
        %3344 = vmatprep.subr.bf16.mxu0 0
        %3345 = vmatpush1.bf16.msra.mxu0 %v3311
        %3346 = vmatprep.subr.bf16.mxu0 0
        %3347 = vmatpush1.bf16.msra.mxu0 %v3309
        %3348 = vmatprep.subr.bf16.mxu0 0
        %3349 = vmatpush2.bf16.msra.mxu0 0
        %3350 = vmatprep.subr.bf16.mxu0 0
        %3351 = vmatpush2.bf16.msra.mxu0 0
        %3352 = vmatprep.subr.bf16.mxu0 0
        %3353 = vmatpush2.bf16.msra.mxu0 0
        %3354 = vmatprep.subr.bf16.mxu0 0
        %3355 = vmatpush2.bf16.msra.mxu0 0
        %3356 = vmatprep.subr.bf16.mxu0 0
        %3357 = vmatpush2.bf16.msra.mxu0 0
        %3358 = vmatprep.subr.bf16.mxu0 0
        %3359 = vmatpush2.bf16.msra.mxu0 0
        %3360 = vmatprep.subr.bf16.mxu0 0
        %3361 = vmatpush2.bf16.msra.mxu0 0
        %3362 = vmatprep.subr.bf16.mxu0 0
        %3363 = vmatpush2.bf16.msra.mxu0 0
        %3364 = vmatprep.mubr.bf16.mxu0 0
        %3365 = vmatmul.mubr.bf16.gmra.mxu0 %v3321
        %v3366 = vpop.f32.mrf.mxu0
        %v3367 = vadd.f32 0.0, %v3366
        %v3368 = vpop.f32.mrf.mxu0
        %v3369 = vpop.f32.mrf.mxu0
        %v3370 = vadd.f32 0.0, %v3369
        %v3371 = vpop.f32.mrf.mxu0
        %3372 = vmatprep.mubr.bf16.mxu0 0
        %3373 = vmatmul.mubr.bf16.gmra.mxu0 %v3324
        %v3374 = vpop.f32.mrf.mxu0
        %v3375 = vadd.f32 0.0, %v3374
        %v3376 = vpop.f32.mrf.mxu0
        %v3377 = vpop.f32.mrf.mxu0
        %v3378 = vadd.f32 0.0, %v3377
        %v3379 = vpop.f32.mrf.mxu0
        %3380 = vmatprep.mubr.bf16.mxu0 0
        %3381 = vmatmul.mubr.bf16.gmra.mxu0 %v3327
        %v3382 = vpop.f32.mrf.mxu0
        %v3383 = vadd.f32 0.0, %v3382
        %v3384 = vpop.f32.mrf.mxu0
        %v3385 = vpop.f32.mrf.mxu0
        %v3386 = vadd.f32 0.0, %v3385
        %v3387 = vpop.f32.mrf.mxu0
        %3388 = vmatprep.mubr.bf16.mxu0 0
        %3389 = vmatmul.mubr.bf16.gmra.mxu0 %v3330
        %v3390 = vpop.f32.mrf.mxu0
        %v3391 = vadd.f32 0.0, %v3390
        %v3392 = vpop.f32.mrf.mxu0
        %v3393 = vpop.f32.mrf.mxu0
        %v3394 = vadd.f32 0.0, %v3393
        %v3395 = vpop.f32.mrf.mxu0
        %3396 = vdwg.mxu0
        %3405 = vrot.lane.b32.xlu0 %v3367, 48
        %v3406 = vpop.permute.xlu0 %3405
        %3407 = vrot.lane.b32.xlu0 %v3370, 48
        %v3408 = vpop.permute.xlu0 %3407
        %3409 = vrot.lane.b32.xlu0 %v3375, 48
        %v3410 = vpop.permute.xlu0 %3409
        %3411 = vrot.lane.b32.xlu0 %v3378, 48
        %v3412 = vpop.permute.xlu0 %3411
        %3413 = vrot.lane.b32.xlu0 %v3383, 48
        %v3414 = vpop.permute.xlu0 %3413
        %3415 = vrot.lane.b32.xlu0 %v3386, 48
        %v3416 = vpop.permute.xlu0 %3415
        %3417 = vrot.lane.b32.xlu0 %v3391, 48
        %v3418 = vpop.permute.xlu0 %3417
        %3419 = vrot.lane.b32.xlu0 %v3394, 48
        %v3420 = vpop.permute.xlu0 %3419
        %vm3429 = vcmask 523648
        %3430 = vst.msk [vmem:[#allocation2] sm:$0xff] %vm3429, %v3406
        %3431 = vst.msk [vmem:[#allocation2 + $0x8] sm:$0xff] %vm3429, %v3408
        %3432 = vst.msk [vmem:[#allocation2 + $0x10] sm:$0xff] %vm3429, %v3410
        %3433 = vst.msk [vmem:[#allocation2 + $0x18] sm:$0xff] %vm3429, %v3412
        %3434 = vst.msk [vmem:[#allocation2 + $0x20] sm:$0xff] %vm3429, %v3414
        %3435 = vst.msk [vmem:[#allocation2 + $0x28] sm:$0xff] %vm3429, %v3416
        %3436 = vst.msk [vmem:[#allocation2 + $0x30] sm:$0xff] %vm3429, %v3418
        %3437 = vst.msk [vmem:[#allocation2 + $0x38] sm:$0xff] %vm3429, %v3420
        %v3438 = vld [vmem:[#allocation2] sm:$0xff]
        %v3439 = vld [vmem:[#allocation2 + $0x8] sm:$0xff]
        %v3440 = vld [vmem:[#allocation2 + $0x10] sm:$0xff]
        %v3441 = vld [vmem:[#allocation2 + $0x18] sm:$0xff]
        %v3442 = vld [vmem:[#allocation2 + $0x20] sm:$0xff]
        %v3443 = vld [vmem:[#allocation2 + $0x28] sm:$0xff]
        %v3444 = vld [vmem:[#allocation2 + $0x30] sm:$0xff]
        %v3445 = vld [vmem:[#allocation2 + $0x38] sm:$0xff]
        %v3446 = vpack.c.bf16 %v3439, %v3438
        %v3447 = vpack.c.bf16 %v3441, %v3440
        %v3448 = vpack.c.bf16 %v3443, %v3442
        %v3449 = vpack.c.bf16 %v3445, %v3444
        %v3451 = vlaneseq
        %v3452 = vshrl.u32 %v3451, 7
        %v3453 = vsub.s32 0, %v3452
        %v3454 = vrot.slane %v1874, %v3453
        %v3464 = vunpack.c.l.b16 %v1866
        %v3465 = vunpack.c.l.b16 %v1867
        %v3466 = vunpack.c.l.b16 %v1868
        %v3467 = vunpack.c.l.b16 %v1869
        %v3468 = vunpack.c.l.b16 %v1870
        %v3469 = vunpack.c.l.b16 %v1871
        %v3470 = vunpack.c.l.b16 %v1872
        %v3471 = vunpack.c.l.b16 %v1873
        %v3472 = vpack.c.b16 %v3465, %v3464
        %v3473 = vpack.c.b16 %v3467, %v3466
        %v3474 = vpack.c.b16 %v3469, %v3468
        %v3475 = vpack.c.b16 %v3471, %v3470
        %v3481 = vsel %vm1226, %v3446, 0
        %v3484 = vsel %vm1226, %v3447, 0
        %v3487 = vsel %vm1226, %v3448, 0
        %v3490 = vsel %vm1226, %v3449, 0
        %3492 = vmatprep.subr.bf16.mxu0 0
        %3493 = vmatpush1.bf16.msra.mxu0 0
        %3494 = vmatprep.subr.bf16.mxu0 0
        %3495 = vmatpush1.bf16.msra.mxu0 0
        %3496 = vmatprep.subr.bf16.mxu0 0
        %3497 = vmatpush1.bf16.msra.mxu0 0
        %3498 = vmatprep.subr.bf16.mxu0 0
        %3499 = vmatpush1.bf16.msra.mxu0 0
        %3500 = vmatprep.subr.bf16.mxu0 0
        %3501 = vmatpush1.bf16.msra.mxu0 %v3475
        %3502 = vmatprep.subr.bf16.mxu0 0
        %3503 = vmatpush1.bf16.msra.mxu0 %v3474
        %3504 = vmatprep.subr.bf16.mxu0 0
        %3505 = vmatpush1.bf16.msra.mxu0 %v3473
        %3506 = vmatprep.subr.bf16.mxu0 0
        %3507 = vmatpush1.bf16.msra.mxu0 %v3472
        %3508 = vmatprep.subr.bf16.mxu0 0
        %3509 = vmatpush2.bf16.msra.mxu0 0
        %3510 = vmatprep.subr.bf16.mxu0 0
        %3511 = vmatpush2.bf16.msra.mxu0 0
        %3512 = vmatprep.subr.bf16.mxu0 0
        %3513 = vmatpush2.bf16.msra.mxu0 0
        %3514 = vmatprep.subr.bf16.mxu0 0
        %3515 = vmatpush2.bf16.msra.mxu0 0
        %3516 = vmatprep.subr.bf16.mxu0 0
        %3517 = vmatpush2.bf16.msra.mxu0 0
        %3518 = vmatprep.subr.bf16.mxu0 0
        %3519 = vmatpush2.bf16.msra.mxu0 0
        %3520 = vmatprep.subr.bf16.mxu0 0
        %3521 = vmatpush2.bf16.msra.mxu0 0
        %3522 = vmatprep.subr.bf16.mxu0 0
        %3523 = vmatpush2.bf16.msra.mxu0 0
        %3524 = vmatprep.mubr.bf16.mxu0 0
        %3525 = vmatmul.mubr.bf16.gmra.mxu0 %v3481
        %v3526 = vpop.f32.mrf.mxu0
        %v3527 = vadd.f32 %v3454, %v3526
        %v3528 = vpop.f32.mrf.mxu0
        %v3529 = vpop.f32.mrf.mxu0
        %v3530 = vadd.f32 %v3454, %v3529
        %v3531 = vpop.f32.mrf.mxu0
        %3532 = vmatprep.mubr.bf16.mxu0 0
        %3533 = vmatmul.mubr.bf16.gmra.mxu0 %v3484
        %v3534 = vpop.f32.mrf.mxu0
        %v3535 = vadd.f32 %v3454, %v3534
        %v3536 = vpop.f32.mrf.mxu0
        %v3537 = vpop.f32.mrf.mxu0
        %v3538 = vadd.f32 %v3454, %v3537
        %v3539 = vpop.f32.mrf.mxu0
        %3540 = vmatprep.mubr.bf16.mxu0 0
        %3541 = vmatmul.mubr.bf16.gmra.mxu0 %v3487
        %v3542 = vpop.f32.mrf.mxu0
        %v3543 = vadd.f32 %v3454, %v3542
        %v3544 = vpop.f32.mrf.mxu0
        %v3545 = vpop.f32.mrf.mxu0
        %v3546 = vadd.f32 %v3454, %v3545
        %v3547 = vpop.f32.mrf.mxu0
        %3548 = vmatprep.mubr.bf16.mxu0 0
        %3549 = vmatmul.mubr.bf16.gmra.mxu0 %v3490
        %v3550 = vpop.f32.mrf.mxu0
        %v3551 = vadd.f32 %v3454, %v3550
        %v3552 = vpop.f32.mrf.mxu0
        %v3553 = vpop.f32.mrf.mxu0
        %v3554 = vadd.f32 %v3454, %v3553
        %v3555 = vpop.f32.mrf.mxu0
        %3556 = vdwg.mxu0
        %v3557 = vadd.f32 %v1678, %v3527
        %v3558 = vadd.f32 %v1681, %v3530
        %v3559 = vadd.f32 %v1686, %v3535
        %v3560 = vadd.f32 %v1689, %v3538
        %v3561 = vadd.f32 %v1694, %v3543
        %v3562 = vadd.f32 %v1697, %v3546
        %v3563 = vadd.f32 %v1702, %v3551
        %v3564 = vadd.f32 %v1705, %v3554
        %v3565 = vld [vmem:[#allocation23] sm:$0x1]
        %v3566 = vld [vmem:[#allocation24] sm:$0x1]
        %v3567 = vsel %vm1226, %v3557, 0.0
        %3568 = vadd.xlane.f32.xlu0 %v3567
        %v3569 = vpop.xlane.xlu0 %3568
        %v3570 = vsel %vm1226, %v3558, 0.0
        %3571 = vadd.xlane.f32.xlu0 %v3570
        %v3572 = vpop.xlane.xlu0 %3571
        %v3573 = vsel %vm1226, %v3559, 0.0
        %3574 = vadd.xlane.f32.xlu0 %v3573
        %v3575 = vpop.xlane.xlu0 %3574
        %v3576 = vsel %vm1226, %v3560, 0.0
        %3577 = vadd.xlane.f32.xlu0 %v3576
        %v3578 = vpop.xlane.xlu0 %3577
        %v3579 = vsel %vm1226, %v3561, 0.0
        %3580 = vadd.xlane.f32.xlu0 %v3579
        %v3581 = vpop.xlane.xlu0 %3580
        %v3582 = vsel %vm1226, %v3562, 0.0
        %3583 = vadd.xlane.f32.xlu0 %v3582
        %v3584 = vpop.xlane.xlu0 %3583
        %v3585 = vsel %vm1226, %v3563, 0.0
        %3586 = vadd.xlane.f32.xlu0 %v3585
        %v3587 = vpop.xlane.xlu0 %3586
        %v3588 = vsel %vm1226, %v3564, 0.0
        %3589 = vadd.xlane.f32.xlu0 %v3588
        %v3590 = vpop.xlane.xlu0 %3589
        %v3591 = vmul.f32 %v3569, %v1514
        %v3592 = vmul.f32 %v3572, %v1514
        %v3593 = vmul.f32 %v3575, %v1514
        %v3594 = vmul.f32 %v3578, %v1514
        %v3595 = vmul.f32 %v3581, %v1514
        %v3596 = vmul.f32 %v3584, %v1514
        %v3597 = vmul.f32 %v3587, %v1514
        %v3598 = vmul.f32 %v3590, %v1514
        %v3599 = vsub.f32 %v3557, %v3591
        %v3600 = vsub.f32 %v3558, %v3592
        %v3601 = vsub.f32 %v3559, %v3593
        %v3602 = vsub.f32 %v3560, %v3594
        %v3603 = vsub.f32 %v3561, %v3595
        %v3604 = vsub.f32 %v3562, %v3596
        %v3605 = vsub.f32 %v3563, %v3597
        %v3606 = vsub.f32 %v3564, %v3598
        %v3607 = vmul.f32 %v3599, %v3599
        %v3608 = vmul.f32 %v3600, %v3600
        %v3609 = vmul.f32 %v3601, %v3601
        %v3610 = vmul.f32 %v3602, %v3602
        %v3611 = vmul.f32 %v3603, %v3603
        %v3612 = vmul.f32 %v3604, %v3604
        %v3613 = vmul.f32 %v3605, %v3605
        %v3614 = vmul.f32 %v3606, %v3606
        %v3615 = vsel %vm1226, %v3607, 0.0
        %3616 = vadd.xlane.f32.xlu0 %v3615
        %v3617 = vpop.xlane.xlu0 %3616
        %v3618 = vsel %vm1226, %v3608, 0.0
        %3619 = vadd.xlane.f32.xlu0 %v3618
        %v3620 = vpop.xlane.xlu0 %3619
        %v3621 = vsel %vm1226, %v3609, 0.0
        %3622 = vadd.xlane.f32.xlu0 %v3621
        %v3623 = vpop.xlane.xlu0 %3622
        %v3624 = vsel %vm1226, %v3610, 0.0
        %3625 = vadd.xlane.f32.xlu0 %v3624
        %v3626 = vpop.xlane.xlu0 %3625
        %v3627 = vsel %vm1226, %v3611, 0.0
        %3628 = vadd.xlane.f32.xlu0 %v3627
        %v3629 = vpop.xlane.xlu0 %3628
        %v3630 = vsel %vm1226, %v3612, 0.0
        %3631 = vadd.xlane.f32.xlu0 %v3630
        %v3632 = vpop.xlane.xlu0 %3631
        %v3633 = vsel %vm1226, %v3613, 0.0
        %3634 = vadd.xlane.f32.xlu0 %v3633
        %v3635 = vpop.xlane.xlu0 %3634
        %v3636 = vsel %vm1226, %v3614, 0.0
        %3637 = vadd.xlane.f32.xlu0 %v3636
        %v3638 = vpop.xlane.xlu0 %3637
        %v3639 = vmul.f32 %v3617, %v1514
        %v3640 = vmul.f32 %v3620, %v1514
        %v3641 = vmul.f32 %v3623, %v1514
        %v3642 = vmul.f32 %v3626, %v1514
        %v3643 = vmul.f32 %v3629, %v1514
        %v3644 = vmul.f32 %v3632, %v1514
        %v3645 = vmul.f32 %v3635, %v1514
        %v3646 = vmul.f32 %v3638, %v1514
        %v3647 = vadd.f32 %v3639, 1e-05
        %v3648 = vadd.f32 %v3640, 1e-05
        %v3649 = vadd.f32 %v3641, 1e-05
        %v3650 = vadd.f32 %v3642, 1e-05
        %v3651 = vadd.f32 %v3643, 1e-05
        %v3652 = vadd.f32 %v3644, 1e-05
        %v3653 = vadd.f32 %v3645, 1e-05
        %v3654 = vadd.f32 %v3646, 1e-05
        %v3655 = vrsqrt.pop %v3647
        %v3656 = vrsqrt.pop %v3648
        %v3657 = vrsqrt.pop %v3649
        %v3658 = vrsqrt.pop %v3650
        %v3659 = vrsqrt.pop %v3651
        %v3660 = vrsqrt.pop %v3652
        %v3661 = vrsqrt.pop %v3653
        %v3662 = vrsqrt.pop %v3654
        %v3663 = vmul.f32 %v3599, %v3655
        %v3664 = vmul.f32 %v3600, %v3656
        %v3665 = vmul.f32 %v3601, %v3657
        %v3666 = vmul.f32 %v3602, %v3658
        %v3667 = vmul.f32 %v3603, %v3659
        %v3668 = vmul.f32 %v3604, %v3660
        %v3669 = vmul.f32 %v3605, %v3661
        %v3670 = vmul.f32 %v3606, %v3662
        %v3672 = vlaneseq
        %v3673 = vshrl.u32 %v3672, 7
        %v3674 = vsub.s32 0, %v3673
        %v3675 = vrot.slane %v3565, %v3674
        %v3677 = vmul.f32 %v3663, %v3675
        %v3678 = vmul.f32 %v3664, %v3675
        %v3679 = vmul.f32 %v3665, %v3675
        %v3680 = vmul.f32 %v3666, %v3675
        %v3681 = vmul.f32 %v3667, %v3675
        %v3682 = vmul.f32 %v3668, %v3675
        %v3683 = vmul.f32 %v3669, %v3675
        %v3684 = vmul.f32 %v3670, %v3675
        %v3686 = vlaneseq
        %v3687 = vshrl.u32 %v3686, 7
        %v3688 = vsub.s32 0, %v3687
        %v3689 = vrot.slane %v3566, %v3688
        %v3691 = vadd.f32 %v3677, %v3689
        %v3692 = vadd.f32 %v3678, %v3689
        %v3693 = vadd.f32 %v3679, %v3689
        %v3694 = vadd.f32 %v3680, %v3689
        %v3695 = vadd.f32 %v3681, %v3689
        %v3696 = vadd.f32 %v3682, %v3689
        %v3697 = vadd.f32 %v3683, %v3689
        %v3698 = vadd.f32 %v3684, %v3689
        %v3699 = vld [vmem:[#allocation26] sm:$0xf]
        %v3700 = vld [vmem:[#allocation26 + $0x4] sm:$0xf]
        %v3701 = vld [vmem:[#allocation26 + $0x8] sm:$0xf]
        %v3702 = vld [vmem:[#allocation26 + $0xc] sm:$0xf]
        %v3703 = vld [vmem:[#allocation26 + $0x10] sm:$0xf]
        %v3704 = vld [vmem:[#allocation26 + $0x14] sm:$0xf]
        %v3705 = vld [vmem:[#allocation26 + $0x18] sm:$0xf]
        %v3706 = vld [vmem:[#allocation26 + $0x1c] sm:$0xf]
        %v3707 = vld [vmem:[#allocation27] sm:$0xf]
        %v3708 = vld [vmem:[#allocation27 + $0x4] sm:$0xf]
        %v3709 = vld [vmem:[#allocation27 + $0x8] sm:$0xf]
        %v3710 = vld [vmem:[#allocation27 + $0xc] sm:$0xf]
        %v3711 = vld [vmem:[#allocation29] sm:$0xf]
        %v3712 = vld [vmem:[#allocation29 + $0x4] sm:$0xf]
        %v3713 = vld [vmem:[#allocation29 + $0x8] sm:$0xf]
        %v3714 = vld [vmem:[#allocation29 + $0xc] sm:$0xf]
        %v3715 = vld [vmem:[%s39] sm:$0xf]
        %v3716 = vld [vmem:[%s39 + $0x4] sm:$0xf]
        %v3717 = vld [vmem:[%s39 + $0x8] sm:$0xf]
        %v3718 = vld [vmem:[%s39 + $0xc] sm:$0xf]
        %v3719 = vld [vmem:[%s39 + $0x10] sm:$0xf]
        %v3720 = vld [vmem:[%s39 + $0x14] sm:$0xf]
        %v3721 = vld [vmem:[%s39 + $0x18] sm:$0xf]
        %v3722 = vld [vmem:[%s39 + $0x1c] sm:$0xf]
        %v3723 = vld [vmem:[#allocation30] sm:$0x1]
        %v3724 = vpack.c.bf16 %v3692, %v3691
        %v3725 = vpack.c.bf16 %v3694, %v3693
        %v3726 = vpack.c.bf16 %v3696, %v3695
        %v3727 = vpack.c.bf16 %v3698, %v3697
        %v3736 = vunpack.c.l.b16 %v3699
        %v3737 = vunpack.c.l.b16 %v3700
        %v3738 = vunpack.c.l.b16 %v3701
        %v3739 = vunpack.c.l.b16 %v3702
        %v3740 = vunpack.c.l.b16 %v3703
        %v3741 = vunpack.c.l.b16 %v3704
        %v3742 = vunpack.c.l.b16 %v3705
        %v3743 = vunpack.c.l.b16 %v3706
        %v3744 = vpack.c.b16 %v3737, %v3736
        %v3745 = vpack.c.b16 %v3739, %v3738
        %v3746 = vpack.c.b16 %v3741, %v3740
        %v3747 = vpack.c.b16 %v3743, %v3742
        %v3753 = vsel %vm1226, %v3724, 0
        %v3756 = vsel %vm1226, %v3725, 0
        %v3759 = vsel %vm1226, %v3726, 0
        %v3762 = vsel %vm1226, %v3727, 0
        %3764 = vmatprep.subr.bf16.mxu0 0
        %3765 = vmatpush1.bf16.msra.mxu0 0
        %3766 = vmatprep.subr.bf16.mxu0 0
        %3767 = vmatpush1.bf16.msra.mxu0 0
        %3768 = vmatprep.subr.bf16.mxu0 0
        %3769 = vmatpush1.bf16.msra.mxu0 0
        %3770 = vmatprep.subr.bf16.mxu0 0
        %3771 = vmatpush1.bf16.msra.mxu0 0
        %3772 = vmatprep.subr.bf16.mxu0 0
        %3773 = vmatpush1.bf16.msra.mxu0 %v3747
        %3774 = vmatprep.subr.bf16.mxu0 0
        %3775 = vmatpush1.bf16.msra.mxu0 %v3746
        %3776 = vmatprep.subr.bf16.mxu0 0
        %3777 = vmatpush1.bf16.msra.mxu0 %v3745
        %3778 = vmatprep.subr.bf16.mxu0 0
        %3779 = vmatpush1.bf16.msra.mxu0 %v3744
        %3780 = vmatprep.subr.bf16.mxu0 0
        %3781 = vmatpush2.bf16.msra.mxu0 0
        %3782 = vmatprep.subr.bf16.mxu0 0
        %3783 = vmatpush2.bf16.msra.mxu0 0
        %3784 = vmatprep.subr.bf16.mxu0 0
        %3785 = vmatpush2.bf16.msra.mxu0 0
        %3786 = vmatprep.subr.bf16.mxu0 0
        %3787 = vmatpush2.bf16.msra.mxu0 0
        %3788 = vmatprep.subr.bf16.mxu0 0
        %3789 = vmatpush2.bf16.msra.mxu0 0
        %3790 = vmatprep.subr.bf16.mxu0 0
        %3791 = vmatpush2.bf16.msra.mxu0 0
        %3792 = vmatprep.subr.bf16.mxu0 0
        %3793 = vmatpush2.bf16.msra.mxu0 0
        %3794 = vmatprep.subr.bf16.mxu0 0
        %3795 = vmatpush2.bf16.msra.mxu0 0
        %3796 = vmatprep.mubr.bf16.mxu0 0
        %3797 = vmatmul.mubr.bf16.gmra.mxu0 %v3753
        %v3798 = vpop.f32.mrf.mxu0
        %v3799 = vadd.f32 0.0, %v3798
        %v3800 = vpop.f32.mrf.mxu0
        %v3801 = vpop.f32.mrf.mxu0
        %v3802 = vadd.f32 0.0, %v3801
        %v3803 = vpop.f32.mrf.mxu0
        %3804 = vmatprep.mubr.bf16.mxu0 0
        %3805 = vmatmul.mubr.bf16.gmra.mxu0 %v3756
        %v3806 = vpop.f32.mrf.mxu0
        %v3807 = vadd.f32 0.0, %v3806
        %v3808 = vpop.f32.mrf.mxu0
        %v3809 = vpop.f32.mrf.mxu0
        %v3810 = vadd.f32 0.0, %v3809
        %v3811 = vpop.f32.mrf.mxu0
        %3812 = vmatprep.mubr.bf16.mxu0 0
        %3813 = vmatmul.mubr.bf16.gmra.mxu0 %v3759
        %v3814 = vpop.f32.mrf.mxu0
        %v3815 = vadd.f32 0.0, %v3814
        %v3816 = vpop.f32.mrf.mxu0
        %v3817 = vpop.f32.mrf.mxu0
        %v3818 = vadd.f32 0.0, %v3817
        %v3819 = vpop.f32.mrf.mxu0
        %3820 = vmatprep.mubr.bf16.mxu0 0
        %3821 = vmatmul.mubr.bf16.gmra.mxu0 %v3762
        %v3822 = vpop.f32.mrf.mxu0
        %v3823 = vadd.f32 0.0, %v3822
        %v3824 = vpop.f32.mrf.mxu0
        %v3825 = vpop.f32.mrf.mxu0
        %v3826 = vadd.f32 0.0, %v3825
        %v3827 = vpop.f32.mrf.mxu0
        %3828 = vdwg.mxu0
        %v3829 = vpack.c.bf16 %v1217, %v1217
        %v3834 = vunpack.c.l.b16 %v3707
        %v3835 = vunpack.c.l.b16 %v3708
        %v3836 = vunpack.c.l.b16 %v3709
        %v3837 = vunpack.c.l.b16 %v3710
        %v3838 = vpack.c.b16 %v3835, %v3834
        %v3839 = vpack.c.b16 %v3837, %v3836
        %vm3842 = vcmask 261120
        %v3844 = vsel %vm3842, %v3829, 0
        %3846 = vmatprep.subr.bf16.mxu0 0
        %3847 = vmatpush1.bf16.msra.mxu0 0
        %3848 = vmatprep.subr.bf16.mxu0 0
        %3849 = vmatpush1.bf16.msra.mxu0 0
        %3850 = vmatprep.subr.bf16.mxu0 0
        %3851 = vmatpush1.bf16.msra.mxu0 0
        %3852 = vmatprep.subr.bf16.mxu0 0
        %3853 = vmatpush1.bf16.msra.mxu0 0
        %3854 = vmatprep.subr.bf16.mxu0 0
        %3855 = vmatpush1.bf16.msra.mxu0 0
        %3856 = vmatprep.subr.bf16.mxu0 0
        %3857 = vmatpush1.bf16.msra.mxu0 0
        %3858 = vmatprep.subr.bf16.mxu0 0
        %3859 = vmatpush1.bf16.msra.mxu0 %v3839
        %3860 = vmatprep.subr.bf16.mxu0 0
        %3861 = vmatpush1.bf16.msra.mxu0 %v3838
        %3862 = vmatprep.subr.bf16.mxu0 0
        %3863 = vmatpush2.bf16.msra.mxu0 0
        %3864 = vmatprep.subr.bf16.mxu0 0
        %3865 = vmatpush2.bf16.msra.mxu0 0
        %3866 = vmatprep.subr.bf16.mxu0 0
        %3867 = vmatpush2.bf16.msra.mxu0 0
        %3868 = vmatprep.subr.bf16.mxu0 0
        %3869 = vmatpush2.bf16.msra.mxu0 0
        %3870 = vmatprep.subr.bf16.mxu0 0
        %3871 = vmatpush2.bf16.msra.mxu0 0
        %3872 = vmatprep.subr.bf16.mxu0 0
        %3873 = vmatpush2.bf16.msra.mxu0 0
        %3874 = vmatprep.subr.bf16.mxu0 0
        %3875 = vmatpush2.bf16.msra.mxu0 0
        %3876 = vmatprep.subr.bf16.mxu0 0
        %3877 = vmatpush2.bf16.msra.mxu0 0
        %3878 = vmatprep.mubr.bf16.mxu0 0
        %3879 = vmatmul.mubr.bf16.gmra.mxu0 %v3844
        %v3880 = vpop.f32.mrf.mxu0
        %v3881 = vadd.f32 0.0, %v3880
        %v3882 = vpop.f32.mrf.mxu0
        %v3883 = vpop.f32.mrf.mxu0
        %v3884 = vpop.f32.mrf.mxu0
        %3885 = vdwg.mxu0
        %v3890 = vunpack.c.l.b16 %v3711
        %v3891 = vunpack.c.l.b16 %v3712
        %v3892 = vunpack.c.l.b16 %v3713
        %v3893 = vunpack.c.l.b16 %v3714
        %v3894 = vpack.c.b16 %v3891, %v3890
        %v3895 = vpack.c.b16 %v3893, %v3892
        %3898 = vmatprep.subr.bf16.mxu0 0
        %3899 = vmatpush1.bf16.msra.mxu0 0
        %3900 = vmatprep.subr.bf16.mxu0 0
        %3901 = vmatpush1.bf16.msra.mxu0 0
        %3902 = vmatprep.subr.bf16.mxu0 0
        %3903 = vmatpush1.bf16.msra.mxu0 0
        %3904 = vmatprep.subr.bf16.mxu0 0
        %3905 = vmatpush1.bf16.msra.mxu0 0
        %3906 = vmatprep.subr.bf16.mxu0 0
        %3907 = vmatpush1.bf16.msra.mxu0 0
        %3908 = vmatprep.subr.bf16.mxu0 0
        %3909 = vmatpush1.bf16.msra.mxu0 0
        %3910 = vmatprep.subr.bf16.mxu0 0
        %3911 = vmatpush1.bf16.msra.mxu0 %v3895
        %3912 = vmatprep.subr.bf16.mxu0 0
        %3913 = vmatpush1.bf16.msra.mxu0 %v3894
        %3914 = vmatprep.subr.bf16.mxu0 0
        %3915 = vmatpush2.bf16.msra.mxu0 0
        %3916 = vmatprep.subr.bf16.mxu0 0
        %3917 = vmatpush2.bf16.msra.mxu0 0
        %3918 = vmatprep.subr.bf16.mxu0 0
        %3919 = vmatpush2.bf16.msra.mxu0 0
        %3920 = vmatprep.subr.bf16.mxu0 0
        %3921 = vmatpush2.bf16.msra.mxu0 0
        %3922 = vmatprep.subr.bf16.mxu0 0
        %3923 = vmatpush2.bf16.msra.mxu0 0
        %3924 = vmatprep.subr.bf16.mxu0 0
        %3925 = vmatpush2.bf16.msra.mxu0 0
        %3926 = vmatprep.subr.bf16.mxu0 0
        %3927 = vmatpush2.bf16.msra.mxu0 0
        %3928 = vmatprep.subr.bf16.mxu0 0
        %3929 = vmatpush2.bf16.msra.mxu0 0
        %3930 = vmatprep.mubr.bf16.mxu0 0
        %3931 = vmatmul.mubr.bf16.gmra.mxu0 %v3844
        %v3932 = vpop.f32.mrf.mxu0
        %v3933 = vadd.f32 0.0, %v3932
        %v3934 = vpop.f32.mrf.mxu0
        %v3935 = vpop.f32.mrf.mxu0
        %v3936 = vpop.f32.mrf.mxu0
        %3937 = vdwg.mxu0
        %v3938 = vmul.f32 %v3799, 0.25
        %v3939 = vmul.f32 %v3802, 0.25
        %v3940 = vmul.f32 %v3807, 0.25
        %v3941 = vmul.f32 %v3810, 0.25
        %v3942 = vmul.f32 %v3815, 0.25
        %v3943 = vmul.f32 %v3818, 0.25
        %v3944 = vmul.f32 %v3823, 0.25
        %v3945 = vmul.f32 %v3826, 0.25
        %v3946 = vpack.c.bf16 %v3939, %v3938
        %v3947 = vpack.c.bf16 %v3941, %v3940
        %v3948 = vpack.c.bf16 %v3943, %v3942
        %v3949 = vpack.c.bf16 %v3945, %v3944
        %v3950 = vpack.c.bf16 %v3881, %v3881
        %v3951 = vpack.c.bf16 %v3933, %v3933
        %v3953 = vsel %vm2178, %v3946, 0
        %v3956 = vsel %vm2178, %v3947, 0
        %v3959 = vsel %vm2178, %v3948, 0
        %v3962 = vsel %vm2178, %v3949, 0
        %v3965 = vsel %vm2178, %v3950, 0
        %3967 = vmatprep.subr.bf16.mxu0 0
        %3968 = vmatpush1.bf16.xpose.msra.mxu0 0
        %3969 = vmatprep.subr.bf16.mxu0 0
        %3970 = vmatpush1.bf16.xpose.msra.mxu0 0
        %3971 = vmatprep.subr.bf16.mxu0 0
        %3972 = vmatpush1.bf16.xpose.msra.mxu0 0
        %3973 = vmatprep.subr.bf16.mxu0 0
        %3974 = vmatpush1.bf16.xpose.msra.mxu0 0
        %3975 = vmatprep.subr.bf16.mxu0 0
        %3976 = vmatpush1.bf16.xpose.msra.mxu0 0
        %3977 = vmatprep.subr.bf16.mxu0 0
        %3978 = vmatpush1.bf16.xpose.msra.mxu0 0
        %3979 = vmatprep.subr.bf16.mxu0 0
        %3980 = vmatpush1.bf16.xpose.msra.mxu0 0
        %3981 = vmatprep.subr.bf16.mxu0 0
        %3982 = vmatpush1.bf16.xpose.msra.mxu0 %v3965
        %3983 = vmatprep.subr.bf16.mxu0 0
        %3984 = vmatpush2.bf16.xpose.msra.mxu0 0
        %3985 = vmatprep.subr.bf16.mxu0 0
        %3986 = vmatpush2.bf16.xpose.msra.mxu0 0
        %3987 = vmatprep.subr.bf16.mxu0 0
        %3988 = vmatpush2.bf16.xpose.msra.mxu0 0
        %3989 = vmatprep.subr.bf16.mxu0 0
        %3990 = vmatpush2.bf16.xpose.msra.mxu0 0
        %3991 = vmatprep.subr.bf16.mxu0 0
        %3992 = vmatpush2.bf16.xpose.msra.mxu0 0
        %3993 = vmatprep.subr.bf16.mxu0 0
        %3994 = vmatpush2.bf16.xpose.msra.mxu0 0
        %3995 = vmatprep.subr.bf16.mxu0 0
        %3996 = vmatpush2.bf16.xpose.msra.mxu0 0
        %3997 = vmatprep.subr.bf16.mxu0 0
        %3998 = vmatpush2.bf16.xpose.msra.mxu0 0
        %3999 = vmatprep.mubr.bf16.mxu0 0
        %4000 = vmatmul.mubr.bf16.gmra.mxu0 %v3953
        %v4001 = vpop.f32.mrf.mxu0
        %v4002 = vadd.f32 0.0, %v4001
        %v4003 = vpop.f32.mrf.mxu0
        %v4004 = vpop.f32.mrf.mxu0
        %v4005 = vadd.f32 0.0, %v4004
        %v4006 = vpop.f32.mrf.mxu0
        %4007 = vmatprep.mubr.bf16.mxu0 0
        %4008 = vmatmul.mubr.bf16.gmra.mxu0 %v3956
        %v4009 = vpop.f32.mrf.mxu0
        %v4010 = vadd.f32 0.0, %v4009
        %v4011 = vpop.f32.mrf.mxu0
        %v4012 = vpop.f32.mrf.mxu0
        %v4013 = vadd.f32 0.0, %v4012
        %v4014 = vpop.f32.mrf.mxu0
        %4015 = vmatprep.mubr.bf16.mxu0 0
        %4016 = vmatmul.mubr.bf16.gmra.mxu0 %v3959
        %v4017 = vpop.f32.mrf.mxu0
        %v4018 = vadd.f32 0.0, %v4017
        %v4019 = vpop.f32.mrf.mxu0
        %v4020 = vpop.f32.mrf.mxu0
        %v4021 = vadd.f32 0.0, %v4020
        %v4022 = vpop.f32.mrf.mxu0
        %4023 = vmatprep.mubr.bf16.mxu0 0
        %4024 = vmatmul.mubr.bf16.gmra.mxu0 %v3962
        %v4025 = vpop.f32.mrf.mxu0
        %v4026 = vadd.f32 0.0, %v4025
        %v4027 = vpop.f32.mrf.mxu0
        %v4028 = vpop.f32.mrf.mxu0
        %v4029 = vadd.f32 0.0, %v4028
        %v4030 = vpop.f32.mrf.mxu0
        %4031 = vdwg.mxu0
        %vm4032 = vcmask 64512
        %v4033 = vsel %vm4032, %v4002, -inf
        %4034 = vmax.xlane.f32.xlu0 %v4033
        %v4035 = vpop.xlane.xlu0 %4034
        %v4036 = vsel %vm4032, %v4005, -inf
        %4037 = vmax.xlane.f32.xlu0 %v4036
        %v4038 = vpop.xlane.xlu0 %4037
        %v4039 = vsel %vm4032, %v4010, -inf
        %4040 = vmax.xlane.f32.xlu0 %v4039
        %v4041 = vpop.xlane.xlu0 %4040
        %v4042 = vsel %vm4032, %v4013, -inf
        %4043 = vmax.xlane.f32.xlu0 %v4042
        %v4044 = vpop.xlane.xlu0 %4043
        %v4045 = vsel %vm4032, %v4018, -inf
        %4046 = vmax.xlane.f32.xlu0 %v4045
        %v4047 = vpop.xlane.xlu0 %4046
        %v4048 = vsel %vm4032, %v4021, -inf
        %4049 = vmax.xlane.f32.xlu0 %v4048
        %v4050 = vpop.xlane.xlu0 %4049
        %v4051 = vsel %vm4032, %v4026, -inf
        %4052 = vmax.xlane.f32.xlu0 %v4051
        %v4053 = vpop.xlane.xlu0 %4052
        %v4054 = vsel %vm4032, %v4029, -inf
        %4055 = vmax.xlane.f32.xlu0 %v4054
        %v4056 = vpop.xlane.xlu0 %4055
        %v4057 = vsub.f32 %v4002, %v4035
        %v4058 = vsub.f32 %v4005, %v4038
        %v4059 = vsub.f32 %v4010, %v4041
        %v4060 = vsub.f32 %v4013, %v4044
        %v4061 = vsub.f32 %v4018, %v4047
        %v4062 = vsub.f32 %v4021, %v4050
        %v4063 = vsub.f32 %v4026, %v4053
        %v4064 = vsub.f32 %v4029, %v4056
        %v4065 = vmul.f32 %v4057, 1.442695
        %v4066 = vpow.pop %v4065
        %v4067 = vmul.f32 %v4058, 1.442695
        %v4068 = vpow.pop %v4067
        %v4069 = vmul.f32 %v4059, 1.442695
        %v4070 = vpow.pop %v4069
        %v4071 = vmul.f32 %v4060, 1.442695
        %v4072 = vpow.pop %v4071
        %v4073 = vmul.f32 %v4061, 1.442695
        %v4074 = vpow.pop %v4073
        %v4075 = vmul.f32 %v4062, 1.442695
        %v4076 = vpow.pop %v4075
        %v4077 = vmul.f32 %v4063, 1.442695
        %v4078 = vpow.pop %v4077
        %v4079 = vmul.f32 %v4064, 1.442695
        %v4080 = vpow.pop %v4079
        %v4081 = vsel %vm4032, %v4066, 0.0
        %4082 = vadd.xlane.f32.xlu0 %v4081
        %v4083 = vpop.xlane.xlu0 %4082
        %v4084 = vsel %vm4032, %v4068, 0.0
        %4085 = vadd.xlane.f32.xlu0 %v4084
        %v4086 = vpop.xlane.xlu0 %4085
        %v4087 = vsel %vm4032, %v4070, 0.0
        %4088 = vadd.xlane.f32.xlu0 %v4087
        %v4089 = vpop.xlane.xlu0 %4088
        %v4090 = vsel %vm4032, %v4072, 0.0
        %4091 = vadd.xlane.f32.xlu0 %v4090
        %v4092 = vpop.xlane.xlu0 %4091
        %v4093 = vsel %vm4032, %v4074, 0.0
        %4094 = vadd.xlane.f32.xlu0 %v4093
        %v4095 = vpop.xlane.xlu0 %4094
        %v4096 = vsel %vm4032, %v4076, 0.0
        %4097 = vadd.xlane.f32.xlu0 %v4096
        %v4098 = vpop.xlane.xlu0 %4097
        %v4099 = vsel %vm4032, %v4078, 0.0
        %4100 = vadd.xlane.f32.xlu0 %v4099
        %v4101 = vpop.xlane.xlu0 %4100
        %v4102 = vsel %vm4032, %v4080, 0.0
        %4103 = vadd.xlane.f32.xlu0 %v4102
        %v4104 = vpop.xlane.xlu0 %4103
        %v4105 = vrcp.pop %v4083
        %v4106 = vmul.f32 %v4066, %v4105
        %v4107 = vrcp.pop %v4086
        %v4108 = vmul.f32 %v4068, %v4107
        %v4109 = vrcp.pop %v4089
        %v4110 = vmul.f32 %v4070, %v4109
        %v4111 = vrcp.pop %v4092
        %v4112 = vmul.f32 %v4072, %v4111
        %v4113 = vrcp.pop %v4095
        %v4114 = vmul.f32 %v4074, %v4113
        %v4115 = vrcp.pop %v4098
        %v4116 = vmul.f32 %v4076, %v4115
        %v4117 = vrcp.pop %v4101
        %v4118 = vmul.f32 %v4078, %v4117
        %v4119 = vrcp.pop %v4104
        %v4120 = vmul.f32 %v4080, %v4119
        %v4121 = vpack.c.bf16 %v4108, %v4106
        %v4122 = vpack.c.bf16 %v4112, %v4110
        %v4123 = vpack.c.bf16 %v4116, %v4114
        %v4124 = vpack.c.bf16 %v4120, %v4118
        %v4126 = vsel %vm4032, %v4121, 0
        %v4129 = vsel %vm4032, %v4122, 0
        %v4132 = vsel %vm4032, %v4123, 0
        %v4135 = vsel %vm4032, %v4124, 0
        %vm4137 = vcmask 1043456
        %v4139 = vsel %vm4137, %v3951, 0
        %4141 = vmatprep.subr.bf16.mxu0 0
        %4142 = vmatpush1.bf16.msra.mxu0 0
        %4143 = vmatprep.subr.bf16.mxu0 0
        %4144 = vmatpush1.bf16.msra.mxu0 0
        %4145 = vmatprep.subr.bf16.mxu0 0
        %4146 = vmatpush1.bf16.msra.mxu0 0
        %4147 = vmatprep.subr.bf16.mxu0 0
        %4148 = vmatpush1.bf16.msra.mxu0 0
        %4149 = vmatprep.subr.bf16.mxu0 0
        %4150 = vmatpush1.bf16.msra.mxu0 0
        %4151 = vmatprep.subr.bf16.mxu0 0
        %4152 = vmatpush1.bf16.msra.mxu0 0
        %4153 = vmatprep.subr.bf16.mxu0 0
        %4154 = vmatpush1.bf16.msra.mxu0 0
        %4155 = vmatprep.subr.bf16.mxu0 0
        %4156 = vmatpush1.bf16.msra.mxu0 %v4139
        %4157 = vmatprep.subr.bf16.mxu0 0
        %4158 = vmatpush2.bf16.msra.mxu0 0
        %4159 = vmatprep.subr.bf16.mxu0 0
        %4160 = vmatpush2.bf16.msra.mxu0 0
        %4161 = vmatprep.subr.bf16.mxu0 0
        %4162 = vmatpush2.bf16.msra.mxu0 0
        %4163 = vmatprep.subr.bf16.mxu0 0
        %4164 = vmatpush2.bf16.msra.mxu0 0
        %4165 = vmatprep.subr.bf16.mxu0 0
        %4166 = vmatpush2.bf16.msra.mxu0 0
        %4167 = vmatprep.subr.bf16.mxu0 0
        %4168 = vmatpush2.bf16.msra.mxu0 0
        %4169 = vmatprep.subr.bf16.mxu0 0
        %4170 = vmatpush2.bf16.msra.mxu0 0
        %4171 = vmatprep.subr.bf16.mxu0 0
        %4172 = vmatpush2.bf16.msra.mxu0 0
        %4173 = vmatprep.mubr.bf16.mxu0 0
        %4174 = vmatmul.mubr.bf16.gmra.mxu0 %v4126
        %v4175 = vpop.f32.mrf.mxu0
        %v4176 = vadd.f32 0.0, %v4175
        %v4177 = vpop.f32.mrf.mxu0
        %v4178 = vpop.f32.mrf.mxu0
        %v4179 = vadd.f32 0.0, %v4178
        %v4180 = vpop.f32.mrf.mxu0
        %4181 = vmatprep.mubr.bf16.mxu0 0
        %4182 = vmatmul.mubr.bf16.gmra.mxu0 %v4129
        %v4183 = vpop.f32.mrf.mxu0
        %v4184 = vadd.f32 0.0, %v4183
        %v4185 = vpop.f32.mrf.mxu0
        %v4186 = vpop.f32.mrf.mxu0
        %v4187 = vadd.f32 0.0, %v4186
        %v4188 = vpop.f32.mrf.mxu0
        %4189 = vmatprep.mubr.bf16.mxu0 0
        %4190 = vmatmul.mubr.bf16.gmra.mxu0 %v4132
        %v4191 = vpop.f32.mrf.mxu0
        %v4192 = vadd.f32 0.0, %v4191
        %v4193 = vpop.f32.mrf.mxu0
        %v4194 = vpop.f32.mrf.mxu0
        %v4195 = vadd.f32 0.0, %v4194
        %v4196 = vpop.f32.mrf.mxu0
        %4197 = vmatprep.mubr.bf16.mxu0 0
        %4198 = vmatmul.mubr.bf16.gmra.mxu0 %v4135
        %v4199 = vpop.f32.mrf.mxu0
        %v4200 = vadd.f32 0.0, %v4199
        %v4201 = vpop.f32.mrf.mxu0
        %v4202 = vpop.f32.mrf.mxu0
        %v4203 = vadd.f32 0.0, %v4202
        %v4204 = vpop.f32.mrf.mxu0
        %4205 = vdwg.mxu0
        %4206 = vst.msk [vmem:[#allocation2] sm:$0xff] %vm2178, %v4176
        %4207 = vst.msk [vmem:[#allocation2 + $0x8] sm:$0xff] %vm2178, %v4179
        %4208 = vst.msk [vmem:[#allocation2 + $0x10] sm:$0xff] %vm2178, %v4184
        %4209 = vst.msk [vmem:[#allocation2 + $0x18] sm:$0xff] %vm2178, %v4187
        %4210 = vst.msk [vmem:[#allocation2 + $0x20] sm:$0xff] %vm2178, %v4192
        %4211 = vst.msk [vmem:[#allocation2 + $0x28] sm:$0xff] %vm2178, %v4195
        %4212 = vst.msk [vmem:[#allocation2 + $0x30] sm:$0xff] %vm2178, %v4200
        %4213 = vst.msk [vmem:[#allocation2 + $0x38] sm:$0xff] %vm2178, %v4203
        %4218 = vrot.lane.b32.xlu0 %v3946, 112
        %v4219 = vpop.permute.xlu0 %4218
        %4220 = vrot.lane.b32.xlu0 %v3947, 112
        %v4221 = vpop.permute.xlu0 %4220
        %4222 = vrot.lane.b32.xlu0 %v3948, 112
        %v4223 = vpop.permute.xlu0 %4222
        %4224 = vrot.lane.b32.xlu0 %v3949, 112
        %v4225 = vpop.permute.xlu0 %4224
        %4227 = vrot.lane.b32.xlu0 %v3950, 112
        %v4228 = vpop.permute.xlu0 %4227
        %v4230 = vsel %vm2178, %v4219, 0
        %v4233 = vsel %vm2178, %v4221, 0
        %v4236 = vsel %vm2178, %v4223, 0
        %v4239 = vsel %vm2178, %v4225, 0
        %v4242 = vsel %vm2178, %v4228, 0
        %4244 = vmatprep.subr.bf16.mxu0 0
        %4245 = vmatpush1.bf16.xpose.msra.mxu0 0
        %4246 = vmatprep.subr.bf16.mxu0 0
        %4247 = vmatpush1.bf16.xpose.msra.mxu0 0
        %4248 = vmatprep.subr.bf16.mxu0 0
        %4249 = vmatpush1.bf16.xpose.msra.mxu0 0
        %4250 = vmatprep.subr.bf16.mxu0 0
        %4251 = vmatpush1.bf16.xpose.msra.mxu0 0
        %4252 = vmatprep.subr.bf16.mxu0 0
        %4253 = vmatpush1.bf16.xpose.msra.mxu0 0
        %4254 = vmatprep.subr.bf16.mxu0 0
        %4255 = vmatpush1.bf16.xpose.msra.mxu0 0
        %4256 = vmatprep.subr.bf16.mxu0 0
        %4257 = vmatpush1.bf16.xpose.msra.mxu0 0
        %4258 = vmatprep.subr.bf16.mxu0 0
        %4259 = vmatpush1.bf16.xpose.msra.mxu0 %v4242
        %4260 = vmatprep.subr.bf16.mxu0 0
        %4261 = vmatpush2.bf16.xpose.msra.mxu0 0
        %4262 = vmatprep.subr.bf16.mxu0 0
        %4263 = vmatpush2.bf16.xpose.msra.mxu0 0
        %4264 = vmatprep.subr.bf16.mxu0 0
        %4265 = vmatpush2.bf16.xpose.msra.mxu0 0
        %4266 = vmatprep.subr.bf16.mxu0 0
        %4267 = vmatpush2.bf16.xpose.msra.mxu0 0
        %4268 = vmatprep.subr.bf16.mxu0 0
        %4269 = vmatpush2.bf16.xpose.msra.mxu0 0
        %4270 = vmatprep.subr.bf16.mxu0 0
        %4271 = vmatpush2.bf16.xpose.msra.mxu0 0
        %4272 = vmatprep.subr.bf16.mxu0 0
        %4273 = vmatpush2.bf16.xpose.msra.mxu0 0
        %4274 = vmatprep.subr.bf16.mxu0 0
        %4275 = vmatpush2.bf16.xpose.msra.mxu0 0
        %4276 = vmatprep.mubr.bf16.mxu0 0
        %4277 = vmatmul.mubr.bf16.gmra.mxu0 %v4230
        %v4278 = vpop.f32.mrf.mxu0
        %v4279 = vadd.f32 0.0, %v4278
        %v4280 = vpop.f32.mrf.mxu0
        %v4281 = vpop.f32.mrf.mxu0
        %v4282 = vadd.f32 0.0, %v4281
        %v4283 = vpop.f32.mrf.mxu0
        %4284 = vmatprep.mubr.bf16.mxu0 0
        %4285 = vmatmul.mubr.bf16.gmra.mxu0 %v4233
        %v4286 = vpop.f32.mrf.mxu0
        %v4287 = vadd.f32 0.0, %v4286
        %v4288 = vpop.f32.mrf.mxu0
        %v4289 = vpop.f32.mrf.mxu0
        %v4290 = vadd.f32 0.0, %v4289
        %v4291 = vpop.f32.mrf.mxu0
        %4292 = vmatprep.mubr.bf16.mxu0 0
        %4293 = vmatmul.mubr.bf16.gmra.mxu0 %v4236
        %v4294 = vpop.f32.mrf.mxu0
        %v4295 = vadd.f32 0.0, %v4294
        %v4296 = vpop.f32.mrf.mxu0
        %v4297 = vpop.f32.mrf.mxu0
        %v4298 = vadd.f32 0.0, %v4297
        %v4299 = vpop.f32.mrf.mxu0
        %4300 = vmatprep.mubr.bf16.mxu0 0
        %4301 = vmatmul.mubr.bf16.gmra.mxu0 %v4239
        %v4302 = vpop.f32.mrf.mxu0
        %v4303 = vadd.f32 0.0, %v4302
        %v4304 = vpop.f32.mrf.mxu0
        %v4305 = vpop.f32.mrf.mxu0
        %v4306 = vadd.f32 0.0, %v4305
        %v4307 = vpop.f32.mrf.mxu0
        %4308 = vdwg.mxu0
        %v4309 = vsel %vm4032, %v4279, -inf
        %4310 = vmax.xlane.f32.xlu0 %v4309
        %v4311 = vpop.xlane.xlu0 %4310
        %v4312 = vsel %vm4032, %v4282, -inf
        %4313 = vmax.xlane.f32.xlu0 %v4312
        %v4314 = vpop.xlane.xlu0 %4313
        %v4315 = vsel %vm4032, %v4287, -inf
        %4316 = vmax.xlane.f32.xlu0 %v4315
        %v4317 = vpop.xlane.xlu0 %4316
        %v4318 = vsel %vm4032, %v4290, -inf
        %4319 = vmax.xlane.f32.xlu0 %v4318
        %v4320 = vpop.xlane.xlu0 %4319
        %v4321 = vsel %vm4032, %v4295, -inf
        %4322 = vmax.xlane.f32.xlu0 %v4321
        %v4323 = vpop.xlane.xlu0 %4322
        %v4324 = vsel %vm4032, %v4298, -inf
        %4325 = vmax.xlane.f32.xlu0 %v4324
        %v4326 = vpop.xlane.xlu0 %4325
        %v4327 = vsel %vm4032, %v4303, -inf
        %4328 = vmax.xlane.f32.xlu0 %v4327
        %v4329 = vpop.xlane.xlu0 %4328
        %v4330 = vsel %vm4032, %v4306, -inf
        %4331 = vmax.xlane.f32.xlu0 %v4330
        %v4332 = vpop.xlane.xlu0 %4331
        %v4333 = vsub.f32 %v4279, %v4311
        %v4334 = vsub.f32 %v4282, %v4314
        %v4335 = vsub.f32 %v4287, %v4317
        %v4336 = vsub.f32 %v4290, %v4320
        %v4337 = vsub.f32 %v4295, %v4323
        %v4338 = vsub.f32 %v4298, %v4326
        %v4339 = vsub.f32 %v4303, %v4329
        %v4340 = vsub.f32 %v4306, %v4332
        %v4341 = vmul.f32 %v4333, 1.442695
        %v4342 = vpow.pop %v4341
        %v4343 = vmul.f32 %v4334, 1.442695
        %v4344 = vpow.pop %v4343
        %v4345 = vmul.f32 %v4335, 1.442695
        %v4346 = vpow.pop %v4345
        %v4347 = vmul.f32 %v4336, 1.442695
        %v4348 = vpow.pop %v4347
        %v4349 = vmul.f32 %v4337, 1.442695
        %v4350 = vpow.pop %v4349
        %v4351 = vmul.f32 %v4338, 1.442695
        %v4352 = vpow.pop %v4351
        %v4353 = vmul.f32 %v4339, 1.442695
        %v4354 = vpow.pop %v4353
        %v4355 = vmul.f32 %v4340, 1.442695
        %v4356 = vpow.pop %v4355
        %v4357 = vsel %vm4032, %v4342, 0.0
        %4358 = vadd.xlane.f32.xlu0 %v4357
        %v4359 = vpop.xlane.xlu0 %4358
        %v4360 = vsel %vm4032, %v4344, 0.0
        %4361 = vadd.xlane.f32.xlu0 %v4360
        %v4362 = vpop.xlane.xlu0 %4361
        %v4363 = vsel %vm4032, %v4346, 0.0
        %4364 = vadd.xlane.f32.xlu0 %v4363
        %v4365 = vpop.xlane.xlu0 %4364
        %v4366 = vsel %vm4032, %v4348, 0.0
        %4367 = vadd.xlane.f32.xlu0 %v4366
        %v4368 = vpop.xlane.xlu0 %4367
        %v4369 = vsel %vm4032, %v4350, 0.0
        %4370 = vadd.xlane.f32.xlu0 %v4369
        %v4371 = vpop.xlane.xlu0 %4370
        %v4372 = vsel %vm4032, %v4352, 0.0
        %4373 = vadd.xlane.f32.xlu0 %v4372
        %v4374 = vpop.xlane.xlu0 %4373
        %v4375 = vsel %vm4032, %v4354, 0.0
        %4376 = vadd.xlane.f32.xlu0 %v4375
        %v4377 = vpop.xlane.xlu0 %4376
        %v4378 = vsel %vm4032, %v4356, 0.0
        %4379 = vadd.xlane.f32.xlu0 %v4378
        %v4380 = vpop.xlane.xlu0 %4379
        %v4381 = vrcp.pop %v4359
        %v4382 = vmul.f32 %v4342, %v4381
        %v4383 = vrcp.pop %v4362
        %v4384 = vmul.f32 %v4344, %v4383
        %v4385 = vrcp.pop %v4365
        %v4386 = vmul.f32 %v4346, %v4385
        %v4387 = vrcp.pop %v4368
        %v4388 = vmul.f32 %v4348, %v4387
        %v4389 = vrcp.pop %v4371
        %v4390 = vmul.f32 %v4350, %v4389
        %v4391 = vrcp.pop %v4374
        %v4392 = vmul.f32 %v4352, %v4391
        %v4393 = vrcp.pop %v4377
        %v4394 = vmul.f32 %v4354, %v4393
        %v4395 = vrcp.pop %v4380
        %v4396 = vmul.f32 %v4356, %v4395
        %v4397 = vpack.c.bf16 %v4384, %v4382
        %v4398 = vpack.c.bf16 %v4388, %v4386
        %v4399 = vpack.c.bf16 %v4392, %v4390
        %v4400 = vpack.c.bf16 %v4396, %v4394
        %4402 = vrot.lane.b32.xlu0 %v3951, 112
        %v4403 = vpop.permute.xlu0 %4402
        %v4405 = vsel %vm4032, %v4397, 0
        %v4408 = vsel %vm4032, %v4398, 0
        %v4411 = vsel %vm4032, %v4399, 0
        %v4414 = vsel %vm4032, %v4400, 0
        %v4417 = vsel %vm4137, %v4403, 0
        %4419 = vmatprep.subr.bf16.mxu0 0
        %4420 = vmatpush1.bf16.msra.mxu0 0
        %4421 = vmatprep.subr.bf16.mxu0 0
        %4422 = vmatpush1.bf16.msra.mxu0 0
        %4423 = vmatprep.subr.bf16.mxu0 0
        %4424 = vmatpush1.bf16.msra.mxu0 0
        %4425 = vmatprep.subr.bf16.mxu0 0
        %4426 = vmatpush1.bf16.msra.mxu0 0
        %4427 = vmatprep.subr.bf16.mxu0 0
        %4428 = vmatpush1.bf16.msra.mxu0 0
        %4429 = vmatprep.subr.bf16.mxu0 0
        %4430 = vmatpush1.bf16.msra.mxu0 0
        %4431 = vmatprep.subr.bf16.mxu0 0
        %4432 = vmatpush1.bf16.msra.mxu0 0
        %4433 = vmatprep.subr.bf16.mxu0 0
        %4434 = vmatpush1.bf16.msra.mxu0 %v4417
        %4435 = vmatprep.subr.bf16.mxu0 0
        %4436 = vmatpush2.bf16.msra.mxu0 0
        %4437 = vmatprep.subr.bf16.mxu0 0
        %4438 = vmatpush2.bf16.msra.mxu0 0
        %4439 = vmatprep.subr.bf16.mxu0 0
        %4440 = vmatpush2.bf16.msra.mxu0 0
        %4441 = vmatprep.subr.bf16.mxu0 0
        %4442 = vmatpush2.bf16.msra.mxu0 0
        %4443 = vmatprep.subr.bf16.mxu0 0
        %4444 = vmatpush2.bf16.msra.mxu0 0
        %4445 = vmatprep.subr.bf16.mxu0 0
        %4446 = vmatpush2.bf16.msra.mxu0 0
        %4447 = vmatprep.subr.bf16.mxu0 0
        %4448 = vmatpush2.bf16.msra.mxu0 0
        %4449 = vmatprep.subr.bf16.mxu0 0
        %4450 = vmatpush2.bf16.msra.mxu0 0
        %4451 = vmatprep.mubr.bf16.mxu0 0
        %4452 = vmatmul.mubr.bf16.gmra.mxu0 %v4405
        %v4453 = vpop.f32.mrf.mxu0
        %v4454 = vadd.f32 0.0, %v4453
        %v4455 = vpop.f32.mrf.mxu0
        %v4456 = vpop.f32.mrf.mxu0
        %v4457 = vadd.f32 0.0, %v4456
        %v4458 = vpop.f32.mrf.mxu0
        %4459 = vmatprep.mubr.bf16.mxu0 0
        %4460 = vmatmul.mubr.bf16.gmra.mxu0 %v4408
        %v4461 = vpop.f32.mrf.mxu0
        %v4462 = vadd.f32 0.0, %v4461
        %v4463 = vpop.f32.mrf.mxu0
        %v4464 = vpop.f32.mrf.mxu0
        %v4465 = vadd.f32 0.0, %v4464
        %v4466 = vpop.f32.mrf.mxu0
        %4467 = vmatprep.mubr.bf16.mxu0 0
        %4468 = vmatmul.mubr.bf16.gmra.mxu0 %v4411
        %v4469 = vpop.f32.mrf.mxu0
        %v4470 = vadd.f32 0.0, %v4469
        %v4471 = vpop.f32.mrf.mxu0
        %v4472 = vpop.f32.mrf.mxu0
        %v4473 = vadd.f32 0.0, %v4472
        %v4474 = vpop.f32.mrf.mxu0
        %4475 = vmatprep.mubr.bf16.mxu0 0
        %4476 = vmatmul.mubr.bf16.gmra.mxu0 %v4414
        %v4477 = vpop.f32.mrf.mxu0
        %v4478 = vadd.f32 0.0, %v4477
        %v4479 = vpop.f32.mrf.mxu0
        %v4480 = vpop.f32.mrf.mxu0
        %v4481 = vadd.f32 0.0, %v4480
        %v4482 = vpop.f32.mrf.mxu0
        %4483 = vdwg.mxu0
        %4492 = vrot.lane.b32.xlu0 %v4454, 16
        %v4493 = vpop.permute.xlu0 %4492
        %4494 = vrot.lane.b32.xlu0 %v4457, 16
        %v4495 = vpop.permute.xlu0 %4494
        %4496 = vrot.lane.b32.xlu0 %v4462, 16
        %v4497 = vpop.permute.xlu0 %4496
        %4498 = vrot.lane.b32.xlu0 %v4465, 16
        %v4499 = vpop.permute.xlu0 %4498
        %4500 = vrot.lane.b32.xlu0 %v4470, 16
        %v4501 = vpop.permute.xlu0 %4500
        %4502 = vrot.lane.b32.xlu0 %v4473, 16
        %v4503 = vpop.permute.xlu0 %4502
        %4504 = vrot.lane.b32.xlu0 %v4478, 16
        %v4505 = vpop.permute.xlu0 %4504
        %4506 = vrot.lane.b32.xlu0 %v4481, 16
        %v4507 = vpop.permute.xlu0 %4506
        %4516 = vst.msk [vmem:[#allocation2] sm:$0xff] %vm2775, %v4493
        %4517 = vst.msk [vmem:[#allocation2 + $0x8] sm:$0xff] %vm2775, %v4495
        %4518 = vst.msk [vmem:[#allocation2 + $0x10] sm:$0xff] %vm2775, %v4497
        %4519 = vst.msk [vmem:[#allocation2 + $0x18] sm:$0xff] %vm2775, %v4499
        %4520 = vst.msk [vmem:[#allocation2 + $0x20] sm:$0xff] %vm2775, %v4501
        %4521 = vst.msk [vmem:[#allocation2 + $0x28] sm:$0xff] %vm2775, %v4503
        %4522 = vst.msk [vmem:[#allocation2 + $0x30] sm:$0xff] %vm2775, %v4505
        %4523 = vst.msk [vmem:[#allocation2 + $0x38] sm:$0xff] %vm2775, %v4507
        %4524 = vrot.lane.b32.xlu0 %v3946, 96
        %v4525 = vpop.permute.xlu0 %4524
        %4526 = vrot.lane.b32.xlu0 %v3947, 96
        %v4527 = vpop.permute.xlu0 %4526
        %4528 = vrot.lane.b32.xlu0 %v3948, 96
        %v4529 = vpop.permute.xlu0 %4528
        %4530 = vrot.lane.b32.xlu0 %v3949, 96
        %v4531 = vpop.permute.xlu0 %4530
        %4532 = vrot.lane.b32.xlu0 %v3950, 96
        %v4533 = vpop.permute.xlu0 %4532
        %v4535 = vsel %vm2178, %v4525, 0
        %v4538 = vsel %vm2178, %v4527, 0
        %v4541 = vsel %vm2178, %v4529, 0
        %v4544 = vsel %vm2178, %v4531, 0
        %v4547 = vsel %vm2178, %v4533, 0
        %4549 = vmatprep.subr.bf16.mxu0 0
        %4550 = vmatpush1.bf16.xpose.msra.mxu0 0
        %4551 = vmatprep.subr.bf16.mxu0 0
        %4552 = vmatpush1.bf16.xpose.msra.mxu0 0
        %4553 = vmatprep.subr.bf16.mxu0 0
        %4554 = vmatpush1.bf16.xpose.msra.mxu0 0
        %4555 = vmatprep.subr.bf16.mxu0 0
        %4556 = vmatpush1.bf16.xpose.msra.mxu0 0
        %4557 = vmatprep.subr.bf16.mxu0 0
        %4558 = vmatpush1.bf16.xpose.msra.mxu0 0
        %4559 = vmatprep.subr.bf16.mxu0 0
        %4560 = vmatpush1.bf16.xpose.msra.mxu0 0
        %4561 = vmatprep.subr.bf16.mxu0 0
        %4562 = vmatpush1.bf16.xpose.msra.mxu0 0
        %4563 = vmatprep.subr.bf16.mxu0 0
        %4564 = vmatpush1.bf16.xpose.msra.mxu0 %v4547
        %4565 = vmatprep.subr.bf16.mxu0 0
        %4566 = vmatpush2.bf16.xpose.msra.mxu0 0
        %4567 = vmatprep.subr.bf16.mxu0 0
        %4568 = vmatpush2.bf16.xpose.msra.mxu0 0
        %4569 = vmatprep.subr.bf16.mxu0 0
        %4570 = vmatpush2.bf16.xpose.msra.mxu0 0
        %4571 = vmatprep.subr.bf16.mxu0 0
        %4572 = vmatpush2.bf16.xpose.msra.mxu0 0
        %4573 = vmatprep.subr.bf16.mxu0 0
        %4574 = vmatpush2.bf16.xpose.msra.mxu0 0
        %4575 = vmatprep.subr.bf16.mxu0 0
        %4576 = vmatpush2.bf16.xpose.msra.mxu0 0
        %4577 = vmatprep.subr.bf16.mxu0 0
        %4578 = vmatpush2.bf16.xpose.msra.mxu0 0
        %4579 = vmatprep.subr.bf16.mxu0 0
        %4580 = vmatpush2.bf16.xpose.msra.mxu0 0
        %4581 = vmatprep.mubr.bf16.mxu0 0
        %4582 = vmatmul.mubr.bf16.gmra.mxu0 %v4535
        %v4583 = vpop.f32.mrf.mxu0
        %v4584 = vadd.f32 0.0, %v4583
        %v4585 = vpop.f32.mrf.mxu0
        %v4586 = vpop.f32.mrf.mxu0
        %v4587 = vadd.f32 0.0, %v4586
        %v4588 = vpop.f32.mrf.mxu0
        %4589 = vmatprep.mubr.bf16.mxu0 0
        %4590 = vmatmul.mubr.bf16.gmra.mxu0 %v4538
        %v4591 = vpop.f32.mrf.mxu0
        %v4592 = vadd.f32 0.0, %v4591
        %v4593 = vpop.f32.mrf.mxu0
        %v4594 = vpop.f32.mrf.mxu0
        %v4595 = vadd.f32 0.0, %v4594
        %v4596 = vpop.f32.mrf.mxu0
        %4597 = vmatprep.mubr.bf16.mxu0 0
        %4598 = vmatmul.mubr.bf16.gmra.mxu0 %v4541
        %v4599 = vpop.f32.mrf.mxu0
        %v4600 = vadd.f32 0.0, %v4599
        %v4601 = vpop.f32.mrf.mxu0
        %v4602 = vpop.f32.mrf.mxu0
        %v4603 = vadd.f32 0.0, %v4602
        %v4604 = vpop.f32.mrf.mxu0
        %4605 = vmatprep.mubr.bf16.mxu0 0
        %4606 = vmatmul.mubr.bf16.gmra.mxu0 %v4544
        %v4607 = vpop.f32.mrf.mxu0
        %v4608 = vadd.f32 0.0, %v4607
        %v4609 = vpop.f32.mrf.mxu0
        %v4610 = vpop.f32.mrf.mxu0
        %v4611 = vadd.f32 0.0, %v4610
        %v4612 = vpop.f32.mrf.mxu0
        %4613 = vdwg.mxu0
        %v4614 = vsel %vm4032, %v4584, -inf
        %4615 = vmax.xlane.f32.xlu0 %v4614
        %v4616 = vpop.xlane.xlu0 %4615
        %v4617 = vsel %vm4032, %v4587, -inf
        %4618 = vmax.xlane.f32.xlu0 %v4617
        %v4619 = vpop.xlane.xlu0 %4618
        %v4620 = vsel %vm4032, %v4592, -inf
        %4621 = vmax.xlane.f32.xlu0 %v4620
        %v4622 = vpop.xlane.xlu0 %4621
        %v4623 = vsel %vm4032, %v4595, -inf
        %4624 = vmax.xlane.f32.xlu0 %v4623
        %v4625 = vpop.xlane.xlu0 %4624
        %v4626 = vsel %vm4032, %v4600, -inf
        %4627 = vmax.xlane.f32.xlu0 %v4626
        %v4628 = vpop.xlane.xlu0 %4627
        %v4629 = vsel %vm4032, %v4603, -inf
        %4630 = vmax.xlane.f32.xlu0 %v4629
        %v4631 = vpop.xlane.xlu0 %4630
        %v4632 = vsel %vm4032, %v4608, -inf
        %4633 = vmax.xlane.f32.xlu0 %v4632
        %v4634 = vpop.xlane.xlu0 %4633
        %v4635 = vsel %vm4032, %v4611, -inf
        %4636 = vmax.xlane.f32.xlu0 %v4635
        %v4637 = vpop.xlane.xlu0 %4636
        %v4638 = vsub.f32 %v4584, %v4616
        %v4639 = vsub.f32 %v4587, %v4619
        %v4640 = vsub.f32 %v4592, %v4622
        %v4641 = vsub.f32 %v4595, %v4625
        %v4642 = vsub.f32 %v4600, %v4628
        %v4643 = vsub.f32 %v4603, %v4631
        %v4644 = vsub.f32 %v4608, %v4634
        %v4645 = vsub.f32 %v4611, %v4637
        %v4646 = vmul.f32 %v4638, 1.442695
        %v4647 = vpow.pop %v4646
        %v4648 = vmul.f32 %v4639, 1.442695
        %v4649 = vpow.pop %v4648
        %v4650 = vmul.f32 %v4640, 1.442695
        %v4651 = vpow.pop %v4650
        %v4652 = vmul.f32 %v4641, 1.442695
        %v4653 = vpow.pop %v4652
        %v4654 = vmul.f32 %v4642, 1.442695
        %v4655 = vpow.pop %v4654
        %v4656 = vmul.f32 %v4643, 1.442695
        %v4657 = vpow.pop %v4656
        %v4658 = vmul.f32 %v4644, 1.442695
        %v4659 = vpow.pop %v4658
        %v4660 = vmul.f32 %v4645, 1.442695
        %v4661 = vpow.pop %v4660
        %v4662 = vsel %vm4032, %v4647, 0.0
        %4663 = vadd.xlane.f32.xlu0 %v4662
        %v4664 = vpop.xlane.xlu0 %4663
        %v4665 = vsel %vm4032, %v4649, 0.0
        %4666 = vadd.xlane.f32.xlu0 %v4665
        %v4667 = vpop.xlane.xlu0 %4666
        %v4668 = vsel %vm4032, %v4651, 0.0
        %4669 = vadd.xlane.f32.xlu0 %v4668
        %v4670 = vpop.xlane.xlu0 %4669
        %v4671 = vsel %vm4032, %v4653, 0.0
        %4672 = vadd.xlane.f32.xlu0 %v4671
        %v4673 = vpop.xlane.xlu0 %4672
        %v4674 = vsel %vm4032, %v4655, 0.0
        %4675 = vadd.xlane.f32.xlu0 %v4674
        %v4676 = vpop.xlane.xlu0 %4675
        %v4677 = vsel %vm4032, %v4657, 0.0
        %4678 = vadd.xlane.f32.xlu0 %v4677
        %v4679 = vpop.xlane.xlu0 %4678
        %v4680 = vsel %vm4032, %v4659, 0.0
        %4681 = vadd.xlane.f32.xlu0 %v4680
        %v4682 = vpop.xlane.xlu0 %4681
        %v4683 = vsel %vm4032, %v4661, 0.0
        %4684 = vadd.xlane.f32.xlu0 %v4683
        %v4685 = vpop.xlane.xlu0 %4684
        %v4686 = vrcp.pop %v4664
        %v4687 = vmul.f32 %v4647, %v4686
        %v4688 = vrcp.pop %v4667
        %v4689 = vmul.f32 %v4649, %v4688
        %v4690 = vrcp.pop %v4670
        %v4691 = vmul.f32 %v4651, %v4690
        %v4692 = vrcp.pop %v4673
        %v4693 = vmul.f32 %v4653, %v4692
        %v4694 = vrcp.pop %v4676
        %v4695 = vmul.f32 %v4655, %v4694
        %v4696 = vrcp.pop %v4679
        %v4697 = vmul.f32 %v4657, %v4696
        %v4698 = vrcp.pop %v4682
        %v4699 = vmul.f32 %v4659, %v4698
        %v4700 = vrcp.pop %v4685
        %v4701 = vmul.f32 %v4661, %v4700
        %v4702 = vpack.c.bf16 %v4689, %v4687
        %v4703 = vpack.c.bf16 %v4693, %v4691
        %v4704 = vpack.c.bf16 %v4697, %v4695
        %v4705 = vpack.c.bf16 %v4701, %v4699
        %4706 = vrot.lane.b32.xlu0 %v3951, 96
        %v4707 = vpop.permute.xlu0 %4706
        %v4709 = vsel %vm4032, %v4702, 0
        %v4712 = vsel %vm4032, %v4703, 0
        %v4715 = vsel %vm4032, %v4704, 0
        %v4718 = vsel %vm4032, %v4705, 0
        %v4721 = vsel %vm4137, %v4707, 0
        %4723 = vmatprep.subr.bf16.mxu0 0
        %4724 = vmatpush1.bf16.msra.mxu0 0
        %4725 = vmatprep.subr.bf16.mxu0 0
        %4726 = vmatpush1.bf16.msra.mxu0 0
        %4727 = vmatprep.subr.bf16.mxu0 0
        %4728 = vmatpush1.bf16.msra.mxu0 0
        %4729 = vmatprep.subr.bf16.mxu0 0
        %4730 = vmatpush1.bf16.msra.mxu0 0
        %4731 = vmatprep.subr.bf16.mxu0 0
        %4732 = vmatpush1.bf16.msra.mxu0 0
        %4733 = vmatprep.subr.bf16.mxu0 0
        %4734 = vmatpush1.bf16.msra.mxu0 0
        %4735 = vmatprep.subr.bf16.mxu0 0
        %4736 = vmatpush1.bf16.msra.mxu0 0
        %4737 = vmatprep.subr.bf16.mxu0 0
        %4738 = vmatpush1.bf16.msra.mxu0 %v4721
        %4739 = vmatprep.subr.bf16.mxu0 0
        %4740 = vmatpush2.bf16.msra.mxu0 0
        %4741 = vmatprep.subr.bf16.mxu0 0
        %4742 = vmatpush2.bf16.msra.mxu0 0
        %4743 = vmatprep.subr.bf16.mxu0 0
        %4744 = vmatpush2.bf16.msra.mxu0 0
        %4745 = vmatprep.subr.bf16.mxu0 0
        %4746 = vmatpush2.bf16.msra.mxu0 0
        %4747 = vmatprep.subr.bf16.mxu0 0
        %4748 = vmatpush2.bf16.msra.mxu0 0
        %4749 = vmatprep.subr.bf16.mxu0 0
        %4750 = vmatpush2.bf16.msra.mxu0 0
        %4751 = vmatprep.subr.bf16.mxu0 0
        %4752 = vmatpush2.bf16.msra.mxu0 0
        %4753 = vmatprep.subr.bf16.mxu0 0
        %4754 = vmatpush2.bf16.msra.mxu0 0
        %4755 = vmatprep.mubr.bf16.mxu0 0
        %4756 = vmatmul.mubr.bf16.gmra.mxu0 %v4709
        %v4757 = vpop.f32.mrf.mxu0
        %v4758 = vadd.f32 0.0, %v4757
        %v4759 = vpop.f32.mrf.mxu0
        %v4760 = vpop.f32.mrf.mxu0
        %v4761 = vadd.f32 0.0, %v4760
        %v4762 = vpop.f32.mrf.mxu0
        %4763 = vmatprep.mubr.bf16.mxu0 0
        %4764 = vmatmul.mubr.bf16.gmra.mxu0 %v4712
        %v4765 = vpop.f32.mrf.mxu0
        %v4766 = vadd.f32 0.0, %v4765
        %v4767 = vpop.f32.mrf.mxu0
        %v4768 = vpop.f32.mrf.mxu0
        %v4769 = vadd.f32 0.0, %v4768
        %v4770 = vpop.f32.mrf.mxu0
        %4771 = vmatprep.mubr.bf16.mxu0 0
        %4772 = vmatmul.mubr.bf16.gmra.mxu0 %v4715
        %v4773 = vpop.f32.mrf.mxu0
        %v4774 = vadd.f32 0.0, %v4773
        %v4775 = vpop.f32.mrf.mxu0
        %v4776 = vpop.f32.mrf.mxu0
        %v4777 = vadd.f32 0.0, %v4776
        %v4778 = vpop.f32.mrf.mxu0
        %4779 = vmatprep.mubr.bf16.mxu0 0
        %4780 = vmatmul.mubr.bf16.gmra.mxu0 %v4718
        %v4781 = vpop.f32.mrf.mxu0
        %v4782 = vadd.f32 0.0, %v4781
        %v4783 = vpop.f32.mrf.mxu0
        %v4784 = vpop.f32.mrf.mxu0
        %v4785 = vadd.f32 0.0, %v4784
        %v4786 = vpop.f32.mrf.mxu0
        %4787 = vdwg.mxu0
        %4796 = vrot.lane.b32.xlu0 %v4758, 32
        %v4797 = vpop.permute.xlu0 %4796
        %4798 = vrot.lane.b32.xlu0 %v4761, 32
        %v4799 = vpop.permute.xlu0 %4798
        %4800 = vrot.lane.b32.xlu0 %v4766, 32
        %v4801 = vpop.permute.xlu0 %4800
        %4802 = vrot.lane.b32.xlu0 %v4769, 32
        %v4803 = vpop.permute.xlu0 %4802
        %4804 = vrot.lane.b32.xlu0 %v4774, 32
        %v4805 = vpop.permute.xlu0 %4804
        %4806 = vrot.lane.b32.xlu0 %v4777, 32
        %v4807 = vpop.permute.xlu0 %4806
        %4808 = vrot.lane.b32.xlu0 %v4782, 32
        %v4809 = vpop.permute.xlu0 %4808
        %4810 = vrot.lane.b32.xlu0 %v4785, 32
        %v4811 = vpop.permute.xlu0 %4810
        %4820 = vst.msk [vmem:[#allocation2] sm:$0xff] %vm3102, %v4797
        %4821 = vst.msk [vmem:[#allocation2 + $0x8] sm:$0xff] %vm3102, %v4799
        %4822 = vst.msk [vmem:[#allocation2 + $0x10] sm:$0xff] %vm3102, %v4801
        %4823 = vst.msk [vmem:[#allocation2 + $0x18] sm:$0xff] %vm3102, %v4803
        %4824 = vst.msk [vmem:[#allocation2 + $0x20] sm:$0xff] %vm3102, %v4805
        %4825 = vst.msk [vmem:[#allocation2 + $0x28] sm:$0xff] %vm3102, %v4807
        %4826 = vst.msk [vmem:[#allocation2 + $0x30] sm:$0xff] %vm3102, %v4809
        %4827 = vst.msk [vmem:[#allocation2 + $0x38] sm:$0xff] %vm3102, %v4811
        %4828 = vrot.lane.b32.xlu0 %v3946, 80
        %v4829 = vpop.permute.xlu0 %4828
        %4830 = vrot.lane.b32.xlu0 %v3947, 80
        %v4831 = vpop.permute.xlu0 %4830
        %4832 = vrot.lane.b32.xlu0 %v3948, 80
        %v4833 = vpop.permute.xlu0 %4832
        %4834 = vrot.lane.b32.xlu0 %v3949, 80
        %v4835 = vpop.permute.xlu0 %4834
        %4836 = vrot.lane.b32.xlu0 %v3950, 80
        %v4837 = vpop.permute.xlu0 %4836
        %v4839 = vsel %vm2178, %v4829, 0
        %v4842 = vsel %vm2178, %v4831, 0
        %v4845 = vsel %vm2178, %v4833, 0
        %v4848 = vsel %vm2178, %v4835, 0
        %v4851 = vsel %vm2178, %v4837, 0
        %4853 = vmatprep.subr.bf16.mxu0 0
        %4854 = vmatpush1.bf16.xpose.msra.mxu0 0
        %4855 = vmatprep.subr.bf16.mxu0 0
        %4856 = vmatpush1.bf16.xpose.msra.mxu0 0
        %4857 = vmatprep.subr.bf16.mxu0 0
        %4858 = vmatpush1.bf16.xpose.msra.mxu0 0
        %4859 = vmatprep.subr.bf16.mxu0 0
        %4860 = vmatpush1.bf16.xpose.msra.mxu0 0
        %4861 = vmatprep.subr.bf16.mxu0 0
        %4862 = vmatpush1.bf16.xpose.msra.mxu0 0
        %4863 = vmatprep.subr.bf16.mxu0 0
        %4864 = vmatpush1.bf16.xpose.msra.mxu0 0
        %4865 = vmatprep.subr.bf16.mxu0 0
        %4866 = vmatpush1.bf16.xpose.msra.mxu0 0
        %4867 = vmatprep.subr.bf16.mxu0 0
        %4868 = vmatpush1.bf16.xpose.msra.mxu0 %v4851
        %4869 = vmatprep.subr.bf16.mxu0 0
        %4870 = vmatpush2.bf16.xpose.msra.mxu0 0
        %4871 = vmatprep.subr.bf16.mxu0 0
        %4872 = vmatpush2.bf16.xpose.msra.mxu0 0
        %4873 = vmatprep.subr.bf16.mxu0 0
        %4874 = vmatpush2.bf16.xpose.msra.mxu0 0
        %4875 = vmatprep.subr.bf16.mxu0 0
        %4876 = vmatpush2.bf16.xpose.msra.mxu0 0
        %4877 = vmatprep.subr.bf16.mxu0 0
        %4878 = vmatpush2.bf16.xpose.msra.mxu0 0
        %4879 = vmatprep.subr.bf16.mxu0 0
        %4880 = vmatpush2.bf16.xpose.msra.mxu0 0
        %4881 = vmatprep.subr.bf16.mxu0 0
        %4882 = vmatpush2.bf16.xpose.msra.mxu0 0
        %4883 = vmatprep.subr.bf16.mxu0 0
        %4884 = vmatpush2.bf16.xpose.msra.mxu0 0
        %4885 = vmatprep.mubr.bf16.mxu0 0
        %4886 = vmatmul.mubr.bf16.gmra.mxu0 %v4839
        %v4887 = vpop.f32.mrf.mxu0
        %v4888 = vadd.f32 0.0, %v4887
        %v4889 = vpop.f32.mrf.mxu0
        %v4890 = vpop.f32.mrf.mxu0
        %v4891 = vadd.f32 0.0, %v4890
        %v4892 = vpop.f32.mrf.mxu0
        %4893 = vmatprep.mubr.bf16.mxu0 0
        %4894 = vmatmul.mubr.bf16.gmra.mxu0 %v4842
        %v4895 = vpop.f32.mrf.mxu0
        %v4896 = vadd.f32 0.0, %v4895
        %v4897 = vpop.f32.mrf.mxu0
        %v4898 = vpop.f32.mrf.mxu0
        %v4899 = vadd.f32 0.0, %v4898
        %v4900 = vpop.f32.mrf.mxu0
        %4901 = vmatprep.mubr.bf16.mxu0 0
        %4902 = vmatmul.mubr.bf16.gmra.mxu0 %v4845
        %v4903 = vpop.f32.mrf.mxu0
        %v4904 = vadd.f32 0.0, %v4903
        %v4905 = vpop.f32.mrf.mxu0
        %v4906 = vpop.f32.mrf.mxu0
        %v4907 = vadd.f32 0.0, %v4906
        %v4908 = vpop.f32.mrf.mxu0
        %4909 = vmatprep.mubr.bf16.mxu0 0
        %4910 = vmatmul.mubr.bf16.gmra.mxu0 %v4848
        %v4911 = vpop.f32.mrf.mxu0
        %v4912 = vadd.f32 0.0, %v4911
        %v4913 = vpop.f32.mrf.mxu0
        %v4914 = vpop.f32.mrf.mxu0
        %v4915 = vadd.f32 0.0, %v4914
        %v4916 = vpop.f32.mrf.mxu0
        %4917 = vdwg.mxu0
        %v4918 = vsel %vm4032, %v4888, -inf
        %4919 = vmax.xlane.f32.xlu0 %v4918
        %v4920 = vpop.xlane.xlu0 %4919
        %v4921 = vsel %vm4032, %v4891, -inf
        %4922 = vmax.xlane.f32.xlu0 %v4921
        %v4923 = vpop.xlane.xlu0 %4922
        %v4924 = vsel %vm4032, %v4896, -inf
        %4925 = vmax.xlane.f32.xlu0 %v4924
        %v4926 = vpop.xlane.xlu0 %4925
        %v4927 = vsel %vm4032, %v4899, -inf
        %4928 = vmax.xlane.f32.xlu0 %v4927
        %v4929 = vpop.xlane.xlu0 %4928
        %v4930 = vsel %vm4032, %v4904, -inf
        %4931 = vmax.xlane.f32.xlu0 %v4930
        %v4932 = vpop.xlane.xlu0 %4931
        %v4933 = vsel %vm4032, %v4907, -inf
        %4934 = vmax.xlane.f32.xlu0 %v4933
        %v4935 = vpop.xlane.xlu0 %4934
        %v4936 = vsel %vm4032, %v4912, -inf
        %4937 = vmax.xlane.f32.xlu0 %v4936
        %v4938 = vpop.xlane.xlu0 %4937
        %v4939 = vsel %vm4032, %v4915, -inf
        %4940 = vmax.xlane.f32.xlu0 %v4939
        %v4941 = vpop.xlane.xlu0 %4940
        %v4942 = vsub.f32 %v4888, %v4920
        %v4943 = vsub.f32 %v4891, %v4923
        %v4944 = vsub.f32 %v4896, %v4926
        %v4945 = vsub.f32 %v4899, %v4929
        %v4946 = vsub.f32 %v4904, %v4932
        %v4947 = vsub.f32 %v4907, %v4935
        %v4948 = vsub.f32 %v4912, %v4938
        %v4949 = vsub.f32 %v4915, %v4941
        %v4950 = vmul.f32 %v4942, 1.442695
        %v4951 = vpow.pop %v4950
        %v4952 = vmul.f32 %v4943, 1.442695
        %v4953 = vpow.pop %v4952
        %v4954 = vmul.f32 %v4944, 1.442695
        %v4955 = vpow.pop %v4954
        %v4956 = vmul.f32 %v4945, 1.442695
        %v4957 = vpow.pop %v4956
        %v4958 = vmul.f32 %v4946, 1.442695
        %v4959 = vpow.pop %v4958
        %v4960 = vmul.f32 %v4947, 1.442695
        %v4961 = vpow.pop %v4960
        %v4962 = vmul.f32 %v4948, 1.442695
        %v4963 = vpow.pop %v4962
        %v4964 = vmul.f32 %v4949, 1.442695
        %v4965 = vpow.pop %v4964
        %v4966 = vsel %vm4032, %v4951, 0.0
        %4967 = vadd.xlane.f32.xlu0 %v4966
        %v4968 = vpop.xlane.xlu0 %4967
        %v4969 = vsel %vm4032, %v4953, 0.0
        %4970 = vadd.xlane.f32.xlu0 %v4969
        %v4971 = vpop.xlane.xlu0 %4970
        %v4972 = vsel %vm4032, %v4955, 0.0
        %4973 = vadd.xlane.f32.xlu0 %v4972
        %v4974 = vpop.xlane.xlu0 %4973
        %v4975 = vsel %vm4032, %v4957, 0.0
        %4976 = vadd.xlane.f32.xlu0 %v4975
        %v4977 = vpop.xlane.xlu0 %4976
        %v4978 = vsel %vm4032, %v4959, 0.0
        %4979 = vadd.xlane.f32.xlu0 %v4978
        %v4980 = vpop.xlane.xlu0 %4979
        %v4981 = vsel %vm4032, %v4961, 0.0
        %4982 = vadd.xlane.f32.xlu0 %v4981
        %v4983 = vpop.xlane.xlu0 %4982
        %v4984 = vsel %vm4032, %v4963, 0.0
        %4985 = vadd.xlane.f32.xlu0 %v4984
        %v4986 = vpop.xlane.xlu0 %4985
        %v4987 = vsel %vm4032, %v4965, 0.0
        %4988 = vadd.xlane.f32.xlu0 %v4987
        %v4989 = vpop.xlane.xlu0 %4988
        %v4990 = vrcp.pop %v4968
        %v4991 = vmul.f32 %v4951, %v4990
        %v4992 = vrcp.pop %v4971
        %v4993 = vmul.f32 %v4953, %v4992
        %v4994 = vrcp.pop %v4974
        %v4995 = vmul.f32 %v4955, %v4994
        %v4996 = vrcp.pop %v4977
        %v4997 = vmul.f32 %v4957, %v4996
        %v4998 = vrcp.pop %v4980
        %v4999 = vmul.f32 %v4959, %v4998
        %v5000 = vrcp.pop %v4983
        %v5001 = vmul.f32 %v4961, %v5000
        %v5002 = vrcp.pop %v4986
        %v5003 = vmul.f32 %v4963, %v5002
        %v5004 = vrcp.pop %v4989
        %v5005 = vmul.f32 %v4965, %v5004
        %v5006 = vpack.c.bf16 %v4993, %v4991
        %v5007 = vpack.c.bf16 %v4997, %v4995
        %v5008 = vpack.c.bf16 %v5001, %v4999
        %v5009 = vpack.c.bf16 %v5005, %v5003
        %5010 = vrot.lane.b32.xlu0 %v3951, 80
        %v5011 = vpop.permute.xlu0 %5010
        %v5013 = vsel %vm4032, %v5006, 0
        %v5016 = vsel %vm4032, %v5007, 0
        %v5019 = vsel %vm4032, %v5008, 0
        %v5022 = vsel %vm4032, %v5009, 0
        %v5025 = vsel %vm4137, %v5011, 0
        %5027 = vmatprep.subr.bf16.mxu0 0
        %5028 = vmatpush1.bf16.msra.mxu0 0
        %5029 = vmatprep.subr.bf16.mxu0 0
        %5030 = vmatpush1.bf16.msra.mxu0 0
        %5031 = vmatprep.subr.bf16.mxu0 0
        %5032 = vmatpush1.bf16.msra.mxu0 0
        %5033 = vmatprep.subr.bf16.mxu0 0
        %5034 = vmatpush1.bf16.msra.mxu0 0
        %5035 = vmatprep.subr.bf16.mxu0 0
        %5036 = vmatpush1.bf16.msra.mxu0 0
        %5037 = vmatprep.subr.bf16.mxu0 0
        %5038 = vmatpush1.bf16.msra.mxu0 0
        %5039 = vmatprep.subr.bf16.mxu0 0
        %5040 = vmatpush1.bf16.msra.mxu0 0
        %5041 = vmatprep.subr.bf16.mxu0 0
        %5042 = vmatpush1.bf16.msra.mxu0 %v5025
        %5043 = vmatprep.subr.bf16.mxu0 0
        %5044 = vmatpush2.bf16.msra.mxu0 0
        %5045 = vmatprep.subr.bf16.mxu0 0
        %5046 = vmatpush2.bf16.msra.mxu0 0
        %5047 = vmatprep.subr.bf16.mxu0 0
        %5048 = vmatpush2.bf16.msra.mxu0 0
        %5049 = vmatprep.subr.bf16.mxu0 0
        %5050 = vmatpush2.bf16.msra.mxu0 0
        %5051 = vmatprep.subr.bf16.mxu0 0
        %5052 = vmatpush2.bf16.msra.mxu0 0
        %5053 = vmatprep.subr.bf16.mxu0 0
        %5054 = vmatpush2.bf16.msra.mxu0 0
        %5055 = vmatprep.subr.bf16.mxu0 0
        %5056 = vmatpush2.bf16.msra.mxu0 0
        %5057 = vmatprep.subr.bf16.mxu0 0
        %5058 = vmatpush2.bf16.msra.mxu0 0
        %5059 = vmatprep.mubr.bf16.mxu0 0
        %5060 = vmatmul.mubr.bf16.gmra.mxu0 %v5013
        %v5061 = vpop.f32.mrf.mxu0
        %v5062 = vadd.f32 0.0, %v5061
        %v5063 = vpop.f32.mrf.mxu0
        %v5064 = vpop.f32.mrf.mxu0
        %v5065 = vadd.f32 0.0, %v5064
        %v5066 = vpop.f32.mrf.mxu0
        %5067 = vmatprep.mubr.bf16.mxu0 0
        %5068 = vmatmul.mubr.bf16.gmra.mxu0 %v5016
        %v5069 = vpop.f32.mrf.mxu0
        %v5070 = vadd.f32 0.0, %v5069
        %v5071 = vpop.f32.mrf.mxu0
        %v5072 = vpop.f32.mrf.mxu0
        %v5073 = vadd.f32 0.0, %v5072
        %v5074 = vpop.f32.mrf.mxu0
        %5075 = vmatprep.mubr.bf16.mxu0 0
        %5076 = vmatmul.mubr.bf16.gmra.mxu0 %v5019
        %v5077 = vpop.f32.mrf.mxu0
        %v5078 = vadd.f32 0.0, %v5077
        %v5079 = vpop.f32.mrf.mxu0
        %v5080 = vpop.f32.mrf.mxu0
        %v5081 = vadd.f32 0.0, %v5080
        %v5082 = vpop.f32.mrf.mxu0
        %5083 = vmatprep.mubr.bf16.mxu0 0
        %5084 = vmatmul.mubr.bf16.gmra.mxu0 %v5022
        %v5085 = vpop.f32.mrf.mxu0
        %v5086 = vadd.f32 0.0, %v5085
        %v5087 = vpop.f32.mrf.mxu0
        %v5088 = vpop.f32.mrf.mxu0
        %v5089 = vadd.f32 0.0, %v5088
        %v5090 = vpop.f32.mrf.mxu0
        %5091 = vdwg.mxu0
        %5100 = vrot.lane.b32.xlu0 %v5062, 48
        %v5101 = vpop.permute.xlu0 %5100
        %5102 = vrot.lane.b32.xlu0 %v5065, 48
        %v5103 = vpop.permute.xlu0 %5102
        %5104 = vrot.lane.b32.xlu0 %v5070, 48
        %v5105 = vpop.permute.xlu0 %5104
        %5106 = vrot.lane.b32.xlu0 %v5073, 48
        %v5107 = vpop.permute.xlu0 %5106
        %5108 = vrot.lane.b32.xlu0 %v5078, 48
        %v5109 = vpop.permute.xlu0 %5108
        %5110 = vrot.lane.b32.xlu0 %v5081, 48
        %v5111 = vpop.permute.xlu0 %5110
        %5112 = vrot.lane.b32.xlu0 %v5086, 48
        %v5113 = vpop.permute.xlu0 %5112
        %5114 = vrot.lane.b32.xlu0 %v5089, 48
        %v5115 = vpop.permute.xlu0 %5114
        %5124 = vst.msk [vmem:[#allocation2] sm:$0xff] %vm3429, %v5101
        %5125 = vst.msk [vmem:[#allocation2 + $0x8] sm:$0xff] %vm3429, %v5103
        %5126 = vst.msk [vmem:[#allocation2 + $0x10] sm:$0xff] %vm3429, %v5105
        %5127 = vst.msk [vmem:[#allocation2 + $0x18] sm:$0xff] %vm3429, %v5107
        %5128 = vst.msk [vmem:[#allocation2 + $0x20] sm:$0xff] %vm3429, %v5109
        %5129 = vst.msk [vmem:[#allocation2 + $0x28] sm:$0xff] %vm3429, %v5111
        %5130 = vst.msk [vmem:[#allocation2 + $0x30] sm:$0xff] %vm3429, %v5113
        %5131 = vst.msk [vmem:[#allocation2 + $0x38] sm:$0xff] %vm3429, %v5115
        %v5132 = vld [vmem:[#allocation2] sm:$0xff]
        %v5133 = vld [vmem:[#allocation2 + $0x8] sm:$0xff]
        %v5134 = vld [vmem:[#allocation2 + $0x10] sm:$0xff]
        %v5135 = vld [vmem:[#allocation2 + $0x18] sm:$0xff]
        %v5136 = vld [vmem:[#allocation2 + $0x20] sm:$0xff]
        %v5137 = vld [vmem:[#allocation2 + $0x28] sm:$0xff]
        %v5138 = vld [vmem:[#allocation2 + $0x30] sm:$0xff]
        %v5139 = vld [vmem:[#allocation2 + $0x38] sm:$0xff]
        %v5140 = vpack.c.bf16 %v5133, %v5132
        %v5141 = vpack.c.bf16 %v5135, %v5134
        %v5142 = vpack.c.bf16 %v5137, %v5136
        %v5143 = vpack.c.bf16 %v5139, %v5138
        %v5145 = vlaneseq
        %v5146 = vshrl.u32 %v5145, 7
        %v5147 = vsub.s32 0, %v5146
        %v5148 = vrot.slane %v3723, %v5147
        %v5158 = vunpack.c.l.b16 %v3715
        %v5159 = vunpack.c.l.b16 %v3716
        %v5160 = vunpack.c.l.b16 %v3717
        %v5161 = vunpack.c.l.b16 %v3718
        %v5162 = vunpack.c.l.b16 %v3719
        %v5163 = vunpack.c.l.b16 %v3720
        %v5164 = vunpack.c.l.b16 %v3721
        %v5165 = vunpack.c.l.b16 %v3722
        %v5166 = vpack.c.b16 %v5159, %v5158
        %v5167 = vpack.c.b16 %v5161, %v5160
        %v5168 = vpack.c.b16 %v5163, %v5162
        %v5169 = vpack.c.b16 %v5165, %v5164
        %v5175 = vsel %vm1226, %v5140, 0
        %v5178 = vsel %vm1226, %v5141, 0
        %v5181 = vsel %vm1226, %v5142, 0
        %v5184 = vsel %vm1226, %v5143, 0
        %5186 = vmatprep.subr.bf16.mxu0 0
        %5187 = vmatpush1.bf16.msra.mxu0 0
        %5188 = vmatprep.subr.bf16.mxu0 0
        %5189 = vmatpush1.bf16.msra.mxu0 0
        %5190 = vmatprep.subr.bf16.mxu0 0
        %5191 = vmatpush1.bf16.msra.mxu0 0
        %5192 = vmatprep.subr.bf16.mxu0 0
        %5193 = vmatpush1.bf16.msra.mxu0 0
        %5194 = vmatprep.subr.bf16.mxu0 0
        %5195 = vmatpush1.bf16.msra.mxu0 %v5169
        %5196 = vmatprep.subr.bf16.mxu0 0
        %5197 = vmatpush1.bf16.msra.mxu0 %v5168
        %5198 = vmatprep.subr.bf16.mxu0 0
        %5199 = vmatpush1.bf16.msra.mxu0 %v5167
        %5200 = vmatprep.subr.bf16.mxu0 0
        %5201 = vmatpush1.bf16.msra.mxu0 %v5166
        %5202 = vmatprep.subr.bf16.mxu0 0
        %5203 = vmatpush2.bf16.msra.mxu0 0
        %5204 = vmatprep.subr.bf16.mxu0 0
        %5205 = vmatpush2.bf16.msra.mxu0 0
        %5206 = vmatprep.subr.bf16.mxu0 0
        %5207 = vmatpush2.bf16.msra.mxu0 0
        %5208 = vmatprep.subr.bf16.mxu0 0
        %5209 = vmatpush2.bf16.msra.mxu0 0
        %5210 = vmatprep.subr.bf16.mxu0 0
        %5211 = vmatpush2.bf16.msra.mxu0 0
        %5212 = vmatprep.subr.bf16.mxu0 0
        %5213 = vmatpush2.bf16.msra.mxu0 0
        %5214 = vmatprep.subr.bf16.mxu0 0
        %5215 = vmatpush2.bf16.msra.mxu0 0
        %5216 = vmatprep.subr.bf16.mxu0 0
        %5217 = vmatpush2.bf16.msra.mxu0 0
        %5218 = vmatprep.mubr.bf16.mxu0 0
        %5219 = vmatmul.mubr.bf16.gmra.mxu0 %v5175
        %v5220 = vpop.f32.mrf.mxu0
        %v5221 = vadd.f32 %v5148, %v5220
        %v5222 = vpop.f32.mrf.mxu0
        %v5223 = vpop.f32.mrf.mxu0
        %v5224 = vadd.f32 %v5148, %v5223
        %v5225 = vpop.f32.mrf.mxu0
        %5226 = vmatprep.mubr.bf16.mxu0 0
        %5227 = vmatmul.mubr.bf16.gmra.mxu0 %v5178
        %v5228 = vpop.f32.mrf.mxu0
        %v5229 = vadd.f32 %v5148, %v5228
        %v5230 = vpop.f32.mrf.mxu0
        %v5231 = vpop.f32.mrf.mxu0
        %v5232 = vadd.f32 %v5148, %v5231
        %v5233 = vpop.f32.mrf.mxu0
        %5234 = vmatprep.mubr.bf16.mxu0 0
        %5235 = vmatmul.mubr.bf16.gmra.mxu0 %v5181
        %v5236 = vpop.f32.mrf.mxu0
        %v5237 = vadd.f32 %v5148, %v5236
        %v5238 = vpop.f32.mrf.mxu0
        %v5239 = vpop.f32.mrf.mxu0
        %v5240 = vadd.f32 %v5148, %v5239
        %v5241 = vpop.f32.mrf.mxu0
        %5242 = vmatprep.mubr.bf16.mxu0 0
        %5243 = vmatmul.mubr.bf16.gmra.mxu0 %v5184
        %v5244 = vpop.f32.mrf.mxu0
        %v5245 = vadd.f32 %v5148, %v5244
        %v5246 = vpop.f32.mrf.mxu0
        %v5247 = vpop.f32.mrf.mxu0
        %v5248 = vadd.f32 %v5148, %v5247
        %v5249 = vpop.f32.mrf.mxu0
        %5250 = vdwg.mxu0
        %v5251 = vadd.f32 %v3557, %v5221
        %v5252 = vadd.f32 %v3558, %v5224
        %v5253 = vadd.f32 %v3559, %v5229
        %v5254 = vadd.f32 %v3560, %v5232
        %v5255 = vadd.f32 %v3561, %v5237
        %v5256 = vadd.f32 %v3562, %v5240
        %v5257 = vadd.f32 %v3563, %v5245
        %v5258 = vadd.f32 %v3564, %v5248
        %v5259 = vld [vmem:[#allocation32] sm:$0x1]
        %v5260 = vld [vmem:[%s45] sm:$0x1]
        %v5261 = vsel %vm1226, %v5251, 0.0
        %5262 = vadd.xlane.f32.xlu0 %v5261
        %v5263 = vpop.xlane.xlu0 %5262
        %v5264 = vsel %vm1226, %v5252, 0.0
        %5265 = vadd.xlane.f32.xlu0 %v5264
        %v5266 = vpop.xlane.xlu0 %5265
        %v5267 = vsel %vm1226, %v5253, 0.0
        %5268 = vadd.xlane.f32.xlu0 %v5267
        %v5269 = vpop.xlane.xlu0 %5268
        %v5270 = vsel %vm1226, %v5254, 0.0
        %5271 = vadd.xlane.f32.xlu0 %v5270
        %v5272 = vpop.xlane.xlu0 %5271
        %v5273 = vsel %vm1226, %v5255, 0.0
        %5274 = vadd.xlane.f32.xlu0 %v5273
        %v5275 = vpop.xlane.xlu0 %5274
        %v5276 = vsel %vm1226, %v5256, 0.0
        %5277 = vadd.xlane.f32.xlu0 %v5276
        %v5278 = vpop.xlane.xlu0 %5277
        %v5279 = vsel %vm1226, %v5257, 0.0
        %5280 = vadd.xlane.f32.xlu0 %v5279
        %v5281 = vpop.xlane.xlu0 %5280
        %v5282 = vsel %vm1226, %v5258, 0.0
        %5283 = vadd.xlane.f32.xlu0 %v5282
        %v5284 = vpop.xlane.xlu0 %5283
        %v5285 = vmul.f32 %v5263, %v1514
        %v5286 = vmul.f32 %v5266, %v1514
        %v5287 = vmul.f32 %v5269, %v1514
        %v5288 = vmul.f32 %v5272, %v1514
        %v5289 = vmul.f32 %v5275, %v1514
        %v5290 = vmul.f32 %v5278, %v1514
        %v5291 = vmul.f32 %v5281, %v1514
        %v5292 = vmul.f32 %v5284, %v1514
        %v5293 = vsub.f32 %v5251, %v5285
        %v5294 = vsub.f32 %v5252, %v5286
        %v5295 = vsub.f32 %v5253, %v5287
        %v5296 = vsub.f32 %v5254, %v5288
        %v5297 = vsub.f32 %v5255, %v5289
        %v5298 = vsub.f32 %v5256, %v5290
        %v5299 = vsub.f32 %v5257, %v5291
        %v5300 = vsub.f32 %v5258, %v5292
        %v5301 = vmul.f32 %v5293, %v5293
        %v5302 = vmul.f32 %v5294, %v5294
        %v5303 = vmul.f32 %v5295, %v5295
        %v5304 = vmul.f32 %v5296, %v5296
        %v5305 = vmul.f32 %v5297, %v5297
        %v5306 = vmul.f32 %v5298, %v5298
        %v5307 = vmul.f32 %v5299, %v5299
        %v5308 = vmul.f32 %v5300, %v5300
        %v5309 = vsel %vm1226, %v5301, 0.0
        %5310 = vadd.xlane.f32.xlu0 %v5309
        %v5311 = vpop.xlane.xlu0 %5310
        %v5312 = vsel %vm1226, %v5302, 0.0
        %5313 = vadd.xlane.f32.xlu0 %v5312
        %v5314 = vpop.xlane.xlu0 %5313
        %v5315 = vsel %vm1226, %v5303, 0.0
        %5316 = vadd.xlane.f32.xlu0 %v5315
        %v5317 = vpop.xlane.xlu0 %5316
        %v5318 = vsel %vm1226, %v5304, 0.0
        %5319 = vadd.xlane.f32.xlu0 %v5318
        %v5320 = vpop.xlane.xlu0 %5319
        %v5321 = vsel %vm1226, %v5305, 0.0
        %5322 = vadd.xlane.f32.xlu0 %v5321
        %v5323 = vpop.xlane.xlu0 %5322
        %v5324 = vsel %vm1226, %v5306, 0.0
        %5325 = vadd.xlane.f32.xlu0 %v5324
        %v5326 = vpop.xlane.xlu0 %5325
        %v5327 = vsel %vm1226, %v5307, 0.0
        %5328 = vadd.xlane.f32.xlu0 %v5327
        %v5329 = vpop.xlane.xlu0 %5328
        %v5330 = vsel %vm1226, %v5308, 0.0
        %5331 = vadd.xlane.f32.xlu0 %v5330
        %v5332 = vpop.xlane.xlu0 %5331
        %v5333 = vmul.f32 %v5311, %v1514
        %v5334 = vmul.f32 %v5314, %v1514
        %v5335 = vmul.f32 %v5317, %v1514
        %v5336 = vmul.f32 %v5320, %v1514
        %v5337 = vmul.f32 %v5323, %v1514
        %v5338 = vmul.f32 %v5326, %v1514
        %v5339 = vmul.f32 %v5329, %v1514
        %v5340 = vmul.f32 %v5332, %v1514
        %v5341 = vadd.f32 %v5333, 1e-05
        %v5342 = vadd.f32 %v5334, 1e-05
        %v5343 = vadd.f32 %v5335, 1e-05
        %v5344 = vadd.f32 %v5336, 1e-05
        %v5345 = vadd.f32 %v5337, 1e-05
        %v5346 = vadd.f32 %v5338, 1e-05
        %v5347 = vadd.f32 %v5339, 1e-05
        %v5348 = vadd.f32 %v5340, 1e-05
        %v5349 = vrsqrt.pop %v5341
        %v5350 = vrsqrt.pop %v5342
        %v5351 = vrsqrt.pop %v5343
        %v5352 = vrsqrt.pop %v5344
        %v5353 = vrsqrt.pop %v5345
        %v5354 = vrsqrt.pop %v5346
        %v5355 = vrsqrt.pop %v5347
        %v5356 = vrsqrt.pop %v5348
        %v5357 = vmul.f32 %v5293, %v5349
        %v5358 = vmul.f32 %v5294, %v5350
        %v5359 = vmul.f32 %v5295, %v5351
        %v5360 = vmul.f32 %v5296, %v5352
        %v5361 = vmul.f32 %v5297, %v5353
        %v5362 = vmul.f32 %v5298, %v5354
        %v5363 = vmul.f32 %v5299, %v5355
        %v5364 = vmul.f32 %v5300, %v5356
        %v5366 = vlaneseq
        %v5367 = vshrl.u32 %v5366, 7
        %v5368 = vsub.s32 0, %v5367
        %v5369 = vrot.slane %v5259, %v5368
        %v5371 = vmul.f32 %v5357, %v5369
        %v5372 = vmul.f32 %v5358, %v5369
        %v5373 = vmul.f32 %v5359, %v5369
        %v5374 = vmul.f32 %v5360, %v5369
        %v5375 = vmul.f32 %v5361, %v5369
        %v5376 = vmul.f32 %v5362, %v5369
        %v5377 = vmul.f32 %v5363, %v5369
        %v5378 = vmul.f32 %v5364, %v5369
        %v5380 = vlaneseq
        %v5381 = vshrl.u32 %v5380, 7
        %v5382 = vsub.s32 0, %v5381
        %v5383 = vrot.slane %v5260, %v5382
        %v5385 = vadd.f32 %v5371, %v5383
        %v5386 = vadd.f32 %v5372, %v5383
        %v5387 = vadd.f32 %v5373, %v5383
        %v5388 = vadd.f32 %v5374, %v5383
        %v5389 = vadd.f32 %v5375, %v5383
        %v5390 = vadd.f32 %v5376, %v5383
        %v5391 = vadd.f32 %v5377, %v5383
        %v5392 = vadd.f32 %v5378, %v5383
        %v5393 = vpack.c.bf16 %v5386, %v5385
        %v5394 = vpack.c.bf16 %v5388, %v5387
        %v5395 = vpack.c.bf16 %v5390, %v5389
        %v5396 = vpack.c.bf16 %v5392, %v5391
        %v5397 = vld [vmem:[#allocation33] sm:$0xff]
        %v5398 = vld [vmem:[#allocation33 + $0x8] sm:$0xff]
        %v5399 = vld [vmem:[#allocation33 + $0x10] sm:$0xff]
        %v5400 = vld [vmem:[#allocation33 + $0x18] sm:$0xff]
        %v5401 = vld [vmem:[#allocation33 + $0x20] sm:$0xff]
        %v5402 = vld [vmem:[#allocation33 + $0x28] sm:$0xff]
        %v5403 = vld [vmem:[#allocation33 + $0x30] sm:$0xff]
        %v5404 = vld [vmem:[#allocation33 + $0x38] sm:$0xff]
        %v5405 = vld [vmem:[#allocation33 + $0x40] sm:$0xff]
        %v5406 = vld [vmem:[#allocation33 + $0x48] sm:$0xff]
        %v5407 = vld [vmem:[#allocation33 + $0x50] sm:$0xff]
        %v5408 = vld [vmem:[#allocation33 + $0x58] sm:$0xff]
        %v5409 = vld [vmem:[#allocation33 + $0x60] sm:$0xff]
        %v5410 = vld [vmem:[#allocation33 + $0x68] sm:$0xff]
        %v5411 = vld [vmem:[#allocation33 + $0x70] sm:$0xff]
        %v5412 = vld [vmem:[#allocation33 + $0x78] sm:$0xff]
        %v5413 = vld [vmem:[%s49] sm:$0xf]
        %v5415 = vlaneseq
        %v5416 = vshrl.u32 %v5415, 7
        %v5417 = vsub.s32 0, %v5416
        %v5418 = vrot.slane %v5413, %v5417
        %v5419 = vlaneseq
        %v5420 = vshrl.u32 %v5419, 7
        %v5421 = vsub.s32 1, %v5420
        %v5422 = vrot.slane %v5413, %v5421
        %v5423 = vlaneseq
        %v5424 = vshrl.u32 %v5423, 7
        %v5425 = vsub.s32 2, %v5424
        %v5426 = vrot.slane %v5413, %v5425
        %v5427 = vlaneseq
        %v5428 = vshrl.u32 %v5427, 7
        %v5429 = vsub.s32 3, %v5428
        %v5430 = vrot.slane %v5413, %v5429
        %v5451 = vunpack.c.l.b16 %v5397
        %v5452 = vunpack.c.h.b16 %v5397
        %v5453 = vunpack.c.l.b16 %v5398
        %v5454 = vunpack.c.h.b16 %v5398
        %v5455 = vunpack.c.l.b16 %v5399
        %v5456 = vunpack.c.h.b16 %v5399
        %v5457 = vunpack.c.l.b16 %v5400
        %v5458 = vunpack.c.h.b16 %v5400
        %v5459 = vunpack.c.l.b16 %v5401
        %v5460 = vunpack.c.h.b16 %v5401
        %v5461 = vunpack.c.l.b16 %v5402
        %v5462 = vunpack.c.h.b16 %v5402
        %v5463 = vunpack.c.l.b16 %v5403
        %v5464 = vunpack.c.h.b16 %v5403
        %v5465 = vunpack.c.l.b16 %v5404
        %v5466 = vunpack.c.h.b16 %v5404
        %v5467 = vunpack.c.l.b16 %v5405
        %v5468 = vunpack.c.h.b16 %v5405
        %v5469 = vunpack.c.l.b16 %v5406
        %v5470 = vunpack.c.h.b16 %v5406
        %v5471 = vunpack.c.l.b16 %v5407
        %v5472 = vunpack.c.h.b16 %v5407
        %v5473 = vunpack.c.l.b16 %v5408
        %v5474 = vunpack.c.h.b16 %v5408
        %v5475 = vunpack.c.l.b16 %v5409
        %v5476 = vunpack.c.h.b16 %v5409
        %v5477 = vunpack.c.l.b16 %v5410
        %v5478 = vunpack.c.h.b16 %v5410
        %v5479 = vunpack.c.l.b16 %v5411
        %v5480 = vunpack.c.h.b16 %v5411
        %v5481 = vunpack.c.l.b16 %v5412
        %v5482 = vunpack.c.h.b16 %v5412
        %v5483 = vpack.c.b16 %v5455, %v5451
        %v5484 = vpack.c.b16 %v5456, %v5452
        %v5485 = vpack.c.b16 %v5457, %v5453
        %v5486 = vpack.c.b16 %v5458, %v5454
        %v5487 = vpack.c.b16 %v5463, %v5459
        %v5488 = vpack.c.b16 %v5464, %v5460
        %v5489 = vpack.c.b16 %v5465, %v5461
        %v5490 = vpack.c.b16 %v5466, %v5462
        %v5491 = vpack.c.b16 %v5471, %v5467
        %v5492 = vpack.c.b16 %v5472, %v5468
        %v5493 = vpack.c.b16 %v5473, %v5469
        %v5494 = vpack.c.b16 %v5474, %v5470
        %v5495 = vpack.c.b16 %v5479, %v5475
        %v5496 = vpack.c.b16 %v5480, %v5476
        %v5497 = vpack.c.b16 %v5481, %v5477
        %v5498 = vpack.c.b16 %v5482, %v5478
        %v5516 = vsel %vm1226, %v5393, 0
        %v5519 = vsel %vm1226, %v5394, 0
        %v5522 = vsel %vm1226, %v5395, 0
        %v5525 = vsel %vm1226, %v5396, 0
        %5527 = vmatprep.subr.bf16.mxu0 0
        %5528 = vmatpush1.bf16.msra.mxu0 0
        %5529 = vmatprep.subr.bf16.mxu0 0
        %5530 = vmatpush1.bf16.msra.mxu0 0
        %5531 = vmatprep.subr.bf16.mxu0 0
        %5532 = vmatpush1.bf16.msra.mxu0 0
        %5533 = vmatprep.subr.bf16.mxu0 0
        %5534 = vmatpush1.bf16.msra.mxu0 0
        %5535 = vmatprep.subr.bf16.mxu0 %v5496
        %5536 = vmatpush1.bf16.msra.mxu0 %v5495
        %5537 = vmatprep.subr.bf16.mxu0 %v5492
        %5538 = vmatpush1.bf16.msra.mxu0 %v5491
        %5539 = vmatprep.subr.bf16.mxu0 %v5488
        %5540 = vmatpush1.bf16.msra.mxu0 %v5487
        %5541 = vmatprep.subr.bf16.mxu0 %v5484
        %5542 = vmatpush1.bf16.msra.mxu0 %v5483
        %5543 = vmatprep.subr.bf16.mxu0 0
        %5544 = vmatpush2.bf16.msra.mxu0 0
        %5545 = vmatprep.subr.bf16.mxu0 0
        %5546 = vmatpush2.bf16.msra.mxu0 0
        %5547 = vmatprep.subr.bf16.mxu0 0
        %5548 = vmatpush2.bf16.msra.mxu0 0
        %5549 = vmatprep.subr.bf16.mxu0 0
        %5550 = vmatpush2.bf16.msra.mxu0 0
        %5551 = vmatprep.subr.bf16.mxu0 0
        %5552 = vmatpush2.bf16.msra.mxu0 0
        %5553 = vmatprep.subr.bf16.mxu0 0
        %5554 = vmatpush2.bf16.msra.mxu0 0
        %5555 = vmatprep.subr.bf16.mxu0 0
        %5556 = vmatpush2.bf16.msra.mxu0 0
        %5557 = vmatprep.subr.bf16.mxu0 0
        %5558 = vmatpush2.bf16.msra.mxu0 0
        %5559 = vmatprep.mubr.bf16.mxu0 0
        %5560 = vmatmul.mubr.bf16.gmra.mxu0 %v5516
        %v5561 = vpop.f32.mrf.mxu0
        %v5562 = vadd.f32 %v5418, %v5561
        %v5563 = vpop.f32.mrf.mxu0
        %v5564 = vadd.f32 %v5422, %v5563
        %v5565 = vpop.f32.mrf.mxu0
        %v5566 = vadd.f32 %v5418, %v5565
        %v5567 = vpop.f32.mrf.mxu0
        %v5568 = vadd.f32 %v5422, %v5567
        %5569 = vmatprep.mubr.bf16.mxu0 0
        %5570 = vmatmul.mubr.bf16.gmra.mxu0 %v5519
        %v5571 = vpop.f32.mrf.mxu0
        %v5572 = vadd.f32 %v5418, %v5571
        %v5573 = vpop.f32.mrf.mxu0
        %v5574 = vadd.f32 %v5422, %v5573
        %v5575 = vpop.f32.mrf.mxu0
        %v5576 = vadd.f32 %v5418, %v5575
        %v5577 = vpop.f32.mrf.mxu0
        %v5578 = vadd.f32 %v5422, %v5577
        %5579 = vmatprep.mubr.bf16.mxu0 0
        %5580 = vmatmul.mubr.bf16.gmra.mxu0 %v5522
        %v5581 = vpop.f32.mrf.mxu0
        %v5582 = vadd.f32 %v5418, %v5581
        %v5583 = vpop.f32.mrf.mxu0
        %v5584 = vadd.f32 %v5422, %v5583
        %v5585 = vpop.f32.mrf.mxu0
        %v5586 = vadd.f32 %v5418, %v5585
        %v5587 = vpop.f32.mrf.mxu0
        %v5588 = vadd.f32 %v5422, %v5587
        %5589 = vmatprep.mubr.bf16.mxu0 0
        %5590 = vmatmul.mubr.bf16.gmra.mxu0 %v5525
        %v5591 = vpop.f32.mrf.mxu0
        %v5592 = vadd.f32 %v5418, %v5591
        %v5593 = vpop.f32.mrf.mxu0
        %v5594 = vadd.f32 %v5422, %v5593
        %v5595 = vpop.f32.mrf.mxu0
        %v5596 = vadd.f32 %v5418, %v5595
        %v5597 = vpop.f32.mrf.mxu0
        %v5598 = vadd.f32 %v5422, %v5597
        %5599 = vdwg.mxu0
        %5600 = vmatprep.subr.bf16.mxu0 0
        %5601 = vmatpush1.bf16.msra.mxu0 0
        %5602 = vmatprep.subr.bf16.mxu0 0
        %5603 = vmatpush1.bf16.msra.mxu0 0
        %5604 = vmatprep.subr.bf16.mxu0 0
        %5605 = vmatpush1.bf16.msra.mxu0 0
        %5606 = vmatprep.subr.bf16.mxu0 0
        %5607 = vmatpush1.bf16.msra.mxu0 0
        %5608 = vmatprep.subr.bf16.mxu0 %v5498
        %5609 = vmatpush1.bf16.msra.mxu0 %v5497
        %5610 = vmatprep.subr.bf16.mxu0 %v5494
        %5611 = vmatpush1.bf16.msra.mxu0 %v5493
        %5612 = vmatprep.subr.bf16.mxu0 %v5490
        %5613 = vmatpush1.bf16.msra.mxu0 %v5489
        %5614 = vmatprep.subr.bf16.mxu0 %v5486
        %5615 = vmatpush1.bf16.msra.mxu0 %v5485
        %5616 = vmatprep.subr.bf16.mxu0 0
        %5617 = vmatpush2.bf16.msra.mxu0 0
        %5618 = vmatprep.subr.bf16.mxu0 0
        %5619 = vmatpush2.bf16.msra.mxu0 0
        %5620 = vmatprep.subr.bf16.mxu0 0
        %5621 = vmatpush2.bf16.msra.mxu0 0
        %5622 = vmatprep.subr.bf16.mxu0 0
        %5623 = vmatpush2.bf16.msra.mxu0 0
        %5624 = vmatprep.subr.bf16.mxu0 0
        %5625 = vmatpush2.bf16.msra.mxu0 0
        %5626 = vmatprep.subr.bf16.mxu0 0
        %5627 = vmatpush2.bf16.msra.mxu0 0
        %5628 = vmatprep.subr.bf16.mxu0 0
        %5629 = vmatpush2.bf16.msra.mxu0 0
        %5630 = vmatprep.subr.bf16.mxu0 0
        %5631 = vmatpush2.bf16.msra.mxu0 0
        %5632 = vmatprep.mubr.bf16.mxu0 0
        %5633 = vmatmul.mubr.bf16.gmra.mxu0 %v5516
        %v5634 = vpop.f32.mrf.mxu0
        %v5635 = vadd.f32 %v5426, %v5634
        %v5636 = vpop.f32.mrf.mxu0
        %v5637 = vadd.f32 %v5430, %v5636
        %v5638 = vpop.f32.mrf.mxu0
        %v5639 = vadd.f32 %v5426, %v5638
        %v5640 = vpop.f32.mrf.mxu0
        %v5641 = vadd.f32 %v5430, %v5640
        %5642 = vmatprep.mubr.bf16.mxu0 0
        %5643 = vmatmul.mubr.bf16.gmra.mxu0 %v5519
        %v5644 = vpop.f32.mrf.mxu0
        %v5645 = vadd.f32 %v5426, %v5644
        %v5646 = vpop.f32.mrf.mxu0
        %v5647 = vadd.f32 %v5430, %v5646
        %v5648 = vpop.f32.mrf.mxu0
        %v5649 = vadd.f32 %v5426, %v5648
        %v5650 = vpop.f32.mrf.mxu0
        %v5651 = vadd.f32 %v5430, %v5650
        %5652 = vmatprep.mubr.bf16.mxu0 0
        %5653 = vmatmul.mubr.bf16.gmra.mxu0 %v5522
        %v5654 = vpop.f32.mrf.mxu0
        %v5655 = vadd.f32 %v5426, %v5654
        %v5656 = vpop.f32.mrf.mxu0
        %v5657 = vadd.f32 %v5430, %v5656
        %v5658 = vpop.f32.mrf.mxu0
        %v5659 = vadd.f32 %v5426, %v5658
        %v5660 = vpop.f32.mrf.mxu0
        %v5661 = vadd.f32 %v5430, %v5660
        %5662 = vmatprep.mubr.bf16.mxu0 0
        %5663 = vmatmul.mubr.bf16.gmra.mxu0 %v5525
        %v5664 = vpop.f32.mrf.mxu0
        %v5665 = vadd.f32 %v5426, %v5664
        %v5666 = vpop.f32.mrf.mxu0
        %v5667 = vadd.f32 %v5430, %v5666
        %v5668 = vpop.f32.mrf.mxu0
        %v5669 = vadd.f32 %v5426, %v5668
        %v5670 = vpop.f32.mrf.mxu0
        %v5671 = vadd.f32 %v5430, %v5670
        %5672 = vdwg.mxu0
        %v5673 = vmul.f32 %v5635, 0.5
        %v5674 = vmul.f32 %v5637, 0.5
        %v5675 = vmul.f32 %v5639, 0.5
        %v5676 = vmul.f32 %v5641, 0.5
        %v5677 = vmul.f32 %v5645, 0.5
        %v5678 = vmul.f32 %v5647, 0.5
        %v5679 = vmul.f32 %v5649, 0.5
        %v5680 = vmul.f32 %v5651, 0.5
        %v5681 = vmul.f32 %v5655, 0.5
        %v5682 = vmul.f32 %v5657, 0.5
        %v5683 = vmul.f32 %v5659, 0.5
        %v5684 = vmul.f32 %v5661, 0.5
        %v5685 = vmul.f32 %v5665, 0.5
        %v5686 = vmul.f32 %v5667, 0.5
        %v5687 = vmul.f32 %v5669, 0.5
        %v5688 = vmul.f32 %v5671, 0.5
        %v5689 = vmul.f32 %v5635, 0.044715
        %v5690 = vmul.f32 %v5637, 0.044715
        %v5691 = vmul.f32 %v5639, 0.044715
        %v5692 = vmul.f32 %v5641, 0.044715
        %v5693 = vmul.f32 %v5645, 0.044715
        %v5694 = vmul.f32 %v5647, 0.044715
        %v5695 = vmul.f32 %v5649, 0.044715
        %v5696 = vmul.f32 %v5651, 0.044715
        %v5697 = vmul.f32 %v5655, 0.044715
        %v5698 = vmul.f32 %v5657, 0.044715
        %v5699 = vmul.f32 %v5659, 0.044715
        %v5700 = vmul.f32 %v5661, 0.044715
        %v5701 = vmul.f32 %v5665, 0.044715
        %v5702 = vmul.f32 %v5667, 0.044715
        %v5703 = vmul.f32 %v5669, 0.044715
        %v5704 = vmul.f32 %v5671, 0.044715
        %v5705 = vmul.f32 %v5689, %v5635
        %v5706 = vmul.f32 %v5690, %v5637
        %v5707 = vmul.f32 %v5691, %v5639
        %v5708 = vmul.f32 %v5692, %v5641
        %v5709 = vmul.f32 %v5693, %v5645
        %v5710 = vmul.f32 %v5694, %v5647
        %v5711 = vmul.f32 %v5695, %v5649
        %v5712 = vmul.f32 %v5696, %v5651
        %v5713 = vmul.f32 %v5697, %v5655
        %v5714 = vmul.f32 %v5698, %v5657
        %v5715 = vmul.f32 %v5699, %v5659
        %v5716 = vmul.f32 %v5700, %v5661
        %v5717 = vmul.f32 %v5701, %v5665
        %v5718 = vmul.f32 %v5702, %v5667
        %v5719 = vmul.f32 %v5703, %v5669
        %v5720 = vmul.f32 %v5704, %v5671
        %v5721 = vmul.f32 %v5705, %v5635
        %v5722 = vmul.f32 %v5706, %v5637
        %v5723 = vmul.f32 %v5707, %v5639
        %v5724 = vmul.f32 %v5708, %v5641
        %v5725 = vmul.f32 %v5709, %v5645
        %v5726 = vmul.f32 %v5710, %v5647
        %v5727 = vmul.f32 %v5711, %v5649
        %v5728 = vmul.f32 %v5712, %v5651
        %v5729 = vmul.f32 %v5713, %v5655
        %v5730 = vmul.f32 %v5714, %v5657
        %v5731 = vmul.f32 %v5715, %v5659
        %v5732 = vmul.f32 %v5716, %v5661
        %v5733 = vmul.f32 %v5717, %v5665
        %v5734 = vmul.f32 %v5718, %v5667
        %v5735 = vmul.f32 %v5719, %v5669
        %v5736 = vmul.f32 %v5720, %v5671
        %v5737 = vadd.f32 %v5635, %v5721
        %v5738 = vadd.f32 %v5637, %v5722
        %v5739 = vadd.f32 %v5639, %v5723
        %v5740 = vadd.f32 %v5641, %v5724
        %v5741 = vadd.f32 %v5645, %v5725
        %v5742 = vadd.f32 %v5647, %v5726
        %v5743 = vadd.f32 %v5649, %v5727
        %v5744 = vadd.f32 %v5651, %v5728
        %v5745 = vadd.f32 %v5655, %v5729
        %v5746 = vadd.f32 %v5657, %v5730
        %v5747 = vadd.f32 %v5659, %v5731
        %v5748 = vadd.f32 %v5661, %v5732
        %v5749 = vadd.f32 %v5665, %v5733
        %v5750 = vadd.f32 %v5667, %v5734
        %v5751 = vadd.f32 %v5669, %v5735
        %v5752 = vadd.f32 %v5671, %v5736
        %v5753 = vmul.f32 %v5737, 0.7978846
        %v5754 = vmul.f32 %v5738, 0.7978846
        %v5755 = vmul.f32 %v5739, 0.7978846
        %v5756 = vmul.f32 %v5740, 0.7978846
        %v5757 = vmul.f32 %v5741, 0.7978846
        %v5758 = vmul.f32 %v5742, 0.7978846
        %v5759 = vmul.f32 %v5743, 0.7978846
        %v5760 = vmul.f32 %v5744, 0.7978846
        %v5761 = vmul.f32 %v5745, 0.7978846
        %v5762 = vmul.f32 %v5746, 0.7978846
        %v5763 = vmul.f32 %v5747, 0.7978846
        %v5764 = vmul.f32 %v5748, 0.7978846
        %v5765 = vmul.f32 %v5749, 0.7978846
        %v5766 = vmul.f32 %v5750, 0.7978846
        %v5767 = vmul.f32 %v5751, 0.7978846
        %v5768 = vmul.f32 %v5752, 0.7978846
        %v5769 = vtanh.pop %v5753
        %v5770 = vtanh.pop %v5754
        %v5771 = vtanh.pop %v5755
        %v5772 = vtanh.pop %v5756
        %v5773 = vtanh.pop %v5757
        %v5774 = vtanh.pop %v5758
        %v5775 = vtanh.pop %v5759
        %v5776 = vtanh.pop %v5760
        %v5777 = vtanh.pop %v5761
        %v5778 = vtanh.pop %v5762
        %v5779 = vtanh.pop %v5763
        %v5780 = vtanh.pop %v5764
        %v5781 = vtanh.pop %v5765
        %v5782 = vtanh.pop %v5766
        %v5783 = vtanh.pop %v5767
        %v5784 = vtanh.pop %v5768
        %v5785 = vadd.f32 %v5769, 1.0
        %v5786 = vadd.f32 %v5770, 1.0
        %v5787 = vadd.f32 %v5771, 1.0
        %v5788 = vadd.f32 %v5772, 1.0
        %v5789 = vadd.f32 %v5773, 1.0
        %v5790 = vadd.f32 %v5774, 1.0
        %v5791 = vadd.f32 %v5775, 1.0
        %v5792 = vadd.f32 %v5776, 1.0
        %v5793 = vadd.f32 %v5777, 1.0
        %v5794 = vadd.f32 %v5778, 1.0
        %v5795 = vadd.f32 %v5779, 1.0
        %v5796 = vadd.f32 %v5780, 1.0
        %v5797 = vadd.f32 %v5781, 1.0
        %v5798 = vadd.f32 %v5782, 1.0
        %v5799 = vadd.f32 %v5783, 1.0
        %v5800 = vadd.f32 %v5784, 1.0
        %v5801 = vmul.f32 %v5673, %v5785
        %v5802 = vmul.f32 %v5674, %v5786
        %v5803 = vmul.f32 %v5675, %v5787
        %v5804 = vmul.f32 %v5676, %v5788
        %v5805 = vmul.f32 %v5677, %v5789
        %v5806 = vmul.f32 %v5678, %v5790
        %v5807 = vmul.f32 %v5679, %v5791
        %v5808 = vmul.f32 %v5680, %v5792
        %v5809 = vmul.f32 %v5681, %v5793
        %v5810 = vmul.f32 %v5682, %v5794
        %v5811 = vmul.f32 %v5683, %v5795
        %v5812 = vmul.f32 %v5684, %v5796
        %v5813 = vmul.f32 %v5685, %v5797
        %v5814 = vmul.f32 %v5686, %v5798
        %v5815 = vmul.f32 %v5687, %v5799
        %v5816 = vmul.f32 %v5688, %v5800
        %v5817 = vmul.f32 %v5562, %v5801
        %v5818 = vmul.f32 %v5564, %v5802
        %v5819 = vmul.f32 %v5566, %v5803
        %v5820 = vmul.f32 %v5568, %v5804
        %v5821 = vmul.f32 %v5572, %v5805
        %v5822 = vmul.f32 %v5574, %v5806
        %v5823 = vmul.f32 %v5576, %v5807
        %v5824 = vmul.f32 %v5578, %v5808
        %v5825 = vmul.f32 %v5582, %v5809
        %v5826 = vmul.f32 %v5584, %v5810
        %v5827 = vmul.f32 %v5586, %v5811
        %v5828 = vmul.f32 %v5588, %v5812
        %v5829 = vmul.f32 %v5592, %v5813
        %v5830 = vmul.f32 %v5594, %v5814
        %v5831 = vmul.f32 %v5596, %v5815
        %v5832 = vmul.f32 %v5598, %v5816
        %v5833 = vpack.c.bf16 %v5819, %v5817
        %v5834 = vpack.c.bf16 %v5820, %v5818
        %v5835 = vpack.c.bf16 %v5823, %v5821
        %v5836 = vpack.c.bf16 %v5824, %v5822
        %v5837 = vpack.c.bf16 %v5827, %v5825
        %v5838 = vpack.c.bf16 %v5828, %v5826
        %v5839 = vpack.c.bf16 %v5831, %v5829
        %v5840 = vpack.c.bf16 %v5832, %v5830
        %v5841 = vld [vmem:[%s51] sm:$0xf]
        %v5842 = vld [vmem:[%s51 + $0x4] sm:$0xf]
        %v5843 = vld [vmem:[%s51 + $0x8] sm:$0xf]
        %v5844 = vld [vmem:[%s51 + $0xc] sm:$0xf]
        %v5845 = vld [vmem:[%s51 + $0x10] sm:$0xf]
        %v5846 = vld [vmem:[%s51 + $0x14] sm:$0xf]
        %v5847 = vld [vmem:[%s51 + $0x18] sm:$0xf]
        %v5848 = vld [vmem:[%s51 + $0x1c] sm:$0xf]
        %v5849 = vld [vmem:[%s51 + $0x20] sm:$0xf]
        %v5850 = vld [vmem:[%s51 + $0x24] sm:$0xf]
        %v5851 = vld [vmem:[%s51 + $0x28] sm:$0xf]
        %v5852 = vld [vmem:[%s51 + $0x2c] sm:$0xf]
        %v5853 = vld [vmem:[%s51 + $0x30] sm:$0xf]
        %v5854 = vld [vmem:[%s51 + $0x34] sm:$0xf]
        %v5855 = vld [vmem:[%s51 + $0x38] sm:$0xf]
        %v5856 = vld [vmem:[%s51 + $0x3c] sm:$0xf]
        %v5857 = vld [vmem:[%s51 + $0x40] sm:$0xf]
        %v5858 = vld [vmem:[%s51 + $0x44] sm:$0xf]
        %v5859 = vld [vmem:[%s51 + $0x48] sm:$0xf]
        %v5860 = vld [vmem:[%s51 + $0x4c] sm:$0xf]
        %v5861 = vld [vmem:[%s51 + $0x50] sm:$0xf]
        %v5862 = vld [vmem:[%s51 + $0x54] sm:$0xf]
        %v5863 = vld [vmem:[%s51 + $0x58] sm:$0xf]
        %v5864 = vld [vmem:[%s51 + $0x5c] sm:$0xf]
        %v5865 = vld [vmem:[%s51 + $0x60] sm:$0xf]
        %v5866 = vld [vmem:[%s51 + $0x64] sm:$0xf]
        %v5867 = vld [vmem:[%s51 + $0x68] sm:$0xf]
        %v5868 = vld [vmem:[%s51 + $0x6c] sm:$0xf]
        %v5869 = vld [vmem:[%s51 + $0x70] sm:$0xf]
        %v5870 = vld [vmem:[%s51 + $0x74] sm:$0xf]
        %v5871 = vld [vmem:[%s51 + $0x78] sm:$0xf]
        %v5872 = vld [vmem:[%s51 + $0x7c] sm:$0xf]
        %v5873 = vld [vmem:[%s53] sm:$0x1]
        %v5875 = vlaneseq
        %v5876 = vshrl.u32 %v5875, 7
        %v5877 = vsub.s32 0, %v5876
        %v5878 = vrot.slane %v5873, %v5877
        %v5912 = vunpack.c.l.b16 %v5841
        %v5913 = vunpack.c.l.b16 %v5842
        %v5914 = vunpack.c.l.b16 %v5843
        %v5915 = vunpack.c.l.b16 %v5844
        %v5916 = vunpack.c.l.b16 %v5845
        %v5917 = vunpack.c.l.b16 %v5846
        %v5918 = vunpack.c.l.b16 %v5847
        %v5919 = vunpack.c.l.b16 %v5848
        %v5920 = vunpack.c.l.b16 %v5849
        %v5921 = vunpack.c.l.b16 %v5850
        %v5922 = vunpack.c.l.b16 %v5851
        %v5923 = vunpack.c.l.b16 %v5852
        %v5924 = vunpack.c.l.b16 %v5853
        %v5925 = vunpack.c.l.b16 %v5854
        %v5926 = vunpack.c.l.b16 %v5855
        %v5927 = vunpack.c.l.b16 %v5856
        %v5928 = vunpack.c.l.b16 %v5857
        %v5929 = vunpack.c.l.b16 %v5858
        %v5930 = vunpack.c.l.b16 %v5859
        %v5931 = vunpack.c.l.b16 %v5860
        %v5932 = vunpack.c.l.b16 %v5861
        %v5933 = vunpack.c.l.b16 %v5862
        %v5934 = vunpack.c.l.b16 %v5863
        %v5935 = vunpack.c.l.b16 %v5864
        %v5936 = vunpack.c.l.b16 %v5865
        %v5937 = vunpack.c.l.b16 %v5866
        %v5938 = vunpack.c.l.b16 %v5867
        %v5939 = vunpack.c.l.b16 %v5868
        %v5940 = vunpack.c.l.b16 %v5869
        %v5941 = vunpack.c.l.b16 %v5870
        %v5942 = vunpack.c.l.b16 %v5871
        %v5943 = vunpack.c.l.b16 %v5872
        %v5944 = vpack.c.b16 %v5913, %v5912
        %v5945 = vpack.c.b16 %v5915, %v5914
        %v5946 = vpack.c.b16 %v5917, %v5916
        %v5947 = vpack.c.b16 %v5919, %v5918
        %v5948 = vpack.c.b16 %v5921, %v5920
        %v5949 = vpack.c.b16 %v5923, %v5922
        %v5950 = vpack.c.b16 %v5925, %v5924
        %v5951 = vpack.c.b16 %v5927, %v5926
        %v5952 = vpack.c.b16 %v5929, %v5928
        %v5953 = vpack.c.b16 %v5931, %v5930
        %v5954 = vpack.c.b16 %v5933, %v5932
        %v5955 = vpack.c.b16 %v5935, %v5934
        %v5956 = vpack.c.b16 %v5937, %v5936
        %v5957 = vpack.c.b16 %v5939, %v5938
        %v5958 = vpack.c.b16 %v5941, %v5940
        %v5959 = vpack.c.b16 %v5943, %v5942
        %5976 = vmatprep.subr.bf16.mxu0 0
        %5977 = vmatpush1.bf16.msra.mxu0 %v5951
        %5978 = vmatprep.subr.bf16.mxu0 0
        %5979 = vmatpush1.bf16.msra.mxu0 %v5950
        %5980 = vmatprep.subr.bf16.mxu0 0
        %5981 = vmatpush1.bf16.msra.mxu0 %v5949
        %5982 = vmatprep.subr.bf16.mxu0 0
        %5983 = vmatpush1.bf16.msra.mxu0 %v5948
        %5984 = vmatprep.subr.bf16.mxu0 0
        %5985 = vmatpush1.bf16.msra.mxu0 %v5947
        %5986 = vmatprep.subr.bf16.mxu0 0
        %5987 = vmatpush1.bf16.msra.mxu0 %v5946
        %5988 = vmatprep.subr.bf16.mxu0 0
        %5989 = vmatpush1.bf16.msra.mxu0 %v5945
        %5990 = vmatprep.subr.bf16.mxu0 0
        %5991 = vmatpush1.bf16.msra.mxu0 %v5944
        %5992 = vmatprep.subr.bf16.mxu0 0
        %5993 = vmatpush2.bf16.msra.mxu0 %v5959
        %5994 = vmatprep.subr.bf16.mxu0 0
        %5995 = vmatpush2.bf16.msra.mxu0 %v5958
        %5996 = vmatprep.subr.bf16.mxu0 0
        %5997 = vmatpush2.bf16.msra.mxu0 %v5957
        %5998 = vmatprep.subr.bf16.mxu0 0
        %5999 = vmatpush2.bf16.msra.mxu0 %v5956
        %6000 = vmatprep.subr.bf16.mxu0 0
        %6001 = vmatpush2.bf16.msra.mxu0 %v5955
        %6002 = vmatprep.subr.bf16.mxu0 0
        %6003 = vmatpush2.bf16.msra.mxu0 %v5954
        %6004 = vmatprep.subr.bf16.mxu0 0
        %6005 = vmatpush2.bf16.msra.mxu0 %v5953
        %6006 = vmatprep.subr.bf16.mxu0 0
        %6007 = vmatpush2.bf16.msra.mxu0 %v5952
        %6008 = vmatprep.mubr.bf16.mxu0 %v5834
        %6009 = vmatmul.mubr.bf16.gmra.mxu0 %v5833
        %v6010 = vpop.f32.mrf.mxu0
        %v6011 = vadd.f32 %v5878, %v6010
        %v6012 = vpop.f32.mrf.mxu0
        %v6013 = vpop.f32.mrf.mxu0
        %v6014 = vadd.f32 %v5878, %v6013
        %v6015 = vpop.f32.mrf.mxu0
        %6016 = vmatprep.mubr.bf16.mxu0 %v5836
        %6017 = vmatmul.mubr.bf16.gmra.mxu0 %v5835
        %v6018 = vpop.f32.mrf.mxu0
        %v6019 = vadd.f32 %v5878, %v6018
        %v6020 = vpop.f32.mrf.mxu0
        %v6021 = vpop.f32.mrf.mxu0
        %v6022 = vadd.f32 %v5878, %v6021
        %v6023 = vpop.f32.mrf.mxu0
        %6024 = vmatprep.mubr.bf16.mxu0 %v5838
        %6025 = vmatmul.mubr.bf16.gmra.mxu0 %v5837
        %v6026 = vpop.f32.mrf.mxu0
        %v6027 = vadd.f32 %v5878, %v6026
        %v6028 = vpop.f32.mrf.mxu0
        %v6029 = vpop.f32.mrf.mxu0
        %v6030 = vadd.f32 %v5878, %v6029
        %v6031 = vpop.f32.mrf.mxu0
        %6032 = vmatprep.mubr.bf16.mxu0 %v5840
        %6033 = vmatmul.mubr.bf16.gmra.mxu0 %v5839
        %v6034 = vpop.f32.mrf.mxu0
        %v6035 = vadd.f32 %v5878, %v6034
        %v6036 = vpop.f32.mrf.mxu0
        %v6037 = vpop.f32.mrf.mxu0
        %v6038 = vadd.f32 %v5878, %v6037
        %v6039 = vpop.f32.mrf.mxu0
        %6040 = vdwg.mxu0
        %v6041 = vadd.f32 %v5251, %v6011
        %v6042 = vadd.f32 %v5252, %v6014
        %v6043 = vadd.f32 %v5253, %v6019
        %v6044 = vadd.f32 %v5254, %v6022
        %v6045 = vadd.f32 %v5255, %v6027
        %v6046 = vadd.f32 %v5256, %v6030
        %v6047 = vadd.f32 %v5257, %v6035
        %v6048 = vadd.f32 %v5258, %v6038
        %v6049 = vpack.c.bf16 %v6042, %v6041
        %v6050 = vpack.c.bf16 %v6044, %v6043
        %v6051 = vpack.c.bf16 %v6046, %v6045
        %v6052 = vpack.c.bf16 %v6048, %v6047
        %v6053 = vld [vmem:[#allocation35] sm:$0xf]
        %v6054 = vld [vmem:[#allocation35 + $0x4] sm:$0xf]
        %v6055 = vld [vmem:[#allocation35 + $0x8] sm:$0xf]
        %v6056 = vld [vmem:[#allocation35 + $0xc] sm:$0xf]
        %v6057 = vld [vmem:[#allocation35 + $0x10] sm:$0xf]
        %v6058 = vld [vmem:[#allocation35 + $0x14] sm:$0xf]
        %v6059 = vld [vmem:[#allocation35 + $0x18] sm:$0xf]
        %v6060 = vld [vmem:[#allocation35 + $0x1c] sm:$0xf]
        %v6061 = vld [vmem:[%s57] sm:$0x1]
        %v6063 = vlaneseq
        %v6064 = vshrl.u32 %v6063, 7
        %v6065 = vsub.s32 0, %v6064
        %v6066 = vrot.slane %v6061, %v6065
        %v6076 = vunpack.c.l.b16 %v6053
        %v6077 = vunpack.c.l.b16 %v6054
        %v6078 = vunpack.c.l.b16 %v6055
        %v6079 = vunpack.c.l.b16 %v6056
        %v6080 = vunpack.c.l.b16 %v6057
        %v6081 = vunpack.c.l.b16 %v6058
        %v6082 = vunpack.c.l.b16 %v6059
        %v6083 = vunpack.c.l.b16 %v6060
        %v6084 = vpack.c.b16 %v6077, %v6076
        %v6085 = vpack.c.b16 %v6079, %v6078
        %v6086 = vpack.c.b16 %v6081, %v6080
        %v6087 = vpack.c.b16 %v6083, %v6082
        %v6093 = vsel %vm1226, %v6049, 0
        %v6096 = vsel %vm1226, %v6050, 0
        %v6099 = vsel %vm1226, %v6051, 0
        %v6102 = vsel %vm1226, %v6052, 0
        %6104 = vmatprep.subr.bf16.mxu0 0
        %6105 = vmatpush1.bf16.msra.mxu0 0
        %6106 = vmatprep.subr.bf16.mxu0 0
        %6107 = vmatpush1.bf16.msra.mxu0 0
        %6108 = vmatprep.subr.bf16.mxu0 0
        %6109 = vmatpush1.bf16.msra.mxu0 0
        %6110 = vmatprep.subr.bf16.mxu0 0
        %6111 = vmatpush1.bf16.msra.mxu0 0
        %6112 = vmatprep.subr.bf16.mxu0 0
        %6113 = vmatpush1.bf16.msra.mxu0 %v6087
        %6114 = vmatprep.subr.bf16.mxu0 0
        %6115 = vmatpush1.bf16.msra.mxu0 %v6086
        %6116 = vmatprep.subr.bf16.mxu0 0
        %6117 = vmatpush1.bf16.msra.mxu0 %v6085
        %6118 = vmatprep.subr.bf16.mxu0 0
        %6119 = vmatpush1.bf16.msra.mxu0 %v6084
        %6120 = vmatprep.subr.bf16.mxu0 0
        %6121 = vmatpush2.bf16.msra.mxu0 0
        %6122 = vmatprep.subr.bf16.mxu0 0
        %6123 = vmatpush2.bf16.msra.mxu0 0
        %6124 = vmatprep.subr.bf16.mxu0 0
        %6125 = vmatpush2.bf16.msra.mxu0 0
        %6126 = vmatprep.subr.bf16.mxu0 0
        %6127 = vmatpush2.bf16.msra.mxu0 0
        %6128 = vmatprep.subr.bf16.mxu0 0
        %6129 = vmatpush2.bf16.msra.mxu0 0
        %6130 = vmatprep.subr.bf16.mxu0 0
        %6131 = vmatpush2.bf16.msra.mxu0 0
        %6132 = vmatprep.subr.bf16.mxu0 0
        %6133 = vmatpush2.bf16.msra.mxu0 0
        %6134 = vmatprep.subr.bf16.mxu0 0
        %6135 = vmatpush2.bf16.msra.mxu0 0
        %6136 = vmatprep.mubr.bf16.mxu0 0
        %6137 = vmatmul.mubr.bf16.gmra.mxu0 %v6093
        %v6138 = vpop.f32.mrf.mxu0
        %v6139 = vadd.f32 %v6066, %v6138
        %v6140 = vpop.f32.mrf.mxu0
        %v6141 = vpop.f32.mrf.mxu0
        %v6142 = vadd.f32 %v6066, %v6141
        %v6143 = vpop.f32.mrf.mxu0
        %6144 = vmatprep.mubr.bf16.mxu0 0
        %6145 = vmatmul.mubr.bf16.gmra.mxu0 %v6096
        %v6146 = vpop.f32.mrf.mxu0
        %v6147 = vadd.f32 %v6066, %v6146
        %v6148 = vpop.f32.mrf.mxu0
        %v6149 = vpop.f32.mrf.mxu0
        %v6150 = vadd.f32 %v6066, %v6149
        %v6151 = vpop.f32.mrf.mxu0
        %6152 = vmatprep.mubr.bf16.mxu0 0
        %6153 = vmatmul.mubr.bf16.gmra.mxu0 %v6099
        %v6154 = vpop.f32.mrf.mxu0
        %v6155 = vadd.f32 %v6066, %v6154
        %v6156 = vpop.f32.mrf.mxu0
        %v6157 = vpop.f32.mrf.mxu0
        %v6158 = vadd.f32 %v6066, %v6157
        %v6159 = vpop.f32.mrf.mxu0
        %6160 = vmatprep.mubr.bf16.mxu0 0
        %6161 = vmatmul.mubr.bf16.gmra.mxu0 %v6102
        %v6162 = vpop.f32.mrf.mxu0
        %v6163 = vadd.f32 %v6066, %v6162
        %v6164 = vpop.f32.mrf.mxu0
        %v6165 = vpop.f32.mrf.mxu0
        %v6166 = vadd.f32 %v6066, %v6165
        %v6167 = vpop.f32.mrf.mxu0
        %6168 = vdwg.mxu0
        %v6169 = vadd.f32 %v6139, %v1209
        %v6170 = vadd.f32 %v6142, %v1210
        %v6171 = vadd.f32 %v6147, %v1211
        %v6172 = vadd.f32 %v6150, %v1212
        %v6173 = vadd.f32 %v6155, %v1213
        %v6174 = vadd.f32 %v6158, %v1214
        %v6175 = vadd.f32 %v6163, %v1215
        %v6176 = vadd.f32 %v6166, %v1216
        %6177 = vst.msk [vmem:[%s1202] sm:$0xff] %vm1226, %v6169
        %6178 = vst.msk [vmem:[%s1202 + $0x8] sm:$0xff] %vm1226, %v6170
        %6179 = vst.msk [vmem:[%s1202 + $0x10] sm:$0xff] %vm1226, %v6171
        %6180 = vst.msk [vmem:[%s1202 + $0x18] sm:$0xff] %vm1226, %v6172
        %6181 = vst.msk [vmem:[%s1202 + $0x20] sm:$0xff] %vm1226, %v6173
        %6182 = vst.msk [vmem:[%s1202 + $0x28] sm:$0xff] %vm1226, %v6174
        %6183 = vst.msk [vmem:[%s1202 + $0x30] sm:$0xff] %vm1226, %v6175
        %6184 = vst.msk [vmem:[%s1202 + $0x38] sm:$0xff] %vm1226, %v6176
        %s6185 = sand.u32 %s713, 1
        %s6186 = scalar_lea.sflag [#allocation5], %s6185
        %s6187 = sand.u32 %s713, 1
        %s6188 = smul.addr %s6187, 64
        %s6189 = scalar_lea.vmem [#allocation36], %s6188
        // Predicated region
        $region221: #{tpu_custom_call.1} parent=135 // pred_check
          %p6190 = pneg %p723
        $region222: #{tpu_custom_call.1} parent=135 // pred_check_branch
          %6192 = sbr.rel (%p6190) target = $region224
        $region223: #{tpu_custom_call.1} parent=135 // pred_region
          %s6194 = ssub.s32 1024, 1024
          %6195 = vsyncadd %s6186, %s6194
          %s6196 = smul.addr %s86, 8
          %s6197 = smul.addr %s6196, 128
          %s6198 = scalar_lea.hbm %s59, %s6197
          %s6199 = sshll.u32 %s6189, 4
          %s6200 = int_to_ptr.vmem [resolvable:$true] %s6199
          %6205 = dma.vmem_to_hbm [thread:$0]  %s6200, 1024, %s6198, %s6186, 128, 128, 8
        $region224: #{tpu_custom_call.1} parent=135 // pred_fallthru
          _
      $region136: #{tpu_custom_call.1} parent=5 // pred_fallthru
        _
      %p6206 = scmp.le.s32.totalorder 2, %s81
      // Predicated region
      $region225: #{tpu_custom_call.1} parent=5 // pred_check
        %p6207 = pneg %p6206
      $region226: #{tpu_custom_call.1} parent=5 // pred_check_branch
        %6209 = sbr.rel (%p6207) target = $region228
      $region227: #{tpu_custom_call.1} parent=5 // pred_region
        %s6210 = ssub.s32 %s81, 2
        // Predicated region
        $region229: #{tpu_custom_call.1} parent=227 // pred_check
          %p6211 = pneg %p729
        $region230: #{tpu_custom_call.1} parent=227 // pred_check_branch
          %6213 = sbr.rel (%p6211) target = $region232
        $region231: #{tpu_custom_call.1} parent=227 // pred_region
          %s6214 = sand.u32 %s714, 1
          %s6215 = scalar_lea.sflag [#allocation5], %s6214
          %s6216 = sand.u32 %s714, 1
          %s6217 = smul.addr %s6216, 64
          %s6218 = scalar_lea.vmem [#allocation36], %s6217
          %6219 = dma.done %s6215, 1024
        $region232: #{tpu_custom_call.1} parent=227 // pred_fallthru
          _
      $region228: #{tpu_custom_call.1} parent=5 // pred_fallthru
        _
    $region6: #{tpu_custom_call.1} parent=1 // loop_footer
      %s85 = sadd.s32 1, %s81
    $region7: #{tpu_custom_call.1} parent=1 // loop_footer_branch
      %80 = sbr.rel target = $region3
    $region8: #{tpu_custom_call.1} parent=1 // loop_exit
      _
    %6220 = vsyncpa [#allocation4], 1
    %s6221 = scalar_lea.sflag [#allocation4], 1
    %6222 = vsyncpa %s6221, 1
    %6223 = vsyncpa [#allocation7], 1
    %6224 = vsyncpa [#allocation10], 1
    %6225 = vsyncpa [#allocation13], 1
    %6226 = vsyncpa [#allocation16], 1
    %6227 = vsyncpa [#allocation19], 1
    %6228 = vsyncpa [#allocation22], 1
    %6229 = vsyncpa [#allocation25], 1
    %6230 = vsyncpa [#allocation28], 1
    %6231 = vsyncpa [#allocation31], 1
    %6232 = vsyncpa [#allocation34], 1
    %6233 = vsyncpa [#allocation5], 1
    %s6234 = scalar_lea.sflag [#allocation5], 1
    %6235 = vsyncpa %s6234, 1

</llo_original>
